<compile_context>
chip_gen: v5e
topology: v5e:2x2
jax: 0.10.0
libtpu: 0.0.40
codegen_flags: <defaults>
</compile_context>

<pallas_src>
import functools

import jax
import jax.numpy as jnp
from jax import lax
from jax.experimental import pallas as pl
from jax.experimental.pallas import tpu as pltpu


def _round_up(v, m):
    return (v + m - 1) // m * m


_VMEM = pl.BlockSpec(memory_space=pltpu.MemorySpace.VMEM)


# ----------------------------------------------------------------------------
# Fused decoder-step kernel.
#
#   x_ref    : (Bp, Ip)        bf16   decode-step input (T == 1), padded
#   h{1,2,3} : (Bp, Hkp)       f32    initial hidden states (padded cols = 0)
#   enc_ref  : (Bp, S, H3p)    bf16   encoder outputs (padded cols = 0)
#   mask_ref : (Bp, 1)         f32    per-batch mask
#   w*_ref   : per-gate [r|z|n] 128-lane slabs, bf16; biases f32 (1, 3*Hkp)
#   outputs  : sig (Bp,128) f32, lab (Bp,128) f32, att (Bp,S) f32,
#              h1n/h2n/h3n (Bp, Hkp) f32
# ----------------------------------------------------------------------------
def _decoder_step_kernel(
        x_ref, h1_ref, h2_ref, h3_ref, enc_ref, mask_ref,
        w1x_ref, whh1_ref, bih1_ref, bhh1_ref,
        w2x_ref, w2o1_ref, whh2_ref, bih2_ref, bhh2_ref,
        w3x_ref, w3o1_ref, w3o2_ref, whh3_ref, bih3_ref, bhh3_ref,
        wa_ref, wl_ref, bl_ref, wsd_ref, wsc_ref, bs_ref,
        sig_ref, lab_ref, att_ref, h1n_ref, h2n_ref, h3n_ref,
        *, n_seg):
    H1p = whh1_ref.shape[0]
    H2p = whh2_ref.shape[0]
    H3p = whh3_ref.shape[0]

    def gru_cell(gi, h, whh_ref, bhh, Hp):
        # W_hh streamed from VMEM at the dot; h cast to bf16, f32 accumulate.
        gh = jnp.dot(h.astype(jnp.bfloat16), whh_ref[...],
                     preferred_element_type=jnp.float32) + bhh
        r = jax.nn.sigmoid(gi[:, :Hp] + gh[:, :Hp])
        z = jax.nn.sigmoid(gi[:, Hp:2 * Hp] + gh[:, Hp:2 * Hp])
        n = jnp.tanh(gi[:, 2 * Hp:] + r * gh[:, 2 * Hp:])
        return (1.0 - z) * n + z * h

    x = x_ref[...]                                            # (Bp, Ip) bf16

    # ---- GRU1 (T == 1, so out1 == h1_n) -----------------------------------
    gi1 = (jnp.dot(x, w1x_ref[...], preferred_element_type=jnp.float32)
           + bih1_ref[...])
    out1 = gru_cell(gi1, h1_ref[...], whh1_ref, bhh1_ref[...], H1p)
    h1n_ref[...] = out1
    out1_bf = out1.astype(jnp.bfloat16)

    # ---- GRU2 on cat(x, out1): concat decomposed into per-source matmuls --
    gi2 = (jnp.dot(x, w2x_ref[...], preferred_element_type=jnp.float32)
           + jnp.dot(out1_bf, w2o1_ref[...], preferred_element_type=jnp.float32)
           + bih2_ref[...])
    out2 = gru_cell(gi2, h2_ref[...], whh2_ref, bhh2_ref[...], H2p)
    h2n_ref[...] = out2
    out2_bf = out2.astype(jnp.bfloat16)

    # ---- GRU3 on cat(x, out1, out2) ----------------------------------------
    gi3 = (jnp.dot(x, w3x_ref[...], preferred_element_type=jnp.float32)
           + jnp.dot(out1_bf, w3o1_ref[...], preferred_element_type=jnp.float32)
           + jnp.dot(out2_bf, w3o2_ref[...], preferred_element_type=jnp.float32)
           + bih3_ref[...])
    out3 = gru_cell(gi3, h3_ref[...], whh3_ref, bhh3_ref[...], H3p)
    h3n_ref[...] = out3
    out3_bf = out3.astype(jnp.bfloat16)

    # ---- Luong 'general' attention -----------------------------------------
    enc = enc_ref[...].astype(jnp.float32)                    # (Bp, S, H3p)
    score_lin = jnp.dot(out3_bf, wa_ref[...],
                        preferred_element_type=jnp.float32)   # (Bp, H3p)
    score = jnp.sum(enc * score_lin[:, None, :], axis=-1)     # (Bp, S)
    m = jnp.max(score, axis=-1, keepdims=True)
    e = jnp.exp(score - m)
    # Per-batch mask applied AFTER softmax, no renormalization (exactly like
    # the PyTorch module).  Padded batch rows are sliced off in the wrapper.
    att = (e / jnp.sum(e, axis=-1, keepdims=True)) * mask_ref[...]
    att_ref[...] = att
    ctx = jnp.sum(att[:, :, None] * enc, axis=1)              # (Bp, H3p)

    # ---- fc_label -> log_softmax over the true n_seg classes ---------------
    lab = (jnp.dot(out3_bf, wl_ref[...], preferred_element_type=jnp.float32)
           + bl_ref[...])
    col = lax.broadcasted_iota(jnp.int32, lab.shape, 1)
    lab = jnp.where(col < n_seg, lab, jnp.float32(-1e30))
    lmax = jnp.max(lab, axis=-1, keepdims=True)
    lse = jnp.log(jnp.sum(jnp.exp(lab - lmax), axis=-1, keepdims=True)) + lmax
    lab_ref[...] = lab - lse

    # ---- fc_signal on cat(out3, context): two matmuls + ELU -----------------
    sig = (jnp.dot(out3_bf, wsd_ref[...], preferred_element_type=jnp.float32)
           + jnp.dot(ctx.astype(jnp.bfloat16), wsc_ref[...],
                     preferred_element_type=jnp.float32)
           + bs_ref[...])
    sig_ref[...] = jnp.where(sig > 0, sig, jnp.exp(jnp.minimum(sig, 0.0)) - 1.0)


# ----------------------------------------------------------------------------
# Wrappers.
# ----------------------------------------------------------------------------
def prepare_encoder(enc_outputs, mask, params):
    """Pad + cast encoder outputs / mask ONCE (hoisted out of the decode loop)."""
    B, S, Hd = enc_outputs.shape
    head = params["head"]
    assert Hd == head["Hd"], (Hd, head["Hd"])
    Hp = head["Hp"]
    Bp = _round_up(max(B, 8), 8)
    enc_p = jnp.pad(enc_outputs.astype(jnp.float32),
                    ((0, Bp - B), (0, 0), (0, Hp - Hd))).astype(jnp.bfloat16)
    mask_p = jnp.pad(mask.astype(jnp.float32).reshape(B, 1),
                     ((0, Bp - B), (0, 0)))
    return enc_p, mask_p


def decoder_step(x, h_n, enc_p, mask_p, params):
    """One fused decode step.  x: (B, 1, I_dec); h_n: list of (1, B, Hk)."""
    B, T, I = x.shape
    assert T == 1, "Decoder.forward is only shape-consistent for one decode step"
    g1, g2, g3, head = params["gru1"], params["gru2"], params["gru3"], params["head"]
    Ip = params["Ip"]
    H1, H2, H3 = g1["H"], g2["H"], g3["H"]
    H1p, H2p, H3p = g1["Hp"], g2["Hp"], g3["Hp"]
    Bp, S = enc_p.shape[0], enc_p.shape[1]

    x_p = jnp.pad(x[:, 0, :].astype(jnp.float32),
                  ((0, Bp - B), (0, Ip - I))).astype(jnp.bfloat16)
    h1_0 = jnp.pad(h_n[0][0].astype(jnp.float32), ((0, Bp - B), (0, H1p - H1)))
    h2_0 = jnp.pad(h_n[1][0].astype(jnp.float32), ((0, Bp - B), (0, H2p - H2)))
    h3_0 = jnp.pad(h_n[2][0].astype(jnp.float32), ((0, Bp - B), (0, H3p - H3)))

    kern = functools.partial(_decoder_step_kernel, n_seg=head["n_seg"])
    out_shapes = (
        jax.ShapeDtypeStruct((Bp, head["P"]), jnp.float32),   # signal head slab
        jax.ShapeDtypeStruct((Bp, head["P"]), jnp.float32),   # label head slab
        jax.ShapeDtypeStruct((Bp, S), jnp.float32),           # attention weights
        jax.ShapeDtypeStruct((Bp, H1p), jnp.float32),
        jax.ShapeDtypeStruct((Bp, H2p), jnp.float32),
        jax.ShapeDtypeStruct((Bp, H3p), jnp.float32),
    )
    sig, lab, att, h1n, h2n, h3n = pl.pallas_call(
        kern,
        out_shape=out_shapes,
        in_specs=[_VMEM] * 27,
        out_specs=tuple([_VMEM] * 6),
        compiler_params=pltpu.CompilerParams(vmem_limit_bytes=32 * 1024 * 1024),
    )(x_p, h1_0, h2_0, h3_0, enc_p, mask_p,
      g1["w_src"][0], g1["whh"], g1["bih"], g1["bhh"],
      g2["w_src"][0], g2["w_src"][1], g2["whh"], g2["bih"], g2["bhh"],
      g3["w_src"][0], g3["w_src"][1], g3["w_src"][2], g3["whh"], g3["bih"], g3["bhh"],
      head["wa"], head["wl"], head["bl"], head["wsd"], head["wsc"], head["bs"])

    output = jnp.concatenate(
        [sig[:B, :head["n_sig"]], lab[:B, :head["n_seg"]]], axis=-1)[:, None, :]
    h_list = [h1n[:B, :H1][None], h2n[:B, :H2][None], h3n[:B, :H3][None]]
    return output, h_list, att[:B, :, None]


def decoder_forward(x, h_n, enc_outputs, mask, params):
    """Signature-compatible with Decoder.forward (dropout = identity / eval)."""
    enc_p, mask_p = prepare_encoder(enc_outputs, mask, params)
    return decoder_step(x, h_n, enc_p, mask_p, params)


# ----------------------------------------------------------------------------
# Deterministic synthetic parameters (shapes follow Decoder.__init__).
# Weights are split per input source, padded per-gate to 128-lane slabs and
# cast to bf16 once here.
# ----------------------------------------------------------------------------
def _uniform(key, shape, scale=0.1):
    return jax.random.uniform(key, shape, jnp.float32, -scale, scale)


def init_gru_params(key, src_sizes, src_pads, hidden_size):
    I, H = sum(src_sizes), hidden_size
    Hp = _round_up(H, 128)
    k = jax.random.split(key, 4)
    wih = _uniform(k[0], (I, 3 * H))
    whh = _uniform(k[1], (H, 3 * H))
    bih = _uniform(k[2], (3 * H,)).at[:H].set(0.0)  # module zeroes bias_ih r-gate
    bhh = _uniform(k[3], (3 * H,))

    def pad_gates(w, rp):
        rows = w.shape[0]
        out = jnp.zeros((rp, 3 * Hp), jnp.float32)
        for g in range(3):
            out = out.at[:rows, g * Hp:g * Hp + H].set(w[:, g * H:(g + 1) * H])
        return out.astype(jnp.bfloat16)

    def pad_bias(b):
        out = jnp.zeros((1, 3 * Hp), jnp.float32)
        for g in range(3):
            out = out.at[0, g * Hp:g * Hp + H].set(b[g * H:(g + 1) * H])
        return out

    w_srcs, off = [], 0
    for sz, rp in zip(src_sizes, src_pads):
        w_srcs.append(pad_gates(wih[off:off + sz], rp))
        off += sz

    return {
        "H": H, "Hp": Hp,
        "w_src": w_srcs,
        "whh": pad_gates(whh, Hp),
        "bih": pad_bias(bih),
        "bhh": pad_bias(bhh),
        "raw": {"wih": wih, "whh": whh, "bih": bih[None, :], "bhh": bhh[None, :]},
    }


def init_head_params(key, hidden, n_sig, n_seg):
    Hd, Hp, P = hidden, _round_up(hidden, 128), 128
    k = jax.random.split(key, 5)
    wa = _uniform(k[0], (Hd, Hd), 0.05)   # Luong 'general' W (stored transposed)
    wl = _uniform(k[1], (Hd, n_seg))
    bl = _uniform(k[2], (n_seg,))
    ws = _uniform(k[3], (2 * Hd, n_sig))
    bs = _uniform(k[4], (n_sig,))

    def padw(w, r, c):
        return jnp.zeros((r, c), jnp.float32).at[:w.shape[0], :w.shape[1]].set(w)

    return {
        "Hd": Hd, "Hp": Hp, "P": P, "n_sig": n_sig, "n_seg": n_seg,
        "wa": padw(wa, Hp, Hp).astype(jnp.bfloat16),
        "wl": padw(wl, Hp, P).astype(jnp.bfloat16),
        "bl": padw(bl[None, :], 1, P),
        "wsd": padw(ws[:Hd], Hp, P).astype(jnp.bfloat16),
        "wsc": padw(ws[Hd:], Hp, P).astype(jnp.bfloat16),
        "bs": padw(bs[None, :], 1, P),
        "raw": {"wa": wa, "wl": wl, "bl": bl, "ws": ws, "bs": bs},
    }


def init_decoder_params(key, input_size_decoder, input_size_encoder, hidden_size,
                        output_size_signal, output_size_segment):
    eoL1 = hidden_size
    eiL2 = input_size_encoder + eoL1 * 2
    eoL2 = eiL2 * 2
    eiL3 = eoL2 * 2 + eoL1 * 2 + input_size_encoder
    eoL3 = eiL3 * 2
    iL1, oL1 = input_size_decoder, eoL1 * 2
    iL2, oL2 = oL1 + iL1, eoL2 * 2
    iL3, oL3 = oL2 + oL1 + iL1, eoL3 * 2
    del iL2, iL3  # implicit in the per-source splits below

    Ip = _round_up(iL1, 128)
    H1p, H2p = _round_up(oL1, 128), _round_up(oL2, 128)

    k1, k2, k3, k4 = jax.random.split(key, 4)
    return {
        "Ip": Ip,
        "gru1": init_gru_params(k1, [iL1], [Ip], oL1),
        "gru2": init_gru_params(k2, [iL1, oL1], [Ip, H1p], oL2),
        "gru3": init_gru_params(k3, [iL1, oL1, oL2], [Ip, H1p, H2p], oL3),
        "head": init_head_params(k4, oL3, output_size_signal, output_size_segment),
        "dims": {"oL1": oL1, "oL2": oL2, "oL3": oL3},
    }


# ----------------------------------------------------------------------------
# Pure-JAX reference (same bf16 matmul precision, bf16-rounded enc) for a
# correctness check.  NOTE: h is re-cast to bf16 at every recurrent step for
# the W_hh matmul in both kernel and reference; a pure-f32 PyTorch GRU would
# diverge beyond 2e-3 for long sequences / large hidden states.
# ----------------------------------------------------------------------------
def _ref_gru(x_btf, h0, raw):
    wih, whh, bih, bhh = raw["wih"], raw["whh"], raw["bih"], raw["bhh"]
    H = whh.shape[0]
    wih_bf, whh_bf = wih.astype(jnp.bfloat16), whh.astype(jnp.bfloat16)

    def step(h, x_t):
        gi = jnp.dot(x_t.astype(jnp.bfloat16), wih_bf,
                     preferred_element_type=jnp.float32) + bih
        gh = jnp.dot(h.astype(jnp.bfloat16), whh_bf,
                     preferred_element_type=jnp.float32) + bhh
        r = jax.nn.sigmoid(gi[:, :H] + gh[:, :H])
        z = jax.nn.sigmoid(gi[:, H:2 * H] + gh[:, H:2 * H])
        n = jnp.tanh(gi[:, 2 * H:] + r * gh[:, 2 * H:])
        h_new = (1.0 - z) * n + z * h
        return h_new, h_new

    hT, outs = lax.scan(step, h0.astype(jnp.float32),
                        jnp.transpose(x_btf, (1, 0, 2)))
    return jnp.transpose(outs, (1, 0, 2)), hT


def _ref_decoder(x, h_n, enc, mask, params):
    out1, h1 = _ref_gru(x, h_n[0][0], params["gru1"]["raw"])
    out2, h2 = _ref_gru(jnp.concatenate([x, out1], 2), h_n[1][0],
                        params["gru2"]["raw"])
    out3, h3 = _ref_gru(jnp.concatenate([x, out1, out2], 2), h_n[2][0],
                        params["gru3"]["raw"])
    raw = params["head"]["raw"]
    enc_f = enc.astype(jnp.bfloat16).astype(jnp.float32)  # kernel holds enc in bf16

    score_lin = jnp.dot(out3[:, 0, :].astype(jnp.bfloat16),
                        raw["wa"].astype(jnp.bfloat16),
                        preferred_element_type=jnp.float32)           # (B,H)
    score = jnp.einsum("bsh,bh->bs", enc_f, score_lin)[:, :, None]    # (B,S,1)
    att = jax.nn.softmax(score, axis=1) * mask[:, None, None]
    ctx = jnp.sum(att * enc_f, axis=1)[:, None, :]                    # (B,1,H)

    lab = jnp.dot(out3.astype(jnp.bfloat16), raw["wl"].astype(jnp.bfloat16),
                  preferred_element_type=jnp.float32) + raw["bl"]
    out_label = jax.nn.log_softmax(lab, axis=2)
    cat = jnp.concatenate([out3, ctx], axis=-1)
    sig = jnp.dot(cat.astype(jnp.bfloat16), raw["ws"].astype(jnp.bfloat16),
                  preferred_element_type=jnp.float32) + raw["bs"]
    out_signal = jax.nn.elu(sig)
    output = jnp.concatenate([out_signal, out_label], axis=2)
    return output, [h1[None], h2[None], h3[None]], att


# ----------------------------------------------------------------------------
if __name__ == "__main__":
    B, T_dec, S_enc = 2, 1, 8
    input_size_decoder = 4
    input_size_encoder = 4
    hidden_size = 8
    output_size_signal = 1
    output_size_segment = 4

    key = jax.random.PRNGKey(0)
    kp, kx, ke, kh1, kh2, kh3, km = jax.random.split(key, 7)

    params = init_decoder_params(kp, input_size_decoder, input_size_encoder,
                                 hidden_size, output_size_signal,
                                 output_size_segment)
    oL1, oL2, oL3 = (params["dims"]["oL1"], params["dims"]["oL2"],
                     params["dims"]["oL3"])

    x = jax.random.normal(kx, (B, T_dec, input_size_decoder), jnp.float32) * 0.5
    enc_outputs = jax.random.normal(ke, (B, S_enc, oL3), jnp.float32) * 0.05
    h_n = [jax.random.normal(kh1, (1, B, oL1), jnp.float32) * 0.1,
           jax.random.normal(kh2, (1, B, oL2), jnp.float32) * 0.1,
           jax.random.normal(kh3, (1, B, oL3), jnp.float32) * 0.1]
    mask = (jax.random.uniform(km, (B,)) > 0.3).astype(jnp.float32)

    # Encoder outputs are constant over an autoregressive decode loop: pad +
    # cast them ONCE, then run the fused single-call step.
    enc_p, mask_p = prepare_encoder(enc_outputs, mask, params)
    step = jax.jit(functools.partial(decoder_step, params=params))
    output, (h1, h2, h3), att = step(x, h_n, enc_p, mask_p)
    jax.block_until_ready(output)
    jax.block_until_ready(att)

    # Shape checks against the PyTorch module semantics.
    assert output.shape == (B, T_dec, output_size_signal + output_size_segment)
    assert h1.shape == (1, B, oL1) and h2.shape == (1, B, oL2) and h3.shape == (1, B, oL3)
    assert att.shape == (B, S_enc, 1), att.shape

    # Numerical check vs. the pure-JAX reference (same bf16 matmul precision).
    ref_out, (r1, r2, r3), ref_att = _ref_decoder(x, h_n, enc_outputs, mask, params)
    assert jnp.allclose(output, ref_out, atol=2e-3, rtol=2e-3), \
        float(jnp.max(jnp.abs(output - ref_out)))
    assert jnp.allclose(h1, r1, atol=2e-3, rtol=2e-3)
    assert jnp.allclose(h2, r2, atol=2e-3, rtol=2e-3)
    assert jnp.allclose(h3, r3, atol=2e-3, rtol=2e-3)
    assert jnp.allclose(att, ref_att, atol=2e-3, rtol=2e-3)

    print("KERNEL_OK")
</pallas_src>

<mosaic_0001>
module attributes {stable_mosaic.version = 11 : i64} {
  func.func @_decoder_step_kernel(%arg0: memref<8x128xbf16, #tpu.memory_space<vmem>>, %arg1: memref<8x128xf32, #tpu.memory_space<vmem>>, %arg2: memref<8x128xf32, #tpu.memory_space<vmem>>, %arg3: memref<8x512xf32, #tpu.memory_space<vmem>>, %arg4: memref<8x8x512xbf16, #tpu.memory_space<vmem>>, %arg5: memref<8x1xf32, #tpu.memory_space<vmem>>, %arg6: memref<128x384xbf16, #tpu.memory_space<vmem>>, %arg7: memref<128x384xbf16, #tpu.memory_space<vmem>>, %arg8: memref<1x384xf32, #tpu.memory_space<vmem>>, %arg9: memref<1x384xf32, #tpu.memory_space<vmem>>, %arg10: memref<128x384xbf16, #tpu.memory_space<vmem>>, %arg11: memref<128x384xbf16, #tpu.memory_space<vmem>>, %arg12: memref<128x384xbf16, #tpu.memory_space<vmem>>, %arg13: memref<1x384xf32, #tpu.memory_space<vmem>>, %arg14: memref<1x384xf32, #tpu.memory_space<vmem>>, %arg15: memref<128x1536xbf16, #tpu.memory_space<vmem>>, %arg16: memref<128x1536xbf16, #tpu.memory_space<vmem>>, %arg17: memref<128x1536xbf16, #tpu.memory_space<vmem>>, %arg18: memref<512x1536xbf16, #tpu.memory_space<vmem>>, %arg19: memref<1x1536xf32, #tpu.memory_space<vmem>>, %arg20: memref<1x1536xf32, #tpu.memory_space<vmem>>, %arg21: memref<512x512xbf16, #tpu.memory_space<vmem>>, %arg22: memref<512x128xbf16, #tpu.memory_space<vmem>>, %arg23: memref<1x128xf32, #tpu.memory_space<vmem>>, %arg24: memref<512x128xbf16, #tpu.memory_space<vmem>>, %arg25: memref<512x128xbf16, #tpu.memory_space<vmem>>, %arg26: memref<1x128xf32, #tpu.memory_space<vmem>>, %arg27: memref<8x128xf32, #tpu.memory_space<vmem>>, %arg28: memref<8x128xf32, #tpu.memory_space<vmem>>, %arg29: memref<8x8xf32, #tpu.memory_space<vmem>>, %arg30: memref<8x128xf32, #tpu.memory_space<vmem>>, %arg31: memref<8x128xf32, #tpu.memory_space<vmem>>, %arg32: memref<8x512xf32, #tpu.memory_space<vmem>>) attributes {dimension_semantics = [], scalar_prefetch = 0 : i64, scratch_operands = 0 : i64, tpu.core_type = #tpu.core_type<tc>} {
    %c0 = arith.constant 0 : index
    %c0_0 = arith.constant 0 : index
    %0 = vector.load %arg0[%c0, %c0_0] : memref<8x128xbf16, #tpu.memory_space<vmem>>, vector<8x128xbf16>
    %c0_1 = arith.constant 0 : index
    %c0_2 = arith.constant 0 : index
    %1 = vector.load %arg6[%c0_1, %c0_2] : memref<128x384xbf16, #tpu.memory_space<vmem>>, vector<128x384xbf16>
    %cst = arith.constant dense<0.000000e+00> : vector<8x384xf32>
    %2 = tpu.matmul %0, %1, %cst {dimension_numbers = #tpu.dot_dimension_numbers<[1], [0], [0], [1], [0, 0, 1, 1], [], []>} : vector<8x128xbf16>, vector<128x384xbf16>, vector<8x384xf32> -> vector<8x384xf32>
    %c0_3 = arith.constant 0 : index
    %c0_4 = arith.constant 0 : index
    %3 = vector.load %arg8[%c0_3, %c0_4] : memref<1x384xf32, #tpu.memory_space<vmem>>, vector<1x384xf32>
    %4 = vector.broadcast %3 : vector<1x384xf32> to vector<8x384xf32>
    %5 = arith.addf %2, %4 : vector<8x384xf32>
    %c0_5 = arith.constant 0 : index
    %c0_6 = arith.constant 0 : index
    %6 = vector.load %arg1[%c0_5, %c0_6] : memref<8x128xf32, #tpu.memory_space<vmem>>, vector<8x128xf32>
    %c0_7 = arith.constant 0 : index
    %c0_8 = arith.constant 0 : index
    %7 = vector.load %arg9[%c0_7, %c0_8] : memref<1x384xf32, #tpu.memory_space<vmem>>, vector<1x384xf32>
    %8 = arith.truncf %6 : vector<8x128xf32> to vector<8x128xbf16>
    %c0_9 = arith.constant 0 : index
    %c0_10 = arith.constant 0 : index
    %9 = vector.load %arg7[%c0_9, %c0_10] : memref<128x384xbf16, #tpu.memory_space<vmem>>, vector<128x384xbf16>
    %cst_11 = arith.constant dense<0.000000e+00> : vector<8x384xf32>
    %10 = tpu.matmul %8, %9, %cst_11 {dimension_numbers = #tpu.dot_dimension_numbers<[1], [0], [0], [1], [0, 0, 1, 1], [], []>} : vector<8x128xbf16>, vector<128x384xbf16>, vector<8x384xf32> -> vector<8x384xf32>
    %11 = vector.broadcast %7 : vector<1x384xf32> to vector<8x384xf32>
    %12 = arith.addf %10, %11 : vector<8x384xf32>
    %13 = vector.extract_strided_slice %5 {offsets = [0, 0], sizes = [8, 128], strides = [1, 1]} : vector<8x384xf32> to vector<8x128xf32>
    %14 = vector.extract_strided_slice %12 {offsets = [0, 0], sizes = [8, 128], strides = [1, 1]} : vector<8x384xf32> to vector<8x128xf32>
    %15 = arith.addf %13, %14 : vector<8x128xf32>
    %16 = arith.negf %15 : vector<8x128xf32>
    %17 = math.exp %16 : vector<8x128xf32>
    %cst_12 = arith.constant 1.000000e+00 : f32
    %18 = vector.broadcast %cst_12 : f32 to vector<8x128xf32>
    %19 = arith.addf %18, %17 : vector<8x128xf32>
    %20 = arith.divf %18, %19 : vector<8x128xf32>
    %21 = vector.extract_strided_slice %5 {offsets = [0, 128], sizes = [8, 128], strides = [1, 1]} : vector<8x384xf32> to vector<8x128xf32>
    %22 = vector.extract_strided_slice %12 {offsets = [0, 128], sizes = [8, 128], strides = [1, 1]} : vector<8x384xf32> to vector<8x128xf32>
    %23 = arith.addf %21, %22 : vector<8x128xf32>
    %24 = arith.negf %23 : vector<8x128xf32>
    %25 = math.exp %24 : vector<8x128xf32>
    %cst_13 = arith.constant 1.000000e+00 : f32
    %26 = vector.broadcast %cst_13 : f32 to vector<8x128xf32>
    %27 = arith.addf %26, %25 : vector<8x128xf32>
    %28 = arith.divf %26, %27 : vector<8x128xf32>
    %29 = vector.extract_strided_slice %5 {offsets = [0, 256], sizes = [8, 128], strides = [1, 1]} : vector<8x384xf32> to vector<8x128xf32>
    %30 = vector.extract_strided_slice %12 {offsets = [0, 256], sizes = [8, 128], strides = [1, 1]} : vector<8x384xf32> to vector<8x128xf32>
    %31 = arith.mulf %20, %30 : vector<8x128xf32>
    %32 = arith.addf %29, %31 : vector<8x128xf32>
    %33 = math.tanh %32 : vector<8x128xf32>
    %cst_14 = arith.constant 1.000000e+00 : f32
    %34 = vector.broadcast %cst_14 : f32 to vector<8x128xf32>
    %35 = arith.subf %34, %28 : vector<8x128xf32>
    %36 = arith.mulf %35, %33 : vector<8x128xf32>
    %37 = arith.mulf %28, %6 : vector<8x128xf32>
    %38 = arith.addf %36, %37 : vector<8x128xf32>
    %c0_15 = arith.constant 0 : index
    %c0_16 = arith.constant 0 : index
    %39 = vector.load %arg30[%c0_15, %c0_16] : memref<8x128xf32, #tpu.memory_space<vmem>>, vector<8x128xf32>
    tpu.vector_store %arg30[%c0_15, %c0_16], %38 {strides = array<i32>} : memref<8x128xf32, #tpu.memory_space<vmem>>, vector<8x128xf32>,
    %40 = arith.truncf %38 : vector<8x128xf32> to vector<8x128xbf16>
    %c0_17 = arith.constant 0 : index
    %c0_18 = arith.constant 0 : index
    %41 = vector.load %arg10[%c0_17, %c0_18] : memref<128x384xbf16, #tpu.memory_space<vmem>>, vector<128x384xbf16>
    %cst_19 = arith.constant dense<0.000000e+00> : vector<8x384xf32>
    %42 = tpu.matmul %0, %41, %cst_19 {dimension_numbers = #tpu.dot_dimension_numbers<[1], [0], [0], [1], [0, 0, 1, 1], [], []>} : vector<8x128xbf16>, vector<128x384xbf16>, vector<8x384xf32> -> vector<8x384xf32>
    %c0_20 = arith.constant 0 : index
    %c0_21 = arith.constant 0 : index
    %43 = vector.load %arg11[%c0_20, %c0_21] : memref<128x384xbf16, #tpu.memory_space<vmem>>, vector<128x384xbf16>
    %cst_22 = arith.constant dense<0.000000e+00> : vector<8x384xf32>
    %44 = tpu.matmul %40, %43, %cst_22 {dimension_numbers = #tpu.dot_dimension_numbers<[1], [0], [0], [1], [0, 0, 1, 1], [], []>} : vector<8x128xbf16>, vector<128x384xbf16>, vector<8x384xf32> -> vector<8x384xf32>
    %45 = arith.addf %42, %44 : vector<8x384xf32>
    %c0_23 = arith.constant 0 : index
    %c0_24 = arith.constant 0 : index
    %46 = vector.load %arg13[%c0_23, %c0_24] : memref<1x384xf32, #tpu.memory_space<vmem>>, vector<1x384xf32>
    %47 = vector.broadcast %46 : vector<1x384xf32> to vector<8x384xf32>
    %48 = arith.addf %45, %47 : vector<8x384xf32>
    %c0_25 = arith.constant 0 : index
    %c0_26 = arith.constant 0 : index
    %49 = vector.load %arg2[%c0_25, %c0_26] : memref<8x128xf32, #tpu.memory_space<vmem>>, vector<8x128xf32>
    %c0_27 = arith.constant 0 : index
    %c0_28 = arith.constant 0 : index
    %50 = vector.load %arg14[%c0_27, %c0_28] : memref<1x384xf32, #tpu.memory_space<vmem>>, vector<1x384xf32>
    %51 = arith.truncf %49 : vector<8x128xf32> to vector<8x128xbf16>
    %c0_29 = arith.constant 0 : index
    %c0_30 = arith.constant 0 : index
    %52 = vector.load %arg12[%c0_29, %c0_30] : memref<128x384xbf16, #tpu.memory_space<vmem>>, vector<128x384xbf16>
    %cst_31 = arith.constant dense<0.000000e+00> : vector<8x384xf32>
    %53 = tpu.matmul %51, %52, %cst_31 {dimension_numbers = #tpu.dot_dimension_numbers<[1], [0], [0], [1], [0, 0, 1, 1], [], []>} : vector<8x128xbf16>, vector<128x384xbf16>, vector<8x384xf32> -> vector<8x384xf32>
    %54 = vector.broadcast %50 : vector<1x384xf32> to vector<8x384xf32>
    %55 = arith.addf %53, %54 : vector<8x384xf32>
    %56 = vector.extract_strided_slice %48 {offsets = [0, 0], sizes = [8, 128], strides = [1, 1]} : vector<8x384xf32> to vector<8x128xf32>
    %57 = vector.extract_strided_slice %55 {offsets = [0, 0], sizes = [8, 128], strides = [1, 1]} : vector<8x384xf32> to vector<8x128xf32>
    %58 = arith.addf %56, %57 : vector<8x128xf32>
    %59 = arith.negf %58 : vector<8x128xf32>
    %60 = math.exp %59 : vector<8x128xf32>
    %cst_32 = arith.constant 1.000000e+00 : f32
    %61 = vector.broadcast %cst_32 : f32 to vector<8x128xf32>
    %62 = arith.addf %61, %60 : vector<8x128xf32>
    %63 = arith.divf %61, %62 : vector<8x128xf32>
    %64 = vector.extract_strided_slice %48 {offsets = [0, 128], sizes = [8, 128], strides = [1, 1]} : vector<8x384xf32> to vector<8x128xf32>
    %65 = vector.extract_strided_slice %55 {offsets = [0, 128], sizes = [8, 128], strides = [1, 1]} : vector<8x384xf32> to vector<8x128xf32>
    %66 = arith.addf %64, %65 : vector<8x128xf32>
    %67 = arith.negf %66 : vector<8x128xf32>
    %68 = math.exp %67 : vector<8x128xf32>
    %cst_33 = arith.constant 1.000000e+00 : f32
    %69 = vector.broadcast %cst_33 : f32 to vector<8x128xf32>
    %70 = arith.addf %69, %68 : vector<8x128xf32>
    %71 = arith.divf %69, %70 : vector<8x128xf32>
    %72 = vector.extract_strided_slice %48 {offsets = [0, 256], sizes = [8, 128], strides = [1, 1]} : vector<8x384xf32> to vector<8x128xf32>
    %73 = vector.extract_strided_slice %55 {offsets = [0, 256], sizes = [8, 128], strides = [1, 1]} : vector<8x384xf32> to vector<8x128xf32>
    %74 = arith.mulf %63, %73 : vector<8x128xf32>
    %75 = arith.addf %72, %74 : vector<8x128xf32>
    %76 = math.tanh %75 : vector<8x128xf32>
    %cst_34 = arith.constant 1.000000e+00 : f32
    %77 = vector.broadcast %cst_34 : f32 to vector<8x128xf32>
    %78 = arith.subf %77, %71 : vector<8x128xf32>
    %79 = arith.mulf %78, %76 : vector<8x128xf32>
    %80 = arith.mulf %71, %49 : vector<8x128xf32>
    %81 = arith.addf %79, %80 : vector<8x128xf32>
    %c0_35 = arith.constant 0 : index
    %c0_36 = arith.constant 0 : index
    %82 = vector.load %arg31[%c0_35, %c0_36] : memref<8x128xf32, #tpu.memory_space<vmem>>, vector<8x128xf32>
    tpu.vector_store %arg31[%c0_35, %c0_36], %81 {strides = array<i32>} : memref<8x128xf32, #tpu.memory_space<vmem>>, vector<8x128xf32>,
    %83 = arith.truncf %81 : vector<8x128xf32> to vector<8x128xbf16>
    %c0_37 = arith.constant 0 : index
    %c0_38 = arith.constant 0 : index
    %84 = vector.load %arg15[%c0_37, %c0_38] : memref<128x1536xbf16, #tpu.memory_space<vmem>>, vector<128x1536xbf16>
    %cst_39 = arith.constant dense<0.000000e+00> : vector<8x1536xf32>
    %85 = tpu.matmul %0, %84, %cst_39 {dimension_numbers = #tpu.dot_dimension_numbers<[1], [0], [0], [1], [0, 0, 1, 1], [], []>} : vector<8x128xbf16>, vector<128x1536xbf16>, vector<8x1536xf32> -> vector<8x1536xf32>
    %c0_40 = arith.constant 0 : index
    %c0_41 = arith.constant 0 : index
    %86 = vector.load %arg16[%c0_40, %c0_41] : memref<128x1536xbf16, #tpu.memory_space<vmem>>, vector<128x1536xbf16>
    %cst_42 = arith.constant dense<0.000000e+00> : vector<8x1536xf32>
    %87 = tpu.matmul %40, %86, %cst_42 {dimension_numbers = #tpu.dot_dimension_numbers<[1], [0], [0], [1], [0, 0, 1, 1], [], []>} : vector<8x128xbf16>, vector<128x1536xbf16>, vector<8x1536xf32> -> vector<8x1536xf32>
    %88 = arith.addf %85, %87 : vector<8x1536xf32>
    %c0_43 = arith.constant 0 : index
    %c0_44 = arith.constant 0 : index
    %89 = vector.load %arg17[%c0_43, %c0_44] : memref<128x1536xbf16, #tpu.memory_space<vmem>>, vector<128x1536xbf16>
    %cst_45 = arith.constant dense<0.000000e+00> : vector<8x1536xf32>
    %90 = tpu.matmul %83, %89, %cst_45 {dimension_numbers = #tpu.dot_dimension_numbers<[1], [0], [0], [1], [0, 0, 1, 1], [], []>} : vector<8x128xbf16>, vector<128x1536xbf16>, vector<8x1536xf32> -> vector<8x1536xf32>
    %91 = arith.addf %88, %90 : vector<8x1536xf32>
    %c0_46 = arith.constant 0 : index
    %c0_47 = arith.constant 0 : index
    %92 = vector.load %arg19[%c0_46, %c0_47] : memref<1x1536xf32, #tpu.memory_space<vmem>>, vector<1x1536xf32>
    %93 = vector.broadcast %92 : vector<1x1536xf32> to vector<8x1536xf32>
    %94 = arith.addf %91, %93 : vector<8x1536xf32>
    %c0_48 = arith.constant 0 : index
    %c0_49 = arith.constant 0 : index
    %95 = vector.load %arg3[%c0_48, %c0_49] : memref<8x512xf32, #tpu.memory_space<vmem>>, vector<8x512xf32>
    %c0_50 = arith.constant 0 : index
    %c0_51 = arith.constant 0 : index
    %96 = vector.load %arg20[%c0_50, %c0_51] : memref<1x1536xf32, #tpu.memory_space<vmem>>, vector<1x1536xf32>
    %97 = arith.truncf %95 : vector<8x512xf32> to vector<8x512xbf16>
    %c0_52 = arith.constant 0 : index
    %c0_53 = arith.constant 0 : index
    %98 = vector.load %arg18[%c0_52, %c0_53] : memref<512x1536xbf16, #tpu.memory_space<vmem>>, vector<512x1536xbf16>
    %cst_54 = arith.constant dense<0.000000e+00> : vector<8x1536xf32>
    %99 = tpu.matmul %97, %98, %cst_54 {dimension_numbers = #tpu.dot_dimension_numbers<[1], [0], [0], [1], [0, 0, 1, 1], [], []>} : vector<8x512xbf16>, vector<512x1536xbf16>, vector<8x1536xf32> -> vector<8x1536xf32>
    %100 = vector.broadcast %96 : vector<1x1536xf32> to vector<8x1536xf32>
    %101 = arith.addf %99, %100 : vector<8x1536xf32>
    %102 = vector.extract_strided_slice %94 {offsets = [0, 0], sizes = [8, 512], strides = [1, 1]} : vector<8x1536xf32> to vector<8x512xf32>
    %103 = vector.extract_strided_slice %101 {offsets = [0, 0], sizes = [8, 512], strides = [1, 1]} : vector<8x1536xf32> to vector<8x512xf32>
    %104 = arith.addf %102, %103 : vector<8x512xf32>
    %105 = arith.negf %104 : vector<8x512xf32>
    %106 = math.exp %105 : vector<8x512xf32>
    %cst_55 = arith.constant 1.000000e+00 : f32
    %107 = vector.broadcast %cst_55 : f32 to vector<8x512xf32>
    %108 = arith.addf %107, %106 : vector<8x512xf32>
    %109 = arith.divf %107, %108 : vector<8x512xf32>
    %110 = vector.extract_strided_slice %94 {offsets = [0, 512], sizes = [8, 512], strides = [1, 1]} : vector<8x1536xf32> to vector<8x512xf32>
    %111 = vector.extract_strided_slice %101 {offsets = [0, 512], sizes = [8, 512], strides = [1, 1]} : vector<8x1536xf32> to vector<8x512xf32>
    %112 = arith.addf %110, %111 : vector<8x512xf32>
    %113 = arith.negf %112 : vector<8x512xf32>
    %114 = math.exp %113 : vector<8x512xf32>
    %cst_56 = arith.constant 1.000000e+00 : f32
    %115 = vector.broadcast %cst_56 : f32 to vector<8x512xf32>
    %116 = arith.addf %115, %114 : vector<8x512xf32>
    %117 = arith.divf %115, %116 : vector<8x512xf32>
    %118 = vector.extract_strided_slice %94 {offsets = [0, 1024], sizes = [8, 512], strides = [1, 1]} : vector<8x1536xf32> to vector<8x512xf32>
    %119 = vector.extract_strided_slice %101 {offsets = [0, 1024], sizes = [8, 512], strides = [1, 1]} : vector<8x1536xf32> to vector<8x512xf32>
    %120 = arith.mulf %109, %119 : vector<8x512xf32>
    %121 = arith.addf %118, %120 : vector<8x512xf32>
    %122 = math.tanh %121 : vector<8x512xf32>
    %cst_57 = arith.constant 1.000000e+00 : f32
    %123 = vector.broadcast %cst_57 : f32 to vector<8x512xf32>
    %124 = arith.subf %123, %117 : vector<8x512xf32>
    %125 = arith.mulf %124, %122 : vector<8x512xf32>
    %126 = arith.mulf %117, %95 : vector<8x512xf32>
    %127 = arith.addf %125, %126 : vector<8x512xf32>
    %c0_58 = arith.constant 0 : index
    %c0_59 = arith.constant 0 : index
    %128 = vector.load %arg32[%c0_58, %c0_59] : memref<8x512xf32, #tpu.memory_space<vmem>>, vector<8x512xf32>
    tpu.vector_store %arg32[%c0_58, %c0_59], %127 {strides = array<i32>} : memref<8x512xf32, #tpu.memory_space<vmem>>, vector<8x512xf32>,
    %129 = arith.truncf %127 : vector<8x512xf32> to vector<8x512xbf16>
    %c0_60 = arith.constant 0 : index
    %c0_61 = arith.constant 0 : index
    %c0_62 = arith.constant 0 : index
    %130 = vector.load %arg4[%c0_60, %c0_61, %c0_62] : memref<8x8x512xbf16, #tpu.memory_space<vmem>>, vector<8x8x512xbf16>
    %131 = arith.extf %130 : vector<8x8x512xbf16> to vector<8x8x512xf32>
    %c0_63 = arith.constant 0 : index
    %c0_64 = arith.constant 0 : index
    %132 = vector.load %arg21[%c0_63, %c0_64] : memref<512x512xbf16, #tpu.memory_space<vmem>>, vector<512x512xbf16>
    %cst_65 = arith.constant dense<0.000000e+00> : vector<8x512xf32>
    %133 = tpu.matmul %129, %132, %cst_65 {dimension_numbers = #tpu.dot_dimension_numbers<[1], [0], [0], [1], [0, 0, 1, 1], [], []>} : vector<8x512xbf16>, vector<512x512xbf16>, vector<8x512xf32> -> vector<8x512xf32>
    %134 = vector.shape_cast %133 : vector<8x512xf32> to vector<8x1x512xf32>
    %135 = vector.broadcast %134 : vector<8x1x512xf32> to vector<8x8x512xf32>
    %136 = arith.mulf %131, %135 : vector<8x8x512xf32>
    %cst_66 = arith.constant dense<0.000000e+00> : vector<8x8xf32>
    %137 = vector.multi_reduction <add>, %136, %cst_66 [2] : vector<8x8x512xf32> to vector<8x8xf32>
    %cst_67 = arith.constant dense<0xFF800000> : vector<8xf32>
    %138 = vector.multi_reduction <maximumf>, %137, %cst_67 [1] : vector<8x8xf32> to vector<8xf32>
    %139 = vector.shape_cast %138 : vector<8xf32> to vector<8x1xf32>
    %140 = vector.broadcast %139 : vector<8x1xf32> to vector<8x8xf32>
    %141 = arith.subf %137, %140 : vector<8x8xf32>
    %142 = math.exp %141 : vector<8x8xf32>
    %cst_68 = arith.constant dense<0.000000e+00> : vector<8xf32>
    %143 = vector.multi_reduction <add>, %142, %cst_68 [1] : vector<8x8xf32> to vector<8xf32>
    %144 = vector.shape_cast %143 : vector<8xf32> to vector<8x1xf32>
    %145 = vector.broadcast %144 : vector<8x1xf32> to vector<8x8xf32>
    %146 = arith.divf %142, %145 : vector<8x8xf32>
    %c0_69 = arith.constant 0 : index
    %c0_70 = arith.constant 0 : index
    %147 = vector.load %arg5[%c0_69, %c0_70] : memref<8x1xf32, #tpu.memory_space<vmem>>, vector<8x1xf32>
    %148 = vector.broadcast %147 : vector<8x1xf32> to vector<8x8xf32>
    %149 = arith.mulf %146, %148 : vector<8x8xf32>
    %c0_71 = arith.constant 0 : index
    %c0_72 = arith.constant 0 : index
    %150 = vector.load %arg29[%c0_71, %c0_72] : memref<8x8xf32, #tpu.memory_space<vmem>>, vector<8x8xf32>
    tpu.vector_store %arg29[%c0_71, %c0_72], %149 {strides = array<i32>} : memref<8x8xf32, #tpu.memory_space<vmem>>, vector<8x8xf32>,
    %151 = vector.shape_cast %149 : vector<8x8xf32> to vector<8x8x1xf32>
    %152 = vector.broadcast %151 : vector<8x8x1xf32> to vector<8x8x512xf32>
    %153 = arith.mulf %152, %131 : vector<8x8x512xf32>
    %cst_73 = arith.constant dense<0.000000e+00> : vector<8x512xf32>
    %154 = vector.multi_reduction <add>, %153, %cst_73 [1] : vector<8x8x512xf32> to vector<8x512xf32>
    %c0_74 = arith.constant 0 : index
    %c0_75 = arith.constant 0 : index
    %155 = vector.load %arg22[%c0_74, %c0_75] : memref<512x128xbf16, #tpu.memory_space<vmem>>, vector<512x128xbf16>
    %cst_76 = arith.constant dense<0.000000e+00> : vector<8x128xf32>
    %156 = tpu.matmul %129, %155, %cst_76 {dimension_numbers = #tpu.dot_dimension_numbers<[1], [0], [0], [1], [0, 0, 1, 1], [], []>} : vector<8x512xbf16>, vector<512x128xbf16>, vector<8x128xf32> -> vector<8x128xf32>
    %c0_77 = arith.constant 0 : index
    %c0_78 = arith.constant 0 : index
    %157 = vector.load %arg23[%c0_77, %c0_78] : memref<1x128xf32, #tpu.memory_space<vmem>>, vector<1x128xf32>
    %158 = vector.broadcast %157 : vector<1x128xf32> to vector<8x128xf32>
    %159 = arith.addf %156, %158 : vector<8x128xf32>
    %160 = tpu.iota {dimensions = array<i32: 1>} : vector<8x128xi32>
    %c4_i32 = arith.constant 4 : i32
    %161 = vector.broadcast %c4_i32 : i32 to vector<8x128xi32>
    %162 = arith.cmpi slt, %160, %161 : vector<8x128xi32>
    %cst_79 = arith.constant -1.000000e+30 : f32
    %163 = vector.broadcast %cst_79 : f32 to vector<8x128xf32>
    %164 = arith.select %162, %159, %163 : vector<8x128xi1>, vector<8x128xf32>
    %cst_80 = arith.constant dense<0xFF800000> : vector<8xf32>
    %165 = vector.multi_reduction <maximumf>, %164, %cst_80 [1] : vector<8x128xf32> to vector<8xf32>
    %166 = vector.shape_cast %165 : vector<8xf32> to vector<8x1xf32>
    %167 = vector.broadcast %166 : vector<8x1xf32> to vector<8x128xf32>
    %168 = arith.subf %164, %167 : vector<8x128xf32>
    %169 = math.exp %168 : vector<8x128xf32>
    %cst_81 = arith.constant dense<0.000000e+00> : vector<8xf32>
    %170 = vector.multi_reduction <add>, %169, %cst_81 [1] : vector<8x128xf32> to vector<8xf32>
    %171 = vector.shape_cast %170 : vector<8xf32> to vector<8x1xf32>
    %172 = math.log %171 : vector<8x1xf32>
    %173 = arith.addf %172, %166 : vector<8x1xf32>
    %174 = vector.broadcast %173 : vector<8x1xf32> to vector<8x128xf32>
    %175 = arith.subf %164, %174 : vector<8x128xf32>
    %c0_82 = arith.constant 0 : index
    %c0_83 = arith.constant 0 : index
    %176 = vector.load %arg28[%c0_82, %c0_83] : memref<8x128xf32, #tpu.memory_space<vmem>>, vector<8x128xf32>
    tpu.vector_store %arg28[%c0_82, %c0_83], %175 {strides = array<i32>} : memref<8x128xf32, #tpu.memory_space<vmem>>, vector<8x128xf32>,
    %c0_84 = arith.constant 0 : index
    %c0_85 = arith.constant 0 : index
    %177 = vector.load %arg24[%c0_84, %c0_85] : memref<512x128xbf16, #tpu.memory_space<vmem>>, vector<512x128xbf16>
    %cst_86 = arith.constant dense<0.000000e+00> : vector<8x128xf32>
    %178 = tpu.matmul %129, %177, %cst_86 {dimension_numbers = #tpu.dot_dimension_numbers<[1], [0], [0], [1], [0, 0, 1, 1], [], []>} : vector<8x512xbf16>, vector<512x128xbf16>, vector<8x128xf32> -> vector<8x128xf32>
    %179 = arith.truncf %154 : vector<8x512xf32> to vector<8x512xbf16>
    %c0_87 = arith.constant 0 : index
    %c0_88 = arith.constant 0 : index
    %180 = vector.load %arg25[%c0_87, %c0_88] : memref<512x128xbf16, #tpu.memory_space<vmem>>, vector<512x128xbf16>
    %cst_89 = arith.constant dense<0.000000e+00> : vector<8x128xf32>
    %181 = tpu.matmul %179, %180, %cst_89 {dimension_numbers = #tpu.dot_dimension_numbers<[1], [0], [0], [1], [0, 0, 1, 1], [], []>} : vector<8x512xbf16>, vector<512x128xbf16>, vector<8x128xf32> -> vector<8x128xf32>
    %182 = arith.addf %178, %181 : vector<8x128xf32>
    %c0_90 = arith.constant 0 : index
    %c0_91 = arith.constant 0 : index
    %183 = vector.load %arg26[%c0_90, %c0_91] : memref<1x128xf32, #tpu.memory_space<vmem>>, vector<1x128xf32>
    %184 = vector.broadcast %183 : vector<1x128xf32> to vector<8x128xf32>
    %185 = arith.addf %182, %184 : vector<8x128xf32>
    %cst_92 = arith.constant 0.000000e+00 : f32
    %186 = vector.broadcast %cst_92 : f32 to vector<8x128xf32>
    %187 = arith.cmpf ogt, %185, %186 : vector<8x128xf32>
    %cst_93 = arith.constant 0.000000e+00 : f32
    %188 = vector.broadcast %cst_93 : f32 to vector<8x128xf32>
    %189 = arith.minimumf %185, %188 : vector<8x128xf32>
    %190 = math.exp %189 : vector<8x128xf32>
    %cst_94 = arith.constant 1.000000e+00 : f32
    %191 = vector.broadcast %cst_94 : f32 to vector<8x128xf32>
    %192 = arith.subf %190, %191 : vector<8x128xf32>
    %193 = arith.select %187, %185, %192 : vector<8x128xi1>, vector<8x128xf32>
    %c0_95 = arith.constant 0 : index
    %c0_96 = arith.constant 0 : index
    %194 = vector.load %arg27[%c0_95, %c0_96] : memref<8x128xf32, #tpu.memory_space<vmem>>, vector<8x128xf32>
    tpu.vector_store %arg27[%c0_95, %c0_96], %193 {strides = array<i32>} : memref<8x128xf32, #tpu.memory_space<vmem>>, vector<8x128xf32>,
    return
  }
}

</mosaic_0001>

<llo_original>
// kernel: decoder_step.1
$region0: #{decoder_step.1}
  #allocation0 [shape = 'u32[]', space=smem, size = 0x4, offset = 0x4, fixed_abs, tag = 'smem constant byte address 0x4 - core index']
  #allocation1 [shape = 'u32[72,128]{1,0:T(1,128)}', space=vmem, size = 0x9000, scoped, tag = 'internal scratch']
  %s0 = inlined_call_operand.smem [shape: u32[33], index: -1, kind: input, shape index: {}]
  %s1 = sld [smem:[%s0]]
  %s2 = scalar_lea.smem %s0, 1
  %s3 = sld [smem:[%s2]]
  %s4 = scalar_lea.smem %s0, 2
  %s5 = sld [smem:[%s4]]
  %s6 = scalar_lea.smem %s0, 3
  %s7 = sld [smem:[%s6]]
  %s8 = scalar_lea.smem %s0, 4
  %s9 = sld [smem:[%s8]]
  %s10 = scalar_lea.smem %s0, 5
  %s11 = sld [smem:[%s10]]
  %s12 = scalar_lea.smem %s0, 6
  %s13 = sld [smem:[%s12]]
  %s14 = scalar_lea.smem %s0, 7
  %s15 = sld [smem:[%s14]]
  %s16 = scalar_lea.smem %s0, 8
  %s17 = sld [smem:[%s16]]
  %s18 = scalar_lea.smem %s0, 9
  %s19 = sld [smem:[%s18]]
  %s20 = scalar_lea.smem %s0, 10
  %s21 = sld [smem:[%s20]]
  %s22 = scalar_lea.smem %s0, 11
  %s23 = sld [smem:[%s22]]
  %s24 = scalar_lea.smem %s0, 12
  %s25 = sld [smem:[%s24]]
  %s26 = scalar_lea.smem %s0, 13
  %s27 = sld [smem:[%s26]]
  %s28 = scalar_lea.smem %s0, 14
  %s29 = sld [smem:[%s28]]
  %s30 = scalar_lea.smem %s0, 15
  %s31 = sld [smem:[%s30]]
  %s32 = scalar_lea.smem %s0, 16
  %s33 = sld [smem:[%s32]]
  %s34 = scalar_lea.smem %s0, 17
  %s35 = sld [smem:[%s34]]
  %s36 = scalar_lea.smem %s0, 18
  %s37 = sld [smem:[%s36]]
  %s38 = scalar_lea.smem %s0, 19
  %s39 = sld [smem:[%s38]]
  %s40 = scalar_lea.smem %s0, 20
  %s41 = sld [smem:[%s40]]
  %s42 = scalar_lea.smem %s0, 21
  %s43 = sld [smem:[%s42]]
  %s44 = scalar_lea.smem %s0, 22
  %s45 = sld [smem:[%s44]]
  %s46 = scalar_lea.smem %s0, 23
  %s47 = sld [smem:[%s46]]
  %s48 = scalar_lea.smem %s0, 24
  %s49 = sld [smem:[%s48]]
  %s50 = scalar_lea.smem %s0, 25
  %s51 = sld [smem:[%s50]]
  %s52 = scalar_lea.smem %s0, 26
  %s53 = sld [smem:[%s52]]
  %s54 = scalar_lea.smem %s0, 27
  %s55 = sld [smem:[%s54]]
  %s56 = scalar_lea.smem %s0, 28
  %s57 = sld [smem:[%s56]]
  %s58 = scalar_lea.smem %s0, 29
  %s59 = sld [smem:[%s58]]
  %s60 = scalar_lea.smem %s0, 30
  %s61 = sld [smem:[%s60]]
  %s62 = scalar_lea.smem %s0, 31
  %s63 = sld [smem:[%s62]]
  %s64 = scalar_lea.smem %s0, 32
  %s65 = sld [smem:[%s64]]
  %66 = xla_tuple %s55, %s57, %s59, %s61, %s63, %s65
  %s67 = sld [smem:[#allocation0]]
  $region246: #{decoder_step.1} parent=0
    _
  %s69 = ssub.s32 1, %s67
  %s70 = scalar_select 0, %s69, %s67
  $region1: #{decoder_step.1} parent=0
    #allocation2 [shape = 'u8[65536]{0}', space=vmem, size = 0x10000, scoped, tag = 'input window, operand 4, single buffered']
    #allocation3 [shape = 's32[1]{0}', space=sflag, size = 0x4, scoped, tag = 'scoped memory for decoder_step.1']
    #allocation4 [shape = 'u8[98304]{0}', space=vmem, size = 0x18000, scoped, tag = 'input window, operand 6, single buffered']
    #allocation5 [shape = 's32[1]{0}', space=sflag, size = 0x4, scoped, tag = 'scoped memory for decoder_step.1']
    #allocation6 [shape = 'u8[98304]{0}', space=vmem, size = 0x18000, scoped, tag = 'input window, operand 7, single buffered']
    #allocation7 [shape = 'u8[1536]{0}', space=vmem, size = 0x800, scoped, tag = 'input window, operand 8, single buffered']
    #allocation8 [shape = 's32[1]{0}', space=sflag, size = 0x4, scoped, tag = 'scoped memory for decoder_step.1']
    #allocation9 [shape = 'u8[1536]{0}', space=vmem, size = 0x800, scoped, tag = 'input window, operand 9, single buffered']
    #allocation10 [shape = 'u8[98304]{0}', space=vmem, size = 0x18000, scoped, tag = 'input window, operand 10, single buffered']
    #allocation11 [shape = 's32[1]{0}', space=sflag, size = 0x4, scoped, tag = 'scoped memory for decoder_step.1']
    #allocation12 [shape = 'u8[98304]{0}', space=vmem, size = 0x18000, scoped, tag = 'input window, operand 11, single buffered']
    #allocation13 [shape = 'u8[98304]{0}', space=vmem, size = 0x18000, scoped, tag = 'input window, operand 12, single buffered']
    #allocation14 [shape = 's32[1]{0}', space=sflag, size = 0x4, scoped, tag = 'scoped memory for decoder_step.1']
    #allocation15 [shape = 'u8[1536]{0}', space=vmem, size = 0x800, scoped, tag = 'input window, operand 13, single buffered']
    #allocation16 [shape = 'u8[1536]{0}', space=vmem, size = 0x800, scoped, tag = 'input window, operand 14, single buffered']
    #allocation17 [shape = 's32[1]{0}', space=sflag, size = 0x4, scoped, tag = 'scoped memory for decoder_step.1']
    #allocation18 [shape = 'u8[393216]{0}', space=vmem, size = 0x60000, scoped, tag = 'input window, operand 15, single buffered']
    #allocation19 [shape = 'u8[393216]{0}', space=vmem, size = 0x60000, scoped, tag = 'input window, operand 16, single buffered']
    #allocation20 [shape = 's32[1]{0}', space=sflag, size = 0x4, scoped, tag = 'scoped memory for decoder_step.1']
    #allocation21 [shape = 'u8[393216]{0}', space=vmem, size = 0x60000, scoped, tag = 'input window, operand 17, single buffered']
    #allocation22 [shape = 'u8[1572864]{0}', space=vmem, size = 0x180000, scoped, tag = 'input window, operand 18, single buffered']
    #allocation23 [shape = 's32[1]{0}', space=sflag, size = 0x4, scoped, tag = 'scoped memory for decoder_step.1']
    #allocation24 [shape = 'u8[6144]{0}', space=vmem, size = 0x1800, scoped, tag = 'input window, operand 19, single buffered']
    #allocation25 [shape = 'u8[6144]{0}', space=vmem, size = 0x1800, scoped, tag = 'input window, operand 20, single buffered']
    #allocation26 [shape = 's32[1]{0}', space=sflag, size = 0x4, scoped, tag = 'scoped memory for decoder_step.1']
    #allocation27 [shape = 'u8[524288]{0}', space=vmem, size = 0x80000, scoped, tag = 'input window, operand 21, single buffered']
    #allocation28 [shape = 'u8[131072]{0}', space=vmem, size = 0x20000, scoped, tag = 'input window, operand 22, single buffered']
    #allocation29 [shape = 's32[1]{0}', space=sflag, size = 0x4, scoped, tag = 'scoped memory for decoder_step.1']
    #allocation30 [shape = 'u8[512]{0}', space=vmem, size = 0x400, scoped, tag = 'input window, operand 23, single buffered']
    #allocation31 [shape = 'u8[131072]{0}', space=vmem, size = 0x20000, scoped, tag = 'input window, operand 24, single buffered']
    #allocation32 [shape = 's32[1]{0}', space=sflag, size = 0x4, scoped, tag = 'scoped memory for decoder_step.1']
    #allocation33 [shape = 'u8[131072]{0}', space=vmem, size = 0x20000, scoped, tag = 'input window, operand 25, single buffered']
    #allocation34 [shape = 'u8[512]{0}', space=vmem, size = 0x400, scoped, tag = 'input window, operand 26, single buffered']
    #allocation35 [shape = 's32[1]{0}', space=sflag, size = 0x4, scoped, tag = 'scoped memory for decoder_step.1']
    %71 = vsyncpa [#allocation3], 0
    %72 = vsyncpa [#allocation5], 0
    %73 = vsyncpa [#allocation8], 0
    %74 = vsyncpa [#allocation11], 0
    %75 = vsyncpa [#allocation14], 0
    %76 = vsyncpa [#allocation17], 0
    %77 = vsyncpa [#allocation20], 0
    %78 = vsyncpa [#allocation23], 0
    %79 = vsyncpa [#allocation26], 0
    %80 = vsyncpa [#allocation29], 0
    %81 = vsyncpa [#allocation32], 0
    %82 = vsyncpa [#allocation35], 0
    // Predicated region
    $region2: #{decoder_step.1} parent=1 // pred_check
      _
    $region3: #{decoder_step.1} parent=1 // pred_check_branch
      %84 = sbr.rel (0) target = $region5
    $region4: #{decoder_step.1} parent=1 // pred_region
      _
    $region5: #{decoder_step.1} parent=1 // pred_fallthru
      _
    // Predicated region
    $region6: #{decoder_step.1} parent=1 // pred_check
      _
    $region7: #{decoder_step.1} parent=1 // pred_check_branch
      %86 = sbr.rel (0) target = $region9
    $region8: #{decoder_step.1} parent=1 // pred_region
      _
    $region9: #{decoder_step.1} parent=1 // pred_fallthru
      _
    // Predicated region
    $region10: #{decoder_step.1} parent=1 // pred_check
      _
    $region11: #{decoder_step.1} parent=1 // pred_check_branch
      %88 = sbr.rel (0) target = $region13
    $region12: #{decoder_step.1} parent=1 // pred_region
      _
    $region13: #{decoder_step.1} parent=1 // pred_fallthru
      _
    // Predicated region
    $region14: #{decoder_step.1} parent=1 // pred_check
      _
    $region15: #{decoder_step.1} parent=1 // pred_check_branch
      %90 = sbr.rel (0) target = $region17
    $region16: #{decoder_step.1} parent=1 // pred_region
      _
    $region17: #{decoder_step.1} parent=1 // pred_fallthru
      _
    // Predicated region
    $region18: #{decoder_step.1} parent=1 // pred_check
      _
    $region19: #{decoder_step.1} parent=1 // pred_check_branch
      %92 = sbr.rel (0) target = $region21
    $region20: #{decoder_step.1} parent=1 // pred_region
      %94 = vsyncadd [#allocation3], 0
      %s95 = sshll.u32 %s9, 4
      %s96 = int_to_ptr.hbm [resolvable:$true] %s95
      %s97 = sshll.u32 [#allocation2], 4
      %s98 = int_to_ptr.vmem [resolvable:$true] %s97
      %103 = dma.hbm_to_vmem [thread:$0]  %s96, 2048, %s98, [#allocation3], 256, 256, 16
    $region21: #{decoder_step.1} parent=1 // pred_fallthru
      _
    // Predicated region
    $region22: #{decoder_step.1} parent=1 // pred_check
      _
    $region23: #{decoder_step.1} parent=1 // pred_check_branch
      %105 = sbr.rel (0) target = $region25
    $region24: #{decoder_step.1} parent=1 // pred_region
      _
    $region25: #{decoder_step.1} parent=1 // pred_fallthru
      _
    // Predicated region
    $region26: #{decoder_step.1} parent=1 // pred_check
      _
    $region27: #{decoder_step.1} parent=1 // pred_check_branch
      %107 = sbr.rel (0) target = $region29
    $region28: #{decoder_step.1} parent=1 // pred_region
      %109 = vsyncadd [#allocation5], 0
      %s110 = sshll.u32 %s13, 4
      %s111 = int_to_ptr.hbm [resolvable:$true] %s110
      %s112 = sshll.u32 [#allocation4], 4
      %s113 = int_to_ptr.vmem [resolvable:$true] %s112
      %118 = dma.hbm_to_vmem [thread:$0]  %s111, 3072, %s113, [#allocation5], 192, 192, 12
    $region29: #{decoder_step.1} parent=1 // pred_fallthru
      _
    // Predicated region
    $region30: #{decoder_step.1} parent=1 // pred_check
      _
    $region31: #{decoder_step.1} parent=1 // pred_check_branch
      %120 = sbr.rel (0) target = $region33
    $region32: #{decoder_step.1} parent=1 // pred_region
      %122 = vsyncadd [#allocation5], 0
      %s123 = sshll.u32 %s15, 4
      %s124 = int_to_ptr.hbm [resolvable:$true] %s123
      %s125 = sshll.u32 [#allocation6], 4
      %s126 = int_to_ptr.vmem [resolvable:$true] %s125
      %131 = dma.hbm_to_vmem [thread:$0]  %s124, 3072, %s126, [#allocation5], 192, 192, 12
    $region33: #{decoder_step.1} parent=1 // pred_fallthru
      _
    // Predicated region
    $region34: #{decoder_step.1} parent=1 // pred_check
      _
    $region35: #{decoder_step.1} parent=1 // pred_check_branch
      %133 = sbr.rel (0) target = $region37
    $region36: #{decoder_step.1} parent=1 // pred_region
      %135 = vsyncadd [#allocation8], 0
      %s137 = sshll.u32 %s17, 4
      %s138 = int_to_ptr.hbm [resolvable:$true] %s137
      %s139 = sshll.u32 [#allocation7], 4
      %s140 = int_to_ptr.vmem [resolvable:$true] %s139
      %142 = dma.hbm_to_vmem [thread:$0]  %s138, 48, %s140, [#allocation8]
    $region37: #{decoder_step.1} parent=1 // pred_fallthru
      _
    // Predicated region
    $region38: #{decoder_step.1} parent=1 // pred_check
      _
    $region39: #{decoder_step.1} parent=1 // pred_check_branch
      %144 = sbr.rel (0) target = $region41
    $region40: #{decoder_step.1} parent=1 // pred_region
      %146 = vsyncadd [#allocation8], 0
      %s148 = sshll.u32 %s19, 4
      %s149 = int_to_ptr.hbm [resolvable:$true] %s148
      %s150 = sshll.u32 [#allocation9], 4
      %s151 = int_to_ptr.vmem [resolvable:$true] %s150
      %153 = dma.hbm_to_vmem [thread:$0]  %s149, 48, %s151, [#allocation8]
    $region41: #{decoder_step.1} parent=1 // pred_fallthru
      _
    // Predicated region
    $region42: #{decoder_step.1} parent=1 // pred_check
      _
    $region43: #{decoder_step.1} parent=1 // pred_check_branch
      %155 = sbr.rel (0) target = $region45
    $region44: #{decoder_step.1} parent=1 // pred_region
      %157 = vsyncadd [#allocation11], 0
      %s158 = sshll.u32 %s21, 4
      %s159 = int_to_ptr.hbm [resolvable:$true] %s158
      %s160 = sshll.u32 [#allocation10], 4
      %s161 = int_to_ptr.vmem [resolvable:$true] %s160
      %166 = dma.hbm_to_vmem [thread:$0]  %s159, 3072, %s161, [#allocation11], 192, 192, 12
    $region45: #{decoder_step.1} parent=1 // pred_fallthru
      _
    // Predicated region
    $region46: #{decoder_step.1} parent=1 // pred_check
      _
    $region47: #{decoder_step.1} parent=1 // pred_check_branch
      %168 = sbr.rel (0) target = $region49
    $region48: #{decoder_step.1} parent=1 // pred_region
      %170 = vsyncadd [#allocation11], 0
      %s171 = sshll.u32 %s23, 4
      %s172 = int_to_ptr.hbm [resolvable:$true] %s171
      %s173 = sshll.u32 [#allocation12], 4
      %s174 = int_to_ptr.vmem [resolvable:$true] %s173
      %179 = dma.hbm_to_vmem [thread:$0]  %s172, 3072, %s174, [#allocation11], 192, 192, 12
    $region49: #{decoder_step.1} parent=1 // pred_fallthru
      _
    // Predicated region
    $region50: #{decoder_step.1} parent=1 // pred_check
      _
    $region51: #{decoder_step.1} parent=1 // pred_check_branch
      %181 = sbr.rel (0) target = $region53
    $region52: #{decoder_step.1} parent=1 // pred_region
      %183 = vsyncadd [#allocation14], 0
      %s184 = sshll.u32 %s25, 4
      %s185 = int_to_ptr.hbm [resolvable:$true] %s184
      %s186 = sshll.u32 [#allocation13], 4
      %s187 = int_to_ptr.vmem [resolvable:$true] %s186
      %192 = dma.hbm_to_vmem [thread:$0]  %s185, 3072, %s187, [#allocation14], 192, 192, 12
    $region53: #{decoder_step.1} parent=1 // pred_fallthru
      _
    // Predicated region
    $region54: #{decoder_step.1} parent=1 // pred_check
      _
    $region55: #{decoder_step.1} parent=1 // pred_check_branch
      %194 = sbr.rel (0) target = $region57
    $region56: #{decoder_step.1} parent=1 // pred_region
      %196 = vsyncadd [#allocation14], 0
      %s198 = sshll.u32 %s27, 4
      %s199 = int_to_ptr.hbm [resolvable:$true] %s198
      %s200 = sshll.u32 [#allocation15], 4
      %s201 = int_to_ptr.vmem [resolvable:$true] %s200
      %203 = dma.hbm_to_vmem [thread:$0]  %s199, 48, %s201, [#allocation14]
    $region57: #{decoder_step.1} parent=1 // pred_fallthru
      _
    // Predicated region
    $region58: #{decoder_step.1} parent=1 // pred_check
      _
    $region59: #{decoder_step.1} parent=1 // pred_check_branch
      %205 = sbr.rel (0) target = $region61
    $region60: #{decoder_step.1} parent=1 // pred_region
      %207 = vsyncadd [#allocation17], 0
      %s209 = sshll.u32 %s29, 4
      %s210 = int_to_ptr.hbm [resolvable:$true] %s209
      %s211 = sshll.u32 [#allocation16], 4
      %s212 = int_to_ptr.vmem [resolvable:$true] %s211
      %214 = dma.hbm_to_vmem [thread:$0]  %s210, 48, %s212, [#allocation17]
    $region61: #{decoder_step.1} parent=1 // pred_fallthru
      _
    // Predicated region
    $region62: #{decoder_step.1} parent=1 // pred_check
      _
    $region63: #{decoder_step.1} parent=1 // pred_check_branch
      %216 = sbr.rel (0) target = $region65
    $region64: #{decoder_step.1} parent=1 // pred_region
      %218 = vsyncadd [#allocation17], 0
      %s219 = sshll.u32 %s31, 4
      %s220 = int_to_ptr.hbm [resolvable:$true] %s219
      %s221 = sshll.u32 [#allocation18], 4
      %s222 = int_to_ptr.vmem [resolvable:$true] %s221
      %227 = dma.hbm_to_vmem [thread:$0]  %s220, 12288, %s222, [#allocation17], 768, 768, 48
    $region65: #{decoder_step.1} parent=1 // pred_fallthru
      _
    // Predicated region
    $region66: #{decoder_step.1} parent=1 // pred_check
      _
    $region67: #{decoder_step.1} parent=1 // pred_check_branch
      %229 = sbr.rel (0) target = $region69
    $region68: #{decoder_step.1} parent=1 // pred_region
      %231 = vsyncadd [#allocation20], 0
      %s232 = sshll.u32 %s33, 4
      %s233 = int_to_ptr.hbm [resolvable:$true] %s232
      %s234 = sshll.u32 [#allocation19], 4
      %s235 = int_to_ptr.vmem [resolvable:$true] %s234
      %240 = dma.hbm_to_vmem [thread:$0]  %s233, 12288, %s235, [#allocation20], 768, 768, 48
    $region69: #{decoder_step.1} parent=1 // pred_fallthru
      _
    // Predicated region
    $region70: #{decoder_step.1} parent=1 // pred_check
      _
    $region71: #{decoder_step.1} parent=1 // pred_check_branch
      %242 = sbr.rel (0) target = $region73
    $region72: #{decoder_step.1} parent=1 // pred_region
      %244 = vsyncadd [#allocation20], 0
      %s245 = sshll.u32 %s35, 4
      %s246 = int_to_ptr.hbm [resolvable:$true] %s245
      %s247 = sshll.u32 [#allocation21], 4
      %s248 = int_to_ptr.vmem [resolvable:$true] %s247
      %253 = dma.hbm_to_vmem [thread:$0]  %s246, 12288, %s248, [#allocation20], 768, 768, 48
    $region73: #{decoder_step.1} parent=1 // pred_fallthru
      _
    // Predicated region
    $region74: #{decoder_step.1} parent=1 // pred_check
      _
    $region75: #{decoder_step.1} parent=1 // pred_check_branch
      %255 = sbr.rel (0) target = $region77
    $region76: #{decoder_step.1} parent=1 // pred_region
      %257 = vsyncadd [#allocation23], 0
      %s258 = sshll.u32 %s37, 4
      %s259 = int_to_ptr.hbm [resolvable:$true] %s258
      %s260 = sshll.u32 [#allocation22], 4
      %s261 = int_to_ptr.vmem [resolvable:$true] %s260
      %266 = dma.hbm_to_vmem [thread:$0]  %s259, 49152, %s261, [#allocation23], 768, 768, 48
    $region77: #{decoder_step.1} parent=1 // pred_fallthru
      _
    // Predicated region
    $region78: #{decoder_step.1} parent=1 // pred_check
      _
    $region79: #{decoder_step.1} parent=1 // pred_check_branch
      %268 = sbr.rel (0) target = $region81
    $region80: #{decoder_step.1} parent=1 // pred_region
      %270 = vsyncadd [#allocation23], 0
      %s272 = sshll.u32 %s39, 4
      %s273 = int_to_ptr.hbm [resolvable:$true] %s272
      %s274 = sshll.u32 [#allocation24], 4
      %s275 = int_to_ptr.vmem [resolvable:$true] %s274
      %277 = dma.hbm_to_vmem [thread:$0]  %s273, 192, %s275, [#allocation23]
    $region81: #{decoder_step.1} parent=1 // pred_fallthru
      _
    // Predicated region
    $region82: #{decoder_step.1} parent=1 // pred_check
      _
    $region83: #{decoder_step.1} parent=1 // pred_check_branch
      %279 = sbr.rel (0) target = $region85
    $region84: #{decoder_step.1} parent=1 // pred_region
      %281 = vsyncadd [#allocation26], 0
      %s283 = sshll.u32 %s41, 4
      %s284 = int_to_ptr.hbm [resolvable:$true] %s283
      %s285 = sshll.u32 [#allocation25], 4
      %s286 = int_to_ptr.vmem [resolvable:$true] %s285
      %288 = dma.hbm_to_vmem [thread:$0]  %s284, 192, %s286, [#allocation26]
    $region85: #{decoder_step.1} parent=1 // pred_fallthru
      _
    // Predicated region
    $region86: #{decoder_step.1} parent=1 // pred_check
      _
    $region87: #{decoder_step.1} parent=1 // pred_check_branch
      %290 = sbr.rel (0) target = $region89
    $region88: #{decoder_step.1} parent=1 // pred_region
      %292 = vsyncadd [#allocation26], 0
      %s293 = sshll.u32 %s43, 4
      %s294 = int_to_ptr.hbm [resolvable:$true] %s293
      %s295 = sshll.u32 [#allocation27], 4
      %s296 = int_to_ptr.vmem [resolvable:$true] %s295
      %301 = dma.hbm_to_vmem [thread:$0]  %s294, 16384, %s296, [#allocation26], 256, 256, 16
    $region89: #{decoder_step.1} parent=1 // pred_fallthru
      _
    // Predicated region
    $region90: #{decoder_step.1} parent=1 // pred_check
      _
    $region91: #{decoder_step.1} parent=1 // pred_check_branch
      %303 = sbr.rel (0) target = $region93
    $region92: #{decoder_step.1} parent=1 // pred_region
      %305 = vsyncadd [#allocation29], 0
      %s306 = sshll.u32 %s45, 4
      %s307 = int_to_ptr.hbm [resolvable:$true] %s306
      %s308 = sshll.u32 [#allocation28], 4
      %s309 = int_to_ptr.vmem [resolvable:$true] %s308
      %314 = dma.hbm_to_vmem [thread:$0]  %s307, 4096, %s309, [#allocation29], 64, 64, 4
    $region93: #{decoder_step.1} parent=1 // pred_fallthru
      _
    // Predicated region
    $region94: #{decoder_step.1} parent=1 // pred_check
      _
    $region95: #{decoder_step.1} parent=1 // pred_check_branch
      %316 = sbr.rel (0) target = $region97
    $region96: #{decoder_step.1} parent=1 // pred_region
      %318 = vsyncadd [#allocation29], 0
      %s320 = sshll.u32 %s47, 4
      %s321 = int_to_ptr.hbm [resolvable:$true] %s320
      %s322 = sshll.u32 [#allocation30], 4
      %s323 = int_to_ptr.vmem [resolvable:$true] %s322
      %325 = dma.hbm_to_vmem [thread:$0]  %s321, 16, %s323, [#allocation29]
    $region97: #{decoder_step.1} parent=1 // pred_fallthru
      _
    // Predicated region
    $region98: #{decoder_step.1} parent=1 // pred_check
      _
    $region99: #{decoder_step.1} parent=1 // pred_check_branch
      %327 = sbr.rel (0) target = $region101
    $region100: #{decoder_step.1} parent=1 // pred_region
      %329 = vsyncadd [#allocation32], 0
      %s330 = sshll.u32 %s49, 4
      %s331 = int_to_ptr.hbm [resolvable:$true] %s330
      %s332 = sshll.u32 [#allocation31], 4
      %s333 = int_to_ptr.vmem [resolvable:$true] %s332
      %338 = dma.hbm_to_vmem [thread:$0]  %s331, 4096, %s333, [#allocation32], 64, 64, 4
    $region101: #{decoder_step.1} parent=1 // pred_fallthru
      _
    // Predicated region
    $region102: #{decoder_step.1} parent=1 // pred_check
      _
    $region103: #{decoder_step.1} parent=1 // pred_check_branch
      %340 = sbr.rel (0) target = $region105
    $region104: #{decoder_step.1} parent=1 // pred_region
      %342 = vsyncadd [#allocation32], 0
      %s343 = sshll.u32 %s51, 4
      %s344 = int_to_ptr.hbm [resolvable:$true] %s343
      %s345 = sshll.u32 [#allocation33], 4
      %s346 = int_to_ptr.vmem [resolvable:$true] %s345
      %351 = dma.hbm_to_vmem [thread:$0]  %s344, 4096, %s346, [#allocation32], 64, 64, 4
    $region105: #{decoder_step.1} parent=1 // pred_fallthru
      _
    // Predicated region
    $region106: #{decoder_step.1} parent=1 // pred_check
      _
    $region107: #{decoder_step.1} parent=1 // pred_check_branch
      %353 = sbr.rel (0) target = $region109
    $region108: #{decoder_step.1} parent=1 // pred_region
      %355 = vsyncadd [#allocation35], 0
      %s357 = sshll.u32 %s53, 4
      %s358 = int_to_ptr.hbm [resolvable:$true] %s357
      %s359 = sshll.u32 [#allocation34], 4
      %s360 = int_to_ptr.vmem [resolvable:$true] %s359
      %362 = dma.hbm_to_vmem [thread:$0]  %s358, 16, %s360, [#allocation35]
    $region109: #{decoder_step.1} parent=1 // pred_fallthru
      _
    // Predicated region
    $region110: #{decoder_step.1} parent=1 // pred_check
      _
    $region111: #{decoder_step.1} parent=1 // pred_check_branch
      %364 = sbr.rel (0) target = $region113
    $region112: #{decoder_step.1} parent=1 // pred_region
      %366 = dma.done [#allocation3], 2048
    $region113: #{decoder_step.1} parent=1 // pred_fallthru
      _
    // Predicated region
    $region114: #{decoder_step.1} parent=1 // pred_check
      _
    $region115: #{decoder_step.1} parent=1 // pred_check_branch
      %368 = sbr.rel (0) target = $region117
    $region116: #{decoder_step.1} parent=1 // pred_region
      %370 = dma.done [#allocation5], 3072
    $region117: #{decoder_step.1} parent=1 // pred_fallthru
      _
    // Predicated region
    $region118: #{decoder_step.1} parent=1 // pred_check
      _
    $region119: #{decoder_step.1} parent=1 // pred_check_branch
      %372 = sbr.rel (0) target = $region121
    $region120: #{decoder_step.1} parent=1 // pred_region
      %374 = dma.done [#allocation5], 3072
    $region121: #{decoder_step.1} parent=1 // pred_fallthru
      _
    // Predicated region
    $region122: #{decoder_step.1} parent=1 // pred_check
      _
    $region123: #{decoder_step.1} parent=1 // pred_check_branch
      %376 = sbr.rel (0) target = $region125
    $region124: #{decoder_step.1} parent=1 // pred_region
      %378 = dma.done [#allocation8], 48
    $region125: #{decoder_step.1} parent=1 // pred_fallthru
      _
    // Predicated region
    $region126: #{decoder_step.1} parent=1 // pred_check
      _
    $region127: #{decoder_step.1} parent=1 // pred_check_branch
      %380 = sbr.rel (0) target = $region129
    $region128: #{decoder_step.1} parent=1 // pred_region
      %382 = dma.done [#allocation8], 48
    $region129: #{decoder_step.1} parent=1 // pred_fallthru
      _
    // Predicated region
    $region130: #{decoder_step.1} parent=1 // pred_check
      _
    $region131: #{decoder_step.1} parent=1 // pred_check_branch
      %384 = sbr.rel (0) target = $region133
    $region132: #{decoder_step.1} parent=1 // pred_region
      %386 = dma.done [#allocation11], 3072
    $region133: #{decoder_step.1} parent=1 // pred_fallthru
      _
    // Predicated region
    $region134: #{decoder_step.1} parent=1 // pred_check
      _
    $region135: #{decoder_step.1} parent=1 // pred_check_branch
      %388 = sbr.rel (0) target = $region137
    $region136: #{decoder_step.1} parent=1 // pred_region
      %390 = dma.done [#allocation11], 3072
    $region137: #{decoder_step.1} parent=1 // pred_fallthru
      _
    // Predicated region
    $region138: #{decoder_step.1} parent=1 // pred_check
      _
    $region139: #{decoder_step.1} parent=1 // pred_check_branch
      %392 = sbr.rel (0) target = $region141
    $region140: #{decoder_step.1} parent=1 // pred_region
      %394 = dma.done [#allocation14], 3072
    $region141: #{decoder_step.1} parent=1 // pred_fallthru
      _
    // Predicated region
    $region142: #{decoder_step.1} parent=1 // pred_check
      _
    $region143: #{decoder_step.1} parent=1 // pred_check_branch
      %396 = sbr.rel (0) target = $region145
    $region144: #{decoder_step.1} parent=1 // pred_region
      %398 = dma.done [#allocation14], 48
    $region145: #{decoder_step.1} parent=1 // pred_fallthru
      _
    // Predicated region
    $region146: #{decoder_step.1} parent=1 // pred_check
      _
    $region147: #{decoder_step.1} parent=1 // pred_check_branch
      %400 = sbr.rel (0) target = $region149
    $region148: #{decoder_step.1} parent=1 // pred_region
      %402 = dma.done [#allocation17], 48
    $region149: #{decoder_step.1} parent=1 // pred_fallthru
      _
    // Predicated region
    $region150: #{decoder_step.1} parent=1 // pred_check
      _
    $region151: #{decoder_step.1} parent=1 // pred_check_branch
      %404 = sbr.rel (0) target = $region153
    $region152: #{decoder_step.1} parent=1 // pred_region
      %406 = dma.done [#allocation17], 12288
    $region153: #{decoder_step.1} parent=1 // pred_fallthru
      _
    // Predicated region
    $region154: #{decoder_step.1} parent=1 // pred_check
      _
    $region155: #{decoder_step.1} parent=1 // pred_check_branch
      %408 = sbr.rel (0) target = $region157
    $region156: #{decoder_step.1} parent=1 // pred_region
      %410 = dma.done [#allocation20], 12288
    $region157: #{decoder_step.1} parent=1 // pred_fallthru
      _
    // Predicated region
    $region158: #{decoder_step.1} parent=1 // pred_check
      _
    $region159: #{decoder_step.1} parent=1 // pred_check_branch
      %412 = sbr.rel (0) target = $region161
    $region160: #{decoder_step.1} parent=1 // pred_region
      %414 = dma.done [#allocation20], 12288
    $region161: #{decoder_step.1} parent=1 // pred_fallthru
      _
    // Predicated region
    $region162: #{decoder_step.1} parent=1 // pred_check
      _
    $region163: #{decoder_step.1} parent=1 // pred_check_branch
      %416 = sbr.rel (0) target = $region165
    $region164: #{decoder_step.1} parent=1 // pred_region
      %418 = dma.done [#allocation23], 49152
    $region165: #{decoder_step.1} parent=1 // pred_fallthru
      _
    // Predicated region
    $region166: #{decoder_step.1} parent=1 // pred_check
      _
    $region167: #{decoder_step.1} parent=1 // pred_check_branch
      %420 = sbr.rel (0) target = $region169
    $region168: #{decoder_step.1} parent=1 // pred_region
      %422 = dma.done [#allocation23], 192
    $region169: #{decoder_step.1} parent=1 // pred_fallthru
      _
    // Predicated region
    $region170: #{decoder_step.1} parent=1 // pred_check
      _
    $region171: #{decoder_step.1} parent=1 // pred_check_branch
      %424 = sbr.rel (0) target = $region173
    $region172: #{decoder_step.1} parent=1 // pred_region
      %426 = dma.done [#allocation26], 192
    $region173: #{decoder_step.1} parent=1 // pred_fallthru
      _
    // Predicated region
    $region174: #{decoder_step.1} parent=1 // pred_check
      _
    $region175: #{decoder_step.1} parent=1 // pred_check_branch
      %428 = sbr.rel (0) target = $region177
    $region176: #{decoder_step.1} parent=1 // pred_region
      %430 = dma.done [#allocation26], 16384
    $region177: #{decoder_step.1} parent=1 // pred_fallthru
      _
    // Predicated region
    $region178: #{decoder_step.1} parent=1 // pred_check
      _
    $region179: #{decoder_step.1} parent=1 // pred_check_branch
      %432 = sbr.rel (0) target = $region181
    $region180: #{decoder_step.1} parent=1 // pred_region
      %434 = dma.done [#allocation29], 4096
    $region181: #{decoder_step.1} parent=1 // pred_fallthru
      _
    // Predicated region
    $region182: #{decoder_step.1} parent=1 // pred_check
      _
    $region183: #{decoder_step.1} parent=1 // pred_check_branch
      %436 = sbr.rel (0) target = $region185
    $region184: #{decoder_step.1} parent=1 // pred_region
      %438 = dma.done [#allocation29], 16
    $region185: #{decoder_step.1} parent=1 // pred_fallthru
      _
    // Predicated region
    $region186: #{decoder_step.1} parent=1 // pred_check
      _
    $region187: #{decoder_step.1} parent=1 // pred_check_branch
      %440 = sbr.rel (0) target = $region189
    $region188: #{decoder_step.1} parent=1 // pred_region
      %442 = dma.done [#allocation32], 4096
    $region189: #{decoder_step.1} parent=1 // pred_fallthru
      _
    // Predicated region
    $region190: #{decoder_step.1} parent=1 // pred_check
      _
    $region191: #{decoder_step.1} parent=1 // pred_check_branch
      %444 = sbr.rel (0) target = $region193
    $region192: #{decoder_step.1} parent=1 // pred_region
      %446 = dma.done [#allocation32], 4096
    $region193: #{decoder_step.1} parent=1 // pred_fallthru
      _
    // Predicated region
    $region194: #{decoder_step.1} parent=1 // pred_check
      _
    $region195: #{decoder_step.1} parent=1 // pred_check_branch
      %448 = sbr.rel (0) target = $region197
    $region196: #{decoder_step.1} parent=1 // pred_region
      %450 = dma.done [#allocation35], 16
    $region197: #{decoder_step.1} parent=1 // pred_fallthru
      _
    %v451 = vld [vmem:[%s1] sm:$0xf]
    %v452 = vld [vmem:[#allocation4] sm:$0xff]
    %v453 = vld [vmem:[#allocation4 + $0x8] sm:$0xf]
    %v454 = vld [vmem:[#allocation4 + $0xc] sm:$0xff]
    %v455 = vld [vmem:[#allocation4 + $0x14] sm:$0xf]
    %v456 = vld [vmem:[#allocation4 + $0x18] sm:$0xff]
    %v457 = vld [vmem:[#allocation4 + $0x20] sm:$0xf]
    %v458 = vld [vmem:[#allocation4 + $0x24] sm:$0xff]
    %v459 = vld [vmem:[#allocation4 + $0x2c] sm:$0xf]
    %v460 = vld [vmem:[#allocation4 + $0x30] sm:$0xff]
    %v461 = vld [vmem:[#allocation4 + $0x38] sm:$0xf]
    %v462 = vld [vmem:[#allocation4 + $0x3c] sm:$0xff]
    %v463 = vld [vmem:[#allocation4 + $0x44] sm:$0xf]
    %v464 = vld [vmem:[#allocation4 + $0x48] sm:$0xff]
    %v465 = vld [vmem:[#allocation4 + $0x50] sm:$0xf]
    %v466 = vld [vmem:[#allocation4 + $0x54] sm:$0xff]
    %v467 = vld [vmem:[#allocation4 + $0x5c] sm:$0xf]
    %v468 = vld [vmem:[#allocation4 + $0x60] sm:$0xff]
    %v469 = vld [vmem:[#allocation4 + $0x68] sm:$0xf]
    %v470 = vld [vmem:[#allocation4 + $0x6c] sm:$0xff]
    %v471 = vld [vmem:[#allocation4 + $0x74] sm:$0xf]
    %v472 = vld [vmem:[#allocation4 + $0x78] sm:$0xff]
    %v473 = vld [vmem:[#allocation4 + $0x80] sm:$0xf]
    %v474 = vld [vmem:[#allocation4 + $0x84] sm:$0xff]
    %v475 = vld [vmem:[#allocation4 + $0x8c] sm:$0xf]
    %v476 = vld [vmem:[#allocation4 + $0x90] sm:$0xff]
    %v477 = vld [vmem:[#allocation4 + $0x98] sm:$0xf]
    %v478 = vld [vmem:[#allocation4 + $0x9c] sm:$0xff]
    %v479 = vld [vmem:[#allocation4 + $0xa4] sm:$0xf]
    %v480 = vld [vmem:[#allocation4 + $0xa8] sm:$0xff]
    %v481 = vld [vmem:[#allocation4 + $0xb0] sm:$0xf]
    %v482 = vld [vmem:[#allocation4 + $0xb4] sm:$0xff]
    %v483 = vld [vmem:[#allocation4 + $0xbc] sm:$0xf]
    %v484 = vld [vmem:[#allocation7] sm:$0x7]
    %v486 = vperm.slane %v484, 0
    %v487 = vperm.slane %v484, 1
    %v488 = vperm.slane %v484, 2
    %v524 = vunpack.c.l.b16 %v452
    %v525 = vunpack.c.h.b16 %v452
    %v526 = vunpack.c.l.b16 %v453
    %v527 = vunpack.c.l.b16 %v454
    %v528 = vunpack.c.h.b16 %v454
    %v529 = vunpack.c.l.b16 %v455
    %v530 = vunpack.c.l.b16 %v456
    %v531 = vunpack.c.h.b16 %v456
    %v532 = vunpack.c.l.b16 %v457
    %v533 = vunpack.c.l.b16 %v458
    %v534 = vunpack.c.h.b16 %v458
    %v535 = vunpack.c.l.b16 %v459
    %v536 = vunpack.c.l.b16 %v460
    %v537 = vunpack.c.h.b16 %v460
    %v538 = vunpack.c.l.b16 %v461
    %v539 = vunpack.c.l.b16 %v462
    %v540 = vunpack.c.h.b16 %v462
    %v541 = vunpack.c.l.b16 %v463
    %v542 = vunpack.c.l.b16 %v464
    %v543 = vunpack.c.h.b16 %v464
    %v544 = vunpack.c.l.b16 %v465
    %v545 = vunpack.c.l.b16 %v466
    %v546 = vunpack.c.h.b16 %v466
    %v547 = vunpack.c.l.b16 %v467
    %v548 = vunpack.c.l.b16 %v468
    %v549 = vunpack.c.h.b16 %v468
    %v550 = vunpack.c.l.b16 %v469
    %v551 = vunpack.c.l.b16 %v470
    %v552 = vunpack.c.h.b16 %v470
    %v553 = vunpack.c.l.b16 %v471
    %v554 = vunpack.c.l.b16 %v472
    %v555 = vunpack.c.h.b16 %v472
    %v556 = vunpack.c.l.b16 %v473
    %v557 = vunpack.c.l.b16 %v474
    %v558 = vunpack.c.h.b16 %v474
    %v559 = vunpack.c.l.b16 %v475
    %v560 = vunpack.c.l.b16 %v476
    %v561 = vunpack.c.h.b16 %v476
    %v562 = vunpack.c.l.b16 %v477
    %v563 = vunpack.c.l.b16 %v478
    %v564 = vunpack.c.h.b16 %v478
    %v565 = vunpack.c.l.b16 %v479
    %v566 = vunpack.c.l.b16 %v480
    %v567 = vunpack.c.h.b16 %v480
    %v568 = vunpack.c.l.b16 %v481
    %v569 = vunpack.c.l.b16 %v482
    %v570 = vunpack.c.h.b16 %v482
    %v571 = vunpack.c.l.b16 %v483
    %v572 = vpack.c.b16 %v527, %v524
    %v573 = vpack.c.b16 %v528, %v525
    %v574 = vpack.c.b16 %v529, %v526
    %v575 = vpack.c.b16 %v533, %v530
    %v576 = vpack.c.b16 %v534, %v531
    %v577 = vpack.c.b16 %v535, %v532
    %v578 = vpack.c.b16 %v539, %v536
    %v579 = vpack.c.b16 %v540, %v537
    %v580 = vpack.c.b16 %v541, %v538
    %v581 = vpack.c.b16 %v545, %v542
    %v582 = vpack.c.b16 %v546, %v543
    %v583 = vpack.c.b16 %v547, %v544
    %v584 = vpack.c.b16 %v551, %v548
    %v585 = vpack.c.b16 %v552, %v549
    %v586 = vpack.c.b16 %v553, %v550
    %v587 = vpack.c.b16 %v557, %v554
    %v588 = vpack.c.b16 %v558, %v555
    %v589 = vpack.c.b16 %v559, %v556
    %v590 = vpack.c.b16 %v563, %v560
    %v591 = vpack.c.b16 %v564, %v561
    %v592 = vpack.c.b16 %v565, %v562
    %v593 = vpack.c.b16 %v569, %v566
    %v594 = vpack.c.b16 %v570, %v567
    %v595 = vpack.c.b16 %v571, %v568
    %620 = vmatpush.bf16.msra.mxu0 %v593
    %621 = vmatpush.bf16.msra.mxu0 %v590
    %622 = vmatpush.bf16.msra.mxu0 %v587
    %623 = vmatpush.bf16.msra.mxu0 %v584
    %624 = vmatpush.bf16.msra.mxu0 %v581
    %625 = vmatpush.bf16.msra.mxu0 %v578
    %626 = vmatpush.bf16.msra.mxu0 %v575
    %627 = vmatpush.bf16.msra.mxu0 %v572
    %628 = vmatmul.bf16.gmra.mxu0 %v451
    %v629 = vpop.f32.mrf.mxu0
    %v630 = vadd.f32 %v486, %v629
    %v631 = vpop.f32.mrf.mxu0
    %632 = vdwg.mxu0
    %633 = vmatpush.bf16.msra.mxu0 %v594
    %634 = vmatpush.bf16.msra.mxu0 %v591
    %635 = vmatpush.bf16.msra.mxu0 %v588
    %636 = vmatpush.bf16.msra.mxu0 %v585
    %637 = vmatpush.bf16.msra.mxu0 %v582
    %638 = vmatpush.bf16.msra.mxu0 %v579
    %639 = vmatpush.bf16.msra.mxu0 %v576
    %640 = vmatpush.bf16.msra.mxu0 %v573
    %641 = vmatmul.bf16.gmra.mxu0 %v451
    %v642 = vpop.f32.mrf.mxu0
    %v643 = vadd.f32 %v487, %v642
    %v644 = vpop.f32.mrf.mxu0
    %645 = vdwg.mxu0
    %646 = vmatpush.bf16.msra.mxu0 %v595
    %647 = vmatpush.bf16.msra.mxu0 %v592
    %648 = vmatpush.bf16.msra.mxu0 %v589
    %649 = vmatpush.bf16.msra.mxu0 %v586
    %650 = vmatpush.bf16.msra.mxu0 %v583
    %651 = vmatpush.bf16.msra.mxu0 %v580
    %652 = vmatpush.bf16.msra.mxu0 %v577
    %653 = vmatpush.bf16.msra.mxu0 %v574
    %654 = vmatmul.bf16.gmra.mxu0 %v451
    %v655 = vpop.f32.mrf.mxu0
    %v656 = vadd.f32 %v488, %v655
    %v657 = vpop.f32.mrf.mxu0
    %658 = vdwg.mxu0
    %v659 = vld [vmem:[%s3] sm:$0xff]
    %v660 = vld [vmem:[#allocation9] sm:$0x7]
    %v661 = vpack.c.bf16 %v659, %v659
    %v662 = vld [vmem:[#allocation6] sm:$0xff]
    %v663 = vld [vmem:[#allocation6 + $0x8] sm:$0xf]
    %v664 = vld [vmem:[#allocation6 + $0xc] sm:$0xff]
    %v665 = vld [vmem:[#allocation6 + $0x14] sm:$0xf]
    %v666 = vld [vmem:[#allocation6 + $0x18] sm:$0xff]
    %v667 = vld [vmem:[#allocation6 + $0x20] sm:$0xf]
    %v668 = vld [vmem:[#allocation6 + $0x24] sm:$0xff]
    %v669 = vld [vmem:[#allocation6 + $0x2c] sm:$0xf]
    %v670 = vld [vmem:[#allocation6 + $0x30] sm:$0xff]
    %v671 = vld [vmem:[#allocation6 + $0x38] sm:$0xf]
    %v672 = vld [vmem:[#allocation6 + $0x3c] sm:$0xff]
    %v673 = vld [vmem:[#allocation6 + $0x44] sm:$0xf]
    %v674 = vld [vmem:[#allocation6 + $0x48] sm:$0xff]
    %v675 = vld [vmem:[#allocation6 + $0x50] sm:$0xf]
    %v676 = vld [vmem:[#allocation6 + $0x54] sm:$0xff]
    %v677 = vld [vmem:[#allocation6 + $0x5c] sm:$0xf]
    %v678 = vld [vmem:[#allocation6 + $0x60] sm:$0xff]
    %v679 = vld [vmem:[#allocation6 + $0x68] sm:$0xf]
    %v680 = vld [vmem:[#allocation6 + $0x6c] sm:$0xff]
    %v681 = vld [vmem:[#allocation6 + $0x74] sm:$0xf]
    %v682 = vld [vmem:[#allocation6 + $0x78] sm:$0xff]
    %v683 = vld [vmem:[#allocation6 + $0x80] sm:$0xf]
    %v684 = vld [vmem:[#allocation6 + $0x84] sm:$0xff]
    %v685 = vld [vmem:[#allocation6 + $0x8c] sm:$0xf]
    %v686 = vld [vmem:[#allocation6 + $0x90] sm:$0xff]
    %v687 = vld [vmem:[#allocation6 + $0x98] sm:$0xf]
    %v688 = vld [vmem:[#allocation6 + $0x9c] sm:$0xff]
    %v689 = vld [vmem:[#allocation6 + $0xa4] sm:$0xf]
    %v690 = vld [vmem:[#allocation6 + $0xa8] sm:$0xff]
    %v691 = vld [vmem:[#allocation6 + $0xb0] sm:$0xf]
    %v692 = vld [vmem:[#allocation6 + $0xb4] sm:$0xff]
    %v693 = vld [vmem:[#allocation6 + $0xbc] sm:$0xf]
    %v695 = vperm.slane %v660, 0
    %v696 = vperm.slane %v660, 1
    %v697 = vperm.slane %v660, 2
    %v733 = vunpack.c.l.b16 %v662
    %v734 = vunpack.c.h.b16 %v662
    %v735 = vunpack.c.l.b16 %v663
    %v736 = vunpack.c.l.b16 %v664
    %v737 = vunpack.c.h.b16 %v664
    %v738 = vunpack.c.l.b16 %v665
    %v739 = vunpack.c.l.b16 %v666
    %v740 = vunpack.c.h.b16 %v666
    %v741 = vunpack.c.l.b16 %v667
    %v742 = vunpack.c.l.b16 %v668
    %v743 = vunpack.c.h.b16 %v668
    %v744 = vunpack.c.l.b16 %v669
    %v745 = vunpack.c.l.b16 %v670
    %v746 = vunpack.c.h.b16 %v670
    %v747 = vunpack.c.l.b16 %v671
    %v748 = vunpack.c.l.b16 %v672
    %v749 = vunpack.c.h.b16 %v672
    %v750 = vunpack.c.l.b16 %v673
    %v751 = vunpack.c.l.b16 %v674
    %v752 = vunpack.c.h.b16 %v674
    %v753 = vunpack.c.l.b16 %v675
    %v754 = vunpack.c.l.b16 %v676
    %v755 = vunpack.c.h.b16 %v676
    %v756 = vunpack.c.l.b16 %v677
    %v757 = vunpack.c.l.b16 %v678
    %v758 = vunpack.c.h.b16 %v678
    %v759 = vunpack.c.l.b16 %v679
    %v760 = vunpack.c.l.b16 %v680
    %v761 = vunpack.c.h.b16 %v680
    %v762 = vunpack.c.l.b16 %v681
    %v763 = vunpack.c.l.b16 %v682
    %v764 = vunpack.c.h.b16 %v682
    %v765 = vunpack.c.l.b16 %v683
    %v766 = vunpack.c.l.b16 %v684
    %v767 = vunpack.c.h.b16 %v684
    %v768 = vunpack.c.l.b16 %v685
    %v769 = vunpack.c.l.b16 %v686
    %v770 = vunpack.c.h.b16 %v686
    %v771 = vunpack.c.l.b16 %v687
    %v772 = vunpack.c.l.b16 %v688
    %v773 = vunpack.c.h.b16 %v688
    %v774 = vunpack.c.l.b16 %v689
    %v775 = vunpack.c.l.b16 %v690
    %v776 = vunpack.c.h.b16 %v690
    %v777 = vunpack.c.l.b16 %v691
    %v778 = vunpack.c.l.b16 %v692
    %v779 = vunpack.c.h.b16 %v692
    %v780 = vunpack.c.l.b16 %v693
    %v781 = vpack.c.b16 %v736, %v733
    %v782 = vpack.c.b16 %v737, %v734
    %v783 = vpack.c.b16 %v738, %v735
    %v784 = vpack.c.b16 %v742, %v739
    %v785 = vpack.c.b16 %v743, %v740
    %v786 = vpack.c.b16 %v744, %v741
    %v787 = vpack.c.b16 %v748, %v745
    %v788 = vpack.c.b16 %v749, %v746
    %v789 = vpack.c.b16 %v750, %v747
    %v790 = vpack.c.b16 %v754, %v751
    %v791 = vpack.c.b16 %v755, %v752
    %v792 = vpack.c.b16 %v756, %v753
    %v793 = vpack.c.b16 %v760, %v757
    %v794 = vpack.c.b16 %v761, %v758
    %v795 = vpack.c.b16 %v762, %v759
    %v796 = vpack.c.b16 %v766, %v763
    %v797 = vpack.c.b16 %v767, %v764
    %v798 = vpack.c.b16 %v768, %v765
    %v799 = vpack.c.b16 %v772, %v769
    %v800 = vpack.c.b16 %v773, %v770
    %v801 = vpack.c.b16 %v774, %v771
    %v802 = vpack.c.b16 %v778, %v775
    %v803 = vpack.c.b16 %v779, %v776
    %v804 = vpack.c.b16 %v780, %v777
    %829 = vmatpush.bf16.msra.mxu0 %v802
    %830 = vmatpush.bf16.msra.mxu0 %v799
    %831 = vmatpush.bf16.msra.mxu0 %v796
    %832 = vmatpush.bf16.msra.mxu0 %v793
    %833 = vmatpush.bf16.msra.mxu0 %v790
    %834 = vmatpush.bf16.msra.mxu0 %v787
    %835 = vmatpush.bf16.msra.mxu0 %v784
    %836 = vmatpush.bf16.msra.mxu0 %v781
    %837 = vmatmul.bf16.gmra.mxu0 %v661
    %v838 = vpop.f32.mrf.mxu0
    %v839 = vadd.f32 %v695, %v838
    %v840 = vpop.f32.mrf.mxu0
    %841 = vdwg.mxu0
    %842 = vmatpush.bf16.msra.mxu0 %v803
    %843 = vmatpush.bf16.msra.mxu0 %v800
    %844 = vmatpush.bf16.msra.mxu0 %v797
    %845 = vmatpush.bf16.msra.mxu0 %v794
    %846 = vmatpush.bf16.msra.mxu0 %v791
    %847 = vmatpush.bf16.msra.mxu0 %v788
    %848 = vmatpush.bf16.msra.mxu0 %v785
    %849 = vmatpush.bf16.msra.mxu0 %v782
    %850 = vmatmul.bf16.gmra.mxu0 %v661
    %v851 = vpop.f32.mrf.mxu0
    %v852 = vadd.f32 %v696, %v851
    %v853 = vpop.f32.mrf.mxu0
    %854 = vdwg.mxu0
    %855 = vmatpush.bf16.msra.mxu0 %v804
    %856 = vmatpush.bf16.msra.mxu0 %v801
    %857 = vmatpush.bf16.msra.mxu0 %v798
    %858 = vmatpush.bf16.msra.mxu0 %v795
    %859 = vmatpush.bf16.msra.mxu0 %v792
    %860 = vmatpush.bf16.msra.mxu0 %v789
    %861 = vmatpush.bf16.msra.mxu0 %v786
    %862 = vmatpush.bf16.msra.mxu0 %v783
    %863 = vmatmul.bf16.gmra.mxu0 %v661
    %v864 = vpop.f32.mrf.mxu0
    %v865 = vadd.f32 %v697, %v864
    %v866 = vpop.f32.mrf.mxu0
    %867 = vdwg.mxu0
    %v868 = vadd.f32 %v630, %v839
    %v869 = vxor.u32 %v868, 2147483648
    %v870 = vmul.f32 %v869, 1.442695
    %v871 = vpow.pop %v870
    %v872 = vadd.f32 %v871, 1.0
    %v873 = vrcp.pop %v872
    %v874 = vmul.f32 %v872, %v873
    %v875 = vsub.f32 1.0, %v874
    %v876 = vmul.f32 %v873, %v875
    %v877 = vadd.f32 %v873, %v876
    %vm878 = vweird.f32 %v872
    %vm879 = vweird.f32 %v873
    %vm880 = vmor %vm878, %vm879
    %v881 = vsel %vm880, %v873, %v877
    %v882 = vand.u32 2147483647, %v872
    %vm883 = vcmp.eq.f32.partialorder %v882, 8.507059e+37
    %v884 = vand.u32 %v872, 2147483648
    %v885 = vor.u32 1.1754944e-38, %v884
    %v886 = vsel %vm883, %v885, %v881
    %v887 = vmul.f32 1.0, %v886
    %v888 = vadd.f32 %v643, %v852
    %v889 = vxor.u32 %v888, 2147483648
    %v890 = vmul.f32 %v889, 1.442695
    %v891 = vpow.pop %v890
    %v892 = vadd.f32 %v891, 1.0
    %v893 = vrcp.pop %v892
    %v894 = vmul.f32 %v892, %v893
    %v895 = vsub.f32 1.0, %v894
    %v896 = vmul.f32 %v893, %v895
    %v897 = vadd.f32 %v893, %v896
    %vm898 = vweird.f32 %v892
    %vm899 = vweird.f32 %v893
    %vm900 = vmor %vm898, %vm899
    %v901 = vsel %vm900, %v893, %v897
    %v902 = vand.u32 2147483647, %v892
    %vm903 = vcmp.eq.f32.partialorder %v902, 8.507059e+37
    %v904 = vand.u32 %v892, 2147483648
    %v905 = vor.u32 1.1754944e-38, %v904
    %v906 = vsel %vm903, %v905, %v901
    %v907 = vmul.f32 1.0, %v906
    %v908 = vmul.f32 %v887, %v865
    %v909 = vadd.f32 %v656, %v908
    %v910 = vtanh.pop %v909
    %v911 = vsub.f32 1.0, %v907
    %v912 = vmul.f32 %v911, %v910
    %v913 = vmul.f32 %v907, %v659
    %v914 = vadd.f32 %v912, %v913
    %915 = vst [vmem:[%s61] sm:$0xff] %v914
    %v916 = vpack.c.bf16 %v914, %v914
    %v917 = vld [vmem:[#allocation10] sm:$0xff]
    %v918 = vld [vmem:[#allocation10 + $0x8] sm:$0xf]
    %v919 = vld [vmem:[#allocation10 + $0xc] sm:$0xff]
    %v920 = vld [vmem:[#allocation10 + $0x14] sm:$0xf]
    %v921 = vld [vmem:[#allocation10 + $0x18] sm:$0xff]
    %v922 = vld [vmem:[#allocation10 + $0x20] sm:$0xf]
    %v923 = vld [vmem:[#allocation10 + $0x24] sm:$0xff]
    %v924 = vld [vmem:[#allocation10 + $0x2c] sm:$0xf]
    %v925 = vld [vmem:[#allocation10 + $0x30] sm:$0xff]
    %v926 = vld [vmem:[#allocation10 + $0x38] sm:$0xf]
    %v927 = vld [vmem:[#allocation10 + $0x3c] sm:$0xff]
    %v928 = vld [vmem:[#allocation10 + $0x44] sm:$0xf]
    %v929 = vld [vmem:[#allocation10 + $0x48] sm:$0xff]
    %v930 = vld [vmem:[#allocation10 + $0x50] sm:$0xf]
    %v931 = vld [vmem:[#allocation10 + $0x54] sm:$0xff]
    %v932 = vld [vmem:[#allocation10 + $0x5c] sm:$0xf]
    %v933 = vld [vmem:[#allocation10 + $0x60] sm:$0xff]
    %v934 = vld [vmem:[#allocation10 + $0x68] sm:$0xf]
    %v935 = vld [vmem:[#allocation10 + $0x6c] sm:$0xff]
    %v936 = vld [vmem:[#allocation10 + $0x74] sm:$0xf]
    %v937 = vld [vmem:[#allocation10 + $0x78] sm:$0xff]
    %v938 = vld [vmem:[#allocation10 + $0x80] sm:$0xf]
    %v939 = vld [vmem:[#allocation10 + $0x84] sm:$0xff]
    %v940 = vld [vmem:[#allocation10 + $0x8c] sm:$0xf]
    %v941 = vld [vmem:[#allocation10 + $0x90] sm:$0xff]
    %v942 = vld [vmem:[#allocation10 + $0x98] sm:$0xf]
    %v943 = vld [vmem:[#allocation10 + $0x9c] sm:$0xff]
    %v944 = vld [vmem:[#allocation10 + $0xa4] sm:$0xf]
    %v945 = vld [vmem:[#allocation10 + $0xa8] sm:$0xff]
    %v946 = vld [vmem:[#allocation10 + $0xb0] sm:$0xf]
    %v947 = vld [vmem:[#allocation10 + $0xb4] sm:$0xff]
    %v948 = vld [vmem:[#allocation10 + $0xbc] sm:$0xf]
    %v949 = vld [vmem:[#allocation12] sm:$0xff]
    %v950 = vld [vmem:[#allocation12 + $0x8] sm:$0xf]
    %v951 = vld [vmem:[#allocation12 + $0xc] sm:$0xff]
    %v952 = vld [vmem:[#allocation12 + $0x14] sm:$0xf]
    %v953 = vld [vmem:[#allocation12 + $0x18] sm:$0xff]
    %v954 = vld [vmem:[#allocation12 + $0x20] sm:$0xf]
    %v955 = vld [vmem:[#allocation12 + $0x24] sm:$0xff]
    %v956 = vld [vmem:[#allocation12 + $0x2c] sm:$0xf]
    %v957 = vld [vmem:[#allocation12 + $0x30] sm:$0xff]
    %v958 = vld [vmem:[#allocation12 + $0x38] sm:$0xf]
    %v959 = vld [vmem:[#allocation12 + $0x3c] sm:$0xff]
    %v960 = vld [vmem:[#allocation12 + $0x44] sm:$0xf]
    %v961 = vld [vmem:[#allocation12 + $0x48] sm:$0xff]
    %v962 = vld [vmem:[#allocation12 + $0x50] sm:$0xf]
    %v963 = vld [vmem:[#allocation12 + $0x54] sm:$0xff]
    %v964 = vld [vmem:[#allocation12 + $0x5c] sm:$0xf]
    %v965 = vld [vmem:[#allocation12 + $0x60] sm:$0xff]
    %v966 = vld [vmem:[#allocation12 + $0x68] sm:$0xf]
    %v967 = vld [vmem:[#allocation12 + $0x6c] sm:$0xff]
    %v968 = vld [vmem:[#allocation12 + $0x74] sm:$0xf]
    %v969 = vld [vmem:[#allocation12 + $0x78] sm:$0xff]
    %v970 = vld [vmem:[#allocation12 + $0x80] sm:$0xf]
    %v971 = vld [vmem:[#allocation12 + $0x84] sm:$0xff]
    %v972 = vld [vmem:[#allocation12 + $0x8c] sm:$0xf]
    %v973 = vld [vmem:[#allocation12 + $0x90] sm:$0xff]
    %v974 = vld [vmem:[#allocation12 + $0x98] sm:$0xf]
    %v975 = vld [vmem:[#allocation12 + $0x9c] sm:$0xff]
    %v976 = vld [vmem:[#allocation12 + $0xa4] sm:$0xf]
    %v977 = vld [vmem:[#allocation12 + $0xa8] sm:$0xff]
    %v978 = vld [vmem:[#allocation12 + $0xb0] sm:$0xf]
    %v979 = vld [vmem:[#allocation12 + $0xb4] sm:$0xff]
    %v980 = vld [vmem:[#allocation12 + $0xbc] sm:$0xf]
    %v1013 = vunpack.c.l.b16 %v949
    %v1014 = vunpack.c.h.b16 %v949
    %v1015 = vunpack.c.l.b16 %v950
    %v1016 = vunpack.c.l.b16 %v951
    %v1017 = vunpack.c.h.b16 %v951
    %v1018 = vunpack.c.l.b16 %v952
    %v1019 = vunpack.c.l.b16 %v953
    %v1020 = vunpack.c.h.b16 %v953
    %v1021 = vunpack.c.l.b16 %v954
    %v1022 = vunpack.c.l.b16 %v955
    %v1023 = vunpack.c.h.b16 %v955
    %v1024 = vunpack.c.l.b16 %v956
    %v1025 = vunpack.c.l.b16 %v957
    %v1026 = vunpack.c.h.b16 %v957
    %v1027 = vunpack.c.l.b16 %v958
    %v1028 = vunpack.c.l.b16 %v959
    %v1029 = vunpack.c.h.b16 %v959
    %v1030 = vunpack.c.l.b16 %v960
    %v1031 = vunpack.c.l.b16 %v961
    %v1032 = vunpack.c.h.b16 %v961
    %v1033 = vunpack.c.l.b16 %v962
    %v1034 = vunpack.c.l.b16 %v963
    %v1035 = vunpack.c.h.b16 %v963
    %v1036 = vunpack.c.l.b16 %v964
    %v1037 = vunpack.c.l.b16 %v965
    %v1038 = vunpack.c.h.b16 %v965
    %v1039 = vunpack.c.l.b16 %v966
    %v1040 = vunpack.c.l.b16 %v967
    %v1041 = vunpack.c.h.b16 %v967
    %v1042 = vunpack.c.l.b16 %v968
    %v1043 = vunpack.c.l.b16 %v969
    %v1044 = vunpack.c.h.b16 %v969
    %v1045 = vunpack.c.l.b16 %v970
    %v1046 = vunpack.c.l.b16 %v971
    %v1047 = vunpack.c.h.b16 %v971
    %v1048 = vunpack.c.l.b16 %v972
    %v1049 = vunpack.c.l.b16 %v973
    %v1050 = vunpack.c.h.b16 %v973
    %v1051 = vunpack.c.l.b16 %v974
    %v1052 = vunpack.c.l.b16 %v975
    %v1053 = vunpack.c.h.b16 %v975
    %v1054 = vunpack.c.l.b16 %v976
    %v1055 = vunpack.c.l.b16 %v977
    %v1056 = vunpack.c.h.b16 %v977
    %v1057 = vunpack.c.l.b16 %v978
    %v1058 = vunpack.c.l.b16 %v979
    %v1059 = vunpack.c.h.b16 %v979
    %v1060 = vunpack.c.l.b16 %v980
    %v1061 = vpack.c.b16 %v1016, %v1013
    %v1062 = vpack.c.b16 %v1017, %v1014
    %v1063 = vpack.c.b16 %v1018, %v1015
    %v1064 = vpack.c.b16 %v1022, %v1019
    %v1065 = vpack.c.b16 %v1023, %v1020
    %v1066 = vpack.c.b16 %v1024, %v1021
    %v1067 = vpack.c.b16 %v1028, %v1025
    %v1068 = vpack.c.b16 %v1029, %v1026
    %v1069 = vpack.c.b16 %v1030, %v1027
    %v1070 = vpack.c.b16 %v1034, %v1031
    %v1071 = vpack.c.b16 %v1035, %v1032
    %v1072 = vpack.c.b16 %v1036, %v1033
    %v1073 = vpack.c.b16 %v1040, %v1037
    %v1074 = vpack.c.b16 %v1041, %v1038
    %v1075 = vpack.c.b16 %v1042, %v1039
    %v1076 = vpack.c.b16 %v1046, %v1043
    %v1077 = vpack.c.b16 %v1047, %v1044
    %v1078 = vpack.c.b16 %v1048, %v1045
    %v1079 = vpack.c.b16 %v1052, %v1049
    %v1080 = vpack.c.b16 %v1053, %v1050
    %v1081 = vpack.c.b16 %v1054, %v1051
    %v1082 = vpack.c.b16 %v1058, %v1055
    %v1083 = vpack.c.b16 %v1059, %v1056
    %v1084 = vpack.c.b16 %v1060, %v1057
    %1109 = vmatpush.bf16.msra.mxu0 %v1082
    %1110 = vmatpush.bf16.msra.mxu0 %v1079
    %1111 = vmatpush.bf16.msra.mxu0 %v1076
    %1112 = vmatpush.bf16.msra.mxu0 %v1073
    %1113 = vmatpush.bf16.msra.mxu0 %v1070
    %1114 = vmatpush.bf16.msra.mxu0 %v1067
    %1115 = vmatpush.bf16.msra.mxu0 %v1064
    %1116 = vmatpush.bf16.msra.mxu0 %v1061
    %1117 = vmatmul.bf16.gmra.mxu0 %v916
    %v1118 = vpop.f32.mrf.mxu0
    %v1119 = vadd.f32 0.0, %v1118
    %v1120 = vpop.f32.mrf.mxu0
    %1121 = vdwg.mxu0
    %1122 = vmatpush.bf16.msra.mxu0 %v1083
    %1123 = vmatpush.bf16.msra.mxu0 %v1080
    %1124 = vmatpush.bf16.msra.mxu0 %v1077
    %1125 = vmatpush.bf16.msra.mxu0 %v1074
    %1126 = vmatpush.bf16.msra.mxu0 %v1071
    %1127 = vmatpush.bf16.msra.mxu0 %v1068
    %1128 = vmatpush.bf16.msra.mxu0 %v1065
    %1129 = vmatpush.bf16.msra.mxu0 %v1062
    %1130 = vmatmul.bf16.gmra.mxu0 %v916
    %v1131 = vpop.f32.mrf.mxu0
    %v1132 = vadd.f32 0.0, %v1131
    %v1133 = vpop.f32.mrf.mxu0
    %1134 = vdwg.mxu0
    %1135 = vmatpush.bf16.msra.mxu0 %v1084
    %1136 = vmatpush.bf16.msra.mxu0 %v1081
    %1137 = vmatpush.bf16.msra.mxu0 %v1078
    %1138 = vmatpush.bf16.msra.mxu0 %v1075
    %1139 = vmatpush.bf16.msra.mxu0 %v1072
    %1140 = vmatpush.bf16.msra.mxu0 %v1069
    %1141 = vmatpush.bf16.msra.mxu0 %v1066
    %1142 = vmatpush.bf16.msra.mxu0 %v1063
    %1143 = vmatmul.bf16.gmra.mxu0 %v916
    %v1144 = vpop.f32.mrf.mxu0
    %v1145 = vadd.f32 0.0, %v1144
    %v1146 = vpop.f32.mrf.mxu0
    %1147 = vdwg.mxu0
    %v1180 = vunpack.c.l.b16 %v917
    %v1181 = vunpack.c.h.b16 %v917
    %v1182 = vunpack.c.l.b16 %v918
    %v1183 = vunpack.c.l.b16 %v919
    %v1184 = vunpack.c.h.b16 %v919
    %v1185 = vunpack.c.l.b16 %v920
    %v1186 = vunpack.c.l.b16 %v921
    %v1187 = vunpack.c.h.b16 %v921
    %v1188 = vunpack.c.l.b16 %v922
    %v1189 = vunpack.c.l.b16 %v923
    %v1190 = vunpack.c.h.b16 %v923
    %v1191 = vunpack.c.l.b16 %v924
    %v1192 = vunpack.c.l.b16 %v925
    %v1193 = vunpack.c.h.b16 %v925
    %v1194 = vunpack.c.l.b16 %v926
    %v1195 = vunpack.c.l.b16 %v927
    %v1196 = vunpack.c.h.b16 %v927
    %v1197 = vunpack.c.l.b16 %v928
    %v1198 = vunpack.c.l.b16 %v929
    %v1199 = vunpack.c.h.b16 %v929
    %v1200 = vunpack.c.l.b16 %v930
    %v1201 = vunpack.c.l.b16 %v931
    %v1202 = vunpack.c.h.b16 %v931
    %v1203 = vunpack.c.l.b16 %v932
    %v1204 = vunpack.c.l.b16 %v933
    %v1205 = vunpack.c.h.b16 %v933
    %v1206 = vunpack.c.l.b16 %v934
    %v1207 = vunpack.c.l.b16 %v935
    %v1208 = vunpack.c.h.b16 %v935
    %v1209 = vunpack.c.l.b16 %v936
    %v1210 = vunpack.c.l.b16 %v937
    %v1211 = vunpack.c.h.b16 %v937
    %v1212 = vunpack.c.l.b16 %v938
    %v1213 = vunpack.c.l.b16 %v939
    %v1214 = vunpack.c.h.b16 %v939
    %v1215 = vunpack.c.l.b16 %v940
    %v1216 = vunpack.c.l.b16 %v941
    %v1217 = vunpack.c.h.b16 %v941
    %v1218 = vunpack.c.l.b16 %v942
    %v1219 = vunpack.c.l.b16 %v943
    %v1220 = vunpack.c.h.b16 %v943
    %v1221 = vunpack.c.l.b16 %v944
    %v1222 = vunpack.c.l.b16 %v945
    %v1223 = vunpack.c.h.b16 %v945
    %v1224 = vunpack.c.l.b16 %v946
    %v1225 = vunpack.c.l.b16 %v947
    %v1226 = vunpack.c.h.b16 %v947
    %v1227 = vunpack.c.l.b16 %v948
    %v1228 = vpack.c.b16 %v1183, %v1180
    %v1229 = vpack.c.b16 %v1184, %v1181
    %v1230 = vpack.c.b16 %v1185, %v1182
    %v1231 = vpack.c.b16 %v1189, %v1186
    %v1232 = vpack.c.b16 %v1190, %v1187
    %v1233 = vpack.c.b16 %v1191, %v1188
    %v1234 = vpack.c.b16 %v1195, %v1192
    %v1235 = vpack.c.b16 %v1196, %v1193
    %v1236 = vpack.c.b16 %v1197, %v1194
    %v1237 = vpack.c.b16 %v1201, %v1198
    %v1238 = vpack.c.b16 %v1202, %v1199
    %v1239 = vpack.c.b16 %v1203, %v1200
    %v1240 = vpack.c.b16 %v1207, %v1204
    %v1241 = vpack.c.b16 %v1208, %v1205
    %v1242 = vpack.c.b16 %v1209, %v1206
    %v1243 = vpack.c.b16 %v1213, %v1210
    %v1244 = vpack.c.b16 %v1214, %v1211
    %v1245 = vpack.c.b16 %v1215, %v1212
    %v1246 = vpack.c.b16 %v1219, %v1216
    %v1247 = vpack.c.b16 %v1220, %v1217
    %v1248 = vpack.c.b16 %v1221, %v1218
    %v1249 = vpack.c.b16 %v1225, %v1222
    %v1250 = vpack.c.b16 %v1226, %v1223
    %v1251 = vpack.c.b16 %v1227, %v1224
    %1276 = vmatpush.bf16.msra.mxu0 %v1249
    %1277 = vmatpush.bf16.msra.mxu0 %v1246
    %1278 = vmatpush.bf16.msra.mxu0 %v1243
    %1279 = vmatpush.bf16.msra.mxu0 %v1240
    %1280 = vmatpush.bf16.msra.mxu0 %v1237
    %1281 = vmatpush.bf16.msra.mxu0 %v1234
    %1282 = vmatpush.bf16.msra.mxu0 %v1231
    %1283 = vmatpush.bf16.msra.mxu0 %v1228
    %1284 = vmatmul.bf16.gmra.mxu0 %v451
    %v1285 = vpop.f32.mrf.mxu0
    %v1286 = vadd.f32 %v1119, %v1285
    %v1287 = vpop.f32.mrf.mxu0
    %1288 = vdwg.mxu0
    %1289 = vmatpush.bf16.msra.mxu0 %v1250
    %1290 = vmatpush.bf16.msra.mxu0 %v1247
    %1291 = vmatpush.bf16.msra.mxu0 %v1244
    %1292 = vmatpush.bf16.msra.mxu0 %v1241
    %1293 = vmatpush.bf16.msra.mxu0 %v1238
    %1294 = vmatpush.bf16.msra.mxu0 %v1235
    %1295 = vmatpush.bf16.msra.mxu0 %v1232
    %1296 = vmatpush.bf16.msra.mxu0 %v1229
    %1297 = vmatmul.bf16.gmra.mxu0 %v451
    %v1298 = vpop.f32.mrf.mxu0
    %v1299 = vadd.f32 %v1132, %v1298
    %v1300 = vpop.f32.mrf.mxu0
    %1301 = vdwg.mxu0
    %1302 = vmatpush.bf16.msra.mxu0 %v1251
    %1303 = vmatpush.bf16.msra.mxu0 %v1248
    %1304 = vmatpush.bf16.msra.mxu0 %v1245
    %1305 = vmatpush.bf16.msra.mxu0 %v1242
    %1306 = vmatpush.bf16.msra.mxu0 %v1239
    %1307 = vmatpush.bf16.msra.mxu0 %v1236
    %1308 = vmatpush.bf16.msra.mxu0 %v1233
    %1309 = vmatpush.bf16.msra.mxu0 %v1230
    %1310 = vmatmul.bf16.gmra.mxu0 %v451
    %v1311 = vpop.f32.mrf.mxu0
    %v1312 = vadd.f32 %v1145, %v1311
    %v1313 = vpop.f32.mrf.mxu0
    %1314 = vdwg.mxu0
    %v1315 = vld [vmem:[#allocation15] sm:$0x7]
    %v1317 = vperm.slane %v1315, 0
    %v1318 = vperm.slane %v1315, 1
    %v1319 = vperm.slane %v1315, 2
    %v1323 = vadd.f32 %v1286, %v1317
    %v1324 = vadd.f32 %v1299, %v1318
    %v1325 = vadd.f32 %v1312, %v1319
    %v1326 = vld [vmem:[%s5] sm:$0xff]
    %v1327 = vld [vmem:[#allocation16] sm:$0x7]
    %v1328 = vpack.c.bf16 %v1326, %v1326
    %v1329 = vld [vmem:[#allocation13] sm:$0xff]
    %v1330 = vld [vmem:[#allocation13 + $0x8] sm:$0xf]
    %v1331 = vld [vmem:[#allocation13 + $0xc] sm:$0xff]
    %v1332 = vld [vmem:[#allocation13 + $0x14] sm:$0xf]
    %v1333 = vld [vmem:[#allocation13 + $0x18] sm:$0xff]
    %v1334 = vld [vmem:[#allocation13 + $0x20] sm:$0xf]
    %v1335 = vld [vmem:[#allocation13 + $0x24] sm:$0xff]
    %v1336 = vld [vmem:[#allocation13 + $0x2c] sm:$0xf]
    %v1337 = vld [vmem:[#allocation13 + $0x30] sm:$0xff]
    %v1338 = vld [vmem:[#allocation13 + $0x38] sm:$0xf]
    %v1339 = vld [vmem:[#allocation13 + $0x3c] sm:$0xff]
    %v1340 = vld [vmem:[#allocation13 + $0x44] sm:$0xf]
    %v1341 = vld [vmem:[#allocation13 + $0x48] sm:$0xff]
    %v1342 = vld [vmem:[#allocation13 + $0x50] sm:$0xf]
    %v1343 = vld [vmem:[#allocation13 + $0x54] sm:$0xff]
    %v1344 = vld [vmem:[#allocation13 + $0x5c] sm:$0xf]
    %v1345 = vld [vmem:[#allocation13 + $0x60] sm:$0xff]
    %v1346 = vld [vmem:[#allocation13 + $0x68] sm:$0xf]
    %v1347 = vld [vmem:[#allocation13 + $0x6c] sm:$0xff]
    %v1348 = vld [vmem:[#allocation13 + $0x74] sm:$0xf]
    %v1349 = vld [vmem:[#allocation13 + $0x78] sm:$0xff]
    %v1350 = vld [vmem:[#allocation13 + $0x80] sm:$0xf]
    %v1351 = vld [vmem:[#allocation13 + $0x84] sm:$0xff]
    %v1352 = vld [vmem:[#allocation13 + $0x8c] sm:$0xf]
    %v1353 = vld [vmem:[#allocation13 + $0x90] sm:$0xff]
    %v1354 = vld [vmem:[#allocation13 + $0x98] sm:$0xf]
    %v1355 = vld [vmem:[#allocation13 + $0x9c] sm:$0xff]
    %v1356 = vld [vmem:[#allocation13 + $0xa4] sm:$0xf]
    %v1357 = vld [vmem:[#allocation13 + $0xa8] sm:$0xff]
    %v1358 = vld [vmem:[#allocation13 + $0xb0] sm:$0xf]
    %v1359 = vld [vmem:[#allocation13 + $0xb4] sm:$0xff]
    %v1360 = vld [vmem:[#allocation13 + $0xbc] sm:$0xf]
    %v1362 = vperm.slane %v1327, 0
    %v1363 = vperm.slane %v1327, 1
    %v1364 = vperm.slane %v1327, 2
    %v1400 = vunpack.c.l.b16 %v1329
    %v1401 = vunpack.c.h.b16 %v1329
    %v1402 = vunpack.c.l.b16 %v1330
    %v1403 = vunpack.c.l.b16 %v1331
    %v1404 = vunpack.c.h.b16 %v1331
    %v1405 = vunpack.c.l.b16 %v1332
    %v1406 = vunpack.c.l.b16 %v1333
    %v1407 = vunpack.c.h.b16 %v1333
    %v1408 = vunpack.c.l.b16 %v1334
    %v1409 = vunpack.c.l.b16 %v1335
    %v1410 = vunpack.c.h.b16 %v1335
    %v1411 = vunpack.c.l.b16 %v1336
    %v1412 = vunpack.c.l.b16 %v1337
    %v1413 = vunpack.c.h.b16 %v1337
    %v1414 = vunpack.c.l.b16 %v1338
    %v1415 = vunpack.c.l.b16 %v1339
    %v1416 = vunpack.c.h.b16 %v1339
    %v1417 = vunpack.c.l.b16 %v1340
    %v1418 = vunpack.c.l.b16 %v1341
    %v1419 = vunpack.c.h.b16 %v1341
    %v1420 = vunpack.c.l.b16 %v1342
    %v1421 = vunpack.c.l.b16 %v1343
    %v1422 = vunpack.c.h.b16 %v1343
    %v1423 = vunpack.c.l.b16 %v1344
    %v1424 = vunpack.c.l.b16 %v1345
    %v1425 = vunpack.c.h.b16 %v1345
    %v1426 = vunpack.c.l.b16 %v1346
    %v1427 = vunpack.c.l.b16 %v1347
    %v1428 = vunpack.c.h.b16 %v1347
    %v1429 = vunpack.c.l.b16 %v1348
    %v1430 = vunpack.c.l.b16 %v1349
    %v1431 = vunpack.c.h.b16 %v1349
    %v1432 = vunpack.c.l.b16 %v1350
    %v1433 = vunpack.c.l.b16 %v1351
    %v1434 = vunpack.c.h.b16 %v1351
    %v1435 = vunpack.c.l.b16 %v1352
    %v1436 = vunpack.c.l.b16 %v1353
    %v1437 = vunpack.c.h.b16 %v1353
    %v1438 = vunpack.c.l.b16 %v1354
    %v1439 = vunpack.c.l.b16 %v1355
    %v1440 = vunpack.c.h.b16 %v1355
    %v1441 = vunpack.c.l.b16 %v1356
    %v1442 = vunpack.c.l.b16 %v1357
    %v1443 = vunpack.c.h.b16 %v1357
    %v1444 = vunpack.c.l.b16 %v1358
    %v1445 = vunpack.c.l.b16 %v1359
    %v1446 = vunpack.c.h.b16 %v1359
    %v1447 = vunpack.c.l.b16 %v1360
    %v1448 = vpack.c.b16 %v1403, %v1400
    %v1449 = vpack.c.b16 %v1404, %v1401
    %v1450 = vpack.c.b16 %v1405, %v1402
    %v1451 = vpack.c.b16 %v1409, %v1406
    %v1452 = vpack.c.b16 %v1410, %v1407
    %v1453 = vpack.c.b16 %v1411, %v1408
    %v1454 = vpack.c.b16 %v1415, %v1412
    %v1455 = vpack.c.b16 %v1416, %v1413
    %v1456 = vpack.c.b16 %v1417, %v1414
    %v1457 = vpack.c.b16 %v1421, %v1418
    %v1458 = vpack.c.b16 %v1422, %v1419
    %v1459 = vpack.c.b16 %v1423, %v1420
    %v1460 = vpack.c.b16 %v1427, %v1424
    %v1461 = vpack.c.b16 %v1428, %v1425
    %v1462 = vpack.c.b16 %v1429, %v1426
    %v1463 = vpack.c.b16 %v1433, %v1430
    %v1464 = vpack.c.b16 %v1434, %v1431
    %v1465 = vpack.c.b16 %v1435, %v1432
    %v1466 = vpack.c.b16 %v1439, %v1436
    %v1467 = vpack.c.b16 %v1440, %v1437
    %v1468 = vpack.c.b16 %v1441, %v1438
    %v1469 = vpack.c.b16 %v1445, %v1442
    %v1470 = vpack.c.b16 %v1446, %v1443
    %v1471 = vpack.c.b16 %v1447, %v1444
    %1496 = vmatpush.bf16.msra.mxu0 %v1469
    %1497 = vmatpush.bf16.msra.mxu0 %v1466
    %1498 = vmatpush.bf16.msra.mxu0 %v1463
    %1499 = vmatpush.bf16.msra.mxu0 %v1460
    %1500 = vmatpush.bf16.msra.mxu0 %v1457
    %1501 = vmatpush.bf16.msra.mxu0 %v1454
    %1502 = vmatpush.bf16.msra.mxu0 %v1451
    %1503 = vmatpush.bf16.msra.mxu0 %v1448
    %1504 = vmatmul.bf16.gmra.mxu0 %v1328
    %v1505 = vpop.f32.mrf.mxu0
    %v1506 = vadd.f32 %v1362, %v1505
    %v1507 = vpop.f32.mrf.mxu0
    %1508 = vdwg.mxu0
    %1509 = vmatpush.bf16.msra.mxu0 %v1470
    %1510 = vmatpush.bf16.msra.mxu0 %v1467
    %1511 = vmatpush.bf16.msra.mxu0 %v1464
    %1512 = vmatpush.bf16.msra.mxu0 %v1461
    %1513 = vmatpush.bf16.msra.mxu0 %v1458
    %1514 = vmatpush.bf16.msra.mxu0 %v1455
    %1515 = vmatpush.bf16.msra.mxu0 %v1452
    %1516 = vmatpush.bf16.msra.mxu0 %v1449
    %1517 = vmatmul.bf16.gmra.mxu0 %v1328
    %v1518 = vpop.f32.mrf.mxu0
    %v1519 = vadd.f32 %v1363, %v1518
    %v1520 = vpop.f32.mrf.mxu0
    %1521 = vdwg.mxu0
    %1522 = vmatpush.bf16.msra.mxu0 %v1471
    %1523 = vmatpush.bf16.msra.mxu0 %v1468
    %1524 = vmatpush.bf16.msra.mxu0 %v1465
    %1525 = vmatpush.bf16.msra.mxu0 %v1462
    %1526 = vmatpush.bf16.msra.mxu0 %v1459
    %1527 = vmatpush.bf16.msra.mxu0 %v1456
    %1528 = vmatpush.bf16.msra.mxu0 %v1453
    %1529 = vmatpush.bf16.msra.mxu0 %v1450
    %1530 = vmatmul.bf16.gmra.mxu0 %v1328
    %v1531 = vpop.f32.mrf.mxu0
    %v1532 = vadd.f32 %v1364, %v1531
    %v1533 = vpop.f32.mrf.mxu0
    %1534 = vdwg.mxu0
    %v1535 = vadd.f32 %v1323, %v1506
    %v1536 = vxor.u32 %v1535, 2147483648
    %v1537 = vmul.f32 %v1536, 1.442695
    %v1538 = vpow.pop %v1537
    %v1539 = vadd.f32 %v1538, 1.0
    %v1540 = vrcp.pop %v1539
    %v1541 = vmul.f32 %v1539, %v1540
    %v1542 = vsub.f32 1.0, %v1541
    %v1543 = vmul.f32 %v1540, %v1542
    %v1544 = vadd.f32 %v1540, %v1543
    %vm1545 = vweird.f32 %v1539
    %vm1546 = vweird.f32 %v1540
    %vm1547 = vmor %vm1545, %vm1546
    %v1548 = vsel %vm1547, %v1540, %v1544
    %v1549 = vand.u32 2147483647, %v1539
    %vm1550 = vcmp.eq.f32.partialorder %v1549, 8.507059e+37
    %v1551 = vand.u32 %v1539, 2147483648
    %v1552 = vor.u32 1.1754944e-38, %v1551
    %v1553 = vsel %vm1550, %v1552, %v1548
    %v1554 = vmul.f32 1.0, %v1553
    %v1555 = vadd.f32 %v1324, %v1519
    %v1556 = vxor.u32 %v1555, 2147483648
    %v1557 = vmul.f32 %v1556, 1.442695
    %v1558 = vpow.pop %v1557
    %v1559 = vadd.f32 %v1558, 1.0
    %v1560 = vrcp.pop %v1559
    %v1561 = vmul.f32 %v1559, %v1560
    %v1562 = vsub.f32 1.0, %v1561
    %v1563 = vmul.f32 %v1560, %v1562
    %v1564 = vadd.f32 %v1560, %v1563
    %vm1565 = vweird.f32 %v1559
    %vm1566 = vweird.f32 %v1560
    %vm1567 = vmor %vm1565, %vm1566
    %v1568 = vsel %vm1567, %v1560, %v1564
    %v1569 = vand.u32 2147483647, %v1559
    %vm1570 = vcmp.eq.f32.partialorder %v1569, 8.507059e+37
    %v1571 = vand.u32 %v1559, 2147483648
    %v1572 = vor.u32 1.1754944e-38, %v1571
    %v1573 = vsel %vm1570, %v1572, %v1568
    %v1574 = vmul.f32 1.0, %v1573
    %v1575 = vmul.f32 %v1554, %v1532
    %v1576 = vadd.f32 %v1325, %v1575
    %v1577 = vtanh.pop %v1576
    %v1578 = vsub.f32 1.0, %v1574
    %v1579 = vmul.f32 %v1578, %v1577
    %v1580 = vmul.f32 %v1574, %v1326
    %v1581 = vadd.f32 %v1579, %v1580
    %1582 = vst [vmem:[%s63] sm:$0xff] %v1581
    %v1583 = vpack.c.bf16 %v1581, %v1581
    %v1584 = vld [vmem:[#allocation18] sm:$0xff]
    %v1585 = vld [vmem:[#allocation18 + $0x8] sm:$0xff]
    %v1586 = vld [vmem:[#allocation18 + $0x10] sm:$0xff]
    %v1587 = vld [vmem:[#allocation18 + $0x18] sm:$0xff]
    %v1588 = vld [vmem:[#allocation18 + $0x20] sm:$0xff]
    %v1589 = vld [vmem:[#allocation18 + $0x28] sm:$0xff]
    %v1590 = vld [vmem:[#allocation18 + $0x30] sm:$0xff]
    %v1591 = vld [vmem:[#allocation18 + $0x38] sm:$0xff]
    %v1592 = vld [vmem:[#allocation18 + $0x40] sm:$0xff]
    %v1593 = vld [vmem:[#allocation18 + $0x48] sm:$0xff]
    %v1594 = vld [vmem:[#allocation18 + $0x50] sm:$0xff]
    %v1595 = vld [vmem:[#allocation18 + $0x58] sm:$0xff]
    %v1596 = vld [vmem:[#allocation18 + $0x60] sm:$0xff]
    %v1597 = vld [vmem:[#allocation18 + $0x68] sm:$0xff]
    %v1598 = vld [vmem:[#allocation18 + $0x70] sm:$0xff]
    %v1599 = vld [vmem:[#allocation18 + $0x78] sm:$0xff]
    %v1600 = vld [vmem:[#allocation18 + $0x80] sm:$0xff]
    %v1601 = vld [vmem:[#allocation18 + $0x88] sm:$0xff]
    %v1602 = vld [vmem:[#allocation18 + $0x90] sm:$0xff]
    %v1603 = vld [vmem:[#allocation18 + $0x98] sm:$0xff]
    %v1604 = vld [vmem:[#allocation18 + $0xa0] sm:$0xff]
    %v1605 = vld [vmem:[#allocation18 + $0xa8] sm:$0xff]
    %v1606 = vld [vmem:[#allocation18 + $0xb0] sm:$0xff]
    %v1607 = vld [vmem:[#allocation18 + $0xb8] sm:$0xff]
    %v1608 = vld [vmem:[#allocation18 + $0xc0] sm:$0xff]
    %v1609 = vld [vmem:[#allocation18 + $0xc8] sm:$0xff]
    %v1610 = vld [vmem:[#allocation18 + $0xd0] sm:$0xff]
    %v1611 = vld [vmem:[#allocation18 + $0xd8] sm:$0xff]
    %v1612 = vld [vmem:[#allocation18 + $0xe0] sm:$0xff]
    %v1613 = vld [vmem:[#allocation18 + $0xe8] sm:$0xff]
    %v1614 = vld [vmem:[#allocation18 + $0xf0] sm:$0xff]
    %v1615 = vld [vmem:[#allocation18 + $0xf8] sm:$0xff]
    %v1616 = vld [vmem:[#allocation18 + $0x100] sm:$0xff]
    %v1617 = vld [vmem:[#allocation18 + $0x108] sm:$0xff]
    %v1618 = vld [vmem:[#allocation18 + $0x110] sm:$0xff]
    %v1619 = vld [vmem:[#allocation18 + $0x118] sm:$0xff]
    %v1620 = vld [vmem:[#allocation18 + $0x120] sm:$0xff]
    %v1621 = vld [vmem:[#allocation18 + $0x128] sm:$0xff]
    %v1622 = vld [vmem:[#allocation18 + $0x130] sm:$0xff]
    %v1623 = vld [vmem:[#allocation18 + $0x138] sm:$0xff]
    %v1624 = vld [vmem:[#allocation18 + $0x140] sm:$0xff]
    %v1625 = vld [vmem:[#allocation18 + $0x148] sm:$0xff]
    %v1626 = vld [vmem:[#allocation18 + $0x150] sm:$0xff]
    %v1627 = vld [vmem:[#allocation18 + $0x158] sm:$0xff]
    %v1628 = vld [vmem:[#allocation18 + $0x160] sm:$0xff]
    %v1629 = vld [vmem:[#allocation18 + $0x168] sm:$0xff]
    %v1630 = vld [vmem:[#allocation18 + $0x170] sm:$0xff]
    %v1631 = vld [vmem:[#allocation18 + $0x178] sm:$0xff]
    %v1632 = vld [vmem:[#allocation18 + $0x180] sm:$0xff]
    %v1633 = vld [vmem:[#allocation18 + $0x188] sm:$0xff]
    %v1634 = vld [vmem:[#allocation18 + $0x190] sm:$0xff]
    %v1635 = vld [vmem:[#allocation18 + $0x198] sm:$0xff]
    %v1636 = vld [vmem:[#allocation18 + $0x1a0] sm:$0xff]
    %v1637 = vld [vmem:[#allocation18 + $0x1a8] sm:$0xff]
    %v1638 = vld [vmem:[#allocation18 + $0x1b0] sm:$0xff]
    %v1639 = vld [vmem:[#allocation18 + $0x1b8] sm:$0xff]
    %v1640 = vld [vmem:[#allocation18 + $0x1c0] sm:$0xff]
    %v1641 = vld [vmem:[#allocation18 + $0x1c8] sm:$0xff]
    %v1642 = vld [vmem:[#allocation18 + $0x1d0] sm:$0xff]
    %v1643 = vld [vmem:[#allocation18 + $0x1d8] sm:$0xff]
    %v1644 = vld [vmem:[#allocation18 + $0x1e0] sm:$0xff]
    %v1645 = vld [vmem:[#allocation18 + $0x1e8] sm:$0xff]
    %v1646 = vld [vmem:[#allocation18 + $0x1f0] sm:$0xff]
    %v1647 = vld [vmem:[#allocation18 + $0x1f8] sm:$0xff]
    %v1648 = vld [vmem:[#allocation18 + $0x200] sm:$0xff]
    %v1649 = vld [vmem:[#allocation18 + $0x208] sm:$0xff]
    %v1650 = vld [vmem:[#allocation18 + $0x210] sm:$0xff]
    %v1651 = vld [vmem:[#allocation18 + $0x218] sm:$0xff]
    %v1652 = vld [vmem:[#allocation18 + $0x220] sm:$0xff]
    %v1653 = vld [vmem:[#allocation18 + $0x228] sm:$0xff]
    %v1654 = vld [vmem:[#allocation18 + $0x230] sm:$0xff]
    %v1655 = vld [vmem:[#allocation18 + $0x238] sm:$0xff]
    %v1656 = vld [vmem:[#allocation18 + $0x240] sm:$0xff]
    %v1657 = vld [vmem:[#allocation18 + $0x248] sm:$0xff]
    %v1658 = vld [vmem:[#allocation18 + $0x250] sm:$0xff]
    %v1659 = vld [vmem:[#allocation18 + $0x258] sm:$0xff]
    %v1660 = vld [vmem:[#allocation18 + $0x260] sm:$0xff]
    %v1661 = vld [vmem:[#allocation18 + $0x268] sm:$0xff]
    %v1662 = vld [vmem:[#allocation18 + $0x270] sm:$0xff]
    %v1663 = vld [vmem:[#allocation18 + $0x278] sm:$0xff]
    %v1664 = vld [vmem:[#allocation18 + $0x280] sm:$0xff]
    %v1665 = vld [vmem:[#allocation18 + $0x288] sm:$0xff]
    %v1666 = vld [vmem:[#allocation18 + $0x290] sm:$0xff]
    %v1667 = vld [vmem:[#allocation18 + $0x298] sm:$0xff]
    %v1668 = vld [vmem:[#allocation18 + $0x2a0] sm:$0xff]
    %v1669 = vld [vmem:[#allocation18 + $0x2a8] sm:$0xff]
    %v1670 = vld [vmem:[#allocation18 + $0x2b0] sm:$0xff]
    %v1671 = vld [vmem:[#allocation18 + $0x2b8] sm:$0xff]
    %v1672 = vld [vmem:[#allocation18 + $0x2c0] sm:$0xff]
    %v1673 = vld [vmem:[#allocation18 + $0x2c8] sm:$0xff]
    %v1674 = vld [vmem:[#allocation18 + $0x2d0] sm:$0xff]
    %v1675 = vld [vmem:[#allocation18 + $0x2d8] sm:$0xff]
    %v1676 = vld [vmem:[#allocation18 + $0x2e0] sm:$0xff]
    %v1677 = vld [vmem:[#allocation18 + $0x2e8] sm:$0xff]
    %v1678 = vld [vmem:[#allocation18 + $0x2f0] sm:$0xff]
    %v1679 = vld [vmem:[#allocation18 + $0x2f8] sm:$0xff]
    %v1680 = vld [vmem:[#allocation19] sm:$0xff]
    %v1681 = vld [vmem:[#allocation19 + $0x8] sm:$0xff]
    %v1682 = vld [vmem:[#allocation19 + $0x10] sm:$0xff]
    %v1683 = vld [vmem:[#allocation19 + $0x18] sm:$0xff]
    %v1684 = vld [vmem:[#allocation19 + $0x20] sm:$0xff]
    %v1685 = vld [vmem:[#allocation19 + $0x28] sm:$0xff]
    %v1686 = vld [vmem:[#allocation19 + $0x30] sm:$0xff]
    %v1687 = vld [vmem:[#allocation19 + $0x38] sm:$0xff]
    %v1688 = vld [vmem:[#allocation19 + $0x40] sm:$0xff]
    %v1689 = vld [vmem:[#allocation19 + $0x48] sm:$0xff]
    %v1690 = vld [vmem:[#allocation19 + $0x50] sm:$0xff]
    %v1691 = vld [vmem:[#allocation19 + $0x58] sm:$0xff]
    %v1692 = vld [vmem:[#allocation19 + $0x60] sm:$0xff]
    %v1693 = vld [vmem:[#allocation19 + $0x68] sm:$0xff]
    %v1694 = vld [vmem:[#allocation19 + $0x70] sm:$0xff]
    %v1695 = vld [vmem:[#allocation19 + $0x78] sm:$0xff]
    %v1696 = vld [vmem:[#allocation19 + $0x80] sm:$0xff]
    %v1697 = vld [vmem:[#allocation19 + $0x88] sm:$0xff]
    %v1698 = vld [vmem:[#allocation19 + $0x90] sm:$0xff]
    %v1699 = vld [vmem:[#allocation19 + $0x98] sm:$0xff]
    %v1700 = vld [vmem:[#allocation19 + $0xa0] sm:$0xff]
    %v1701 = vld [vmem:[#allocation19 + $0xa8] sm:$0xff]
    %v1702 = vld [vmem:[#allocation19 + $0xb0] sm:$0xff]
    %v1703 = vld [vmem:[#allocation19 + $0xb8] sm:$0xff]
    %v1704 = vld [vmem:[#allocation19 + $0xc0] sm:$0xff]
    %v1705 = vld [vmem:[#allocation19 + $0xc8] sm:$0xff]
    %v1706 = vld [vmem:[#allocation19 + $0xd0] sm:$0xff]
    %v1707 = vld [vmem:[#allocation19 + $0xd8] sm:$0xff]
    %v1708 = vld [vmem:[#allocation19 + $0xe0] sm:$0xff]
    %v1709 = vld [vmem:[#allocation19 + $0xe8] sm:$0xff]
    %v1710 = vld [vmem:[#allocation19 + $0xf0] sm:$0xff]
    %v1711 = vld [vmem:[#allocation19 + $0xf8] sm:$0xff]
    %v1712 = vld [vmem:[#allocation19 + $0x100] sm:$0xff]
    %v1713 = vld [vmem:[#allocation19 + $0x108] sm:$0xff]
    %v1714 = vld [vmem:[#allocation19 + $0x110] sm:$0xff]
    %v1715 = vld [vmem:[#allocation19 + $0x118] sm:$0xff]
    %v1716 = vld [vmem:[#allocation19 + $0x120] sm:$0xff]
    %v1717 = vld [vmem:[#allocation19 + $0x128] sm:$0xff]
    %v1718 = vld [vmem:[#allocation19 + $0x130] sm:$0xff]
    %v1719 = vld [vmem:[#allocation19 + $0x138] sm:$0xff]
    %v1720 = vld [vmem:[#allocation19 + $0x140] sm:$0xff]
    %v1721 = vld [vmem:[#allocation19 + $0x148] sm:$0xff]
    %v1722 = vld [vmem:[#allocation19 + $0x150] sm:$0xff]
    %v1723 = vld [vmem:[#allocation19 + $0x158] sm:$0xff]
    %v1724 = vld [vmem:[#allocation19 + $0x160] sm:$0xff]
    %v1725 = vld [vmem:[#allocation19 + $0x168] sm:$0xff]
    %v1726 = vld [vmem:[#allocation19 + $0x170] sm:$0xff]
    %v1727 = vld [vmem:[#allocation19 + $0x178] sm:$0xff]
    %v1728 = vld [vmem:[#allocation19 + $0x180] sm:$0xff]
    %v1729 = vld [vmem:[#allocation19 + $0x188] sm:$0xff]
    %v1730 = vld [vmem:[#allocation19 + $0x190] sm:$0xff]
    %v1731 = vld [vmem:[#allocation19 + $0x198] sm:$0xff]
    %v1732 = vld [vmem:[#allocation19 + $0x1a0] sm:$0xff]
    %v1733 = vld [vmem:[#allocation19 + $0x1a8] sm:$0xff]
    %v1734 = vld [vmem:[#allocation19 + $0x1b0] sm:$0xff]
    %v1735 = vld [vmem:[#allocation19 + $0x1b8] sm:$0xff]
    %v1736 = vld [vmem:[#allocation19 + $0x1c0] sm:$0xff]
    %v1737 = vld [vmem:[#allocation19 + $0x1c8] sm:$0xff]
    %v1738 = vld [vmem:[#allocation19 + $0x1d0] sm:$0xff]
    %v1739 = vld [vmem:[#allocation19 + $0x1d8] sm:$0xff]
    %v1740 = vld [vmem:[#allocation19 + $0x1e0] sm:$0xff]
    %v1741 = vld [vmem:[#allocation19 + $0x1e8] sm:$0xff]
    %v1742 = vld [vmem:[#allocation19 + $0x1f0] sm:$0xff]
    %v1743 = vld [vmem:[#allocation19 + $0x1f8] sm:$0xff]
    %v1744 = vld [vmem:[#allocation19 + $0x200] sm:$0xff]
    %v1745 = vld [vmem:[#allocation19 + $0x208] sm:$0xff]
    %v1746 = vld [vmem:[#allocation19 + $0x210] sm:$0xff]
    %v1747 = vld [vmem:[#allocation19 + $0x218] sm:$0xff]
    %v1748 = vld [vmem:[#allocation19 + $0x220] sm:$0xff]
    %v1749 = vld [vmem:[#allocation19 + $0x228] sm:$0xff]
    %v1750 = vld [vmem:[#allocation19 + $0x230] sm:$0xff]
    %v1751 = vld [vmem:[#allocation19 + $0x238] sm:$0xff]
    %v1752 = vld [vmem:[#allocation19 + $0x240] sm:$0xff]
    %v1753 = vld [vmem:[#allocation19 + $0x248] sm:$0xff]
    %v1754 = vld [vmem:[#allocation19 + $0x250] sm:$0xff]
    %v1755 = vld [vmem:[#allocation19 + $0x258] sm:$0xff]
    %v1756 = vld [vmem:[#allocation19 + $0x260] sm:$0xff]
    %v1757 = vld [vmem:[#allocation19 + $0x268] sm:$0xff]
    %v1758 = vld [vmem:[#allocation19 + $0x270] sm:$0xff]
    %v1759 = vld [vmem:[#allocation19 + $0x278] sm:$0xff]
    %v1760 = vld [vmem:[#allocation19 + $0x280] sm:$0xff]
    %v1761 = vld [vmem:[#allocation19 + $0x288] sm:$0xff]
    %v1762 = vld [vmem:[#allocation19 + $0x290] sm:$0xff]
    %v1763 = vld [vmem:[#allocation19 + $0x298] sm:$0xff]
    %v1764 = vld [vmem:[#allocation19 + $0x2a0] sm:$0xff]
    %v1765 = vld [vmem:[#allocation19 + $0x2a8] sm:$0xff]
    %v1766 = vld [vmem:[#allocation19 + $0x2b0] sm:$0xff]
    %v1767 = vld [vmem:[#allocation19 + $0x2b8] sm:$0xff]
    %v1768 = vld [vmem:[#allocation19 + $0x2c0] sm:$0xff]
    %v1769 = vld [vmem:[#allocation19 + $0x2c8] sm:$0xff]
    %v1770 = vld [vmem:[#allocation19 + $0x2d0] sm:$0xff]
    %v1771 = vld [vmem:[#allocation19 + $0x2d8] sm:$0xff]
    %v1772 = vld [vmem:[#allocation19 + $0x2e0] sm:$0xff]
    %v1773 = vld [vmem:[#allocation19 + $0x2e8] sm:$0xff]
    %v1774 = vld [vmem:[#allocation19 + $0x2f0] sm:$0xff]
    %v1775 = vld [vmem:[#allocation19 + $0x2f8] sm:$0xff]
    %v1872 = vunpack.c.l.b16 %v1680
    %v1873 = vunpack.c.h.b16 %v1680
    %v1874 = vunpack.c.l.b16 %v1681
    %v1875 = vunpack.c.h.b16 %v1681
    %v1876 = vunpack.c.l.b16 %v1682
    %v1877 = vunpack.c.h.b16 %v1682
    %v1878 = vunpack.c.l.b16 %v1683
    %v1879 = vunpack.c.h.b16 %v1683
    %v1880 = vunpack.c.l.b16 %v1684
    %v1881 = vunpack.c.h.b16 %v1684
    %v1882 = vunpack.c.l.b16 %v1685
    %v1883 = vunpack.c.h.b16 %v1685
    %v1884 = vunpack.c.l.b16 %v1686
    %v1885 = vunpack.c.h.b16 %v1686
    %v1886 = vunpack.c.l.b16 %v1687
    %v1887 = vunpack.c.h.b16 %v1687
    %v1888 = vunpack.c.l.b16 %v1688
    %v1889 = vunpack.c.h.b16 %v1688
    %v1890 = vunpack.c.l.b16 %v1689
    %v1891 = vunpack.c.h.b16 %v1689
    %v1892 = vunpack.c.l.b16 %v1690
    %v1893 = vunpack.c.h.b16 %v1690
    %v1894 = vunpack.c.l.b16 %v1691
    %v1895 = vunpack.c.h.b16 %v1691
    %v1896 = vunpack.c.l.b16 %v1692
    %v1897 = vunpack.c.h.b16 %v1692
    %v1898 = vunpack.c.l.b16 %v1693
    %v1899 = vunpack.c.h.b16 %v1693
    %v1900 = vunpack.c.l.b16 %v1694
    %v1901 = vunpack.c.h.b16 %v1694
    %v1902 = vunpack.c.l.b16 %v1695
    %v1903 = vunpack.c.h.b16 %v1695
    %v1904 = vunpack.c.l.b16 %v1696
    %v1905 = vunpack.c.h.b16 %v1696
    %v1906 = vunpack.c.l.b16 %v1697
    %v1907 = vunpack.c.h.b16 %v1697
    %v1908 = vunpack.c.l.b16 %v1698
    %v1909 = vunpack.c.h.b16 %v1698
    %v1910 = vunpack.c.l.b16 %v1699
    %v1911 = vunpack.c.h.b16 %v1699
    %v1912 = vunpack.c.l.b16 %v1700
    %v1913 = vunpack.c.h.b16 %v1700
    %v1914 = vunpack.c.l.b16 %v1701
    %v1915 = vunpack.c.h.b16 %v1701
    %v1916 = vunpack.c.l.b16 %v1702
    %v1917 = vunpack.c.h.b16 %v1702
    %v1918 = vunpack.c.l.b16 %v1703
    %v1919 = vunpack.c.h.b16 %v1703
    %v1920 = vunpack.c.l.b16 %v1704
    %v1921 = vunpack.c.h.b16 %v1704
    %v1922 = vunpack.c.l.b16 %v1705
    %v1923 = vunpack.c.h.b16 %v1705
    %v1924 = vunpack.c.l.b16 %v1706
    %v1925 = vunpack.c.h.b16 %v1706
    %v1926 = vunpack.c.l.b16 %v1707
    %v1927 = vunpack.c.h.b16 %v1707
    %v1928 = vunpack.c.l.b16 %v1708
    %v1929 = vunpack.c.h.b16 %v1708
    %v1930 = vunpack.c.l.b16 %v1709
    %v1931 = vunpack.c.h.b16 %v1709
    %v1932 = vunpack.c.l.b16 %v1710
    %v1933 = vunpack.c.h.b16 %v1710
    %v1934 = vunpack.c.l.b16 %v1711
    %v1935 = vunpack.c.h.b16 %v1711
    %v1936 = vunpack.c.l.b16 %v1712
    %v1937 = vunpack.c.h.b16 %v1712
    %v1938 = vunpack.c.l.b16 %v1713
    %v1939 = vunpack.c.h.b16 %v1713
    %v1940 = vunpack.c.l.b16 %v1714
    %v1941 = vunpack.c.h.b16 %v1714
    %v1942 = vunpack.c.l.b16 %v1715
    %v1943 = vunpack.c.h.b16 %v1715
    %v1944 = vunpack.c.l.b16 %v1716
    %v1945 = vunpack.c.h.b16 %v1716
    %v1946 = vunpack.c.l.b16 %v1717
    %v1947 = vunpack.c.h.b16 %v1717
    %v1948 = vunpack.c.l.b16 %v1718
    %v1949 = vunpack.c.h.b16 %v1718
    %v1950 = vunpack.c.l.b16 %v1719
    %v1951 = vunpack.c.h.b16 %v1719
    %v1952 = vunpack.c.l.b16 %v1720
    %v1953 = vunpack.c.h.b16 %v1720
    %v1954 = vunpack.c.l.b16 %v1721
    %v1955 = vunpack.c.h.b16 %v1721
    %v1956 = vunpack.c.l.b16 %v1722
    %v1957 = vunpack.c.h.b16 %v1722
    %v1958 = vunpack.c.l.b16 %v1723
    %v1959 = vunpack.c.h.b16 %v1723
    %v1960 = vunpack.c.l.b16 %v1724
    %v1961 = vunpack.c.h.b16 %v1724
    %v1962 = vunpack.c.l.b16 %v1725
    %v1963 = vunpack.c.h.b16 %v1725
    %v1964 = vunpack.c.l.b16 %v1726
    %v1965 = vunpack.c.h.b16 %v1726
    %v1966 = vunpack.c.l.b16 %v1727
    %v1967 = vunpack.c.h.b16 %v1727
    %v1968 = vunpack.c.l.b16 %v1728
    %v1969 = vunpack.c.h.b16 %v1728
    %v1970 = vunpack.c.l.b16 %v1729
    %v1971 = vunpack.c.h.b16 %v1729
    %v1972 = vunpack.c.l.b16 %v1730
    %v1973 = vunpack.c.h.b16 %v1730
    %v1974 = vunpack.c.l.b16 %v1731
    %v1975 = vunpack.c.h.b16 %v1731
    %v1976 = vunpack.c.l.b16 %v1732
    %v1977 = vunpack.c.h.b16 %v1732
    %v1978 = vunpack.c.l.b16 %v1733
    %v1979 = vunpack.c.h.b16 %v1733
    %v1980 = vunpack.c.l.b16 %v1734
    %v1981 = vunpack.c.h.b16 %v1734
    %v1982 = vunpack.c.l.b16 %v1735
    %v1983 = vunpack.c.h.b16 %v1735
    %v1984 = vunpack.c.l.b16 %v1736
    %v1985 = vunpack.c.h.b16 %v1736
    %v1986 = vunpack.c.l.b16 %v1737
    %v1987 = vunpack.c.h.b16 %v1737
    %v1988 = vunpack.c.l.b16 %v1738
    %v1989 = vunpack.c.h.b16 %v1738
    %v1990 = vunpack.c.l.b16 %v1739
    %v1991 = vunpack.c.h.b16 %v1739
    %v1992 = vunpack.c.l.b16 %v1740
    %v1993 = vunpack.c.h.b16 %v1740
    %v1994 = vunpack.c.l.b16 %v1741
    %v1995 = vunpack.c.h.b16 %v1741
    %v1996 = vunpack.c.l.b16 %v1742
    %v1997 = vunpack.c.h.b16 %v1742
    %v1998 = vunpack.c.l.b16 %v1743
    %v1999 = vunpack.c.h.b16 %v1743
    %v2000 = vunpack.c.l.b16 %v1744
    %v2001 = vunpack.c.h.b16 %v1744
    %v2002 = vunpack.c.l.b16 %v1745
    %v2003 = vunpack.c.h.b16 %v1745
    %v2004 = vunpack.c.l.b16 %v1746
    %v2005 = vunpack.c.h.b16 %v1746
    %v2006 = vunpack.c.l.b16 %v1747
    %v2007 = vunpack.c.h.b16 %v1747
    %v2008 = vunpack.c.l.b16 %v1748
    %v2009 = vunpack.c.h.b16 %v1748
    %v2010 = vunpack.c.l.b16 %v1749
    %v2011 = vunpack.c.h.b16 %v1749
    %v2012 = vunpack.c.l.b16 %v1750
    %v2013 = vunpack.c.h.b16 %v1750
    %v2014 = vunpack.c.l.b16 %v1751
    %v2015 = vunpack.c.h.b16 %v1751
    %v2016 = vunpack.c.l.b16 %v1752
    %v2017 = vunpack.c.h.b16 %v1752
    %v2018 = vunpack.c.l.b16 %v1753
    %v2019 = vunpack.c.h.b16 %v1753
    %v2020 = vunpack.c.l.b16 %v1754
    %v2021 = vunpack.c.h.b16 %v1754
    %v2022 = vunpack.c.l.b16 %v1755
    %v2023 = vunpack.c.h.b16 %v1755
    %v2024 = vunpack.c.l.b16 %v1756
    %v2025 = vunpack.c.h.b16 %v1756
    %v2026 = vunpack.c.l.b16 %v1757
    %v2027 = vunpack.c.h.b16 %v1757
    %v2028 = vunpack.c.l.b16 %v1758
    %v2029 = vunpack.c.h.b16 %v1758
    %v2030 = vunpack.c.l.b16 %v1759
    %v2031 = vunpack.c.h.b16 %v1759
    %v2032 = vunpack.c.l.b16 %v1760
    %v2033 = vunpack.c.h.b16 %v1760
    %v2034 = vunpack.c.l.b16 %v1761
    %v2035 = vunpack.c.h.b16 %v1761
    %v2036 = vunpack.c.l.b16 %v1762
    %v2037 = vunpack.c.h.b16 %v1762
    %v2038 = vunpack.c.l.b16 %v1763
    %v2039 = vunpack.c.h.b16 %v1763
    %v2040 = vunpack.c.l.b16 %v1764
    %v2041 = vunpack.c.h.b16 %v1764
    %v2042 = vunpack.c.l.b16 %v1765
    %v2043 = vunpack.c.h.b16 %v1765
    %v2044 = vunpack.c.l.b16 %v1766
    %v2045 = vunpack.c.h.b16 %v1766
    %v2046 = vunpack.c.l.b16 %v1767
    %v2047 = vunpack.c.h.b16 %v1767
    %v2048 = vunpack.c.l.b16 %v1768
    %v2049 = vunpack.c.h.b16 %v1768
    %v2050 = vunpack.c.l.b16 %v1769
    %v2051 = vunpack.c.h.b16 %v1769
    %v2052 = vunpack.c.l.b16 %v1770
    %v2053 = vunpack.c.h.b16 %v1770
    %v2054 = vunpack.c.l.b16 %v1771
    %v2055 = vunpack.c.h.b16 %v1771
    %v2056 = vunpack.c.l.b16 %v1772
    %v2057 = vunpack.c.h.b16 %v1772
    %v2058 = vunpack.c.l.b16 %v1773
    %v2059 = vunpack.c.h.b16 %v1773
    %v2060 = vunpack.c.l.b16 %v1774
    %v2061 = vunpack.c.h.b16 %v1774
    %v2062 = vunpack.c.l.b16 %v1775
    %v2063 = vunpack.c.h.b16 %v1775
    %v2064 = vpack.c.b16 %v1884, %v1872
    %v2065 = vpack.c.b16 %v1885, %v1873
    %v2066 = vpack.c.b16 %v1886, %v1874
    %v2067 = vpack.c.b16 %v1887, %v1875
    %v2068 = vpack.c.b16 %v1888, %v1876
    %v2069 = vpack.c.b16 %v1889, %v1877
    %v2070 = vpack.c.b16 %v1890, %v1878
    %v2071 = vpack.c.b16 %v1891, %v1879
    %v2072 = vpack.c.b16 %v1892, %v1880
    %v2073 = vpack.c.b16 %v1893, %v1881
    %v2074 = vpack.c.b16 %v1894, %v1882
    %v2075 = vpack.c.b16 %v1895, %v1883
    %v2076 = vpack.c.b16 %v1908, %v1896
    %v2077 = vpack.c.b16 %v1909, %v1897
    %v2078 = vpack.c.b16 %v1910, %v1898
    %v2079 = vpack.c.b16 %v1911, %v1899
    %v2080 = vpack.c.b16 %v1912, %v1900
    %v2081 = vpack.c.b16 %v1913, %v1901
    %v2082 = vpack.c.b16 %v1914, %v1902
    %v2083 = vpack.c.b16 %v1915, %v1903
    %v2084 = vpack.c.b16 %v1916, %v1904
    %v2085 = vpack.c.b16 %v1917, %v1905
    %v2086 = vpack.c.b16 %v1918, %v1906
    %v2087 = vpack.c.b16 %v1919, %v1907
    %v2088 = vpack.c.b16 %v1932, %v1920
    %v2089 = vpack.c.b16 %v1933, %v1921
    %v2090 = vpack.c.b16 %v1934, %v1922
    %v2091 = vpack.c.b16 %v1935, %v1923
    %v2092 = vpack.c.b16 %v1936, %v1924
    %v2093 = vpack.c.b16 %v1937, %v1925
    %v2094 = vpack.c.b16 %v1938, %v1926
    %v2095 = vpack.c.b16 %v1939, %v1927
    %v2096 = vpack.c.b16 %v1940, %v1928
    %v2097 = vpack.c.b16 %v1941, %v1929
    %v2098 = vpack.c.b16 %v1942, %v1930
    %v2099 = vpack.c.b16 %v1943, %v1931
    %v2100 = vpack.c.b16 %v1956, %v1944
    %v2101 = vpack.c.b16 %v1957, %v1945
    %v2102 = vpack.c.b16 %v1958, %v1946
    %v2103 = vpack.c.b16 %v1959, %v1947
    %v2104 = vpack.c.b16 %v1960, %v1948
    %v2105 = vpack.c.b16 %v1961, %v1949
    %v2106 = vpack.c.b16 %v1962, %v1950
    %v2107 = vpack.c.b16 %v1963, %v1951
    %v2108 = vpack.c.b16 %v1964, %v1952
    %v2109 = vpack.c.b16 %v1965, %v1953
    %v2110 = vpack.c.b16 %v1966, %v1954
    %v2111 = vpack.c.b16 %v1967, %v1955
    %v2112 = vpack.c.b16 %v1980, %v1968
    %v2113 = vpack.c.b16 %v1981, %v1969
    %v2114 = vpack.c.b16 %v1982, %v1970
    %v2115 = vpack.c.b16 %v1983, %v1971
    %v2116 = vpack.c.b16 %v1984, %v1972
    %v2117 = vpack.c.b16 %v1985, %v1973
    %v2118 = vpack.c.b16 %v1986, %v1974
    %v2119 = vpack.c.b16 %v1987, %v1975
    %v2120 = vpack.c.b16 %v1988, %v1976
    %v2121 = vpack.c.b16 %v1989, %v1977
    %v2122 = vpack.c.b16 %v1990, %v1978
    %v2123 = vpack.c.b16 %v1991, %v1979
    %v2124 = vpack.c.b16 %v2004, %v1992
    %v2125 = vpack.c.b16 %v2005, %v1993
    %v2126 = vpack.c.b16 %v2006, %v1994
    %v2127 = vpack.c.b16 %v2007, %v1995
    %v2128 = vpack.c.b16 %v2008, %v1996
    %v2129 = vpack.c.b16 %v2009, %v1997
    %v2130 = vpack.c.b16 %v2010, %v1998
    %v2131 = vpack.c.b16 %v2011, %v1999
    %v2132 = vpack.c.b16 %v2012, %v2000
    %v2133 = vpack.c.b16 %v2013, %v2001
    %v2134 = vpack.c.b16 %v2014, %v2002
    %v2135 = vpack.c.b16 %v2015, %v2003
    %v2136 = vpack.c.b16 %v2028, %v2016
    %v2137 = vpack.c.b16 %v2029, %v2017
    %v2138 = vpack.c.b16 %v2030, %v2018
    %v2139 = vpack.c.b16 %v2031, %v2019
    %v2140 = vpack.c.b16 %v2032, %v2020
    %v2141 = vpack.c.b16 %v2033, %v2021
    %v2142 = vpack.c.b16 %v2034, %v2022
    %v2143 = vpack.c.b16 %v2035, %v2023
    %v2144 = vpack.c.b16 %v2036, %v2024
    %v2145 = vpack.c.b16 %v2037, %v2025
    %v2146 = vpack.c.b16 %v2038, %v2026
    %v2147 = vpack.c.b16 %v2039, %v2027
    %v2148 = vpack.c.b16 %v2052, %v2040
    %v2149 = vpack.c.b16 %v2053, %v2041
    %v2150 = vpack.c.b16 %v2054, %v2042
    %v2151 = vpack.c.b16 %v2055, %v2043
    %v2152 = vpack.c.b16 %v2056, %v2044
    %v2153 = vpack.c.b16 %v2057, %v2045
    %v2154 = vpack.c.b16 %v2058, %v2046
    %v2155 = vpack.c.b16 %v2059, %v2047
    %v2156 = vpack.c.b16 %v2060, %v2048
    %v2157 = vpack.c.b16 %v2061, %v2049
    %v2158 = vpack.c.b16 %v2062, %v2050
    %v2159 = vpack.c.b16 %v2063, %v2051
    %2256 = vmatpush.bf16.msra.mxu0 %v2148
    %2257 = vmatpush.bf16.msra.mxu0 %v2136
    %2258 = vmatpush.bf16.msra.mxu0 %v2124
    %2259 = vmatpush.bf16.msra.mxu0 %v2112
    %2260 = vmatpush.bf16.msra.mxu0 %v2100
    %2261 = vmatpush.bf16.msra.mxu0 %v2088
    %2262 = vmatpush.bf16.msra.mxu0 %v2076
    %2263 = vmatpush.bf16.msra.mxu0 %v2064
    %2264 = vmatmul.bf16.gmra.mxu0 %v916
    %v2265 = vpop.f32.mrf.mxu0
    %v2266 = vadd.f32 0.0, %v2265
    %v2267 = vpop.f32.mrf.mxu0
    %2268 = vdwg.mxu0
    %2269 = vmatpush.bf16.msra.mxu0 %v2149
    %2270 = vmatpush.bf16.msra.mxu0 %v2137
    %2271 = vmatpush.bf16.msra.mxu0 %v2125
    %2272 = vmatpush.bf16.msra.mxu0 %v2113
    %2273 = vmatpush.bf16.msra.mxu0 %v2101
    %2274 = vmatpush.bf16.msra.mxu0 %v2089
    %2275 = vmatpush.bf16.msra.mxu0 %v2077
    %2276 = vmatpush.bf16.msra.mxu0 %v2065
    %2277 = vmatmul.bf16.gmra.mxu0 %v916
    %v2278 = vpop.f32.mrf.mxu0
    %v2279 = vadd.f32 0.0, %v2278
    %v2280 = vpop.f32.mrf.mxu0
    %2281 = vdwg.mxu0
    %2282 = vmatpush.bf16.msra.mxu0 %v2150
    %2283 = vmatpush.bf16.msra.mxu0 %v2138
    %2284 = vmatpush.bf16.msra.mxu0 %v2126
    %2285 = vmatpush.bf16.msra.mxu0 %v2114
    %2286 = vmatpush.bf16.msra.mxu0 %v2102
    %2287 = vmatpush.bf16.msra.mxu0 %v2090
    %2288 = vmatpush.bf16.msra.mxu0 %v2078
    %2289 = vmatpush.bf16.msra.mxu0 %v2066
    %2290 = vmatmul.bf16.gmra.mxu0 %v916
    %v2291 = vpop.f32.mrf.mxu0
    %v2292 = vadd.f32 0.0, %v2291
    %v2293 = vpop.f32.mrf.mxu0
    %2294 = vdwg.mxu0
    %2295 = vmatpush.bf16.msra.mxu0 %v2151
    %2296 = vmatpush.bf16.msra.mxu0 %v2139
    %2297 = vmatpush.bf16.msra.mxu0 %v2127
    %2298 = vmatpush.bf16.msra.mxu0 %v2115
    %2299 = vmatpush.bf16.msra.mxu0 %v2103
    %2300 = vmatpush.bf16.msra.mxu0 %v2091
    %2301 = vmatpush.bf16.msra.mxu0 %v2079
    %2302 = vmatpush.bf16.msra.mxu0 %v2067
    %2303 = vmatmul.bf16.gmra.mxu0 %v916
    %v2304 = vpop.f32.mrf.mxu0
    %v2305 = vadd.f32 0.0, %v2304
    %v2306 = vpop.f32.mrf.mxu0
    %2307 = vdwg.mxu0
    %2308 = vmatpush.bf16.msra.mxu0 %v2152
    %2309 = vmatpush.bf16.msra.mxu0 %v2140
    %2310 = vmatpush.bf16.msra.mxu0 %v2128
    %2311 = vmatpush.bf16.msra.mxu0 %v2116
    %2312 = vmatpush.bf16.msra.mxu0 %v2104
    %2313 = vmatpush.bf16.msra.mxu0 %v2092
    %2314 = vmatpush.bf16.msra.mxu0 %v2080
    %2315 = vmatpush.bf16.msra.mxu0 %v2068
    %2316 = vmatmul.bf16.gmra.mxu0 %v916
    %v2317 = vpop.f32.mrf.mxu0
    %v2318 = vadd.f32 0.0, %v2317
    %v2319 = vpop.f32.mrf.mxu0
    %2320 = vdwg.mxu0
    %2321 = vmatpush.bf16.msra.mxu0 %v2153
    %2322 = vmatpush.bf16.msra.mxu0 %v2141
    %2323 = vmatpush.bf16.msra.mxu0 %v2129
    %2324 = vmatpush.bf16.msra.mxu0 %v2117
    %2325 = vmatpush.bf16.msra.mxu0 %v2105
    %2326 = vmatpush.bf16.msra.mxu0 %v2093
    %2327 = vmatpush.bf16.msra.mxu0 %v2081
    %2328 = vmatpush.bf16.msra.mxu0 %v2069
    %2329 = vmatmul.bf16.gmra.mxu0 %v916
    %v2330 = vpop.f32.mrf.mxu0
    %v2331 = vadd.f32 0.0, %v2330
    %v2332 = vpop.f32.mrf.mxu0
    %2333 = vdwg.mxu0
    %2334 = vmatpush.bf16.msra.mxu0 %v2154
    %2335 = vmatpush.bf16.msra.mxu0 %v2142
    %2336 = vmatpush.bf16.msra.mxu0 %v2130
    %2337 = vmatpush.bf16.msra.mxu0 %v2118
    %2338 = vmatpush.bf16.msra.mxu0 %v2106
    %2339 = vmatpush.bf16.msra.mxu0 %v2094
    %2340 = vmatpush.bf16.msra.mxu0 %v2082
    %2341 = vmatpush.bf16.msra.mxu0 %v2070
    %2342 = vmatmul.bf16.gmra.mxu0 %v916
    %v2343 = vpop.f32.mrf.mxu0
    %v2344 = vadd.f32 0.0, %v2343
    %v2345 = vpop.f32.mrf.mxu0
    %2346 = vdwg.mxu0
    %2347 = vmatpush.bf16.msra.mxu0 %v2155
    %2348 = vmatpush.bf16.msra.mxu0 %v2143
    %2349 = vmatpush.bf16.msra.mxu0 %v2131
    %2350 = vmatpush.bf16.msra.mxu0 %v2119
    %2351 = vmatpush.bf16.msra.mxu0 %v2107
    %2352 = vmatpush.bf16.msra.mxu0 %v2095
    %2353 = vmatpush.bf16.msra.mxu0 %v2083
    %2354 = vmatpush.bf16.msra.mxu0 %v2071
    %2355 = vmatmul.bf16.gmra.mxu0 %v916
    %v2356 = vpop.f32.mrf.mxu0
    %v2357 = vadd.f32 0.0, %v2356
    %v2358 = vpop.f32.mrf.mxu0
    %2359 = vdwg.mxu0
    %2360 = vmatpush.bf16.msra.mxu0 %v2156
    %2361 = vmatpush.bf16.msra.mxu0 %v2144
    %2362 = vmatpush.bf16.msra.mxu0 %v2132
    %2363 = vmatpush.bf16.msra.mxu0 %v2120
    %2364 = vmatpush.bf16.msra.mxu0 %v2108
    %2365 = vmatpush.bf16.msra.mxu0 %v2096
    %2366 = vmatpush.bf16.msra.mxu0 %v2084
    %2367 = vmatpush.bf16.msra.mxu0 %v2072
    %2368 = vmatmul.bf16.gmra.mxu0 %v916
    %v2369 = vpop.f32.mrf.mxu0
    %v2370 = vadd.f32 0.0, %v2369
    %v2371 = vpop.f32.mrf.mxu0
    %2372 = vdwg.mxu0
    %2373 = vmatpush.bf16.msra.mxu0 %v2157
    %2374 = vmatpush.bf16.msra.mxu0 %v2145
    %2375 = vmatpush.bf16.msra.mxu0 %v2133
    %2376 = vmatpush.bf16.msra.mxu0 %v2121
    %2377 = vmatpush.bf16.msra.mxu0 %v2109
    %2378 = vmatpush.bf16.msra.mxu0 %v2097
    %2379 = vmatpush.bf16.msra.mxu0 %v2085
    %2380 = vmatpush.bf16.msra.mxu0 %v2073
    %2381 = vmatmul.bf16.gmra.mxu0 %v916
    %v2382 = vpop.f32.mrf.mxu0
    %v2383 = vadd.f32 0.0, %v2382
    %v2384 = vpop.f32.mrf.mxu0
    %2385 = vdwg.mxu0
    %2386 = vmatpush.bf16.msra.mxu0 %v2158
    %2387 = vmatpush.bf16.msra.mxu0 %v2146
    %2388 = vmatpush.bf16.msra.mxu0 %v2134
    %2389 = vmatpush.bf16.msra.mxu0 %v2122
    %2390 = vmatpush.bf16.msra.mxu0 %v2110
    %2391 = vmatpush.bf16.msra.mxu0 %v2098
    %2392 = vmatpush.bf16.msra.mxu0 %v2086
    %2393 = vmatpush.bf16.msra.mxu0 %v2074
    %2394 = vmatmul.bf16.gmra.mxu0 %v916
    %v2395 = vpop.f32.mrf.mxu0
    %v2396 = vadd.f32 0.0, %v2395
    %v2397 = vpop.f32.mrf.mxu0
    %2398 = vdwg.mxu0
    %2399 = vmatpush.bf16.msra.mxu0 %v2159
    %2400 = vmatpush.bf16.msra.mxu0 %v2147
    %2401 = vmatpush.bf16.msra.mxu0 %v2135
    %2402 = vmatpush.bf16.msra.mxu0 %v2123
    %2403 = vmatpush.bf16.msra.mxu0 %v2111
    %2404 = vmatpush.bf16.msra.mxu0 %v2099
    %2405 = vmatpush.bf16.msra.mxu0 %v2087
    %2406 = vmatpush.bf16.msra.mxu0 %v2075
    %2407 = vmatmul.bf16.gmra.mxu0 %v916
    %v2408 = vpop.f32.mrf.mxu0
    %v2409 = vadd.f32 0.0, %v2408
    %v2410 = vpop.f32.mrf.mxu0
    %2411 = vdwg.mxu0
    %v2508 = vunpack.c.l.b16 %v1584
    %v2509 = vunpack.c.h.b16 %v1584
    %v2510 = vunpack.c.l.b16 %v1585
    %v2511 = vunpack.c.h.b16 %v1585
    %v2512 = vunpack.c.l.b16 %v1586
    %v2513 = vunpack.c.h.b16 %v1586
    %v2514 = vunpack.c.l.b16 %v1587
    %v2515 = vunpack.c.h.b16 %v1587
    %v2516 = vunpack.c.l.b16 %v1588
    %v2517 = vunpack.c.h.b16 %v1588
    %v2518 = vunpack.c.l.b16 %v1589
    %v2519 = vunpack.c.h.b16 %v1589
    %v2520 = vunpack.c.l.b16 %v1590
    %v2521 = vunpack.c.h.b16 %v1590
    %v2522 = vunpack.c.l.b16 %v1591
    %v2523 = vunpack.c.h.b16 %v1591
    %v2524 = vunpack.c.l.b16 %v1592
    %v2525 = vunpack.c.h.b16 %v1592
    %v2526 = vunpack.c.l.b16 %v1593
    %v2527 = vunpack.c.h.b16 %v1593
    %v2528 = vunpack.c.l.b16 %v1594
    %v2529 = vunpack.c.h.b16 %v1594
    %v2530 = vunpack.c.l.b16 %v1595
    %v2531 = vunpack.c.h.b16 %v1595
    %v2532 = vunpack.c.l.b16 %v1596
    %v2533 = vunpack.c.h.b16 %v1596
    %v2534 = vunpack.c.l.b16 %v1597
    %v2535 = vunpack.c.h.b16 %v1597
    %v2536 = vunpack.c.l.b16 %v1598
    %v2537 = vunpack.c.h.b16 %v1598
    %v2538 = vunpack.c.l.b16 %v1599
    %v2539 = vunpack.c.h.b16 %v1599
    %v2540 = vunpack.c.l.b16 %v1600
    %v2541 = vunpack.c.h.b16 %v1600
    %v2542 = vunpack.c.l.b16 %v1601
    %v2543 = vunpack.c.h.b16 %v1601
    %v2544 = vunpack.c.l.b16 %v1602
    %v2545 = vunpack.c.h.b16 %v1602
    %v2546 = vunpack.c.l.b16 %v1603
    %v2547 = vunpack.c.h.b16 %v1603
    %v2548 = vunpack.c.l.b16 %v1604
    %v2549 = vunpack.c.h.b16 %v1604
    %v2550 = vunpack.c.l.b16 %v1605
    %v2551 = vunpack.c.h.b16 %v1605
    %v2552 = vunpack.c.l.b16 %v1606
    %v2553 = vunpack.c.h.b16 %v1606
    %v2554 = vunpack.c.l.b16 %v1607
    %v2555 = vunpack.c.h.b16 %v1607
    %v2556 = vunpack.c.l.b16 %v1608
    %v2557 = vunpack.c.h.b16 %v1608
    %v2558 = vunpack.c.l.b16 %v1609
    %v2559 = vunpack.c.h.b16 %v1609
    %v2560 = vunpack.c.l.b16 %v1610
    %v2561 = vunpack.c.h.b16 %v1610
    %v2562 = vunpack.c.l.b16 %v1611
    %v2563 = vunpack.c.h.b16 %v1611
    %v2564 = vunpack.c.l.b16 %v1612
    %v2565 = vunpack.c.h.b16 %v1612
    %v2566 = vunpack.c.l.b16 %v1613
    %v2567 = vunpack.c.h.b16 %v1613
    %v2568 = vunpack.c.l.b16 %v1614
    %v2569 = vunpack.c.h.b16 %v1614
    %v2570 = vunpack.c.l.b16 %v1615
    %v2571 = vunpack.c.h.b16 %v1615
    %v2572 = vunpack.c.l.b16 %v1616
    %v2573 = vunpack.c.h.b16 %v1616
    %v2574 = vunpack.c.l.b16 %v1617
    %v2575 = vunpack.c.h.b16 %v1617
    %v2576 = vunpack.c.l.b16 %v1618
    %v2577 = vunpack.c.h.b16 %v1618
    %v2578 = vunpack.c.l.b16 %v1619
    %v2579 = vunpack.c.h.b16 %v1619
    %v2580 = vunpack.c.l.b16 %v1620
    %v2581 = vunpack.c.h.b16 %v1620
    %v2582 = vunpack.c.l.b16 %v1621
    %v2583 = vunpack.c.h.b16 %v1621
    %v2584 = vunpack.c.l.b16 %v1622
    %v2585 = vunpack.c.h.b16 %v1622
    %v2586 = vunpack.c.l.b16 %v1623
    %v2587 = vunpack.c.h.b16 %v1623
    %v2588 = vunpack.c.l.b16 %v1624
    %v2589 = vunpack.c.h.b16 %v1624
    %v2590 = vunpack.c.l.b16 %v1625
    %v2591 = vunpack.c.h.b16 %v1625
    %v2592 = vunpack.c.l.b16 %v1626
    %v2593 = vunpack.c.h.b16 %v1626
    %v2594 = vunpack.c.l.b16 %v1627
    %v2595 = vunpack.c.h.b16 %v1627
    %v2596 = vunpack.c.l.b16 %v1628
    %v2597 = vunpack.c.h.b16 %v1628
    %v2598 = vunpack.c.l.b16 %v1629
    %v2599 = vunpack.c.h.b16 %v1629
    %v2600 = vunpack.c.l.b16 %v1630
    %v2601 = vunpack.c.h.b16 %v1630
    %v2602 = vunpack.c.l.b16 %v1631
    %v2603 = vunpack.c.h.b16 %v1631
    %v2604 = vunpack.c.l.b16 %v1632
    %v2605 = vunpack.c.h.b16 %v1632
    %v2606 = vunpack.c.l.b16 %v1633
    %v2607 = vunpack.c.h.b16 %v1633
    %v2608 = vunpack.c.l.b16 %v1634
    %v2609 = vunpack.c.h.b16 %v1634
    %v2610 = vunpack.c.l.b16 %v1635
    %v2611 = vunpack.c.h.b16 %v1635
    %v2612 = vunpack.c.l.b16 %v1636
    %v2613 = vunpack.c.h.b16 %v1636
    %v2614 = vunpack.c.l.b16 %v1637
    %v2615 = vunpack.c.h.b16 %v1637
    %v2616 = vunpack.c.l.b16 %v1638
    %v2617 = vunpack.c.h.b16 %v1638
    %v2618 = vunpack.c.l.b16 %v1639
    %v2619 = vunpack.c.h.b16 %v1639
    %v2620 = vunpack.c.l.b16 %v1640
    %v2621 = vunpack.c.h.b16 %v1640
    %v2622 = vunpack.c.l.b16 %v1641
    %v2623 = vunpack.c.h.b16 %v1641
    %v2624 = vunpack.c.l.b16 %v1642
    %v2625 = vunpack.c.h.b16 %v1642
    %v2626 = vunpack.c.l.b16 %v1643
    %v2627 = vunpack.c.h.b16 %v1643
    %v2628 = vunpack.c.l.b16 %v1644
    %v2629 = vunpack.c.h.b16 %v1644
    %v2630 = vunpack.c.l.b16 %v1645
    %v2631 = vunpack.c.h.b16 %v1645
    %v2632 = vunpack.c.l.b16 %v1646
    %v2633 = vunpack.c.h.b16 %v1646
    %v2634 = vunpack.c.l.b16 %v1647
    %v2635 = vunpack.c.h.b16 %v1647
    %v2636 = vunpack.c.l.b16 %v1648
    %v2637 = vunpack.c.h.b16 %v1648
    %v2638 = vunpack.c.l.b16 %v1649
    %v2639 = vunpack.c.h.b16 %v1649
    %v2640 = vunpack.c.l.b16 %v1650
    %v2641 = vunpack.c.h.b16 %v1650
    %v2642 = vunpack.c.l.b16 %v1651
    %v2643 = vunpack.c.h.b16 %v1651
    %v2644 = vunpack.c.l.b16 %v1652
    %v2645 = vunpack.c.h.b16 %v1652
    %v2646 = vunpack.c.l.b16 %v1653
    %v2647 = vunpack.c.h.b16 %v1653
    %v2648 = vunpack.c.l.b16 %v1654
    %v2649 = vunpack.c.h.b16 %v1654
    %v2650 = vunpack.c.l.b16 %v1655
    %v2651 = vunpack.c.h.b16 %v1655
    %v2652 = vunpack.c.l.b16 %v1656
    %v2653 = vunpack.c.h.b16 %v1656
    %v2654 = vunpack.c.l.b16 %v1657
    %v2655 = vunpack.c.h.b16 %v1657
    %v2656 = vunpack.c.l.b16 %v1658
    %v2657 = vunpack.c.h.b16 %v1658
    %v2658 = vunpack.c.l.b16 %v1659
    %v2659 = vunpack.c.h.b16 %v1659
    %v2660 = vunpack.c.l.b16 %v1660
    %v2661 = vunpack.c.h.b16 %v1660
    %v2662 = vunpack.c.l.b16 %v1661
    %v2663 = vunpack.c.h.b16 %v1661
    %v2664 = vunpack.c.l.b16 %v1662
    %v2665 = vunpack.c.h.b16 %v1662
    %v2666 = vunpack.c.l.b16 %v1663
    %v2667 = vunpack.c.h.b16 %v1663
    %v2668 = vunpack.c.l.b16 %v1664
    %v2669 = vunpack.c.h.b16 %v1664
    %v2670 = vunpack.c.l.b16 %v1665
    %v2671 = vunpack.c.h.b16 %v1665
    %v2672 = vunpack.c.l.b16 %v1666
    %v2673 = vunpack.c.h.b16 %v1666
    %v2674 = vunpack.c.l.b16 %v1667
    %v2675 = vunpack.c.h.b16 %v1667
    %v2676 = vunpack.c.l.b16 %v1668
    %v2677 = vunpack.c.h.b16 %v1668
    %v2678 = vunpack.c.l.b16 %v1669
    %v2679 = vunpack.c.h.b16 %v1669
    %v2680 = vunpack.c.l.b16 %v1670
    %v2681 = vunpack.c.h.b16 %v1670
    %v2682 = vunpack.c.l.b16 %v1671
    %v2683 = vunpack.c.h.b16 %v1671
    %v2684 = vunpack.c.l.b16 %v1672
    %v2685 = vunpack.c.h.b16 %v1672
    %v2686 = vunpack.c.l.b16 %v1673
    %v2687 = vunpack.c.h.b16 %v1673
    %v2688 = vunpack.c.l.b16 %v1674
    %v2689 = vunpack.c.h.b16 %v1674
    %v2690 = vunpack.c.l.b16 %v1675
    %v2691 = vunpack.c.h.b16 %v1675
    %v2692 = vunpack.c.l.b16 %v1676
    %v2693 = vunpack.c.h.b16 %v1676
    %v2694 = vunpack.c.l.b16 %v1677
    %v2695 = vunpack.c.h.b16 %v1677
    %v2696 = vunpack.c.l.b16 %v1678
    %v2697 = vunpack.c.h.b16 %v1678
    %v2698 = vunpack.c.l.b16 %v1679
    %v2699 = vunpack.c.h.b16 %v1679
    %v2700 = vpack.c.b16 %v2520, %v2508
    %v2701 = vpack.c.b16 %v2521, %v2509
    %v2702 = vpack.c.b16 %v2522, %v2510
    %v2703 = vpack.c.b16 %v2523, %v2511
    %v2704 = vpack.c.b16 %v2524, %v2512
    %v2705 = vpack.c.b16 %v2525, %v2513
    %v2706 = vpack.c.b16 %v2526, %v2514
    %v2707 = vpack.c.b16 %v2527, %v2515
    %v2708 = vpack.c.b16 %v2528, %v2516
    %v2709 = vpack.c.b16 %v2529, %v2517
    %v2710 = vpack.c.b16 %v2530, %v2518
    %v2711 = vpack.c.b16 %v2531, %v2519
    %v2712 = vpack.c.b16 %v2544, %v2532
    %v2713 = vpack.c.b16 %v2545, %v2533
    %v2714 = vpack.c.b16 %v2546, %v2534
    %v2715 = vpack.c.b16 %v2547, %v2535
    %v2716 = vpack.c.b16 %v2548, %v2536
    %v2717 = vpack.c.b16 %v2549, %v2537
    %v2718 = vpack.c.b16 %v2550, %v2538
    %v2719 = vpack.c.b16 %v2551, %v2539
    %v2720 = vpack.c.b16 %v2552, %v2540
    %v2721 = vpack.c.b16 %v2553, %v2541
    %v2722 = vpack.c.b16 %v2554, %v2542
    %v2723 = vpack.c.b16 %v2555, %v2543
    %v2724 = vpack.c.b16 %v2568, %v2556
    %v2725 = vpack.c.b16 %v2569, %v2557
    %v2726 = vpack.c.b16 %v2570, %v2558
    %v2727 = vpack.c.b16 %v2571, %v2559
    %v2728 = vpack.c.b16 %v2572, %v2560
    %v2729 = vpack.c.b16 %v2573, %v2561
    %v2730 = vpack.c.b16 %v2574, %v2562
    %v2731 = vpack.c.b16 %v2575, %v2563
    %v2732 = vpack.c.b16 %v2576, %v2564
    %v2733 = vpack.c.b16 %v2577, %v2565
    %v2734 = vpack.c.b16 %v2578, %v2566
    %v2735 = vpack.c.b16 %v2579, %v2567
    %v2736 = vpack.c.b16 %v2592, %v2580
    %v2737 = vpack.c.b16 %v2593, %v2581
    %v2738 = vpack.c.b16 %v2594, %v2582
    %v2739 = vpack.c.b16 %v2595, %v2583
    %v2740 = vpack.c.b16 %v2596, %v2584
    %v2741 = vpack.c.b16 %v2597, %v2585
    %v2742 = vpack.c.b16 %v2598, %v2586
    %v2743 = vpack.c.b16 %v2599, %v2587
    %v2744 = vpack.c.b16 %v2600, %v2588
    %v2745 = vpack.c.b16 %v2601, %v2589
    %v2746 = vpack.c.b16 %v2602, %v2590
    %v2747 = vpack.c.b16 %v2603, %v2591
    %v2748 = vpack.c.b16 %v2616, %v2604
    %v2749 = vpack.c.b16 %v2617, %v2605
    %v2750 = vpack.c.b16 %v2618, %v2606
    %v2751 = vpack.c.b16 %v2619, %v2607
    %v2752 = vpack.c.b16 %v2620, %v2608
    %v2753 = vpack.c.b16 %v2621, %v2609
    %v2754 = vpack.c.b16 %v2622, %v2610
    %v2755 = vpack.c.b16 %v2623, %v2611
    %v2756 = vpack.c.b16 %v2624, %v2612
    %v2757 = vpack.c.b16 %v2625, %v2613
    %v2758 = vpack.c.b16 %v2626, %v2614
    %v2759 = vpack.c.b16 %v2627, %v2615
    %v2760 = vpack.c.b16 %v2640, %v2628
    %v2761 = vpack.c.b16 %v2641, %v2629
    %v2762 = vpack.c.b16 %v2642, %v2630
    %v2763 = vpack.c.b16 %v2643, %v2631
    %v2764 = vpack.c.b16 %v2644, %v2632
    %v2765 = vpack.c.b16 %v2645, %v2633
    %v2766 = vpack.c.b16 %v2646, %v2634
    %v2767 = vpack.c.b16 %v2647, %v2635
    %v2768 = vpack.c.b16 %v2648, %v2636
    %v2769 = vpack.c.b16 %v2649, %v2637
    %v2770 = vpack.c.b16 %v2650, %v2638
    %v2771 = vpack.c.b16 %v2651, %v2639
    %v2772 = vpack.c.b16 %v2664, %v2652
    %v2773 = vpack.c.b16 %v2665, %v2653
    %v2774 = vpack.c.b16 %v2666, %v2654
    %v2775 = vpack.c.b16 %v2667, %v2655
    %v2776 = vpack.c.b16 %v2668, %v2656
    %v2777 = vpack.c.b16 %v2669, %v2657
    %v2778 = vpack.c.b16 %v2670, %v2658
    %v2779 = vpack.c.b16 %v2671, %v2659
    %v2780 = vpack.c.b16 %v2672, %v2660
    %v2781 = vpack.c.b16 %v2673, %v2661
    %v2782 = vpack.c.b16 %v2674, %v2662
    %v2783 = vpack.c.b16 %v2675, %v2663
    %v2784 = vpack.c.b16 %v2688, %v2676
    %v2785 = vpack.c.b16 %v2689, %v2677
    %v2786 = vpack.c.b16 %v2690, %v2678
    %v2787 = vpack.c.b16 %v2691, %v2679
    %v2788 = vpack.c.b16 %v2692, %v2680
    %v2789 = vpack.c.b16 %v2693, %v2681
    %v2790 = vpack.c.b16 %v2694, %v2682
    %v2791 = vpack.c.b16 %v2695, %v2683
    %v2792 = vpack.c.b16 %v2696, %v2684
    %v2793 = vpack.c.b16 %v2697, %v2685
    %v2794 = vpack.c.b16 %v2698, %v2686
    %v2795 = vpack.c.b16 %v2699, %v2687
    %2892 = vmatpush.bf16.msra.mxu0 %v2784
    %2893 = vmatpush.bf16.msra.mxu0 %v2772
    %2894 = vmatpush.bf16.msra.mxu0 %v2760
    %2895 = vmatpush.bf16.msra.mxu0 %v2748
    %2896 = vmatpush.bf16.msra.mxu0 %v2736
    %2897 = vmatpush.bf16.msra.mxu0 %v2724
    %2898 = vmatpush.bf16.msra.mxu0 %v2712
    %2899 = vmatpush.bf16.msra.mxu0 %v2700
    %2900 = vmatmul.bf16.gmra.mxu0 %v451
    %v2901 = vpop.f32.mrf.mxu0
    %v2902 = vadd.f32 %v2266, %v2901
    %v2903 = vpop.f32.mrf.mxu0
    %2904 = vdwg.mxu0
    %2905 = vmatpush.bf16.msra.mxu0 %v2785
    %2906 = vmatpush.bf16.msra.mxu0 %v2773
    %2907 = vmatpush.bf16.msra.mxu0 %v2761
    %2908 = vmatpush.bf16.msra.mxu0 %v2749
    %2909 = vmatpush.bf16.msra.mxu0 %v2737
    %2910 = vmatpush.bf16.msra.mxu0 %v2725
    %2911 = vmatpush.bf16.msra.mxu0 %v2713
    %2912 = vmatpush.bf16.msra.mxu0 %v2701
    %2913 = vmatmul.bf16.gmra.mxu0 %v451
    %v2914 = vpop.f32.mrf.mxu0
    %v2915 = vadd.f32 %v2279, %v2914
    %v2916 = vpop.f32.mrf.mxu0
    %2917 = vdwg.mxu0
    %2918 = vmatpush.bf16.msra.mxu0 %v2786
    %2919 = vmatpush.bf16.msra.mxu0 %v2774
    %2920 = vmatpush.bf16.msra.mxu0 %v2762
    %2921 = vmatpush.bf16.msra.mxu0 %v2750
    %2922 = vmatpush.bf16.msra.mxu0 %v2738
    %2923 = vmatpush.bf16.msra.mxu0 %v2726
    %2924 = vmatpush.bf16.msra.mxu0 %v2714
    %2925 = vmatpush.bf16.msra.mxu0 %v2702
    %2926 = vmatmul.bf16.gmra.mxu0 %v451
    %v2927 = vpop.f32.mrf.mxu0
    %v2928 = vadd.f32 %v2292, %v2927
    %v2929 = vpop.f32.mrf.mxu0
    %2930 = vdwg.mxu0
    %2931 = vmatpush.bf16.msra.mxu0 %v2787
    %2932 = vmatpush.bf16.msra.mxu0 %v2775
    %2933 = vmatpush.bf16.msra.mxu0 %v2763
    %2934 = vmatpush.bf16.msra.mxu0 %v2751
    %2935 = vmatpush.bf16.msra.mxu0 %v2739
    %2936 = vmatpush.bf16.msra.mxu0 %v2727
    %2937 = vmatpush.bf16.msra.mxu0 %v2715
    %2938 = vmatpush.bf16.msra.mxu0 %v2703
    %2939 = vmatmul.bf16.gmra.mxu0 %v451
    %v2940 = vpop.f32.mrf.mxu0
    %v2941 = vadd.f32 %v2305, %v2940
    %v2942 = vpop.f32.mrf.mxu0
    %2943 = vdwg.mxu0
    %2944 = vmatpush.bf16.msra.mxu0 %v2788
    %2945 = vmatpush.bf16.msra.mxu0 %v2776
    %2946 = vmatpush.bf16.msra.mxu0 %v2764
    %2947 = vmatpush.bf16.msra.mxu0 %v2752
    %2948 = vmatpush.bf16.msra.mxu0 %v2740
    %2949 = vmatpush.bf16.msra.mxu0 %v2728
    %2950 = vmatpush.bf16.msra.mxu0 %v2716
    %2951 = vmatpush.bf16.msra.mxu0 %v2704
    %2952 = vmatmul.bf16.gmra.mxu0 %v451
    %v2953 = vpop.f32.mrf.mxu0
    %v2954 = vadd.f32 %v2318, %v2953
    %v2955 = vpop.f32.mrf.mxu0
    %2956 = vdwg.mxu0
    %2957 = vmatpush.bf16.msra.mxu0 %v2789
    %2958 = vmatpush.bf16.msra.mxu0 %v2777
    %2959 = vmatpush.bf16.msra.mxu0 %v2765
    %2960 = vmatpush.bf16.msra.mxu0 %v2753
    %2961 = vmatpush.bf16.msra.mxu0 %v2741
    %2962 = vmatpush.bf16.msra.mxu0 %v2729
    %2963 = vmatpush.bf16.msra.mxu0 %v2717
    %2964 = vmatpush.bf16.msra.mxu0 %v2705
    %2965 = vmatmul.bf16.gmra.mxu0 %v451
    %v2966 = vpop.f32.mrf.mxu0
    %v2967 = vadd.f32 %v2331, %v2966
    %v2968 = vpop.f32.mrf.mxu0
    %2969 = vdwg.mxu0
    %2970 = vmatpush.bf16.msra.mxu0 %v2790
    %2971 = vmatpush.bf16.msra.mxu0 %v2778
    %2972 = vmatpush.bf16.msra.mxu0 %v2766
    %2973 = vmatpush.bf16.msra.mxu0 %v2754
    %2974 = vmatpush.bf16.msra.mxu0 %v2742
    %2975 = vmatpush.bf16.msra.mxu0 %v2730
    %2976 = vmatpush.bf16.msra.mxu0 %v2718
    %2977 = vmatpush.bf16.msra.mxu0 %v2706
    %2978 = vmatmul.bf16.gmra.mxu0 %v451
    %v2979 = vpop.f32.mrf.mxu0
    %v2980 = vadd.f32 %v2344, %v2979
    %v2981 = vpop.f32.mrf.mxu0
    %2982 = vdwg.mxu0
    %2983 = vmatpush.bf16.msra.mxu0 %v2791
    %2984 = vmatpush.bf16.msra.mxu0 %v2779
    %2985 = vmatpush.bf16.msra.mxu0 %v2767
    %2986 = vmatpush.bf16.msra.mxu0 %v2755
    %2987 = vmatpush.bf16.msra.mxu0 %v2743
    %2988 = vmatpush.bf16.msra.mxu0 %v2731
    %2989 = vmatpush.bf16.msra.mxu0 %v2719
    %2990 = vmatpush.bf16.msra.mxu0 %v2707
    %2991 = vmatmul.bf16.gmra.mxu0 %v451
    %v2992 = vpop.f32.mrf.mxu0
    %v2993 = vadd.f32 %v2357, %v2992
    %v2994 = vpop.f32.mrf.mxu0
    %2995 = vdwg.mxu0
    %2996 = vmatpush.bf16.msra.mxu0 %v2792
    %2997 = vmatpush.bf16.msra.mxu0 %v2780
    %2998 = vmatpush.bf16.msra.mxu0 %v2768
    %2999 = vmatpush.bf16.msra.mxu0 %v2756
    %3000 = vmatpush.bf16.msra.mxu0 %v2744
    %3001 = vmatpush.bf16.msra.mxu0 %v2732
    %3002 = vmatpush.bf16.msra.mxu0 %v2720
    %3003 = vmatpush.bf16.msra.mxu0 %v2708
    %3004 = vmatmul.bf16.gmra.mxu0 %v451
    %v3005 = vpop.f32.mrf.mxu0
    %v3006 = vadd.f32 %v2370, %v3005
    %v3007 = vpop.f32.mrf.mxu0
    %3008 = vdwg.mxu0
    %3009 = vmatpush.bf16.msra.mxu0 %v2793
    %3010 = vmatpush.bf16.msra.mxu0 %v2781
    %3011 = vmatpush.bf16.msra.mxu0 %v2769
    %3012 = vmatpush.bf16.msra.mxu0 %v2757
    %3013 = vmatpush.bf16.msra.mxu0 %v2745
    %3014 = vmatpush.bf16.msra.mxu0 %v2733
    %3015 = vmatpush.bf16.msra.mxu0 %v2721
    %3016 = vmatpush.bf16.msra.mxu0 %v2709
    %3017 = vmatmul.bf16.gmra.mxu0 %v451
    %v3018 = vpop.f32.mrf.mxu0
    %v3019 = vadd.f32 %v2383, %v3018
    %v3020 = vpop.f32.mrf.mxu0
    %3021 = vdwg.mxu0
    %3022 = vmatpush.bf16.msra.mxu0 %v2794
    %3023 = vmatpush.bf16.msra.mxu0 %v2782
    %3024 = vmatpush.bf16.msra.mxu0 %v2770
    %3025 = vmatpush.bf16.msra.mxu0 %v2758
    %3026 = vmatpush.bf16.msra.mxu0 %v2746
    %3027 = vmatpush.bf16.msra.mxu0 %v2734
    %3028 = vmatpush.bf16.msra.mxu0 %v2722
    %3029 = vmatpush.bf16.msra.mxu0 %v2710
    %3030 = vmatmul.bf16.gmra.mxu0 %v451
    %v3031 = vpop.f32.mrf.mxu0
    %v3032 = vadd.f32 %v2396, %v3031
    %v3033 = vpop.f32.mrf.mxu0
    %3034 = vdwg.mxu0
    %3035 = vmatpush.bf16.msra.mxu0 %v2795
    %3036 = vmatpush.bf16.msra.mxu0 %v2783
    %3037 = vmatpush.bf16.msra.mxu0 %v2771
    %3038 = vmatpush.bf16.msra.mxu0 %v2759
    %3039 = vmatpush.bf16.msra.mxu0 %v2747
    %3040 = vmatpush.bf16.msra.mxu0 %v2735
    %3041 = vmatpush.bf16.msra.mxu0 %v2723
    %3042 = vmatpush.bf16.msra.mxu0 %v2711
    %3043 = vmatmul.bf16.gmra.mxu0 %v451
    %v3044 = vpop.f32.mrf.mxu0
    %v3045 = vadd.f32 %v2409, %v3044
    %v3046 = vpop.f32.mrf.mxu0
    %3047 = vdwg.mxu0
    %v3048 = vld [vmem:[#allocation21] sm:$0xff]
    %v3049 = vld [vmem:[#allocation21 + $0x8] sm:$0xff]
    %v3050 = vld [vmem:[#allocation21 + $0x10] sm:$0xff]
    %v3051 = vld [vmem:[#allocation21 + $0x18] sm:$0xff]
    %v3052 = vld [vmem:[#allocation21 + $0x20] sm:$0xff]
    %v3053 = vld [vmem:[#allocation21 + $0x28] sm:$0xff]
    %v3054 = vld [vmem:[#allocation21 + $0x30] sm:$0xff]
    %v3055 = vld [vmem:[#allocation21 + $0x38] sm:$0xff]
    %v3056 = vld [vmem:[#allocation21 + $0x40] sm:$0xff]
    %v3057 = vld [vmem:[#allocation21 + $0x48] sm:$0xff]
    %v3058 = vld [vmem:[#allocation21 + $0x50] sm:$0xff]
    %v3059 = vld [vmem:[#allocation21 + $0x58] sm:$0xff]
    %v3060 = vld [vmem:[#allocation21 + $0x60] sm:$0xff]
    %v3061 = vld [vmem:[#allocation21 + $0x68] sm:$0xff]
    %v3062 = vld [vmem:[#allocation21 + $0x70] sm:$0xff]
    %v3063 = vld [vmem:[#allocation21 + $0x78] sm:$0xff]
    %v3064 = vld [vmem:[#allocation21 + $0x80] sm:$0xff]
    %v3065 = vld [vmem:[#allocation21 + $0x88] sm:$0xff]
    %v3066 = vld [vmem:[#allocation21 + $0x90] sm:$0xff]
    %v3067 = vld [vmem:[#allocation21 + $0x98] sm:$0xff]
    %v3068 = vld [vmem:[#allocation21 + $0xa0] sm:$0xff]
    %v3069 = vld [vmem:[#allocation21 + $0xa8] sm:$0xff]
    %v3070 = vld [vmem:[#allocation21 + $0xb0] sm:$0xff]
    %v3071 = vld [vmem:[#allocation21 + $0xb8] sm:$0xff]
    %v3072 = vld [vmem:[#allocation21 + $0xc0] sm:$0xff]
    %v3073 = vld [vmem:[#allocation21 + $0xc8] sm:$0xff]
    %v3074 = vld [vmem:[#allocation21 + $0xd0] sm:$0xff]
    %v3075 = vld [vmem:[#allocation21 + $0xd8] sm:$0xff]
    %v3076 = vld [vmem:[#allocation21 + $0xe0] sm:$0xff]
    %v3077 = vld [vmem:[#allocation21 + $0xe8] sm:$0xff]
    %v3078 = vld [vmem:[#allocation21 + $0xf0] sm:$0xff]
    %v3079 = vld [vmem:[#allocation21 + $0xf8] sm:$0xff]
    %v3080 = vld [vmem:[#allocation21 + $0x100] sm:$0xff]
    %v3081 = vld [vmem:[#allocation21 + $0x108] sm:$0xff]
    %v3082 = vld [vmem:[#allocation21 + $0x110] sm:$0xff]
    %v3083 = vld [vmem:[#allocation21 + $0x118] sm:$0xff]
    %v3084 = vld [vmem:[#allocation21 + $0x120] sm:$0xff]
    %v3085 = vld [vmem:[#allocation21 + $0x128] sm:$0xff]
    %v3086 = vld [vmem:[#allocation21 + $0x130] sm:$0xff]
    %v3087 = vld [vmem:[#allocation21 + $0x138] sm:$0xff]
    %v3088 = vld [vmem:[#allocation21 + $0x140] sm:$0xff]
    %v3089 = vld [vmem:[#allocation21 + $0x148] sm:$0xff]
    %v3090 = vld [vmem:[#allocation21 + $0x150] sm:$0xff]
    %v3091 = vld [vmem:[#allocation21 + $0x158] sm:$0xff]
    %v3092 = vld [vmem:[#allocation21 + $0x160] sm:$0xff]
    %v3093 = vld [vmem:[#allocation21 + $0x168] sm:$0xff]
    %v3094 = vld [vmem:[#allocation21 + $0x170] sm:$0xff]
    %v3095 = vld [vmem:[#allocation21 + $0x178] sm:$0xff]
    %v3096 = vld [vmem:[#allocation21 + $0x180] sm:$0xff]
    %v3097 = vld [vmem:[#allocation21 + $0x188] sm:$0xff]
    %v3098 = vld [vmem:[#allocation21 + $0x190] sm:$0xff]
    %v3099 = vld [vmem:[#allocation21 + $0x198] sm:$0xff]
    %v3100 = vld [vmem:[#allocation21 + $0x1a0] sm:$0xff]
    %v3101 = vld [vmem:[#allocation21 + $0x1a8] sm:$0xff]
    %v3102 = vld [vmem:[#allocation21 + $0x1b0] sm:$0xff]
    %v3103 = vld [vmem:[#allocation21 + $0x1b8] sm:$0xff]
    %v3104 = vld [vmem:[#allocation21 + $0x1c0] sm:$0xff]
    %v3105 = vld [vmem:[#allocation21 + $0x1c8] sm:$0xff]
    %v3106 = vld [vmem:[#allocation21 + $0x1d0] sm:$0xff]
    %v3107 = vld [vmem:[#allocation21 + $0x1d8] sm:$0xff]
    %v3108 = vld [vmem:[#allocation21 + $0x1e0] sm:$0xff]
    %v3109 = vld [vmem:[#allocation21 + $0x1e8] sm:$0xff]
    %v3110 = vld [vmem:[#allocation21 + $0x1f0] sm:$0xff]
    %v3111 = vld [vmem:[#allocation21 + $0x1f8] sm:$0xff]
    %v3112 = vld [vmem:[#allocation21 + $0x200] sm:$0xff]
    %v3113 = vld [vmem:[#allocation21 + $0x208] sm:$0xff]
    %v3114 = vld [vmem:[#allocation21 + $0x210] sm:$0xff]
    %v3115 = vld [vmem:[#allocation21 + $0x218] sm:$0xff]
    %v3116 = vld [vmem:[#allocation21 + $0x220] sm:$0xff]
    %v3117 = vld [vmem:[#allocation21 + $0x228] sm:$0xff]
    %v3118 = vld [vmem:[#allocation21 + $0x230] sm:$0xff]
    %v3119 = vld [vmem:[#allocation21 + $0x238] sm:$0xff]
    %v3120 = vld [vmem:[#allocation21 + $0x240] sm:$0xff]
    %v3121 = vld [vmem:[#allocation21 + $0x248] sm:$0xff]
    %v3122 = vld [vmem:[#allocation21 + $0x250] sm:$0xff]
    %v3123 = vld [vmem:[#allocation21 + $0x258] sm:$0xff]
    %v3124 = vld [vmem:[#allocation21 + $0x260] sm:$0xff]
    %v3125 = vld [vmem:[#allocation21 + $0x268] sm:$0xff]
    %v3126 = vld [vmem:[#allocation21 + $0x270] sm:$0xff]
    %v3127 = vld [vmem:[#allocation21 + $0x278] sm:$0xff]
    %v3128 = vld [vmem:[#allocation21 + $0x280] sm:$0xff]
    %v3129 = vld [vmem:[#allocation21 + $0x288] sm:$0xff]
    %v3130 = vld [vmem:[#allocation21 + $0x290] sm:$0xff]
    %v3131 = vld [vmem:[#allocation21 + $0x298] sm:$0xff]
    %v3132 = vld [vmem:[#allocation21 + $0x2a0] sm:$0xff]
    %v3133 = vld [vmem:[#allocation21 + $0x2a8] sm:$0xff]
    %v3134 = vld [vmem:[#allocation21 + $0x2b0] sm:$0xff]
    %v3135 = vld [vmem:[#allocation21 + $0x2b8] sm:$0xff]
    %v3136 = vld [vmem:[#allocation21 + $0x2c0] sm:$0xff]
    %v3137 = vld [vmem:[#allocation21 + $0x2c8] sm:$0xff]
    %v3138 = vld [vmem:[#allocation21 + $0x2d0] sm:$0xff]
    %v3139 = vld [vmem:[#allocation21 + $0x2d8] sm:$0xff]
    %v3140 = vld [vmem:[#allocation21 + $0x2e0] sm:$0xff]
    %v3141 = vld [vmem:[#allocation21 + $0x2e8] sm:$0xff]
    %v3142 = vld [vmem:[#allocation21 + $0x2f0] sm:$0xff]
    %v3143 = vld [vmem:[#allocation21 + $0x2f8] sm:$0xff]
    %v3240 = vunpack.c.l.b16 %v3048
    %v3241 = vunpack.c.h.b16 %v3048
    %v3242 = vunpack.c.l.b16 %v3049
    %v3243 = vunpack.c.h.b16 %v3049
    %v3244 = vunpack.c.l.b16 %v3050
    %v3245 = vunpack.c.h.b16 %v3050
    %v3246 = vunpack.c.l.b16 %v3051
    %v3247 = vunpack.c.h.b16 %v3051
    %v3248 = vunpack.c.l.b16 %v3052
    %v3249 = vunpack.c.h.b16 %v3052
    %v3250 = vunpack.c.l.b16 %v3053
    %v3251 = vunpack.c.h.b16 %v3053
    %v3252 = vunpack.c.l.b16 %v3054
    %v3253 = vunpack.c.h.b16 %v3054
    %v3254 = vunpack.c.l.b16 %v3055
    %v3255 = vunpack.c.h.b16 %v3055
    %v3256 = vunpack.c.l.b16 %v3056
    %v3257 = vunpack.c.h.b16 %v3056
    %v3258 = vunpack.c.l.b16 %v3057
    %v3259 = vunpack.c.h.b16 %v3057
    %v3260 = vunpack.c.l.b16 %v3058
    %v3261 = vunpack.c.h.b16 %v3058
    %v3262 = vunpack.c.l.b16 %v3059
    %v3263 = vunpack.c.h.b16 %v3059
    %v3264 = vunpack.c.l.b16 %v3060
    %v3265 = vunpack.c.h.b16 %v3060
    %v3266 = vunpack.c.l.b16 %v3061
    %v3267 = vunpack.c.h.b16 %v3061
    %v3268 = vunpack.c.l.b16 %v3062
    %v3269 = vunpack.c.h.b16 %v3062
    %v3270 = vunpack.c.l.b16 %v3063
    %v3271 = vunpack.c.h.b16 %v3063
    %v3272 = vunpack.c.l.b16 %v3064
    %v3273 = vunpack.c.h.b16 %v3064
    %v3274 = vunpack.c.l.b16 %v3065
    %v3275 = vunpack.c.h.b16 %v3065
    %v3276 = vunpack.c.l.b16 %v3066
    %v3277 = vunpack.c.h.b16 %v3066
    %v3278 = vunpack.c.l.b16 %v3067
    %v3279 = vunpack.c.h.b16 %v3067
    %v3280 = vunpack.c.l.b16 %v3068
    %v3281 = vunpack.c.h.b16 %v3068
    %v3282 = vunpack.c.l.b16 %v3069
    %v3283 = vunpack.c.h.b16 %v3069
    %v3284 = vunpack.c.l.b16 %v3070
    %v3285 = vunpack.c.h.b16 %v3070
    %v3286 = vunpack.c.l.b16 %v3071
    %v3287 = vunpack.c.h.b16 %v3071
    %v3288 = vunpack.c.l.b16 %v3072
    %v3289 = vunpack.c.h.b16 %v3072
    %v3290 = vunpack.c.l.b16 %v3073
    %v3291 = vunpack.c.h.b16 %v3073
    %v3292 = vunpack.c.l.b16 %v3074
    %v3293 = vunpack.c.h.b16 %v3074
    %v3294 = vunpack.c.l.b16 %v3075
    %v3295 = vunpack.c.h.b16 %v3075
    %v3296 = vunpack.c.l.b16 %v3076
    %v3297 = vunpack.c.h.b16 %v3076
    %v3298 = vunpack.c.l.b16 %v3077
    %v3299 = vunpack.c.h.b16 %v3077
    %v3300 = vunpack.c.l.b16 %v3078
    %v3301 = vunpack.c.h.b16 %v3078
    %v3302 = vunpack.c.l.b16 %v3079
    %v3303 = vunpack.c.h.b16 %v3079
    %v3304 = vunpack.c.l.b16 %v3080
    %v3305 = vunpack.c.h.b16 %v3080
    %v3306 = vunpack.c.l.b16 %v3081
    %v3307 = vunpack.c.h.b16 %v3081
    %v3308 = vunpack.c.l.b16 %v3082
    %v3309 = vunpack.c.h.b16 %v3082
    %v3310 = vunpack.c.l.b16 %v3083
    %v3311 = vunpack.c.h.b16 %v3083
    %v3312 = vunpack.c.l.b16 %v3084
    %v3313 = vunpack.c.h.b16 %v3084
    %v3314 = vunpack.c.l.b16 %v3085
    %v3315 = vunpack.c.h.b16 %v3085
    %v3316 = vunpack.c.l.b16 %v3086
    %v3317 = vunpack.c.h.b16 %v3086
    %v3318 = vunpack.c.l.b16 %v3087
    %v3319 = vunpack.c.h.b16 %v3087
    %v3320 = vunpack.c.l.b16 %v3088
    %v3321 = vunpack.c.h.b16 %v3088
    %v3322 = vunpack.c.l.b16 %v3089
    %v3323 = vunpack.c.h.b16 %v3089
    %v3324 = vunpack.c.l.b16 %v3090
    %v3325 = vunpack.c.h.b16 %v3090
    %v3326 = vunpack.c.l.b16 %v3091
    %v3327 = vunpack.c.h.b16 %v3091
    %v3328 = vunpack.c.l.b16 %v3092
    %v3329 = vunpack.c.h.b16 %v3092
    %v3330 = vunpack.c.l.b16 %v3093
    %v3331 = vunpack.c.h.b16 %v3093
    %v3332 = vunpack.c.l.b16 %v3094
    %v3333 = vunpack.c.h.b16 %v3094
    %v3334 = vunpack.c.l.b16 %v3095
    %v3335 = vunpack.c.h.b16 %v3095
    %v3336 = vunpack.c.l.b16 %v3096
    %v3337 = vunpack.c.h.b16 %v3096
    %v3338 = vunpack.c.l.b16 %v3097
    %v3339 = vunpack.c.h.b16 %v3097
    %v3340 = vunpack.c.l.b16 %v3098
    %v3341 = vunpack.c.h.b16 %v3098
    %v3342 = vunpack.c.l.b16 %v3099
    %v3343 = vunpack.c.h.b16 %v3099
    %v3344 = vunpack.c.l.b16 %v3100
    %v3345 = vunpack.c.h.b16 %v3100
    %v3346 = vunpack.c.l.b16 %v3101
    %v3347 = vunpack.c.h.b16 %v3101
    %v3348 = vunpack.c.l.b16 %v3102
    %v3349 = vunpack.c.h.b16 %v3102
    %v3350 = vunpack.c.l.b16 %v3103
    %v3351 = vunpack.c.h.b16 %v3103
    %v3352 = vunpack.c.l.b16 %v3104
    %v3353 = vunpack.c.h.b16 %v3104
    %v3354 = vunpack.c.l.b16 %v3105
    %v3355 = vunpack.c.h.b16 %v3105
    %v3356 = vunpack.c.l.b16 %v3106
    %v3357 = vunpack.c.h.b16 %v3106
    %v3358 = vunpack.c.l.b16 %v3107
    %v3359 = vunpack.c.h.b16 %v3107
    %v3360 = vunpack.c.l.b16 %v3108
    %v3361 = vunpack.c.h.b16 %v3108
    %v3362 = vunpack.c.l.b16 %v3109
    %v3363 = vunpack.c.h.b16 %v3109
    %v3364 = vunpack.c.l.b16 %v3110
    %v3365 = vunpack.c.h.b16 %v3110
    %v3366 = vunpack.c.l.b16 %v3111
    %v3367 = vunpack.c.h.b16 %v3111
    %v3368 = vunpack.c.l.b16 %v3112
    %v3369 = vunpack.c.h.b16 %v3112
    %v3370 = vunpack.c.l.b16 %v3113
    %v3371 = vunpack.c.h.b16 %v3113
    %v3372 = vunpack.c.l.b16 %v3114
    %v3373 = vunpack.c.h.b16 %v3114
    %v3374 = vunpack.c.l.b16 %v3115
    %v3375 = vunpack.c.h.b16 %v3115
    %v3376 = vunpack.c.l.b16 %v3116
    %v3377 = vunpack.c.h.b16 %v3116
    %v3378 = vunpack.c.l.b16 %v3117
    %v3379 = vunpack.c.h.b16 %v3117
    %v3380 = vunpack.c.l.b16 %v3118
    %v3381 = vunpack.c.h.b16 %v3118
    %v3382 = vunpack.c.l.b16 %v3119
    %v3383 = vunpack.c.h.b16 %v3119
    %v3384 = vunpack.c.l.b16 %v3120
    %v3385 = vunpack.c.h.b16 %v3120
    %v3386 = vunpack.c.l.b16 %v3121
    %v3387 = vunpack.c.h.b16 %v3121
    %v3388 = vunpack.c.l.b16 %v3122
    %v3389 = vunpack.c.h.b16 %v3122
    %v3390 = vunpack.c.l.b16 %v3123
    %v3391 = vunpack.c.h.b16 %v3123
    %v3392 = vunpack.c.l.b16 %v3124
    %v3393 = vunpack.c.h.b16 %v3124
    %v3394 = vunpack.c.l.b16 %v3125
    %v3395 = vunpack.c.h.b16 %v3125
    %v3396 = vunpack.c.l.b16 %v3126
    %v3397 = vunpack.c.h.b16 %v3126
    %v3398 = vunpack.c.l.b16 %v3127
    %v3399 = vunpack.c.h.b16 %v3127
    %v3400 = vunpack.c.l.b16 %v3128
    %v3401 = vunpack.c.h.b16 %v3128
    %v3402 = vunpack.c.l.b16 %v3129
    %v3403 = vunpack.c.h.b16 %v3129
    %v3404 = vunpack.c.l.b16 %v3130
    %v3405 = vunpack.c.h.b16 %v3130
    %v3406 = vunpack.c.l.b16 %v3131
    %v3407 = vunpack.c.h.b16 %v3131
    %v3408 = vunpack.c.l.b16 %v3132
    %v3409 = vunpack.c.h.b16 %v3132
    %v3410 = vunpack.c.l.b16 %v3133
    %v3411 = vunpack.c.h.b16 %v3133
    %v3412 = vunpack.c.l.b16 %v3134
    %v3413 = vunpack.c.h.b16 %v3134
    %v3414 = vunpack.c.l.b16 %v3135
    %v3415 = vunpack.c.h.b16 %v3135
    %v3416 = vunpack.c.l.b16 %v3136
    %v3417 = vunpack.c.h.b16 %v3136
    %v3418 = vunpack.c.l.b16 %v3137
    %v3419 = vunpack.c.h.b16 %v3137
    %v3420 = vunpack.c.l.b16 %v3138
    %v3421 = vunpack.c.h.b16 %v3138
    %v3422 = vunpack.c.l.b16 %v3139
    %v3423 = vunpack.c.h.b16 %v3139
    %v3424 = vunpack.c.l.b16 %v3140
    %v3425 = vunpack.c.h.b16 %v3140
    %v3426 = vunpack.c.l.b16 %v3141
    %v3427 = vunpack.c.h.b16 %v3141
    %v3428 = vunpack.c.l.b16 %v3142
    %v3429 = vunpack.c.h.b16 %v3142
    %v3430 = vunpack.c.l.b16 %v3143
    %v3431 = vunpack.c.h.b16 %v3143
    %v3432 = vpack.c.b16 %v3252, %v3240
    %v3433 = vpack.c.b16 %v3253, %v3241
    %v3434 = vpack.c.b16 %v3254, %v3242
    %v3435 = vpack.c.b16 %v3255, %v3243
    %v3436 = vpack.c.b16 %v3256, %v3244
    %v3437 = vpack.c.b16 %v3257, %v3245
    %v3438 = vpack.c.b16 %v3258, %v3246
    %v3439 = vpack.c.b16 %v3259, %v3247
    %v3440 = vpack.c.b16 %v3260, %v3248
    %v3441 = vpack.c.b16 %v3261, %v3249
    %v3442 = vpack.c.b16 %v3262, %v3250
    %v3443 = vpack.c.b16 %v3263, %v3251
    %v3444 = vpack.c.b16 %v3276, %v3264
    %v3445 = vpack.c.b16 %v3277, %v3265
    %v3446 = vpack.c.b16 %v3278, %v3266
    %v3447 = vpack.c.b16 %v3279, %v3267
    %v3448 = vpack.c.b16 %v3280, %v3268
    %v3449 = vpack.c.b16 %v3281, %v3269
    %v3450 = vpack.c.b16 %v3282, %v3270
    %v3451 = vpack.c.b16 %v3283, %v3271
    %v3452 = vpack.c.b16 %v3284, %v3272
    %v3453 = vpack.c.b16 %v3285, %v3273
    %v3454 = vpack.c.b16 %v3286, %v3274
    %v3455 = vpack.c.b16 %v3287, %v3275
    %v3456 = vpack.c.b16 %v3300, %v3288
    %v3457 = vpack.c.b16 %v3301, %v3289
    %v3458 = vpack.c.b16 %v3302, %v3290
    %v3459 = vpack.c.b16 %v3303, %v3291
    %v3460 = vpack.c.b16 %v3304, %v3292
    %v3461 = vpack.c.b16 %v3305, %v3293
    %v3462 = vpack.c.b16 %v3306, %v3294
    %v3463 = vpack.c.b16 %v3307, %v3295
    %v3464 = vpack.c.b16 %v3308, %v3296
    %v3465 = vpack.c.b16 %v3309, %v3297
    %v3466 = vpack.c.b16 %v3310, %v3298
    %v3467 = vpack.c.b16 %v3311, %v3299
    %v3468 = vpack.c.b16 %v3324, %v3312
    %v3469 = vpack.c.b16 %v3325, %v3313
    %v3470 = vpack.c.b16 %v3326, %v3314
    %v3471 = vpack.c.b16 %v3327, %v3315
    %v3472 = vpack.c.b16 %v3328, %v3316
    %v3473 = vpack.c.b16 %v3329, %v3317
    %v3474 = vpack.c.b16 %v3330, %v3318
    %v3475 = vpack.c.b16 %v3331, %v3319
    %v3476 = vpack.c.b16 %v3332, %v3320
    %v3477 = vpack.c.b16 %v3333, %v3321
    %v3478 = vpack.c.b16 %v3334, %v3322
    %v3479 = vpack.c.b16 %v3335, %v3323
    %v3480 = vpack.c.b16 %v3348, %v3336
    %v3481 = vpack.c.b16 %v3349, %v3337
    %v3482 = vpack.c.b16 %v3350, %v3338
    %v3483 = vpack.c.b16 %v3351, %v3339
    %v3484 = vpack.c.b16 %v3352, %v3340
    %v3485 = vpack.c.b16 %v3353, %v3341
    %v3486 = vpack.c.b16 %v3354, %v3342
    %v3487 = vpack.c.b16 %v3355, %v3343
    %v3488 = vpack.c.b16 %v3356, %v3344
    %v3489 = vpack.c.b16 %v3357, %v3345
    %v3490 = vpack.c.b16 %v3358, %v3346
    %v3491 = vpack.c.b16 %v3359, %v3347
    %v3492 = vpack.c.b16 %v3372, %v3360
    %v3493 = vpack.c.b16 %v3373, %v3361
    %v3494 = vpack.c.b16 %v3374, %v3362
    %v3495 = vpack.c.b16 %v3375, %v3363
    %v3496 = vpack.c.b16 %v3376, %v3364
    %v3497 = vpack.c.b16 %v3377, %v3365
    %v3498 = vpack.c.b16 %v3378, %v3366
    %v3499 = vpack.c.b16 %v3379, %v3367
    %v3500 = vpack.c.b16 %v3380, %v3368
    %v3501 = vpack.c.b16 %v3381, %v3369
    %v3502 = vpack.c.b16 %v3382, %v3370
    %v3503 = vpack.c.b16 %v3383, %v3371
    %v3504 = vpack.c.b16 %v3396, %v3384
    %v3505 = vpack.c.b16 %v3397, %v3385
    %v3506 = vpack.c.b16 %v3398, %v3386
    %v3507 = vpack.c.b16 %v3399, %v3387
    %v3508 = vpack.c.b16 %v3400, %v3388
    %v3509 = vpack.c.b16 %v3401, %v3389
    %v3510 = vpack.c.b16 %v3402, %v3390
    %v3511 = vpack.c.b16 %v3403, %v3391
    %v3512 = vpack.c.b16 %v3404, %v3392
    %v3513 = vpack.c.b16 %v3405, %v3393
    %v3514 = vpack.c.b16 %v3406, %v3394
    %v3515 = vpack.c.b16 %v3407, %v3395
    %v3516 = vpack.c.b16 %v3420, %v3408
    %v3517 = vpack.c.b16 %v3421, %v3409
    %v3518 = vpack.c.b16 %v3422, %v3410
    %v3519 = vpack.c.b16 %v3423, %v3411
    %v3520 = vpack.c.b16 %v3424, %v3412
    %v3521 = vpack.c.b16 %v3425, %v3413
    %v3522 = vpack.c.b16 %v3426, %v3414
    %v3523 = vpack.c.b16 %v3427, %v3415
    %v3524 = vpack.c.b16 %v3428, %v3416
    %v3525 = vpack.c.b16 %v3429, %v3417
    %v3526 = vpack.c.b16 %v3430, %v3418
    %v3527 = vpack.c.b16 %v3431, %v3419
    %3624 = vmatpush.bf16.msra.mxu0 %v3516
    %3625 = vmatpush.bf16.msra.mxu0 %v3504
    %3626 = vmatpush.bf16.msra.mxu0 %v3492
    %3627 = vmatpush.bf16.msra.mxu0 %v3480
    %3628 = vmatpush.bf16.msra.mxu0 %v3468
    %3629 = vmatpush.bf16.msra.mxu0 %v3456
    %3630 = vmatpush.bf16.msra.mxu0 %v3444
    %3631 = vmatpush.bf16.msra.mxu0 %v3432
    %3632 = vmatmul.bf16.gmra.mxu0 %v1583
    %v3633 = vpop.f32.mrf.mxu0
    %v3634 = vadd.f32 0.0, %v3633
    %v3635 = vpop.f32.mrf.mxu0
    %3636 = vdwg.mxu0
    %3637 = vmatpush.bf16.msra.mxu0 %v3517
    %3638 = vmatpush.bf16.msra.mxu0 %v3505
    %3639 = vmatpush.bf16.msra.mxu0 %v3493
    %3640 = vmatpush.bf16.msra.mxu0 %v3481
    %3641 = vmatpush.bf16.msra.mxu0 %v3469
    %3642 = vmatpush.bf16.msra.mxu0 %v3457
    %3643 = vmatpush.bf16.msra.mxu0 %v3445
    %3644 = vmatpush.bf16.msra.mxu0 %v3433
    %3645 = vmatmul.bf16.gmra.mxu0 %v1583
    %v3646 = vpop.f32.mrf.mxu0
    %v3647 = vadd.f32 0.0, %v3646
    %v3648 = vpop.f32.mrf.mxu0
    %3649 = vdwg.mxu0
    %3650 = vmatpush.bf16.msra.mxu0 %v3518
    %3651 = vmatpush.bf16.msra.mxu0 %v3506
    %3652 = vmatpush.bf16.msra.mxu0 %v3494
    %3653 = vmatpush.bf16.msra.mxu0 %v3482
    %3654 = vmatpush.bf16.msra.mxu0 %v3470
    %3655 = vmatpush.bf16.msra.mxu0 %v3458
    %3656 = vmatpush.bf16.msra.mxu0 %v3446
    %3657 = vmatpush.bf16.msra.mxu0 %v3434
    %3658 = vmatmul.bf16.gmra.mxu0 %v1583
    %v3659 = vpop.f32.mrf.mxu0
    %v3660 = vadd.f32 0.0, %v3659
    %v3661 = vpop.f32.mrf.mxu0
    %3662 = vdwg.mxu0
    %3663 = vmatpush.bf16.msra.mxu0 %v3519
    %3664 = vmatpush.bf16.msra.mxu0 %v3507
    %3665 = vmatpush.bf16.msra.mxu0 %v3495
    %3666 = vmatpush.bf16.msra.mxu0 %v3483
    %3667 = vmatpush.bf16.msra.mxu0 %v3471
    %3668 = vmatpush.bf16.msra.mxu0 %v3459
    %3669 = vmatpush.bf16.msra.mxu0 %v3447
    %3670 = vmatpush.bf16.msra.mxu0 %v3435
    %3671 = vmatmul.bf16.gmra.mxu0 %v1583
    %v3672 = vpop.f32.mrf.mxu0
    %v3673 = vadd.f32 0.0, %v3672
    %v3674 = vpop.f32.mrf.mxu0
    %3675 = vdwg.mxu0
    %3676 = vmatpush.bf16.msra.mxu0 %v3520
    %3677 = vmatpush.bf16.msra.mxu0 %v3508
    %3678 = vmatpush.bf16.msra.mxu0 %v3496
    %3679 = vmatpush.bf16.msra.mxu0 %v3484
    %3680 = vmatpush.bf16.msra.mxu0 %v3472
    %3681 = vmatpush.bf16.msra.mxu0 %v3460
    %3682 = vmatpush.bf16.msra.mxu0 %v3448
    %3683 = vmatpush.bf16.msra.mxu0 %v3436
    %3684 = vmatmul.bf16.gmra.mxu0 %v1583
    %v3685 = vpop.f32.mrf.mxu0
    %v3686 = vadd.f32 0.0, %v3685
    %v3687 = vpop.f32.mrf.mxu0
    %3688 = vdwg.mxu0
    %3689 = vmatpush.bf16.msra.mxu0 %v3521
    %3690 = vmatpush.bf16.msra.mxu0 %v3509
    %3691 = vmatpush.bf16.msra.mxu0 %v3497
    %3692 = vmatpush.bf16.msra.mxu0 %v3485
    %3693 = vmatpush.bf16.msra.mxu0 %v3473
    %3694 = vmatpush.bf16.msra.mxu0 %v3461
    %3695 = vmatpush.bf16.msra.mxu0 %v3449
    %3696 = vmatpush.bf16.msra.mxu0 %v3437
    %3697 = vmatmul.bf16.gmra.mxu0 %v1583
    %v3698 = vpop.f32.mrf.mxu0
    %v3699 = vadd.f32 0.0, %v3698
    %v3700 = vpop.f32.mrf.mxu0
    %3701 = vdwg.mxu0
    %3702 = vmatpush.bf16.msra.mxu0 %v3522
    %3703 = vmatpush.bf16.msra.mxu0 %v3510
    %3704 = vmatpush.bf16.msra.mxu0 %v3498
    %3705 = vmatpush.bf16.msra.mxu0 %v3486
    %3706 = vmatpush.bf16.msra.mxu0 %v3474
    %3707 = vmatpush.bf16.msra.mxu0 %v3462
    %3708 = vmatpush.bf16.msra.mxu0 %v3450
    %3709 = vmatpush.bf16.msra.mxu0 %v3438
    %3710 = vmatmul.bf16.gmra.mxu0 %v1583
    %v3711 = vpop.f32.mrf.mxu0
    %v3712 = vadd.f32 0.0, %v3711
    %v3713 = vpop.f32.mrf.mxu0
    %3714 = vdwg.mxu0
    %3715 = vmatpush.bf16.msra.mxu0 %v3523
    %3716 = vmatpush.bf16.msra.mxu0 %v3511
    %3717 = vmatpush.bf16.msra.mxu0 %v3499
    %3718 = vmatpush.bf16.msra.mxu0 %v3487
    %3719 = vmatpush.bf16.msra.mxu0 %v3475
    %3720 = vmatpush.bf16.msra.mxu0 %v3463
    %3721 = vmatpush.bf16.msra.mxu0 %v3451
    %3722 = vmatpush.bf16.msra.mxu0 %v3439
    %3723 = vmatmul.bf16.gmra.mxu0 %v1583
    %v3724 = vpop.f32.mrf.mxu0
    %v3725 = vadd.f32 0.0, %v3724
    %v3726 = vpop.f32.mrf.mxu0
    %3727 = vdwg.mxu0
    %3728 = vmatpush.bf16.msra.mxu0 %v3524
    %3729 = vmatpush.bf16.msra.mxu0 %v3512
    %3730 = vmatpush.bf16.msra.mxu0 %v3500
    %3731 = vmatpush.bf16.msra.mxu0 %v3488
    %3732 = vmatpush.bf16.msra.mxu0 %v3476
    %3733 = vmatpush.bf16.msra.mxu0 %v3464
    %3734 = vmatpush.bf16.msra.mxu0 %v3452
    %3735 = vmatpush.bf16.msra.mxu0 %v3440
    %3736 = vmatmul.bf16.gmra.mxu0 %v1583
    %v3737 = vpop.f32.mrf.mxu0
    %v3738 = vadd.f32 0.0, %v3737
    %v3739 = vpop.f32.mrf.mxu0
    %3740 = vdwg.mxu0
    %3741 = vmatpush.bf16.msra.mxu0 %v3525
    %3742 = vmatpush.bf16.msra.mxu0 %v3513
    %3743 = vmatpush.bf16.msra.mxu0 %v3501
    %3744 = vmatpush.bf16.msra.mxu0 %v3489
    %3745 = vmatpush.bf16.msra.mxu0 %v3477
    %3746 = vmatpush.bf16.msra.mxu0 %v3465
    %3747 = vmatpush.bf16.msra.mxu0 %v3453
    %3748 = vmatpush.bf16.msra.mxu0 %v3441
    %3749 = vmatmul.bf16.gmra.mxu0 %v1583
    %v3750 = vpop.f32.mrf.mxu0
    %v3751 = vadd.f32 0.0, %v3750
    %v3752 = vpop.f32.mrf.mxu0
    %3753 = vdwg.mxu0
    %3754 = vmatpush.bf16.msra.mxu0 %v3526
    %3755 = vmatpush.bf16.msra.mxu0 %v3514
    %3756 = vmatpush.bf16.msra.mxu0 %v3502
    %3757 = vmatpush.bf16.msra.mxu0 %v3490
    %3758 = vmatpush.bf16.msra.mxu0 %v3478
    %3759 = vmatpush.bf16.msra.mxu0 %v3466
    %3760 = vmatpush.bf16.msra.mxu0 %v3454
    %3761 = vmatpush.bf16.msra.mxu0 %v3442
    %3762 = vmatmul.bf16.gmra.mxu0 %v1583
    %v3763 = vpop.f32.mrf.mxu0
    %v3764 = vadd.f32 0.0, %v3763
    %v3765 = vpop.f32.mrf.mxu0
    %3766 = vdwg.mxu0
    %3767 = vmatpush.bf16.msra.mxu0 %v3527
    %3768 = vmatpush.bf16.msra.mxu0 %v3515
    %3769 = vmatpush.bf16.msra.mxu0 %v3503
    %3770 = vmatpush.bf16.msra.mxu0 %v3491
    %3771 = vmatpush.bf16.msra.mxu0 %v3479
    %3772 = vmatpush.bf16.msra.mxu0 %v3467
    %3773 = vmatpush.bf16.msra.mxu0 %v3455
    %3774 = vmatpush.bf16.msra.mxu0 %v3443
    %3775 = vmatmul.bf16.gmra.mxu0 %v1583
    %v3776 = vpop.f32.mrf.mxu0
    %v3777 = vadd.f32 0.0, %v3776
    %v3778 = vpop.f32.mrf.mxu0
    %3779 = vdwg.mxu0
    %v3780 = vadd.f32 %v2902, %v3634
    %v3781 = vadd.f32 %v2915, %v3647
    %v3782 = vadd.f32 %v2928, %v3660
    %v3783 = vadd.f32 %v2941, %v3673
    %v3784 = vadd.f32 %v2954, %v3686
    %v3785 = vadd.f32 %v2967, %v3699
    %v3786 = vadd.f32 %v2980, %v3712
    %v3787 = vadd.f32 %v2993, %v3725
    %v3788 = vadd.f32 %v3006, %v3738
    %v3789 = vadd.f32 %v3019, %v3751
    %v3790 = vadd.f32 %v3032, %v3764
    %v3791 = vadd.f32 %v3045, %v3777
    %v3792 = vld [vmem:[#allocation24] sm:$0xff]
    %v3793 = vld [vmem:[#allocation24 + $0x8] sm:$0xf]
    %v3796 = vperm.slane %v3792, 0
    %v3797 = vperm.slane %v3792, 1
    %v3798 = vperm.slane %v3792, 2
    %v3799 = vperm.slane %v3792, 3
    %v3800 = vperm.slane %v3792, 4
    %v3801 = vperm.slane %v3792, 5
    %v3802 = vperm.slane %v3792, 6
    %v3803 = vperm.slane %v3792, 7
    %v3804 = vperm.slane %v3793, 0
    %v3805 = vperm.slane %v3793, 1
    %v3806 = vperm.slane %v3793, 2
    %v3807 = vperm.slane %v3793, 3
    %v3820 = vadd.f32 %v3780, %v3796
    %v3821 = vadd.f32 %v3781, %v3797
    %v3822 = vadd.f32 %v3782, %v3798
    %v3823 = vadd.f32 %v3783, %v3799
    %v3824 = vadd.f32 %v3784, %v3800
    %v3825 = vadd.f32 %v3785, %v3801
    %v3826 = vadd.f32 %v3786, %v3802
    %v3827 = vadd.f32 %v3787, %v3803
    %v3828 = vadd.f32 %v3788, %v3804
    %v3829 = vadd.f32 %v3789, %v3805
    %v3830 = vadd.f32 %v3790, %v3806
    %v3831 = vadd.f32 %v3791, %v3807
    %v3832 = vld [vmem:[%s7] sm:$0xff]
    %v3833 = vld [vmem:[%s7 + $0x8] sm:$0xff]
    %v3834 = vld [vmem:[%s7 + $0x10] sm:$0xff]
    %v3835 = vld [vmem:[%s7 + $0x18] sm:$0xff]
    %v3836 = vld [vmem:[#allocation25] sm:$0xff]
    %v3837 = vld [vmem:[#allocation25 + $0x8] sm:$0xf]
    %v3838 = vpack.c.bf16 %v3832, %v3832
    %v3839 = vpack.c.bf16 %v3833, %v3833
    %v3840 = vpack.c.bf16 %v3834, %v3834
    %v3841 = vpack.c.bf16 %v3835, %v3835
    %v3842 = vld [vmem:[#allocation22] sm:$0xff]
    %v3843 = vld [vmem:[#allocation22 + $0x8] sm:$0xff]
    %v3844 = vld [vmem:[#allocation22 + $0x10] sm:$0xff]
    %v3845 = vld [vmem:[#allocation22 + $0x18] sm:$0xff]
    %v3846 = vld [vmem:[#allocation22 + $0x20] sm:$0xff]
    %v3847 = vld [vmem:[#allocation22 + $0x28] sm:$0xff]
    %v3848 = vld [vmem:[#allocation22 + $0x30] sm:$0xff]
    %v3849 = vld [vmem:[#allocation22 + $0x38] sm:$0xff]
    %v3850 = vld [vmem:[#allocation22 + $0x40] sm:$0xff]
    %v3851 = vld [vmem:[#allocation22 + $0x48] sm:$0xff]
    %v3852 = vld [vmem:[#allocation22 + $0x50] sm:$0xff]
    %v3853 = vld [vmem:[#allocation22 + $0x58] sm:$0xff]
    %v3854 = vld [vmem:[#allocation22 + $0x60] sm:$0xff]
    %v3855 = vld [vmem:[#allocation22 + $0x68] sm:$0xff]
    %v3856 = vld [vmem:[#allocation22 + $0x70] sm:$0xff]
    %v3857 = vld [vmem:[#allocation22 + $0x78] sm:$0xff]
    %v3858 = vld [vmem:[#allocation22 + $0x80] sm:$0xff]
    %v3859 = vld [vmem:[#allocation22 + $0x88] sm:$0xff]
    %v3860 = vld [vmem:[#allocation22 + $0x90] sm:$0xff]
    %v3861 = vld [vmem:[#allocation22 + $0x98] sm:$0xff]
    %v3862 = vld [vmem:[#allocation22 + $0xa0] sm:$0xff]
    %v3863 = vld [vmem:[#allocation22 + $0xa8] sm:$0xff]
    %v3864 = vld [vmem:[#allocation22 + $0xb0] sm:$0xff]
    %v3865 = vld [vmem:[#allocation22 + $0xb8] sm:$0xff]
    %v3866 = vld [vmem:[#allocation22 + $0xc0] sm:$0xff]
    %v3867 = vld [vmem:[#allocation22 + $0xc8] sm:$0xff]
    %v3868 = vld [vmem:[#allocation22 + $0xd0] sm:$0xff]
    %v3869 = vld [vmem:[#allocation22 + $0xd8] sm:$0xff]
    %v3870 = vld [vmem:[#allocation22 + $0xe0] sm:$0xff]
    %v3871 = vld [vmem:[#allocation22 + $0xe8] sm:$0xff]
    %v3872 = vld [vmem:[#allocation22 + $0xf0] sm:$0xff]
    %v3873 = vld [vmem:[#allocation22 + $0xf8] sm:$0xff]
    %v3874 = vld [vmem:[#allocation22 + $0x100] sm:$0xff]
    %v3875 = vld [vmem:[#allocation22 + $0x108] sm:$0xff]
    %v3876 = vld [vmem:[#allocation22 + $0x110] sm:$0xff]
    %v3877 = vld [vmem:[#allocation22 + $0x118] sm:$0xff]
    %v3878 = vld [vmem:[#allocation22 + $0x120] sm:$0xff]
    %v3879 = vld [vmem:[#allocation22 + $0x128] sm:$0xff]
    %v3880 = vld [vmem:[#allocation22 + $0x130] sm:$0xff]
    %v3881 = vld [vmem:[#allocation22 + $0x138] sm:$0xff]
    %v3882 = vld [vmem:[#allocation22 + $0x140] sm:$0xff]
    %v3883 = vld [vmem:[#allocation22 + $0x148] sm:$0xff]
    %v3884 = vld [vmem:[#allocation22 + $0x150] sm:$0xff]
    %v3885 = vld [vmem:[#allocation22 + $0x158] sm:$0xff]
    %v3886 = vld [vmem:[#allocation22 + $0x160] sm:$0xff]
    %v3887 = vld [vmem:[#allocation22 + $0x168] sm:$0xff]
    %v3888 = vld [vmem:[#allocation22 + $0x170] sm:$0xff]
    %v3889 = vld [vmem:[#allocation22 + $0x178] sm:$0xff]
    %v3890 = vld [vmem:[#allocation22 + $0x180] sm:$0xff]
    %v3891 = vld [vmem:[#allocation22 + $0x188] sm:$0xff]
    %v3892 = vld [vmem:[#allocation22 + $0x190] sm:$0xff]
    %v3893 = vld [vmem:[#allocation22 + $0x198] sm:$0xff]
    %v3894 = vld [vmem:[#allocation22 + $0x1a0] sm:$0xff]
    %v3895 = vld [vmem:[#allocation22 + $0x1a8] sm:$0xff]
    %v3896 = vld [vmem:[#allocation22 + $0x1b0] sm:$0xff]
    %v3897 = vld [vmem:[#allocation22 + $0x1b8] sm:$0xff]
    %v3898 = vld [vmem:[#allocation22 + $0x1c0] sm:$0xff]
    %v3899 = vld [vmem:[#allocation22 + $0x1c8] sm:$0xff]
    %v3900 = vld [vmem:[#allocation22 + $0x1d0] sm:$0xff]
    %v3901 = vld [vmem:[#allocation22 + $0x1d8] sm:$0xff]
    %v3902 = vld [vmem:[#allocation22 + $0x1e0] sm:$0xff]
    %v3903 = vld [vmem:[#allocation22 + $0x1e8] sm:$0xff]
    %v3904 = vld [vmem:[#allocation22 + $0x1f0] sm:$0xff]
    %v3905 = vld [vmem:[#allocation22 + $0x1f8] sm:$0xff]
    %v3906 = vld [vmem:[#allocation22 + $0x200] sm:$0xff]
    %v3907 = vld [vmem:[#allocation22 + $0x208] sm:$0xff]
    %v3908 = vld [vmem:[#allocation22 + $0x210] sm:$0xff]
    %v3909 = vld [vmem:[#allocation22 + $0x218] sm:$0xff]
    %v3910 = vld [vmem:[#allocation22 + $0x220] sm:$0xff]
    %v3911 = vld [vmem:[#allocation22 + $0x228] sm:$0xff]
    %v3912 = vld [vmem:[#allocation22 + $0x230] sm:$0xff]
    %v3913 = vld [vmem:[#allocation22 + $0x238] sm:$0xff]
    %v3914 = vld [vmem:[#allocation22 + $0x240] sm:$0xff]
    %v3915 = vld [vmem:[#allocation22 + $0x248] sm:$0xff]
    %v3916 = vld [vmem:[#allocation22 + $0x250] sm:$0xff]
    %v3917 = vld [vmem:[#allocation22 + $0x258] sm:$0xff]
    %v3918 = vld [vmem:[#allocation22 + $0x260] sm:$0xff]
    %v3919 = vld [vmem:[#allocation22 + $0x268] sm:$0xff]
    %v3920 = vld [vmem:[#allocation22 + $0x270] sm:$0xff]
    %v3921 = vld [vmem:[#allocation22 + $0x278] sm:$0xff]
    %v3922 = vld [vmem:[#allocation22 + $0x280] sm:$0xff]
    %v3923 = vld [vmem:[#allocation22 + $0x288] sm:$0xff]
    %v3924 = vld [vmem:[#allocation22 + $0x290] sm:$0xff]
    %v3925 = vld [vmem:[#allocation22 + $0x298] sm:$0xff]
    %v3926 = vld [vmem:[#allocation22 + $0x2a0] sm:$0xff]
    %v3927 = vld [vmem:[#allocation22 + $0x2a8] sm:$0xff]
    %v3928 = vld [vmem:[#allocation22 + $0x2b0] sm:$0xff]
    %v3929 = vld [vmem:[#allocation22 + $0x2b8] sm:$0xff]
    %v3930 = vld [vmem:[#allocation22 + $0x2c0] sm:$0xff]
    %v3931 = vld [vmem:[#allocation22 + $0x2c8] sm:$0xff]
    %v3932 = vld [vmem:[#allocation22 + $0x2d0] sm:$0xff]
    %v3933 = vld [vmem:[#allocation22 + $0x2d8] sm:$0xff]
    %v3934 = vld [vmem:[#allocation22 + $0x2e0] sm:$0xff]
    %v3935 = vld [vmem:[#allocation22 + $0x2e8] sm:$0xff]
    %v3936 = vld [vmem:[#allocation22 + $0x2f0] sm:$0xff]
    %v3937 = vld [vmem:[#allocation22 + $0x2f8] sm:$0xff]
    %v3938 = vld [vmem:[#allocation22 + $0x300] sm:$0xff]
    %v3939 = vld [vmem:[#allocation22 + $0x308] sm:$0xff]
    %v3940 = vld [vmem:[#allocation22 + $0x310] sm:$0xff]
    %v3941 = vld [vmem:[#allocation22 + $0x318] sm:$0xff]
    %v3942 = vld [vmem:[#allocation22 + $0x320] sm:$0xff]
    %v3943 = vld [vmem:[#allocation22 + $0x328] sm:$0xff]
    %v3944 = vld [vmem:[#allocation22 + $0x330] sm:$0xff]
    %v3945 = vld [vmem:[#allocation22 + $0x338] sm:$0xff]
    %v3946 = vld [vmem:[#allocation22 + $0x340] sm:$0xff]
    %v3947 = vld [vmem:[#allocation22 + $0x348] sm:$0xff]
    %v3948 = vld [vmem:[#allocation22 + $0x350] sm:$0xff]
    %v3949 = vld [vmem:[#allocation22 + $0x358] sm:$0xff]
    %v3950 = vld [vmem:[#allocation22 + $0x360] sm:$0xff]
    %v3951 = vld [vmem:[#allocation22 + $0x368] sm:$0xff]
    %v3952 = vld [vmem:[#allocation22 + $0x370] sm:$0xff]
    %v3953 = vld [vmem:[#allocation22 + $0x378] sm:$0xff]
    %v3954 = vld [vmem:[#allocation22 + $0x380] sm:$0xff]
    %v3955 = vld [vmem:[#allocation22 + $0x388] sm:$0xff]
    %v3956 = vld [vmem:[#allocation22 + $0x390] sm:$0xff]
    %v3957 = vld [vmem:[#allocation22 + $0x398] sm:$0xff]
    %v3958 = vld [vmem:[#allocation22 + $0x3a0] sm:$0xff]
    %v3959 = vld [vmem:[#allocation22 + $0x3a8] sm:$0xff]
    %v3960 = vld [vmem:[#allocation22 + $0x3b0] sm:$0xff]
    %v3961 = vld [vmem:[#allocation22 + $0x3b8] sm:$0xff]
    %v3962 = vld [vmem:[#allocation22 + $0x3c0] sm:$0xff]
    %v3963 = vld [vmem:[#allocation22 + $0x3c8] sm:$0xff]
    %v3964 = vld [vmem:[#allocation22 + $0x3d0] sm:$0xff]
    %v3965 = vld [vmem:[#allocation22 + $0x3d8] sm:$0xff]
    %v3966 = vld [vmem:[#allocation22 + $0x3e0] sm:$0xff]
    %v3967 = vld [vmem:[#allocation22 + $0x3e8] sm:$0xff]
    %v3968 = vld [vmem:[#allocation22 + $0x3f0] sm:$0xff]
    %v3969 = vld [vmem:[#allocation22 + $0x3f8] sm:$0xff]
    %v3970 = vld [vmem:[#allocation22 + $0x400] sm:$0xff]
    %v3971 = vld [vmem:[#allocation22 + $0x408] sm:$0xff]
    %v3972 = vld [vmem:[#allocation22 + $0x410] sm:$0xff]
    %v3973 = vld [vmem:[#allocation22 + $0x418] sm:$0xff]
    %v3974 = vld [vmem:[#allocation22 + $0x420] sm:$0xff]
    %v3975 = vld [vmem:[#allocation22 + $0x428] sm:$0xff]
    %v3976 = vld [vmem:[#allocation22 + $0x430] sm:$0xff]
    %v3977 = vld [vmem:[#allocation22 + $0x438] sm:$0xff]
    %v3978 = vld [vmem:[#allocation22 + $0x440] sm:$0xff]
    %v3979 = vld [vmem:[#allocation22 + $0x448] sm:$0xff]
    %v3980 = vld [vmem:[#allocation22 + $0x450] sm:$0xff]
    %v3981 = vld [vmem:[#allocation22 + $0x458] sm:$0xff]
    %v3982 = vld [vmem:[#allocation22 + $0x460] sm:$0xff]
    %v3983 = vld [vmem:[#allocation22 + $0x468] sm:$0xff]
    %v3984 = vld [vmem:[#allocation22 + $0x470] sm:$0xff]
    %v3985 = vld [vmem:[#allocation22 + $0x478] sm:$0xff]
    %v3986 = vld [vmem:[#allocation22 + $0x480] sm:$0xff]
    %v3987 = vld [vmem:[#allocation22 + $0x488] sm:$0xff]
    %v3988 = vld [vmem:[#allocation22 + $0x490] sm:$0xff]
    %v3989 = vld [vmem:[#allocation22 + $0x498] sm:$0xff]
    %v3990 = vld [vmem:[#allocation22 + $0x4a0] sm:$0xff]
    %v3991 = vld [vmem:[#allocation22 + $0x4a8] sm:$0xff]
    %v3992 = vld [vmem:[#allocation22 + $0x4b0] sm:$0xff]
    %v3993 = vld [vmem:[#allocation22 + $0x4b8] sm:$0xff]
    %v3994 = vld [vmem:[#allocation22 + $0x4c0] sm:$0xff]
    %v3995 = vld [vmem:[#allocation22 + $0x4c8] sm:$0xff]
    %v3996 = vld [vmem:[#allocation22 + $0x4d0] sm:$0xff]
    %v3997 = vld [vmem:[#allocation22 + $0x4d8] sm:$0xff]
    %v3998 = vld [vmem:[#allocation22 + $0x4e0] sm:$0xff]
    %v3999 = vld [vmem:[#allocation22 + $0x4e8] sm:$0xff]
    %v4000 = vld [vmem:[#allocation22 + $0x4f0] sm:$0xff]
    %v4001 = vld [vmem:[#allocation22 + $0x4f8] sm:$0xff]
    %v4002 = vld [vmem:[#allocation22 + $0x500] sm:$0xff]
    %v4003 = vld [vmem:[#allocation22 + $0x508] sm:$0xff]
    %v4004 = vld [vmem:[#allocation22 + $0x510] sm:$0xff]
    %v4005 = vld [vmem:[#allocation22 + $0x518] sm:$0xff]
    %v4006 = vld [vmem:[#allocation22 + $0x520] sm:$0xff]
    %v4007 = vld [vmem:[#allocation22 + $0x528] sm:$0xff]
    %v4008 = vld [vmem:[#allocation22 + $0x530] sm:$0xff]
    %v4009 = vld [vmem:[#allocation22 + $0x538] sm:$0xff]
    %v4010 = vld [vmem:[#allocation22 + $0x540] sm:$0xff]
    %v4011 = vld [vmem:[#allocation22 + $0x548] sm:$0xff]
    %v4012 = vld [vmem:[#allocation22 + $0x550] sm:$0xff]
    %v4013 = vld [vmem:[#allocation22 + $0x558] sm:$0xff]
    %v4014 = vld [vmem:[#allocation22 + $0x560] sm:$0xff]
    %v4015 = vld [vmem:[#allocation22 + $0x568] sm:$0xff]
    %v4016 = vld [vmem:[#allocation22 + $0x570] sm:$0xff]
    %v4017 = vld [vmem:[#allocation22 + $0x578] sm:$0xff]
    %v4018 = vld [vmem:[#allocation22 + $0x580] sm:$0xff]
    %v4019 = vld [vmem:[#allocation22 + $0x588] sm:$0xff]
    %v4020 = vld [vmem:[#allocation22 + $0x590] sm:$0xff]
    %v4021 = vld [vmem:[#allocation22 + $0x598] sm:$0xff]
    %v4022 = vld [vmem:[#allocation22 + $0x5a0] sm:$0xff]
    %v4023 = vld [vmem:[#allocation22 + $0x5a8] sm:$0xff]
    %v4024 = vld [vmem:[#allocation22 + $0x5b0] sm:$0xff]
    %v4025 = vld [vmem:[#allocation22 + $0x5b8] sm:$0xff]
    %v4026 = vld [vmem:[#allocation22 + $0x5c0] sm:$0xff]
    %v4027 = vld [vmem:[#allocation22 + $0x5c8] sm:$0xff]
    %v4028 = vld [vmem:[#allocation22 + $0x5d0] sm:$0xff]
    %v4029 = vld [vmem:[#allocation22 + $0x5d8] sm:$0xff]
    %v4030 = vld [vmem:[#allocation22 + $0x5e0] sm:$0xff]
    %v4031 = vld [vmem:[#allocation22 + $0x5e8] sm:$0xff]
    %v4032 = vld [vmem:[#allocation22 + $0x5f0] sm:$0xff]
    %v4033 = vld [vmem:[#allocation22 + $0x5f8] sm:$0xff]
    %v4034 = vld [vmem:[#allocation22 + $0x600] sm:$0xff]
    %v4035 = vld [vmem:[#allocation22 + $0x608] sm:$0xff]
    %v4036 = vld [vmem:[#allocation22 + $0x610] sm:$0xff]
    %v4037 = vld [vmem:[#allocation22 + $0x618] sm:$0xff]
    %v4038 = vld [vmem:[#allocation22 + $0x620] sm:$0xff]
    %v4039 = vld [vmem:[#allocation22 + $0x628] sm:$0xff]
    %v4040 = vld [vmem:[#allocation22 + $0x630] sm:$0xff]
    %v4041 = vld [vmem:[#allocation22 + $0x638] sm:$0xff]
    %v4042 = vld [vmem:[#allocation22 + $0x640] sm:$0xff]
    %v4043 = vld [vmem:[#allocation22 + $0x648] sm:$0xff]
    %v4044 = vld [vmem:[#allocation22 + $0x650] sm:$0xff]
    %v4045 = vld [vmem:[#allocation22 + $0x658] sm:$0xff]
    %v4046 = vld [vmem:[#allocation22 + $0x660] sm:$0xff]
    %v4047 = vld [vmem:[#allocation22 + $0x668] sm:$0xff]
    %v4048 = vld [vmem:[#allocation22 + $0x670] sm:$0xff]
    %v4049 = vld [vmem:[#allocation22 + $0x678] sm:$0xff]
    %v4050 = vld [vmem:[#allocation22 + $0x680] sm:$0xff]
    %v4051 = vld [vmem:[#allocation22 + $0x688] sm:$0xff]
    %v4052 = vld [vmem:[#allocation22 + $0x690] sm:$0xff]
    %v4053 = vld [vmem:[#allocation22 + $0x698] sm:$0xff]
    %v4054 = vld [vmem:[#allocation22 + $0x6a0] sm:$0xff]
    %v4055 = vld [vmem:[#allocation22 + $0x6a8] sm:$0xff]
    %v4056 = vld [vmem:[#allocation22 + $0x6b0] sm:$0xff]
    %v4057 = vld [vmem:[#allocation22 + $0x6b8] sm:$0xff]
    %v4058 = vld [vmem:[#allocation22 + $0x6c0] sm:$0xff]
    %v4059 = vld [vmem:[#allocation22 + $0x6c8] sm:$0xff]
    %v4060 = vld [vmem:[#allocation22 + $0x6d0] sm:$0xff]
    %v4061 = vld [vmem:[#allocation22 + $0x6d8] sm:$0xff]
    %v4062 = vld [vmem:[#allocation22 + $0x6e0] sm:$0xff]
    %v4063 = vld [vmem:[#allocation22 + $0x6e8] sm:$0xff]
    %v4064 = vld [vmem:[#allocation22 + $0x6f0] sm:$0xff]
    %v4065 = vld [vmem:[#allocation22 + $0x6f8] sm:$0xff]
    %v4066 = vld [vmem:[#allocation22 + $0x700] sm:$0xff]
    %v4067 = vld [vmem:[#allocation22 + $0x708] sm:$0xff]
    %v4068 = vld [vmem:[#allocation22 + $0x710] sm:$0xff]
    %v4069 = vld [vmem:[#allocation22 + $0x718] sm:$0xff]
    %v4070 = vld [vmem:[#allocation22 + $0x720] sm:$0xff]
    %v4071 = vld [vmem:[#allocation22 + $0x728] sm:$0xff]
    %v4072 = vld [vmem:[#allocation22 + $0x730] sm:$0xff]
    %v4073 = vld [vmem:[#allocation22 + $0x738] sm:$0xff]
    %v4074 = vld [vmem:[#allocation22 + $0x740] sm:$0xff]
    %v4075 = vld [vmem:[#allocation22 + $0x748] sm:$0xff]
    %v4076 = vld [vmem:[#allocation22 + $0x750] sm:$0xff]
    %v4077 = vld [vmem:[#allocation22 + $0x758] sm:$0xff]
    %v4078 = vld [vmem:[#allocation22 + $0x760] sm:$0xff]
    %v4079 = vld [vmem:[#allocation22 + $0x768] sm:$0xff]
    %v4080 = vld [vmem:[#allocation22 + $0x770] sm:$0xff]
    %v4081 = vld [vmem:[#allocation22 + $0x778] sm:$0xff]
    %v4082 = vld [vmem:[#allocation22 + $0x780] sm:$0xff]
    %v4083 = vld [vmem:[#allocation22 + $0x788] sm:$0xff]
    %v4084 = vld [vmem:[#allocation22 + $0x790] sm:$0xff]
    %v4085 = vld [vmem:[#allocation22 + $0x798] sm:$0xff]
    %v4086 = vld [vmem:[#allocation22 + $0x7a0] sm:$0xff]
    %v4087 = vld [vmem:[#allocation22 + $0x7a8] sm:$0xff]
    %v4088 = vld [vmem:[#allocation22 + $0x7b0] sm:$0xff]
    %v4089 = vld [vmem:[#allocation22 + $0x7b8] sm:$0xff]
    %v4090 = vld [vmem:[#allocation22 + $0x7c0] sm:$0xff]
    %v4091 = vld [vmem:[#allocation22 + $0x7c8] sm:$0xff]
    %v4092 = vld [vmem:[#allocation22 + $0x7d0] sm:$0xff]
    %v4093 = vld [vmem:[#allocation22 + $0x7d8] sm:$0xff]
    %v4094 = vld [vmem:[#allocation22 + $0x7e0] sm:$0xff]
    %v4095 = vld [vmem:[#allocation22 + $0x7e8] sm:$0xff]
    %v4096 = vld [vmem:[#allocation22 + $0x7f0] sm:$0xff]
    %v4097 = vld [vmem:[#allocation22 + $0x7f8] sm:$0xff]
    %v4098 = vld [vmem:[#allocation22 + $0x800] sm:$0xff]
    %v4099 = vld [vmem:[#allocation22 + $0x808] sm:$0xff]
    %v4100 = vld [vmem:[#allocation22 + $0x810] sm:$0xff]
    %v4101 = vld [vmem:[#allocation22 + $0x818] sm:$0xff]
    %v4102 = vld [vmem:[#allocation22 + $0x820] sm:$0xff]
    %v4103 = vld [vmem:[#allocation22 + $0x828] sm:$0xff]
    %v4104 = vld [vmem:[#allocation22 + $0x830] sm:$0xff]
    %v4105 = vld [vmem:[#allocation22 + $0x838] sm:$0xff]
    %v4106 = vld [vmem:[#allocation22 + $0x840] sm:$0xff]
    %v4107 = vld [vmem:[#allocation22 + $0x848] sm:$0xff]
    %v4108 = vld [vmem:[#allocation22 + $0x850] sm:$0xff]
    %v4109 = vld [vmem:[#allocation22 + $0x858] sm:$0xff]
    %v4110 = vld [vmem:[#allocation22 + $0x860] sm:$0xff]
    %v4111 = vld [vmem:[#allocation22 + $0x868] sm:$0xff]
    %v4112 = vld [vmem:[#allocation22 + $0x870] sm:$0xff]
    %v4113 = vld [vmem:[#allocation22 + $0x878] sm:$0xff]
    %v4114 = vld [vmem:[#allocation22 + $0x880] sm:$0xff]
    %v4115 = vld [vmem:[#allocation22 + $0x888] sm:$0xff]
    %v4116 = vld [vmem:[#allocation22 + $0x890] sm:$0xff]
    %v4117 = vld [vmem:[#allocation22 + $0x898] sm:$0xff]
    %v4118 = vld [vmem:[#allocation22 + $0x8a0] sm:$0xff]
    %v4119 = vld [vmem:[#allocation22 + $0x8a8] sm:$0xff]
    %v4120 = vld [vmem:[#allocation22 + $0x8b0] sm:$0xff]
    %v4121 = vld [vmem:[#allocation22 + $0x8b8] sm:$0xff]
    %v4122 = vld [vmem:[#allocation22 + $0x8c0] sm:$0xff]
    %v4123 = vld [vmem:[#allocation22 + $0x8c8] sm:$0xff]
    %v4124 = vld [vmem:[#allocation22 + $0x8d0] sm:$0xff]
    %v4125 = vld [vmem:[#allocation22 + $0x8d8] sm:$0xff]
    %v4126 = vld [vmem:[#allocation22 + $0x8e0] sm:$0xff]
    %v4127 = vld [vmem:[#allocation22 + $0x8e8] sm:$0xff]
    %v4128 = vld [vmem:[#allocation22 + $0x8f0] sm:$0xff]
    %v4129 = vld [vmem:[#allocation22 + $0x8f8] sm:$0xff]
    %v4130 = vld [vmem:[#allocation22 + $0x900] sm:$0xff]
    %v4131 = vld [vmem:[#allocation22 + $0x908] sm:$0xff]
    %v4132 = vld [vmem:[#allocation22 + $0x910] sm:$0xff]
    %v4133 = vld [vmem:[#allocation22 + $0x918] sm:$0xff]
    %v4134 = vld [vmem:[#allocation22 + $0x920] sm:$0xff]
    %v4135 = vld [vmem:[#allocation22 + $0x928] sm:$0xff]
    %v4136 = vld [vmem:[#allocation22 + $0x930] sm:$0xff]
    %v4137 = vld [vmem:[#allocation22 + $0x938] sm:$0xff]
    %v4138 = vld [vmem:[#allocation22 + $0x940] sm:$0xff]
    %v4139 = vld [vmem:[#allocation22 + $0x948] sm:$0xff]
    %v4140 = vld [vmem:[#allocation22 + $0x950] sm:$0xff]
    %v4141 = vld [vmem:[#allocation22 + $0x958] sm:$0xff]
    %v4142 = vld [vmem:[#allocation22 + $0x960] sm:$0xff]
    %v4143 = vld [vmem:[#allocation22 + $0x968] sm:$0xff]
    %v4144 = vld [vmem:[#allocation22 + $0x970] sm:$0xff]
    %v4145 = vld [vmem:[#allocation22 + $0x978] sm:$0xff]
    %v4146 = vld [vmem:[#allocation22 + $0x980] sm:$0xff]
    %v4147 = vld [vmem:[#allocation22 + $0x988] sm:$0xff]
    %v4148 = vld [vmem:[#allocation22 + $0x990] sm:$0xff]
    %v4149 = vld [vmem:[#allocation22 + $0x998] sm:$0xff]
    %v4150 = vld [vmem:[#allocation22 + $0x9a0] sm:$0xff]
    %v4151 = vld [vmem:[#allocation22 + $0x9a8] sm:$0xff]
    %v4152 = vld [vmem:[#allocation22 + $0x9b0] sm:$0xff]
    %v4153 = vld [vmem:[#allocation22 + $0x9b8] sm:$0xff]
    %v4154 = vld [vmem:[#allocation22 + $0x9c0] sm:$0xff]
    %v4155 = vld [vmem:[#allocation22 + $0x9c8] sm:$0xff]
    %v4156 = vld [vmem:[#allocation22 + $0x9d0] sm:$0xff]
    %v4157 = vld [vmem:[#allocation22 + $0x9d8] sm:$0xff]
    %v4158 = vld [vmem:[#allocation22 + $0x9e0] sm:$0xff]
    %v4159 = vld [vmem:[#allocation22 + $0x9e8] sm:$0xff]
    %v4160 = vld [vmem:[#allocation22 + $0x9f0] sm:$0xff]
    %v4161 = vld [vmem:[#allocation22 + $0x9f8] sm:$0xff]
    %v4162 = vld [vmem:[#allocation22 + $0xa00] sm:$0xff]
    %v4163 = vld [vmem:[#allocation22 + $0xa08] sm:$0xff]
    %v4164 = vld [vmem:[#allocation22 + $0xa10] sm:$0xff]
    %v4165 = vld [vmem:[#allocation22 + $0xa18] sm:$0xff]
    %v4166 = vld [vmem:[#allocation22 + $0xa20] sm:$0xff]
    %v4167 = vld [vmem:[#allocation22 + $0xa28] sm:$0xff]
    %v4168 = vld [vmem:[#allocation22 + $0xa30] sm:$0xff]
    %v4169 = vld [vmem:[#allocation22 + $0xa38] sm:$0xff]
    %v4170 = vld [vmem:[#allocation22 + $0xa40] sm:$0xff]
    %v4171 = vld [vmem:[#allocation22 + $0xa48] sm:$0xff]
    %v4172 = vld [vmem:[#allocation22 + $0xa50] sm:$0xff]
    %v4173 = vld [vmem:[#allocation22 + $0xa58] sm:$0xff]
    %v4174 = vld [vmem:[#allocation22 + $0xa60] sm:$0xff]
    %v4175 = vld [vmem:[#allocation22 + $0xa68] sm:$0xff]
    %v4176 = vld [vmem:[#allocation22 + $0xa70] sm:$0xff]
    %v4177 = vld [vmem:[#allocation22 + $0xa78] sm:$0xff]
    %v4178 = vld [vmem:[#allocation22 + $0xa80] sm:$0xff]
    %v4179 = vld [vmem:[#allocation22 + $0xa88] sm:$0xff]
    %v4180 = vld [vmem:[#allocation22 + $0xa90] sm:$0xff]
    %v4181 = vld [vmem:[#allocation22 + $0xa98] sm:$0xff]
    %v4182 = vld [vmem:[#allocation22 + $0xaa0] sm:$0xff]
    %v4183 = vld [vmem:[#allocation22 + $0xaa8] sm:$0xff]
    %v4184 = vld [vmem:[#allocation22 + $0xab0] sm:$0xff]
    %v4185 = vld [vmem:[#allocation22 + $0xab8] sm:$0xff]
    %v4186 = vld [vmem:[#allocation22 + $0xac0] sm:$0xff]
    %v4187 = vld [vmem:[#allocation22 + $0xac8] sm:$0xff]
    %v4188 = vld [vmem:[#allocation22 + $0xad0] sm:$0xff]
    %v4189 = vld [vmem:[#allocation22 + $0xad8] sm:$0xff]
    %v4190 = vld [vmem:[#allocation22 + $0xae0] sm:$0xff]
    %v4191 = vld [vmem:[#allocation22 + $0xae8] sm:$0xff]
    %v4192 = vld [vmem:[#allocation22 + $0xaf0] sm:$0xff]
    %v4193 = vld [vmem:[#allocation22 + $0xaf8] sm:$0xff]
    %v4194 = vld [vmem:[#allocation22 + $0xb00] sm:$0xff]
    %v4195 = vld [vmem:[#allocation22 + $0xb08] sm:$0xff]
    %v4196 = vld [vmem:[#allocation22 + $0xb10] sm:$0xff]
    %v4197 = vld [vmem:[#allocation22 + $0xb18] sm:$0xff]
    %v4198 = vld [vmem:[#allocation22 + $0xb20] sm:$0xff]
    %v4199 = vld [vmem:[#allocation22 + $0xb28] sm:$0xff]
    %v4200 = vld [vmem:[#allocation22 + $0xb30] sm:$0xff]
    %v4201 = vld [vmem:[#allocation22 + $0xb38] sm:$0xff]
    %v4202 = vld [vmem:[#allocation22 + $0xb40] sm:$0xff]
    %v4203 = vld [vmem:[#allocation22 + $0xb48] sm:$0xff]
    %v4204 = vld [vmem:[#allocation22 + $0xb50] sm:$0xff]
    %v4205 = vld [vmem:[#allocation22 + $0xb58] sm:$0xff]
    %v4206 = vld [vmem:[#allocation22 + $0xb60] sm:$0xff]
    %v4207 = vld [vmem:[#allocation22 + $0xb68] sm:$0xff]
    %v4208 = vld [vmem:[#allocation22 + $0xb70] sm:$0xff]
    %v4209 = vld [vmem:[#allocation22 + $0xb78] sm:$0xff]
    %v4210 = vld [vmem:[#allocation22 + $0xb80] sm:$0xff]
    %v4211 = vld [vmem:[#allocation22 + $0xb88] sm:$0xff]
    %v4212 = vld [vmem:[#allocation22 + $0xb90] sm:$0xff]
    %v4213 = vld [vmem:[#allocation22 + $0xb98] sm:$0xff]
    %v4214 = vld [vmem:[#allocation22 + $0xba0] sm:$0xff]
    %v4215 = vld [vmem:[#allocation22 + $0xba8] sm:$0xff]
    %v4216 = vld [vmem:[#allocation22 + $0xbb0] sm:$0xff]
    %v4217 = vld [vmem:[#allocation22 + $0xbb8] sm:$0xff]
    %v4218 = vld [vmem:[#allocation22 + $0xbc0] sm:$0xff]
    %v4219 = vld [vmem:[#allocation22 + $0xbc8] sm:$0xff]
    %v4220 = vld [vmem:[#allocation22 + $0xbd0] sm:$0xff]
    %v4221 = vld [vmem:[#allocation22 + $0xbd8] sm:$0xff]
    %v4222 = vld [vmem:[#allocation22 + $0xbe0] sm:$0xff]
    %v4223 = vld [vmem:[#allocation22 + $0xbe8] sm:$0xff]
    %v4224 = vld [vmem:[#allocation22 + $0xbf0] sm:$0xff]
    %v4225 = vld [vmem:[#allocation22 + $0xbf8] sm:$0xff]
    %v4228 = vperm.slane %v3836, 0
    %v4229 = vperm.slane %v3836, 1
    %v4230 = vperm.slane %v3836, 2
    %v4231 = vperm.slane %v3836, 3
    %v4232 = vperm.slane %v3836, 4
    %v4233 = vperm.slane %v3836, 5
    %v4234 = vperm.slane %v3836, 6
    %v4235 = vperm.slane %v3836, 7
    %v4236 = vperm.slane %v3837, 0
    %v4237 = vperm.slane %v3837, 1
    %v4238 = vperm.slane %v3837, 2
    %v4239 = vperm.slane %v3837, 3
    %v4636 = vunpack.c.l.b16 %v3842
    %v4637 = vunpack.c.h.b16 %v3842
    %v4638 = vunpack.c.l.b16 %v3843
    %v4639 = vunpack.c.h.b16 %v3843
    %v4640 = vunpack.c.l.b16 %v3844
    %v4641 = vunpack.c.h.b16 %v3844
    %v4642 = vunpack.c.l.b16 %v3845
    %v4643 = vunpack.c.h.b16 %v3845
    %v4644 = vunpack.c.l.b16 %v3846
    %v4645 = vunpack.c.h.b16 %v3846
    %v4646 = vunpack.c.l.b16 %v3847
    %v4647 = vunpack.c.h.b16 %v3847
    %v4648 = vunpack.c.l.b16 %v3848
    %v4649 = vunpack.c.h.b16 %v3848
    %v4650 = vunpack.c.l.b16 %v3849
    %v4651 = vunpack.c.h.b16 %v3849
    %v4652 = vunpack.c.l.b16 %v3850
    %v4653 = vunpack.c.h.b16 %v3850
    %v4654 = vunpack.c.l.b16 %v3851
    %v4655 = vunpack.c.h.b16 %v3851
    %v4656 = vunpack.c.l.b16 %v3852
    %v4657 = vunpack.c.h.b16 %v3852
    %v4658 = vunpack.c.l.b16 %v3853
    %v4659 = vunpack.c.h.b16 %v3853
    %v4660 = vunpack.c.l.b16 %v3854
    %v4661 = vunpack.c.h.b16 %v3854
    %v4662 = vunpack.c.l.b16 %v3855
    %v4663 = vunpack.c.h.b16 %v3855
    %v4664 = vunpack.c.l.b16 %v3856
    %v4665 = vunpack.c.h.b16 %v3856
    %v4666 = vunpack.c.l.b16 %v3857
    %v4667 = vunpack.c.h.b16 %v3857
    %v4668 = vunpack.c.l.b16 %v3858
    %v4669 = vunpack.c.h.b16 %v3858
    %v4670 = vunpack.c.l.b16 %v3859
    %v4671 = vunpack.c.h.b16 %v3859
    %v4672 = vunpack.c.l.b16 %v3860
    %v4673 = vunpack.c.h.b16 %v3860
    %v4674 = vunpack.c.l.b16 %v3861
    %v4675 = vunpack.c.h.b16 %v3861
    %v4676 = vunpack.c.l.b16 %v3862
    %v4677 = vunpack.c.h.b16 %v3862
    %v4678 = vunpack.c.l.b16 %v3863
    %v4679 = vunpack.c.h.b16 %v3863
    %v4680 = vunpack.c.l.b16 %v3864
    %v4681 = vunpack.c.h.b16 %v3864
    %v4682 = vunpack.c.l.b16 %v3865
    %v4683 = vunpack.c.h.b16 %v3865
    %v4684 = vunpack.c.l.b16 %v3866
    %v4685 = vunpack.c.h.b16 %v3866
    %v4686 = vunpack.c.l.b16 %v3867
    %v4687 = vunpack.c.h.b16 %v3867
    %v4688 = vunpack.c.l.b16 %v3868
    %v4689 = vunpack.c.h.b16 %v3868
    %v4690 = vunpack.c.l.b16 %v3869
    %v4691 = vunpack.c.h.b16 %v3869
    %v4692 = vunpack.c.l.b16 %v3870
    %v4693 = vunpack.c.h.b16 %v3870
    %v4694 = vunpack.c.l.b16 %v3871
    %v4695 = vunpack.c.h.b16 %v3871
    %v4696 = vunpack.c.l.b16 %v3872
    %v4697 = vunpack.c.h.b16 %v3872
    %v4698 = vunpack.c.l.b16 %v3873
    %v4699 = vunpack.c.h.b16 %v3873
    %v4700 = vunpack.c.l.b16 %v3874
    %v4701 = vunpack.c.h.b16 %v3874
    %v4702 = vunpack.c.l.b16 %v3875
    %v4703 = vunpack.c.h.b16 %v3875
    %v4704 = vunpack.c.l.b16 %v3876
    %v4705 = vunpack.c.h.b16 %v3876
    %v4706 = vunpack.c.l.b16 %v3877
    %v4707 = vunpack.c.h.b16 %v3877
    %v4708 = vunpack.c.l.b16 %v3878
    %v4709 = vunpack.c.h.b16 %v3878
    %v4710 = vunpack.c.l.b16 %v3879
    %v4711 = vunpack.c.h.b16 %v3879
    %v4712 = vunpack.c.l.b16 %v3880
    %v4713 = vunpack.c.h.b16 %v3880
    %v4714 = vunpack.c.l.b16 %v3881
    %v4715 = vunpack.c.h.b16 %v3881
    %v4716 = vunpack.c.l.b16 %v3882
    %v4717 = vunpack.c.h.b16 %v3882
    %v4718 = vunpack.c.l.b16 %v3883
    %v4719 = vunpack.c.h.b16 %v3883
    %v4720 = vunpack.c.l.b16 %v3884
    %v4721 = vunpack.c.h.b16 %v3884
    %v4722 = vunpack.c.l.b16 %v3885
    %v4723 = vunpack.c.h.b16 %v3885
    %v4724 = vunpack.c.l.b16 %v3886
    %v4725 = vunpack.c.h.b16 %v3886
    %v4726 = vunpack.c.l.b16 %v3887
    %v4727 = vunpack.c.h.b16 %v3887
    %v4728 = vunpack.c.l.b16 %v3888
    %v4729 = vunpack.c.h.b16 %v3888
    %v4730 = vunpack.c.l.b16 %v3889
    %v4731 = vunpack.c.h.b16 %v3889
    %v4732 = vunpack.c.l.b16 %v3890
    %v4733 = vunpack.c.h.b16 %v3890
    %v4734 = vunpack.c.l.b16 %v3891
    %v4735 = vunpack.c.h.b16 %v3891
    %v4736 = vunpack.c.l.b16 %v3892
    %v4737 = vunpack.c.h.b16 %v3892
    %v4738 = vunpack.c.l.b16 %v3893
    %v4739 = vunpack.c.h.b16 %v3893
    %v4740 = vunpack.c.l.b16 %v3894
    %v4741 = vunpack.c.h.b16 %v3894
    %v4742 = vunpack.c.l.b16 %v3895
    %v4743 = vunpack.c.h.b16 %v3895
    %v4744 = vunpack.c.l.b16 %v3896
    %v4745 = vunpack.c.h.b16 %v3896
    %v4746 = vunpack.c.l.b16 %v3897
    %v4747 = vunpack.c.h.b16 %v3897
    %v4748 = vunpack.c.l.b16 %v3898
    %v4749 = vunpack.c.h.b16 %v3898
    %v4750 = vunpack.c.l.b16 %v3899
    %v4751 = vunpack.c.h.b16 %v3899
    %v4752 = vunpack.c.l.b16 %v3900
    %v4753 = vunpack.c.h.b16 %v3900
    %v4754 = vunpack.c.l.b16 %v3901
    %v4755 = vunpack.c.h.b16 %v3901
    %v4756 = vunpack.c.l.b16 %v3902
    %v4757 = vunpack.c.h.b16 %v3902
    %v4758 = vunpack.c.l.b16 %v3903
    %v4759 = vunpack.c.h.b16 %v3903
    %v4760 = vunpack.c.l.b16 %v3904
    %v4761 = vunpack.c.h.b16 %v3904
    %v4762 = vunpack.c.l.b16 %v3905
    %v4763 = vunpack.c.h.b16 %v3905
    %v4764 = vunpack.c.l.b16 %v3906
    %v4765 = vunpack.c.h.b16 %v3906
    %v4766 = vunpack.c.l.b16 %v3907
    %v4767 = vunpack.c.h.b16 %v3907
    %v4768 = vunpack.c.l.b16 %v3908
    %v4769 = vunpack.c.h.b16 %v3908
    %v4770 = vunpack.c.l.b16 %v3909
    %v4771 = vunpack.c.h.b16 %v3909
    %v4772 = vunpack.c.l.b16 %v3910
    %v4773 = vunpack.c.h.b16 %v3910
    %v4774 = vunpack.c.l.b16 %v3911
    %v4775 = vunpack.c.h.b16 %v3911
    %v4776 = vunpack.c.l.b16 %v3912
    %v4777 = vunpack.c.h.b16 %v3912
    %v4778 = vunpack.c.l.b16 %v3913
    %v4779 = vunpack.c.h.b16 %v3913
    %v4780 = vunpack.c.l.b16 %v3914
    %v4781 = vunpack.c.h.b16 %v3914
    %v4782 = vunpack.c.l.b16 %v3915
    %v4783 = vunpack.c.h.b16 %v3915
    %v4784 = vunpack.c.l.b16 %v3916
    %v4785 = vunpack.c.h.b16 %v3916
    %v4786 = vunpack.c.l.b16 %v3917
    %v4787 = vunpack.c.h.b16 %v3917
    %v4788 = vunpack.c.l.b16 %v3918
    %v4789 = vunpack.c.h.b16 %v3918
    %v4790 = vunpack.c.l.b16 %v3919
    %v4791 = vunpack.c.h.b16 %v3919
    %v4792 = vunpack.c.l.b16 %v3920
    %v4793 = vunpack.c.h.b16 %v3920
    %v4794 = vunpack.c.l.b16 %v3921
    %v4795 = vunpack.c.h.b16 %v3921
    %v4796 = vunpack.c.l.b16 %v3922
    %v4797 = vunpack.c.h.b16 %v3922
    %v4798 = vunpack.c.l.b16 %v3923
    %v4799 = vunpack.c.h.b16 %v3923
    %v4800 = vunpack.c.l.b16 %v3924
    %v4801 = vunpack.c.h.b16 %v3924
    %v4802 = vunpack.c.l.b16 %v3925
    %v4803 = vunpack.c.h.b16 %v3925
    %v4804 = vunpack.c.l.b16 %v3926
    %v4805 = vunpack.c.h.b16 %v3926
    %v4806 = vunpack.c.l.b16 %v3927
    %v4807 = vunpack.c.h.b16 %v3927
    %v4808 = vunpack.c.l.b16 %v3928
    %v4809 = vunpack.c.h.b16 %v3928
    %v4810 = vunpack.c.l.b16 %v3929
    %v4811 = vunpack.c.h.b16 %v3929
    %v4812 = vunpack.c.l.b16 %v3930
    %v4813 = vunpack.c.h.b16 %v3930
    %v4814 = vunpack.c.l.b16 %v3931
    %v4815 = vunpack.c.h.b16 %v3931
    %v4816 = vunpack.c.l.b16 %v3932
    %v4817 = vunpack.c.h.b16 %v3932
    %v4818 = vunpack.c.l.b16 %v3933
    %v4819 = vunpack.c.h.b16 %v3933
    %v4820 = vunpack.c.l.b16 %v3934
    %v4821 = vunpack.c.h.b16 %v3934
    %v4822 = vunpack.c.l.b16 %v3935
    %v4823 = vunpack.c.h.b16 %v3935
    %v4824 = vunpack.c.l.b16 %v3936
    %v4825 = vunpack.c.h.b16 %v3936
    %v4826 = vunpack.c.l.b16 %v3937
    %v4827 = vunpack.c.h.b16 %v3937
    %v4828 = vunpack.c.l.b16 %v3938
    %v4829 = vunpack.c.h.b16 %v3938
    %v4830 = vunpack.c.l.b16 %v3939
    %v4831 = vunpack.c.h.b16 %v3939
    %v4832 = vunpack.c.l.b16 %v3940
    %v4833 = vunpack.c.h.b16 %v3940
    %v4834 = vunpack.c.l.b16 %v3941
    %v4835 = vunpack.c.h.b16 %v3941
    %v4836 = vunpack.c.l.b16 %v3942
    %v4837 = vunpack.c.h.b16 %v3942
    %v4838 = vunpack.c.l.b16 %v3943
    %v4839 = vunpack.c.h.b16 %v3943
    %v4840 = vunpack.c.l.b16 %v3944
    %v4841 = vunpack.c.h.b16 %v3944
    %v4842 = vunpack.c.l.b16 %v3945
    %v4843 = vunpack.c.h.b16 %v3945
    %v4844 = vunpack.c.l.b16 %v3946
    %v4845 = vunpack.c.h.b16 %v3946
    %v4846 = vunpack.c.l.b16 %v3947
    %v4847 = vunpack.c.h.b16 %v3947
    %v4848 = vunpack.c.l.b16 %v3948
    %v4849 = vunpack.c.h.b16 %v3948
    %v4850 = vunpack.c.l.b16 %v3949
    %v4851 = vunpack.c.h.b16 %v3949
    %v4852 = vunpack.c.l.b16 %v3950
    %v4853 = vunpack.c.h.b16 %v3950
    %v4854 = vunpack.c.l.b16 %v3951
    %v4855 = vunpack.c.h.b16 %v3951
    %v4856 = vunpack.c.l.b16 %v3952
    %v4857 = vunpack.c.h.b16 %v3952
    %v4858 = vunpack.c.l.b16 %v3953
    %v4859 = vunpack.c.h.b16 %v3953
    %v4860 = vunpack.c.l.b16 %v3954
    %v4861 = vunpack.c.h.b16 %v3954
    %v4862 = vunpack.c.l.b16 %v3955
    %v4863 = vunpack.c.h.b16 %v3955
    %v4864 = vunpack.c.l.b16 %v3956
    %v4865 = vunpack.c.h.b16 %v3956
    %v4866 = vunpack.c.l.b16 %v3957
    %v4867 = vunpack.c.h.b16 %v3957
    %v4868 = vunpack.c.l.b16 %v3958
    %v4869 = vunpack.c.h.b16 %v3958
    %v4870 = vunpack.c.l.b16 %v3959
    %v4871 = vunpack.c.h.b16 %v3959
    %v4872 = vunpack.c.l.b16 %v3960
    %v4873 = vunpack.c.h.b16 %v3960
    %v4874 = vunpack.c.l.b16 %v3961
    %v4875 = vunpack.c.h.b16 %v3961
    %v4876 = vunpack.c.l.b16 %v3962
    %v4877 = vunpack.c.h.b16 %v3962
    %v4878 = vunpack.c.l.b16 %v3963
    %v4879 = vunpack.c.h.b16 %v3963
    %v4880 = vunpack.c.l.b16 %v3964
    %v4881 = vunpack.c.h.b16 %v3964
    %v4882 = vunpack.c.l.b16 %v3965
    %v4883 = vunpack.c.h.b16 %v3965
    %v4884 = vunpack.c.l.b16 %v3966
    %v4885 = vunpack.c.h.b16 %v3966
    %v4886 = vunpack.c.l.b16 %v3967
    %v4887 = vunpack.c.h.b16 %v3967
    %v4888 = vunpack.c.l.b16 %v3968
    %v4889 = vunpack.c.h.b16 %v3968
    %v4890 = vunpack.c.l.b16 %v3969
    %v4891 = vunpack.c.h.b16 %v3969
    %v4892 = vunpack.c.l.b16 %v3970
    %v4893 = vunpack.c.h.b16 %v3970
    %v4894 = vunpack.c.l.b16 %v3971
    %v4895 = vunpack.c.h.b16 %v3971
    %v4896 = vunpack.c.l.b16 %v3972
    %v4897 = vunpack.c.h.b16 %v3972
    %v4898 = vunpack.c.l.b16 %v3973
    %v4899 = vunpack.c.h.b16 %v3973
    %v4900 = vunpack.c.l.b16 %v3974
    %v4901 = vunpack.c.h.b16 %v3974
    %v4902 = vunpack.c.l.b16 %v3975
    %v4903 = vunpack.c.h.b16 %v3975
    %v4904 = vunpack.c.l.b16 %v3976
    %v4905 = vunpack.c.h.b16 %v3976
    %v4906 = vunpack.c.l.b16 %v3977
    %v4907 = vunpack.c.h.b16 %v3977
    %v4908 = vunpack.c.l.b16 %v3978
    %v4909 = vunpack.c.h.b16 %v3978
    %v4910 = vunpack.c.l.b16 %v3979
    %v4911 = vunpack.c.h.b16 %v3979
    %v4912 = vunpack.c.l.b16 %v3980
    %v4913 = vunpack.c.h.b16 %v3980
    %v4914 = vunpack.c.l.b16 %v3981
    %v4915 = vunpack.c.h.b16 %v3981
    %v4916 = vunpack.c.l.b16 %v3982
    %v4917 = vunpack.c.h.b16 %v3982
    %v4918 = vunpack.c.l.b16 %v3983
    %v4919 = vunpack.c.h.b16 %v3983
    %v4920 = vunpack.c.l.b16 %v3984
    %v4921 = vunpack.c.h.b16 %v3984
    %v4922 = vunpack.c.l.b16 %v3985
    %v4923 = vunpack.c.h.b16 %v3985
    %v4924 = vunpack.c.l.b16 %v3986
    %v4925 = vunpack.c.h.b16 %v3986
    %v4926 = vunpack.c.l.b16 %v3987
    %v4927 = vunpack.c.h.b16 %v3987
    %v4928 = vunpack.c.l.b16 %v3988
    %v4929 = vunpack.c.h.b16 %v3988
    %v4930 = vunpack.c.l.b16 %v3989
    %v4931 = vunpack.c.h.b16 %v3989
    %v4932 = vunpack.c.l.b16 %v3990
    %v4933 = vunpack.c.h.b16 %v3990
    %v4934 = vunpack.c.l.b16 %v3991
    %v4935 = vunpack.c.h.b16 %v3991
    %v4936 = vunpack.c.l.b16 %v3992
    %v4937 = vunpack.c.h.b16 %v3992
    %v4938 = vunpack.c.l.b16 %v3993
    %v4939 = vunpack.c.h.b16 %v3993
    %v4940 = vunpack.c.l.b16 %v3994
    %v4941 = vunpack.c.h.b16 %v3994
    %v4942 = vunpack.c.l.b16 %v3995
    %v4943 = vunpack.c.h.b16 %v3995
    %v4944 = vunpack.c.l.b16 %v3996
    %v4945 = vunpack.c.h.b16 %v3996
    %v4946 = vunpack.c.l.b16 %v3997
    %v4947 = vunpack.c.h.b16 %v3997
    %v4948 = vunpack.c.l.b16 %v3998
    %v4949 = vunpack.c.h.b16 %v3998
    %v4950 = vunpack.c.l.b16 %v3999
    %v4951 = vunpack.c.h.b16 %v3999
    %v4952 = vunpack.c.l.b16 %v4000
    %v4953 = vunpack.c.h.b16 %v4000
    %v4954 = vunpack.c.l.b16 %v4001
    %v4955 = vunpack.c.h.b16 %v4001
    %v4956 = vunpack.c.l.b16 %v4002
    %v4957 = vunpack.c.h.b16 %v4002
    %v4958 = vunpack.c.l.b16 %v4003
    %v4959 = vunpack.c.h.b16 %v4003
    %v4960 = vunpack.c.l.b16 %v4004
    %v4961 = vunpack.c.h.b16 %v4004
    %v4962 = vunpack.c.l.b16 %v4005
    %v4963 = vunpack.c.h.b16 %v4005
    %v4964 = vunpack.c.l.b16 %v4006
    %v4965 = vunpack.c.h.b16 %v4006
    %v4966 = vunpack.c.l.b16 %v4007
    %v4967 = vunpack.c.h.b16 %v4007
    %v4968 = vunpack.c.l.b16 %v4008
    %v4969 = vunpack.c.h.b16 %v4008
    %v4970 = vunpack.c.l.b16 %v4009
    %v4971 = vunpack.c.h.b16 %v4009
    %v4972 = vunpack.c.l.b16 %v4010
    %v4973 = vunpack.c.h.b16 %v4010
    %v4974 = vunpack.c.l.b16 %v4011
    %v4975 = vunpack.c.h.b16 %v4011
    %v4976 = vunpack.c.l.b16 %v4012
    %v4977 = vunpack.c.h.b16 %v4012
    %v4978 = vunpack.c.l.b16 %v4013
    %v4979 = vunpack.c.h.b16 %v4013
    %v4980 = vunpack.c.l.b16 %v4014
    %v4981 = vunpack.c.h.b16 %v4014
    %v4982 = vunpack.c.l.b16 %v4015
    %v4983 = vunpack.c.h.b16 %v4015
    %v4984 = vunpack.c.l.b16 %v4016
    %v4985 = vunpack.c.h.b16 %v4016
    %v4986 = vunpack.c.l.b16 %v4017
    %v4987 = vunpack.c.h.b16 %v4017
    %v4988 = vunpack.c.l.b16 %v4018
    %v4989 = vunpack.c.h.b16 %v4018
    %v4990 = vunpack.c.l.b16 %v4019
    %v4991 = vunpack.c.h.b16 %v4019
    %v4992 = vunpack.c.l.b16 %v4020
    %v4993 = vunpack.c.h.b16 %v4020
    %v4994 = vunpack.c.l.b16 %v4021
    %v4995 = vunpack.c.h.b16 %v4021
    %v4996 = vunpack.c.l.b16 %v4022
    %v4997 = vunpack.c.h.b16 %v4022
    %v4998 = vunpack.c.l.b16 %v4023
    %v4999 = vunpack.c.h.b16 %v4023
    %v5000 = vunpack.c.l.b16 %v4024
    %v5001 = vunpack.c.h.b16 %v4024
    %v5002 = vunpack.c.l.b16 %v4025
    %v5003 = vunpack.c.h.b16 %v4025
    %v5004 = vunpack.c.l.b16 %v4026
    %v5005 = vunpack.c.h.b16 %v4026
    %v5006 = vunpack.c.l.b16 %v4027
    %v5007 = vunpack.c.h.b16 %v4027
    %v5008 = vunpack.c.l.b16 %v4028
    %v5009 = vunpack.c.h.b16 %v4028
    %v5010 = vunpack.c.l.b16 %v4029
    %v5011 = vunpack.c.h.b16 %v4029
    %v5012 = vunpack.c.l.b16 %v4030
    %v5013 = vunpack.c.h.b16 %v4030
    %v5014 = vunpack.c.l.b16 %v4031
    %v5015 = vunpack.c.h.b16 %v4031
    %v5016 = vunpack.c.l.b16 %v4032
    %v5017 = vunpack.c.h.b16 %v4032
    %v5018 = vunpack.c.l.b16 %v4033
    %v5019 = vunpack.c.h.b16 %v4033
    %v5020 = vunpack.c.l.b16 %v4034
    %v5021 = vunpack.c.h.b16 %v4034
    %v5022 = vunpack.c.l.b16 %v4035
    %v5023 = vunpack.c.h.b16 %v4035
    %v5024 = vunpack.c.l.b16 %v4036
    %v5025 = vunpack.c.h.b16 %v4036
    %v5026 = vunpack.c.l.b16 %v4037
    %v5027 = vunpack.c.h.b16 %v4037
    %v5028 = vunpack.c.l.b16 %v4038
    %v5029 = vunpack.c.h.b16 %v4038
    %v5030 = vunpack.c.l.b16 %v4039
    %v5031 = vunpack.c.h.b16 %v4039
    %v5032 = vunpack.c.l.b16 %v4040
    %v5033 = vunpack.c.h.b16 %v4040
    %v5034 = vunpack.c.l.b16 %v4041
    %v5035 = vunpack.c.h.b16 %v4041
    %v5036 = vunpack.c.l.b16 %v4042
    %v5037 = vunpack.c.h.b16 %v4042
    %v5038 = vunpack.c.l.b16 %v4043
    %v5039 = vunpack.c.h.b16 %v4043
    %v5040 = vunpack.c.l.b16 %v4044
    %v5041 = vunpack.c.h.b16 %v4044
    %v5042 = vunpack.c.l.b16 %v4045
    %v5043 = vunpack.c.h.b16 %v4045
    %v5044 = vunpack.c.l.b16 %v4046
    %v5045 = vunpack.c.h.b16 %v4046
    %v5046 = vunpack.c.l.b16 %v4047
    %v5047 = vunpack.c.h.b16 %v4047
    %v5048 = vunpack.c.l.b16 %v4048
    %v5049 = vunpack.c.h.b16 %v4048
    %v5050 = vunpack.c.l.b16 %v4049
    %v5051 = vunpack.c.h.b16 %v4049
    %v5052 = vunpack.c.l.b16 %v4050
    %v5053 = vunpack.c.h.b16 %v4050
    %v5054 = vunpack.c.l.b16 %v4051
    %v5055 = vunpack.c.h.b16 %v4051
    %v5056 = vunpack.c.l.b16 %v4052
    %v5057 = vunpack.c.h.b16 %v4052
    %v5058 = vunpack.c.l.b16 %v4053
    %v5059 = vunpack.c.h.b16 %v4053
    %v5060 = vunpack.c.l.b16 %v4054
    %v5061 = vunpack.c.h.b16 %v4054
    %v5062 = vunpack.c.l.b16 %v4055
    %v5063 = vunpack.c.h.b16 %v4055
    %v5064 = vunpack.c.l.b16 %v4056
    %v5065 = vunpack.c.h.b16 %v4056
    %v5066 = vunpack.c.l.b16 %v4057
    %v5067 = vunpack.c.h.b16 %v4057
    %v5068 = vunpack.c.l.b16 %v4058
    %v5069 = vunpack.c.h.b16 %v4058
    %v5070 = vunpack.c.l.b16 %v4059
    %v5071 = vunpack.c.h.b16 %v4059
    %v5072 = vunpack.c.l.b16 %v4060
    %v5073 = vunpack.c.h.b16 %v4060
    %v5074 = vunpack.c.l.b16 %v4061
    %v5075 = vunpack.c.h.b16 %v4061
    %v5076 = vunpack.c.l.b16 %v4062
    %v5077 = vunpack.c.h.b16 %v4062
    %v5078 = vunpack.c.l.b16 %v4063
    %v5079 = vunpack.c.h.b16 %v4063
    %v5080 = vunpack.c.l.b16 %v4064
    %v5081 = vunpack.c.h.b16 %v4064
    %v5082 = vunpack.c.l.b16 %v4065
    %v5083 = vunpack.c.h.b16 %v4065
    %v5084 = vunpack.c.l.b16 %v4066
    %v5085 = vunpack.c.h.b16 %v4066
    %v5086 = vunpack.c.l.b16 %v4067
    %v5087 = vunpack.c.h.b16 %v4067
    %v5088 = vunpack.c.l.b16 %v4068
    %v5089 = vunpack.c.h.b16 %v4068
    %v5090 = vunpack.c.l.b16 %v4069
    %v5091 = vunpack.c.h.b16 %v4069
    %v5092 = vunpack.c.l.b16 %v4070
    %v5093 = vunpack.c.h.b16 %v4070
    %v5094 = vunpack.c.l.b16 %v4071
    %v5095 = vunpack.c.h.b16 %v4071
    %v5096 = vunpack.c.l.b16 %v4072
    %v5097 = vunpack.c.h.b16 %v4072
    %v5098 = vunpack.c.l.b16 %v4073
    %v5099 = vunpack.c.h.b16 %v4073
    %v5100 = vunpack.c.l.b16 %v4074
    %v5101 = vunpack.c.h.b16 %v4074
    %v5102 = vunpack.c.l.b16 %v4075
    %v5103 = vunpack.c.h.b16 %v4075
    %v5104 = vunpack.c.l.b16 %v4076
    %v5105 = vunpack.c.h.b16 %v4076
    %v5106 = vunpack.c.l.b16 %v4077
    %v5107 = vunpack.c.h.b16 %v4077
    %v5108 = vunpack.c.l.b16 %v4078
    %v5109 = vunpack.c.h.b16 %v4078
    %v5110 = vunpack.c.l.b16 %v4079
    %v5111 = vunpack.c.h.b16 %v4079
    %v5112 = vunpack.c.l.b16 %v4080
    %v5113 = vunpack.c.h.b16 %v4080
    %v5114 = vunpack.c.l.b16 %v4081
    %v5115 = vunpack.c.h.b16 %v4081
    %v5116 = vunpack.c.l.b16 %v4082
    %v5117 = vunpack.c.h.b16 %v4082
    %v5118 = vunpack.c.l.b16 %v4083
    %v5119 = vunpack.c.h.b16 %v4083
    %v5120 = vunpack.c.l.b16 %v4084
    %v5121 = vunpack.c.h.b16 %v4084
    %v5122 = vunpack.c.l.b16 %v4085
    %v5123 = vunpack.c.h.b16 %v4085
    %v5124 = vunpack.c.l.b16 %v4086
    %v5125 = vunpack.c.h.b16 %v4086
    %v5126 = vunpack.c.l.b16 %v4087
    %v5127 = vunpack.c.h.b16 %v4087
    %v5128 = vunpack.c.l.b16 %v4088
    %v5129 = vunpack.c.h.b16 %v4088
    %v5130 = vunpack.c.l.b16 %v4089
    %v5131 = vunpack.c.h.b16 %v4089
    %v5132 = vunpack.c.l.b16 %v4090
    %v5133 = vunpack.c.h.b16 %v4090
    %v5134 = vunpack.c.l.b16 %v4091
    %v5135 = vunpack.c.h.b16 %v4091
    %v5136 = vunpack.c.l.b16 %v4092
    %v5137 = vunpack.c.h.b16 %v4092
    %v5138 = vunpack.c.l.b16 %v4093
    %v5139 = vunpack.c.h.b16 %v4093
    %v5140 = vunpack.c.l.b16 %v4094
    %v5141 = vunpack.c.h.b16 %v4094
    %v5142 = vunpack.c.l.b16 %v4095
    %v5143 = vunpack.c.h.b16 %v4095
    %v5144 = vunpack.c.l.b16 %v4096
    %v5145 = vunpack.c.h.b16 %v4096
    %v5146 = vunpack.c.l.b16 %v4097
    %v5147 = vunpack.c.h.b16 %v4097
    %v5148 = vunpack.c.l.b16 %v4098
    %v5149 = vunpack.c.h.b16 %v4098
    %v5150 = vunpack.c.l.b16 %v4099
    %v5151 = vunpack.c.h.b16 %v4099
    %v5152 = vunpack.c.l.b16 %v4100
    %v5153 = vunpack.c.h.b16 %v4100
    %v5154 = vunpack.c.l.b16 %v4101
    %v5155 = vunpack.c.h.b16 %v4101
    %v5156 = vunpack.c.l.b16 %v4102
    %v5157 = vunpack.c.h.b16 %v4102
    %v5158 = vunpack.c.l.b16 %v4103
    %v5159 = vunpack.c.h.b16 %v4103
    %v5160 = vunpack.c.l.b16 %v4104
    %v5161 = vunpack.c.h.b16 %v4104
    %v5162 = vunpack.c.l.b16 %v4105
    %v5163 = vunpack.c.h.b16 %v4105
    %v5164 = vunpack.c.l.b16 %v4106
    %v5165 = vunpack.c.h.b16 %v4106
    %v5166 = vunpack.c.l.b16 %v4107
    %v5167 = vunpack.c.h.b16 %v4107
    %v5168 = vunpack.c.l.b16 %v4108
    %v5169 = vunpack.c.h.b16 %v4108
    %v5170 = vunpack.c.l.b16 %v4109
    %v5171 = vunpack.c.h.b16 %v4109
    %v5172 = vunpack.c.l.b16 %v4110
    %v5173 = vunpack.c.h.b16 %v4110
    %v5174 = vunpack.c.l.b16 %v4111
    %v5175 = vunpack.c.h.b16 %v4111
    %v5176 = vunpack.c.l.b16 %v4112
    %v5177 = vunpack.c.h.b16 %v4112
    %v5178 = vunpack.c.l.b16 %v4113
    %v5179 = vunpack.c.h.b16 %v4113
    %v5180 = vunpack.c.l.b16 %v4114
    %v5181 = vunpack.c.h.b16 %v4114
    %v5182 = vunpack.c.l.b16 %v4115
    %v5183 = vunpack.c.h.b16 %v4115
    %v5184 = vunpack.c.l.b16 %v4116
    %v5185 = vunpack.c.h.b16 %v4116
    %v5186 = vunpack.c.l.b16 %v4117
    %v5187 = vunpack.c.h.b16 %v4117
    %v5188 = vunpack.c.l.b16 %v4118
    %v5189 = vunpack.c.h.b16 %v4118
    %v5190 = vunpack.c.l.b16 %v4119
    %v5191 = vunpack.c.h.b16 %v4119
    %v5192 = vunpack.c.l.b16 %v4120
    %v5193 = vunpack.c.h.b16 %v4120
    %v5194 = vunpack.c.l.b16 %v4121
    %v5195 = vunpack.c.h.b16 %v4121
    %v5196 = vunpack.c.l.b16 %v4122
    %v5197 = vunpack.c.h.b16 %v4122
    %v5198 = vunpack.c.l.b16 %v4123
    %v5199 = vunpack.c.h.b16 %v4123
    %v5200 = vunpack.c.l.b16 %v4124
    %v5201 = vunpack.c.h.b16 %v4124
    %v5202 = vunpack.c.l.b16 %v4125
    %v5203 = vunpack.c.h.b16 %v4125
    %v5204 = vunpack.c.l.b16 %v4126
    %v5205 = vunpack.c.h.b16 %v4126
    %v5206 = vunpack.c.l.b16 %v4127
    %v5207 = vunpack.c.h.b16 %v4127
    %v5208 = vunpack.c.l.b16 %v4128
    %v5209 = vunpack.c.h.b16 %v4128
    %v5210 = vunpack.c.l.b16 %v4129
    %v5211 = vunpack.c.h.b16 %v4129
    %v5212 = vunpack.c.l.b16 %v4130
    %v5213 = vunpack.c.h.b16 %v4130
    %v5214 = vunpack.c.l.b16 %v4131
    %v5215 = vunpack.c.h.b16 %v4131
    %v5216 = vunpack.c.l.b16 %v4132
    %v5217 = vunpack.c.h.b16 %v4132
    %v5218 = vunpack.c.l.b16 %v4133
    %v5219 = vunpack.c.h.b16 %v4133
    %v5220 = vunpack.c.l.b16 %v4134
    %v5221 = vunpack.c.h.b16 %v4134
    %v5222 = vunpack.c.l.b16 %v4135
    %v5223 = vunpack.c.h.b16 %v4135
    %v5224 = vunpack.c.l.b16 %v4136
    %v5225 = vunpack.c.h.b16 %v4136
    %v5226 = vunpack.c.l.b16 %v4137
    %v5227 = vunpack.c.h.b16 %v4137
    %v5228 = vunpack.c.l.b16 %v4138
    %v5229 = vunpack.c.h.b16 %v4138
    %v5230 = vunpack.c.l.b16 %v4139
    %v5231 = vunpack.c.h.b16 %v4139
    %v5232 = vunpack.c.l.b16 %v4140
    %v5233 = vunpack.c.h.b16 %v4140
    %v5234 = vunpack.c.l.b16 %v4141
    %v5235 = vunpack.c.h.b16 %v4141
    %v5236 = vunpack.c.l.b16 %v4142
    %v5237 = vunpack.c.h.b16 %v4142
    %v5238 = vunpack.c.l.b16 %v4143
    %v5239 = vunpack.c.h.b16 %v4143
    %v5240 = vunpack.c.l.b16 %v4144
    %v5241 = vunpack.c.h.b16 %v4144
    %v5242 = vunpack.c.l.b16 %v4145
    %v5243 = vunpack.c.h.b16 %v4145
    %v5244 = vunpack.c.l.b16 %v4146
    %v5245 = vunpack.c.h.b16 %v4146
    %v5246 = vunpack.c.l.b16 %v4147
    %v5247 = vunpack.c.h.b16 %v4147
    %v5248 = vunpack.c.l.b16 %v4148
    %v5249 = vunpack.c.h.b16 %v4148
    %v5250 = vunpack.c.l.b16 %v4149
    %v5251 = vunpack.c.h.b16 %v4149
    %v5252 = vunpack.c.l.b16 %v4150
    %v5253 = vunpack.c.h.b16 %v4150
    %v5254 = vunpack.c.l.b16 %v4151
    %v5255 = vunpack.c.h.b16 %v4151
    %v5256 = vunpack.c.l.b16 %v4152
    %v5257 = vunpack.c.h.b16 %v4152
    %v5258 = vunpack.c.l.b16 %v4153
    %v5259 = vunpack.c.h.b16 %v4153
    %v5260 = vunpack.c.l.b16 %v4154
    %v5261 = vunpack.c.h.b16 %v4154
    %v5262 = vunpack.c.l.b16 %v4155
    %v5263 = vunpack.c.h.b16 %v4155
    %v5264 = vunpack.c.l.b16 %v4156
    %v5265 = vunpack.c.h.b16 %v4156
    %v5266 = vunpack.c.l.b16 %v4157
    %v5267 = vunpack.c.h.b16 %v4157
    %v5268 = vunpack.c.l.b16 %v4158
    %v5269 = vunpack.c.h.b16 %v4158
    %v5270 = vunpack.c.l.b16 %v4159
    %v5271 = vunpack.c.h.b16 %v4159
    %v5272 = vunpack.c.l.b16 %v4160
    %v5273 = vunpack.c.h.b16 %v4160
    %v5274 = vunpack.c.l.b16 %v4161
    %v5275 = vunpack.c.h.b16 %v4161
    %v5276 = vunpack.c.l.b16 %v4162
    %v5277 = vunpack.c.h.b16 %v4162
    %v5278 = vunpack.c.l.b16 %v4163
    %v5279 = vunpack.c.h.b16 %v4163
    %v5280 = vunpack.c.l.b16 %v4164
    %v5281 = vunpack.c.h.b16 %v4164
    %v5282 = vunpack.c.l.b16 %v4165
    %v5283 = vunpack.c.h.b16 %v4165
    %v5284 = vunpack.c.l.b16 %v4166
    %v5285 = vunpack.c.h.b16 %v4166
    %v5286 = vunpack.c.l.b16 %v4167
    %v5287 = vunpack.c.h.b16 %v4167
    %v5288 = vunpack.c.l.b16 %v4168
    %v5289 = vunpack.c.h.b16 %v4168
    %v5290 = vunpack.c.l.b16 %v4169
    %v5291 = vunpack.c.h.b16 %v4169
    %v5292 = vunpack.c.l.b16 %v4170
    %v5293 = vunpack.c.h.b16 %v4170
    %v5294 = vunpack.c.l.b16 %v4171
    %v5295 = vunpack.c.h.b16 %v4171
    %v5296 = vunpack.c.l.b16 %v4172
    %v5297 = vunpack.c.h.b16 %v4172
    %v5298 = vunpack.c.l.b16 %v4173
    %v5299 = vunpack.c.h.b16 %v4173
    %v5300 = vunpack.c.l.b16 %v4174
    %v5301 = vunpack.c.h.b16 %v4174
    %v5302 = vunpack.c.l.b16 %v4175
    %v5303 = vunpack.c.h.b16 %v4175
    %v5304 = vunpack.c.l.b16 %v4176
    %v5305 = vunpack.c.h.b16 %v4176
    %v5306 = vunpack.c.l.b16 %v4177
    %v5307 = vunpack.c.h.b16 %v4177
    %v5308 = vunpack.c.l.b16 %v4178
    %v5309 = vunpack.c.h.b16 %v4178
    %v5310 = vunpack.c.l.b16 %v4179
    %v5311 = vunpack.c.h.b16 %v4179
    %v5312 = vunpack.c.l.b16 %v4180
    %v5313 = vunpack.c.h.b16 %v4180
    %v5314 = vunpack.c.l.b16 %v4181
    %v5315 = vunpack.c.h.b16 %v4181
    %v5316 = vunpack.c.l.b16 %v4182
    %v5317 = vunpack.c.h.b16 %v4182
    %v5318 = vunpack.c.l.b16 %v4183
    %v5319 = vunpack.c.h.b16 %v4183
    %v5320 = vunpack.c.l.b16 %v4184
    %v5321 = vunpack.c.h.b16 %v4184
    %v5322 = vunpack.c.l.b16 %v4185
    %v5323 = vunpack.c.h.b16 %v4185
    %v5324 = vunpack.c.l.b16 %v4186
    %v5325 = vunpack.c.h.b16 %v4186
    %v5326 = vunpack.c.l.b16 %v4187
    %v5327 = vunpack.c.h.b16 %v4187
    %v5328 = vunpack.c.l.b16 %v4188
    %v5329 = vunpack.c.h.b16 %v4188
    %v5330 = vunpack.c.l.b16 %v4189
    %v5331 = vunpack.c.h.b16 %v4189
    %v5332 = vunpack.c.l.b16 %v4190
    %v5333 = vunpack.c.h.b16 %v4190
    %v5334 = vunpack.c.l.b16 %v4191
    %v5335 = vunpack.c.h.b16 %v4191
    %v5336 = vunpack.c.l.b16 %v4192
    %v5337 = vunpack.c.h.b16 %v4192
    %v5338 = vunpack.c.l.b16 %v4193
    %v5339 = vunpack.c.h.b16 %v4193
    %v5340 = vunpack.c.l.b16 %v4194
    %v5341 = vunpack.c.h.b16 %v4194
    %v5342 = vunpack.c.l.b16 %v4195
    %v5343 = vunpack.c.h.b16 %v4195
    %v5344 = vunpack.c.l.b16 %v4196
    %v5345 = vunpack.c.h.b16 %v4196
    %v5346 = vunpack.c.l.b16 %v4197
    %v5347 = vunpack.c.h.b16 %v4197
    %v5348 = vunpack.c.l.b16 %v4198
    %v5349 = vunpack.c.h.b16 %v4198
    %v5350 = vunpack.c.l.b16 %v4199
    %v5351 = vunpack.c.h.b16 %v4199
    %v5352 = vunpack.c.l.b16 %v4200
    %v5353 = vunpack.c.h.b16 %v4200
    %v5354 = vunpack.c.l.b16 %v4201
    %v5355 = vunpack.c.h.b16 %v4201
    %v5356 = vunpack.c.l.b16 %v4202
    %v5357 = vunpack.c.h.b16 %v4202
    %v5358 = vunpack.c.l.b16 %v4203
    %v5359 = vunpack.c.h.b16 %v4203
    %v5360 = vunpack.c.l.b16 %v4204
    %v5361 = vunpack.c.h.b16 %v4204
    %v5362 = vunpack.c.l.b16 %v4205
    %v5363 = vunpack.c.h.b16 %v4205
    %v5364 = vunpack.c.l.b16 %v4206
    %v5365 = vunpack.c.h.b16 %v4206
    %v5366 = vunpack.c.l.b16 %v4207
    %v5367 = vunpack.c.h.b16 %v4207
    %v5368 = vunpack.c.l.b16 %v4208
    %v5369 = vunpack.c.h.b16 %v4208
    %v5370 = vunpack.c.l.b16 %v4209
    %v5371 = vunpack.c.h.b16 %v4209
    %v5372 = vunpack.c.l.b16 %v4210
    %v5373 = vunpack.c.h.b16 %v4210
    %v5374 = vunpack.c.l.b16 %v4211
    %v5375 = vunpack.c.h.b16 %v4211
    %v5376 = vunpack.c.l.b16 %v4212
    %v5377 = vunpack.c.h.b16 %v4212
    %v5378 = vunpack.c.l.b16 %v4213
    %v5379 = vunpack.c.h.b16 %v4213
    %v5380 = vunpack.c.l.b16 %v4214
    %v5381 = vunpack.c.h.b16 %v4214
    %v5382 = vunpack.c.l.b16 %v4215
    %v5383 = vunpack.c.h.b16 %v4215
    %v5384 = vunpack.c.l.b16 %v4216
    %v5385 = vunpack.c.h.b16 %v4216
    %v5386 = vunpack.c.l.b16 %v4217
    %v5387 = vunpack.c.h.b16 %v4217
    %v5388 = vunpack.c.l.b16 %v4218
    %v5389 = vunpack.c.h.b16 %v4218
    %v5390 = vunpack.c.l.b16 %v4219
    %v5391 = vunpack.c.h.b16 %v4219
    %v5392 = vunpack.c.l.b16 %v4220
    %v5393 = vunpack.c.h.b16 %v4220
    %v5394 = vunpack.c.l.b16 %v4221
    %v5395 = vunpack.c.h.b16 %v4221
    %v5396 = vunpack.c.l.b16 %v4222
    %v5397 = vunpack.c.h.b16 %v4222
    %v5398 = vunpack.c.l.b16 %v4223
    %v5399 = vunpack.c.h.b16 %v4223
    %v5400 = vunpack.c.l.b16 %v4224
    %v5401 = vunpack.c.h.b16 %v4224
    %v5402 = vunpack.c.l.b16 %v4225
    %v5403 = vunpack.c.h.b16 %v4225
    %v5404 = vpack.c.b16 %v4648, %v4636
    %v5405 = vpack.c.b16 %v4649, %v4637
    %v5406 = vpack.c.b16 %v4650, %v4638
    %v5407 = vpack.c.b16 %v4651, %v4639
    %v5408 = vpack.c.b16 %v4652, %v4640
    %v5409 = vpack.c.b16 %v4653, %v4641
    %v5410 = vpack.c.b16 %v4654, %v4642
    %v5411 = vpack.c.b16 %v4655, %v4643
    %v5412 = vpack.c.b16 %v4656, %v4644
    %v5413 = vpack.c.b16 %v4657, %v4645
    %v5414 = vpack.c.b16 %v4658, %v4646
    %v5415 = vpack.c.b16 %v4659, %v4647
    %v5416 = vpack.c.b16 %v4672, %v4660
    %v5417 = vpack.c.b16 %v4673, %v4661
    %v5418 = vpack.c.b16 %v4674, %v4662
    %v5419 = vpack.c.b16 %v4675, %v4663
    %v5420 = vpack.c.b16 %v4676, %v4664
    %v5421 = vpack.c.b16 %v4677, %v4665
    %v5422 = vpack.c.b16 %v4678, %v4666
    %v5423 = vpack.c.b16 %v4679, %v4667
    %v5424 = vpack.c.b16 %v4680, %v4668
    %v5425 = vpack.c.b16 %v4681, %v4669
    %v5426 = vpack.c.b16 %v4682, %v4670
    %v5427 = vpack.c.b16 %v4683, %v4671
    %v5428 = vpack.c.b16 %v4696, %v4684
    %v5429 = vpack.c.b16 %v4697, %v4685
    %v5430 = vpack.c.b16 %v4698, %v4686
    %v5431 = vpack.c.b16 %v4699, %v4687
    %v5432 = vpack.c.b16 %v4700, %v4688
    %v5433 = vpack.c.b16 %v4701, %v4689
    %v5434 = vpack.c.b16 %v4702, %v4690
    %v5435 = vpack.c.b16 %v4703, %v4691
    %v5436 = vpack.c.b16 %v4704, %v4692
    %v5437 = vpack.c.b16 %v4705, %v4693
    %v5438 = vpack.c.b16 %v4706, %v4694
    %v5439 = vpack.c.b16 %v4707, %v4695
    %v5440 = vpack.c.b16 %v4720, %v4708
    %v5441 = vpack.c.b16 %v4721, %v4709
    %v5442 = vpack.c.b16 %v4722, %v4710
    %v5443 = vpack.c.b16 %v4723, %v4711
    %v5444 = vpack.c.b16 %v4724, %v4712
    %v5445 = vpack.c.b16 %v4725, %v4713
    %v5446 = vpack.c.b16 %v4726, %v4714
    %v5447 = vpack.c.b16 %v4727, %v4715
    %v5448 = vpack.c.b16 %v4728, %v4716
    %v5449 = vpack.c.b16 %v4729, %v4717
    %v5450 = vpack.c.b16 %v4730, %v4718
    %v5451 = vpack.c.b16 %v4731, %v4719
    %v5452 = vpack.c.b16 %v4744, %v4732
    %v5453 = vpack.c.b16 %v4745, %v4733
    %v5454 = vpack.c.b16 %v4746, %v4734
    %v5455 = vpack.c.b16 %v4747, %v4735
    %v5456 = vpack.c.b16 %v4748, %v4736
    %v5457 = vpack.c.b16 %v4749, %v4737
    %v5458 = vpack.c.b16 %v4750, %v4738
    %v5459 = vpack.c.b16 %v4751, %v4739
    %v5460 = vpack.c.b16 %v4752, %v4740
    %v5461 = vpack.c.b16 %v4753, %v4741
    %v5462 = vpack.c.b16 %v4754, %v4742
    %v5463 = vpack.c.b16 %v4755, %v4743
    %v5464 = vpack.c.b16 %v4768, %v4756
    %v5465 = vpack.c.b16 %v4769, %v4757
    %v5466 = vpack.c.b16 %v4770, %v4758
    %v5467 = vpack.c.b16 %v4771, %v4759
    %v5468 = vpack.c.b16 %v4772, %v4760
    %v5469 = vpack.c.b16 %v4773, %v4761
    %v5470 = vpack.c.b16 %v4774, %v4762
    %v5471 = vpack.c.b16 %v4775, %v4763
    %v5472 = vpack.c.b16 %v4776, %v4764
    %v5473 = vpack.c.b16 %v4777, %v4765
    %v5474 = vpack.c.b16 %v4778, %v4766
    %v5475 = vpack.c.b16 %v4779, %v4767
    %v5476 = vpack.c.b16 %v4792, %v4780
    %v5477 = vpack.c.b16 %v4793, %v4781
    %v5478 = vpack.c.b16 %v4794, %v4782
    %v5479 = vpack.c.b16 %v4795, %v4783
    %v5480 = vpack.c.b16 %v4796, %v4784
    %v5481 = vpack.c.b16 %v4797, %v4785
    %v5482 = vpack.c.b16 %v4798, %v4786
    %v5483 = vpack.c.b16 %v4799, %v4787
    %v5484 = vpack.c.b16 %v4800, %v4788
    %v5485 = vpack.c.b16 %v4801, %v4789
    %v5486 = vpack.c.b16 %v4802, %v4790
    %v5487 = vpack.c.b16 %v4803, %v4791
    %v5488 = vpack.c.b16 %v4816, %v4804
    %v5489 = vpack.c.b16 %v4817, %v4805
    %v5490 = vpack.c.b16 %v4818, %v4806
    %v5491 = vpack.c.b16 %v4819, %v4807
    %v5492 = vpack.c.b16 %v4820, %v4808
    %v5493 = vpack.c.b16 %v4821, %v4809
    %v5494 = vpack.c.b16 %v4822, %v4810
    %v5495 = vpack.c.b16 %v4823, %v4811
    %v5496 = vpack.c.b16 %v4824, %v4812
    %v5497 = vpack.c.b16 %v4825, %v4813
    %v5498 = vpack.c.b16 %v4826, %v4814
    %v5499 = vpack.c.b16 %v4827, %v4815
    %v5500 = vpack.c.b16 %v4840, %v4828
    %v5501 = vpack.c.b16 %v4841, %v4829
    %v5502 = vpack.c.b16 %v4842, %v4830
    %v5503 = vpack.c.b16 %v4843, %v4831
    %v5504 = vpack.c.b16 %v4844, %v4832
    %v5505 = vpack.c.b16 %v4845, %v4833
    %v5506 = vpack.c.b16 %v4846, %v4834
    %v5507 = vpack.c.b16 %v4847, %v4835
    %v5508 = vpack.c.b16 %v4848, %v4836
    %v5509 = vpack.c.b16 %v4849, %v4837
    %v5510 = vpack.c.b16 %v4850, %v4838
    %v5511 = vpack.c.b16 %v4851, %v4839
    %v5512 = vpack.c.b16 %v4864, %v4852
    %v5513 = vpack.c.b16 %v4865, %v4853
    %v5514 = vpack.c.b16 %v4866, %v4854
    %v5515 = vpack.c.b16 %v4867, %v4855
    %v5516 = vpack.c.b16 %v4868, %v4856
    %v5517 = vpack.c.b16 %v4869, %v4857
    %v5518 = vpack.c.b16 %v4870, %v4858
    %v5519 = vpack.c.b16 %v4871, %v4859
    %v5520 = vpack.c.b16 %v4872, %v4860
    %v5521 = vpack.c.b16 %v4873, %v4861
    %v5522 = vpack.c.b16 %v4874, %v4862
    %v5523 = vpack.c.b16 %v4875, %v4863
    %v5524 = vpack.c.b16 %v4888, %v4876
    %v5525 = vpack.c.b16 %v4889, %v4877
    %v5526 = vpack.c.b16 %v4890, %v4878
    %v5527 = vpack.c.b16 %v4891, %v4879
    %v5528 = vpack.c.b16 %v4892, %v4880
    %v5529 = vpack.c.b16 %v4893, %v4881
    %v5530 = vpack.c.b16 %v4894, %v4882
    %v5531 = vpack.c.b16 %v4895, %v4883
    %v5532 = vpack.c.b16 %v4896, %v4884
    %v5533 = vpack.c.b16 %v4897, %v4885
    %v5534 = vpack.c.b16 %v4898, %v4886
    %v5535 = vpack.c.b16 %v4899, %v4887
    %v5536 = vpack.c.b16 %v4912, %v4900
    %v5537 = vpack.c.b16 %v4913, %v4901
    %v5538 = vpack.c.b16 %v4914, %v4902
    %v5539 = vpack.c.b16 %v4915, %v4903
    %v5540 = vpack.c.b16 %v4916, %v4904
    %v5541 = vpack.c.b16 %v4917, %v4905
    %v5542 = vpack.c.b16 %v4918, %v4906
    %v5543 = vpack.c.b16 %v4919, %v4907
    %v5544 = vpack.c.b16 %v4920, %v4908
    %v5545 = vpack.c.b16 %v4921, %v4909
    %v5546 = vpack.c.b16 %v4922, %v4910
    %v5547 = vpack.c.b16 %v4923, %v4911
    %v5548 = vpack.c.b16 %v4936, %v4924
    %v5549 = vpack.c.b16 %v4937, %v4925
    %v5550 = vpack.c.b16 %v4938, %v4926
    %v5551 = vpack.c.b16 %v4939, %v4927
    %v5552 = vpack.c.b16 %v4940, %v4928
    %v5553 = vpack.c.b16 %v4941, %v4929
    %v5554 = vpack.c.b16 %v4942, %v4930
    %v5555 = vpack.c.b16 %v4943, %v4931
    %v5556 = vpack.c.b16 %v4944, %v4932
    %v5557 = vpack.c.b16 %v4945, %v4933
    %v5558 = vpack.c.b16 %v4946, %v4934
    %v5559 = vpack.c.b16 %v4947, %v4935
    %v5560 = vpack.c.b16 %v4960, %v4948
    %v5561 = vpack.c.b16 %v4961, %v4949
    %v5562 = vpack.c.b16 %v4962, %v4950
    %v5563 = vpack.c.b16 %v4963, %v4951
    %v5564 = vpack.c.b16 %v4964, %v4952
    %v5565 = vpack.c.b16 %v4965, %v4953
    %v5566 = vpack.c.b16 %v4966, %v4954
    %v5567 = vpack.c.b16 %v4967, %v4955
    %v5568 = vpack.c.b16 %v4968, %v4956
    %v5569 = vpack.c.b16 %v4969, %v4957
    %v5570 = vpack.c.b16 %v4970, %v4958
    %v5571 = vpack.c.b16 %v4971, %v4959
    %v5572 = vpack.c.b16 %v4984, %v4972
    %v5573 = vpack.c.b16 %v4985, %v4973
    %v5574 = vpack.c.b16 %v4986, %v4974
    %v5575 = vpack.c.b16 %v4987, %v4975
    %v5576 = vpack.c.b16 %v4988, %v4976
    %v5577 = vpack.c.b16 %v4989, %v4977
    %v5578 = vpack.c.b16 %v4990, %v4978
    %v5579 = vpack.c.b16 %v4991, %v4979
    %v5580 = vpack.c.b16 %v4992, %v4980
    %v5581 = vpack.c.b16 %v4993, %v4981
    %v5582 = vpack.c.b16 %v4994, %v4982
    %v5583 = vpack.c.b16 %v4995, %v4983
    %v5584 = vpack.c.b16 %v5008, %v4996
    %v5585 = vpack.c.b16 %v5009, %v4997
    %v5586 = vpack.c.b16 %v5010, %v4998
    %v5587 = vpack.c.b16 %v5011, %v4999
    %v5588 = vpack.c.b16 %v5012, %v5000
    %v5589 = vpack.c.b16 %v5013, %v5001
    %v5590 = vpack.c.b16 %v5014, %v5002
    %v5591 = vpack.c.b16 %v5015, %v5003
    %v5592 = vpack.c.b16 %v5016, %v5004
    %v5593 = vpack.c.b16 %v5017, %v5005
    %v5594 = vpack.c.b16 %v5018, %v5006
    %v5595 = vpack.c.b16 %v5019, %v5007
    %v5596 = vpack.c.b16 %v5032, %v5020
    %v5597 = vpack.c.b16 %v5033, %v5021
    %v5598 = vpack.c.b16 %v5034, %v5022
    %v5599 = vpack.c.b16 %v5035, %v5023
    %v5600 = vpack.c.b16 %v5036, %v5024
    %v5601 = vpack.c.b16 %v5037, %v5025
    %v5602 = vpack.c.b16 %v5038, %v5026
    %v5603 = vpack.c.b16 %v5039, %v5027
    %v5604 = vpack.c.b16 %v5040, %v5028
    %v5605 = vpack.c.b16 %v5041, %v5029
    %v5606 = vpack.c.b16 %v5042, %v5030
    %v5607 = vpack.c.b16 %v5043, %v5031
    %v5608 = vpack.c.b16 %v5056, %v5044
    %v5609 = vpack.c.b16 %v5057, %v5045
    %v5610 = vpack.c.b16 %v5058, %v5046
    %v5611 = vpack.c.b16 %v5059, %v5047
    %v5612 = vpack.c.b16 %v5060, %v5048
    %v5613 = vpack.c.b16 %v5061, %v5049
    %v5614 = vpack.c.b16 %v5062, %v5050
    %v5615 = vpack.c.b16 %v5063, %v5051
    %v5616 = vpack.c.b16 %v5064, %v5052
    %v5617 = vpack.c.b16 %v5065, %v5053
    %v5618 = vpack.c.b16 %v5066, %v5054
    %v5619 = vpack.c.b16 %v5067, %v5055
    %v5620 = vpack.c.b16 %v5080, %v5068
    %v5621 = vpack.c.b16 %v5081, %v5069
    %v5622 = vpack.c.b16 %v5082, %v5070
    %v5623 = vpack.c.b16 %v5083, %v5071
    %v5624 = vpack.c.b16 %v5084, %v5072
    %v5625 = vpack.c.b16 %v5085, %v5073
    %v5626 = vpack.c.b16 %v5086, %v5074
    %v5627 = vpack.c.b16 %v5087, %v5075
    %v5628 = vpack.c.b16 %v5088, %v5076
    %v5629 = vpack.c.b16 %v5089, %v5077
    %v5630 = vpack.c.b16 %v5090, %v5078
    %v5631 = vpack.c.b16 %v5091, %v5079
    %v5632 = vpack.c.b16 %v5104, %v5092
    %v5633 = vpack.c.b16 %v5105, %v5093
    %v5634 = vpack.c.b16 %v5106, %v5094
    %v5635 = vpack.c.b16 %v5107, %v5095
    %v5636 = vpack.c.b16 %v5108, %v5096
    %v5637 = vpack.c.b16 %v5109, %v5097
    %v5638 = vpack.c.b16 %v5110, %v5098
    %v5639 = vpack.c.b16 %v5111, %v5099
    %v5640 = vpack.c.b16 %v5112, %v5100
    %v5641 = vpack.c.b16 %v5113, %v5101
    %v5642 = vpack.c.b16 %v5114, %v5102
    %v5643 = vpack.c.b16 %v5115, %v5103
    %v5644 = vpack.c.b16 %v5128, %v5116
    %v5645 = vpack.c.b16 %v5129, %v5117
    %v5646 = vpack.c.b16 %v5130, %v5118
    %v5647 = vpack.c.b16 %v5131, %v5119
    %v5648 = vpack.c.b16 %v5132, %v5120
    %v5649 = vpack.c.b16 %v5133, %v5121
    %v5650 = vpack.c.b16 %v5134, %v5122
    %v5651 = vpack.c.b16 %v5135, %v5123
    %v5652 = vpack.c.b16 %v5136, %v5124
    %v5653 = vpack.c.b16 %v5137, %v5125
    %v5654 = vpack.c.b16 %v5138, %v5126
    %v5655 = vpack.c.b16 %v5139, %v5127
    %v5656 = vpack.c.b16 %v5152, %v5140
    %v5657 = vpack.c.b16 %v5153, %v5141
    %v5658 = vpack.c.b16 %v5154, %v5142
    %v5659 = vpack.c.b16 %v5155, %v5143
    %v5660 = vpack.c.b16 %v5156, %v5144
    %v5661 = vpack.c.b16 %v5157, %v5145
    %v5662 = vpack.c.b16 %v5158, %v5146
    %v5663 = vpack.c.b16 %v5159, %v5147
    %v5664 = vpack.c.b16 %v5160, %v5148
    %v5665 = vpack.c.b16 %v5161, %v5149
    %v5666 = vpack.c.b16 %v5162, %v5150
    %v5667 = vpack.c.b16 %v5163, %v5151
    %v5668 = vpack.c.b16 %v5176, %v5164
    %v5669 = vpack.c.b16 %v5177, %v5165
    %v5670 = vpack.c.b16 %v5178, %v5166
    %v5671 = vpack.c.b16 %v5179, %v5167
    %v5672 = vpack.c.b16 %v5180, %v5168
    %v5673 = vpack.c.b16 %v5181, %v5169
    %v5674 = vpack.c.b16 %v5182, %v5170
    %v5675 = vpack.c.b16 %v5183, %v5171
    %v5676 = vpack.c.b16 %v5184, %v5172
    %v5677 = vpack.c.b16 %v5185, %v5173
    %v5678 = vpack.c.b16 %v5186, %v5174
    %v5679 = vpack.c.b16 %v5187, %v5175
    %v5680 = vpack.c.b16 %v5200, %v5188
    %v5681 = vpack.c.b16 %v5201, %v5189
    %v5682 = vpack.c.b16 %v5202, %v5190
    %v5683 = vpack.c.b16 %v5203, %v5191
    %v5684 = vpack.c.b16 %v5204, %v5192
    %v5685 = vpack.c.b16 %v5205, %v5193
    %v5686 = vpack.c.b16 %v5206, %v5194
    %v5687 = vpack.c.b16 %v5207, %v5195
    %v5688 = vpack.c.b16 %v5208, %v5196
    %v5689 = vpack.c.b16 %v5209, %v5197
    %v5690 = vpack.c.b16 %v5210, %v5198
    %v5691 = vpack.c.b16 %v5211, %v5199
    %v5692 = vpack.c.b16 %v5224, %v5212
    %v5693 = vpack.c.b16 %v5225, %v5213
    %v5694 = vpack.c.b16 %v5226, %v5214
    %v5695 = vpack.c.b16 %v5227, %v5215
    %v5696 = vpack.c.b16 %v5228, %v5216
    %v5697 = vpack.c.b16 %v5229, %v5217
    %v5698 = vpack.c.b16 %v5230, %v5218
    %v5699 = vpack.c.b16 %v5231, %v5219
    %v5700 = vpack.c.b16 %v5232, %v5220
    %v5701 = vpack.c.b16 %v5233, %v5221
    %v5702 = vpack.c.b16 %v5234, %v5222
    %v5703 = vpack.c.b16 %v5235, %v5223
    %v5704 = vpack.c.b16 %v5248, %v5236
    %v5705 = vpack.c.b16 %v5249, %v5237
    %v5706 = vpack.c.b16 %v5250, %v5238
    %v5707 = vpack.c.b16 %v5251, %v5239
    %v5708 = vpack.c.b16 %v5252, %v5240
    %v5709 = vpack.c.b16 %v5253, %v5241
    %v5710 = vpack.c.b16 %v5254, %v5242
    %v5711 = vpack.c.b16 %v5255, %v5243
    %v5712 = vpack.c.b16 %v5256, %v5244
    %v5713 = vpack.c.b16 %v5257, %v5245
    %v5714 = vpack.c.b16 %v5258, %v5246
    %v5715 = vpack.c.b16 %v5259, %v5247
    %v5716 = vpack.c.b16 %v5272, %v5260
    %v5717 = vpack.c.b16 %v5273, %v5261
    %v5718 = vpack.c.b16 %v5274, %v5262
    %v5719 = vpack.c.b16 %v5275, %v5263
    %v5720 = vpack.c.b16 %v5276, %v5264
    %v5721 = vpack.c.b16 %v5277, %v5265
    %v5722 = vpack.c.b16 %v5278, %v5266
    %v5723 = vpack.c.b16 %v5279, %v5267
    %v5724 = vpack.c.b16 %v5280, %v5268
    %v5725 = vpack.c.b16 %v5281, %v5269
    %v5726 = vpack.c.b16 %v5282, %v5270
    %v5727 = vpack.c.b16 %v5283, %v5271
    %v5728 = vpack.c.b16 %v5296, %v5284
    %v5729 = vpack.c.b16 %v5297, %v5285
    %v5730 = vpack.c.b16 %v5298, %v5286
    %v5731 = vpack.c.b16 %v5299, %v5287
    %v5732 = vpack.c.b16 %v5300, %v5288
    %v5733 = vpack.c.b16 %v5301, %v5289
    %v5734 = vpack.c.b16 %v5302, %v5290
    %v5735 = vpack.c.b16 %v5303, %v5291
    %v5736 = vpack.c.b16 %v5304, %v5292
    %v5737 = vpack.c.b16 %v5305, %v5293
    %v5738 = vpack.c.b16 %v5306, %v5294
    %v5739 = vpack.c.b16 %v5307, %v5295
    %v5740 = vpack.c.b16 %v5320, %v5308
    %v5741 = vpack.c.b16 %v5321, %v5309
    %v5742 = vpack.c.b16 %v5322, %v5310
    %v5743 = vpack.c.b16 %v5323, %v5311
    %v5744 = vpack.c.b16 %v5324, %v5312
    %v5745 = vpack.c.b16 %v5325, %v5313
    %v5746 = vpack.c.b16 %v5326, %v5314
    %v5747 = vpack.c.b16 %v5327, %v5315
    %v5748 = vpack.c.b16 %v5328, %v5316
    %v5749 = vpack.c.b16 %v5329, %v5317
    %v5750 = vpack.c.b16 %v5330, %v5318
    %v5751 = vpack.c.b16 %v5331, %v5319
    %v5752 = vpack.c.b16 %v5344, %v5332
    %v5753 = vpack.c.b16 %v5345, %v5333
    %v5754 = vpack.c.b16 %v5346, %v5334
    %v5755 = vpack.c.b16 %v5347, %v5335
    %v5756 = vpack.c.b16 %v5348, %v5336
    %v5757 = vpack.c.b16 %v5349, %v5337
    %v5758 = vpack.c.b16 %v5350, %v5338
    %v5759 = vpack.c.b16 %v5351, %v5339
    %v5760 = vpack.c.b16 %v5352, %v5340
    %v5761 = vpack.c.b16 %v5353, %v5341
    %v5762 = vpack.c.b16 %v5354, %v5342
    %v5763 = vpack.c.b16 %v5355, %v5343
    %v5764 = vpack.c.b16 %v5368, %v5356
    %v5765 = vpack.c.b16 %v5369, %v5357
    %v5766 = vpack.c.b16 %v5370, %v5358
    %v5767 = vpack.c.b16 %v5371, %v5359
    %v5768 = vpack.c.b16 %v5372, %v5360
    %v5769 = vpack.c.b16 %v5373, %v5361
    %v5770 = vpack.c.b16 %v5374, %v5362
    %v5771 = vpack.c.b16 %v5375, %v5363
    %v5772 = vpack.c.b16 %v5376, %v5364
    %v5773 = vpack.c.b16 %v5377, %v5365
    %v5774 = vpack.c.b16 %v5378, %v5366
    %v5775 = vpack.c.b16 %v5379, %v5367
    %v5776 = vpack.c.b16 %v5392, %v5380
    %v5777 = vpack.c.b16 %v5393, %v5381
    %v5778 = vpack.c.b16 %v5394, %v5382
    %v5779 = vpack.c.b16 %v5395, %v5383
    %v5780 = vpack.c.b16 %v5396, %v5384
    %v5781 = vpack.c.b16 %v5397, %v5385
    %v5782 = vpack.c.b16 %v5398, %v5386
    %v5783 = vpack.c.b16 %v5399, %v5387
    %v5784 = vpack.c.b16 %v5400, %v5388
    %v5785 = vpack.c.b16 %v5401, %v5389
    %v5786 = vpack.c.b16 %v5402, %v5390
    %v5787 = vpack.c.b16 %v5403, %v5391
    %6172 = vmatpush.bf16.msra.mxu0 %v5488
    %6173 = vmatpush.bf16.msra.mxu0 %v5476
    %6174 = vmatpush.bf16.msra.mxu0 %v5464
    %6175 = vmatpush.bf16.msra.mxu0 %v5452
    %6176 = vmatpush.bf16.msra.mxu0 %v5440
    %6177 = vmatpush.bf16.msra.mxu0 %v5428
    %6178 = vmatpush.bf16.msra.mxu0 %v5416
    %6179 = vmatpush.bf16.msra.mxu0 %v5404
    %6180 = vmatmul.bf16.gmra.mxu0 %v3838
    %v6181 = vpop.f32.mrf.mxu0
    %v6182 = vadd.f32 %v4228, %v6181
    %v6183 = vpop.f32.mrf.mxu0
    %6184 = vdwg.mxu0
    %6185 = vmatpush.bf16.msra.mxu0 %v5584
    %6186 = vmatpush.bf16.msra.mxu0 %v5572
    %6187 = vmatpush.bf16.msra.mxu0 %v5560
    %6188 = vmatpush.bf16.msra.mxu0 %v5548
    %6189 = vmatpush.bf16.msra.mxu0 %v5536
    %6190 = vmatpush.bf16.msra.mxu0 %v5524
    %6191 = vmatpush.bf16.msra.mxu0 %v5512
    %6192 = vmatpush.bf16.msra.mxu0 %v5500
    %6193 = vmatmul.bf16.gmra.mxu0 %v3839
    %v6194 = vpop.f32.mrf.mxu0
    %v6195 = vadd.f32 %v6182, %v6194
    %v6196 = vpop.f32.mrf.mxu0
    %6197 = vdwg.mxu0
    %6198 = vmatpush.bf16.msra.mxu0 %v5680
    %6199 = vmatpush.bf16.msra.mxu0 %v5668
    %6200 = vmatpush.bf16.msra.mxu0 %v5656
    %6201 = vmatpush.bf16.msra.mxu0 %v5644
    %6202 = vmatpush.bf16.msra.mxu0 %v5632
    %6203 = vmatpush.bf16.msra.mxu0 %v5620
    %6204 = vmatpush.bf16.msra.mxu0 %v5608
    %6205 = vmatpush.bf16.msra.mxu0 %v5596
    %6206 = vmatmul.bf16.gmra.mxu0 %v3840
    %v6207 = vpop.f32.mrf.mxu0
    %v6208 = vadd.f32 %v6195, %v6207
    %v6209 = vpop.f32.mrf.mxu0
    %6210 = vdwg.mxu0
    %6211 = vmatpush.bf16.msra.mxu0 %v5776
    %6212 = vmatpush.bf16.msra.mxu0 %v5764
    %6213 = vmatpush.bf16.msra.mxu0 %v5752
    %6214 = vmatpush.bf16.msra.mxu0 %v5740
    %6215 = vmatpush.bf16.msra.mxu0 %v5728
    %6216 = vmatpush.bf16.msra.mxu0 %v5716
    %6217 = vmatpush.bf16.msra.mxu0 %v5704
    %6218 = vmatpush.bf16.msra.mxu0 %v5692
    %6219 = vmatmul.bf16.gmra.mxu0 %v3841
    %v6220 = vpop.f32.mrf.mxu0
    %v6221 = vadd.f32 %v6208, %v6220
    %v6222 = vpop.f32.mrf.mxu0
    %6223 = vdwg.mxu0
    %6224 = vmatpush.bf16.msra.mxu0 %v5489
    %6225 = vmatpush.bf16.msra.mxu0 %v5477
    %6226 = vmatpush.bf16.msra.mxu0 %v5465
    %6227 = vmatpush.bf16.msra.mxu0 %v5453
    %6228 = vmatpush.bf16.msra.mxu0 %v5441
    %6229 = vmatpush.bf16.msra.mxu0 %v5429
    %6230 = vmatpush.bf16.msra.mxu0 %v5417
    %6231 = vmatpush.bf16.msra.mxu0 %v5405
    %6232 = vmatmul.bf16.gmra.mxu0 %v3838
    %v6233 = vpop.f32.mrf.mxu0
    %v6234 = vadd.f32 %v4229, %v6233
    %v6235 = vpop.f32.mrf.mxu0
    %6236 = vdwg.mxu0
    %6237 = vmatpush.bf16.msra.mxu0 %v5585
    %6238 = vmatpush.bf16.msra.mxu0 %v5573
    %6239 = vmatpush.bf16.msra.mxu0 %v5561
    %6240 = vmatpush.bf16.msra.mxu0 %v5549
    %6241 = vmatpush.bf16.msra.mxu0 %v5537
    %6242 = vmatpush.bf16.msra.mxu0 %v5525
    %6243 = vmatpush.bf16.msra.mxu0 %v5513
    %6244 = vmatpush.bf16.msra.mxu0 %v5501
    %6245 = vmatmul.bf16.gmra.mxu0 %v3839
    %v6246 = vpop.f32.mrf.mxu0
    %v6247 = vadd.f32 %v6234, %v6246
    %v6248 = vpop.f32.mrf.mxu0
    %6249 = vdwg.mxu0
    %6250 = vmatpush.bf16.msra.mxu0 %v5681
    %6251 = vmatpush.bf16.msra.mxu0 %v5669
    %6252 = vmatpush.bf16.msra.mxu0 %v5657
    %6253 = vmatpush.bf16.msra.mxu0 %v5645
    %6254 = vmatpush.bf16.msra.mxu0 %v5633
    %6255 = vmatpush.bf16.msra.mxu0 %v5621
    %6256 = vmatpush.bf16.msra.mxu0 %v5609
    %6257 = vmatpush.bf16.msra.mxu0 %v5597
    %6258 = vmatmul.bf16.gmra.mxu0 %v3840
    %v6259 = vpop.f32.mrf.mxu0
    %v6260 = vadd.f32 %v6247, %v6259
    %v6261 = vpop.f32.mrf.mxu0
    %6262 = vdwg.mxu0
    %6263 = vmatpush.bf16.msra.mxu0 %v5777
    %6264 = vmatpush.bf16.msra.mxu0 %v5765
    %6265 = vmatpush.bf16.msra.mxu0 %v5753
    %6266 = vmatpush.bf16.msra.mxu0 %v5741
    %6267 = vmatpush.bf16.msra.mxu0 %v5729
    %6268 = vmatpush.bf16.msra.mxu0 %v5717
    %6269 = vmatpush.bf16.msra.mxu0 %v5705
    %6270 = vmatpush.bf16.msra.mxu0 %v5693
    %6271 = vmatmul.bf16.gmra.mxu0 %v3841
    %v6272 = vpop.f32.mrf.mxu0
    %v6273 = vadd.f32 %v6260, %v6272
    %v6274 = vpop.f32.mrf.mxu0
    %6275 = vdwg.mxu0
    %6276 = vmatpush.bf16.msra.mxu0 %v5490
    %6277 = vmatpush.bf16.msra.mxu0 %v5478
    %6278 = vmatpush.bf16.msra.mxu0 %v5466
    %6279 = vmatpush.bf16.msra.mxu0 %v5454
    %6280 = vmatpush.bf16.msra.mxu0 %v5442
    %6281 = vmatpush.bf16.msra.mxu0 %v5430
    %6282 = vmatpush.bf16.msra.mxu0 %v5418
    %6283 = vmatpush.bf16.msra.mxu0 %v5406
    %6284 = vmatmul.bf16.gmra.mxu0 %v3838
    %v6285 = vpop.f32.mrf.mxu0
    %v6286 = vadd.f32 %v4230, %v6285
    %v6287 = vpop.f32.mrf.mxu0
    %6288 = vdwg.mxu0
    %6289 = vmatpush.bf16.msra.mxu0 %v5586
    %6290 = vmatpush.bf16.msra.mxu0 %v5574
    %6291 = vmatpush.bf16.msra.mxu0 %v5562
    %6292 = vmatpush.bf16.msra.mxu0 %v5550
    %6293 = vmatpush.bf16.msra.mxu0 %v5538
    %6294 = vmatpush.bf16.msra.mxu0 %v5526
    %6295 = vmatpush.bf16.msra.mxu0 %v5514
    %6296 = vmatpush.bf16.msra.mxu0 %v5502
    %6297 = vmatmul.bf16.gmra.mxu0 %v3839
    %v6298 = vpop.f32.mrf.mxu0
    %v6299 = vadd.f32 %v6286, %v6298
    %v6300 = vpop.f32.mrf.mxu0
    %6301 = vdwg.mxu0
    %6302 = vmatpush.bf16.msra.mxu0 %v5682
    %6303 = vmatpush.bf16.msra.mxu0 %v5670
    %6304 = vmatpush.bf16.msra.mxu0 %v5658
    %6305 = vmatpush.bf16.msra.mxu0 %v5646
    %6306 = vmatpush.bf16.msra.mxu0 %v5634
    %6307 = vmatpush.bf16.msra.mxu0 %v5622
    %6308 = vmatpush.bf16.msra.mxu0 %v5610
    %6309 = vmatpush.bf16.msra.mxu0 %v5598
    %6310 = vmatmul.bf16.gmra.mxu0 %v3840
    %v6311 = vpop.f32.mrf.mxu0
    %v6312 = vadd.f32 %v6299, %v6311
    %v6313 = vpop.f32.mrf.mxu0
    %6314 = vdwg.mxu0
    %6315 = vmatpush.bf16.msra.mxu0 %v5778
    %6316 = vmatpush.bf16.msra.mxu0 %v5766
    %6317 = vmatpush.bf16.msra.mxu0 %v5754
    %6318 = vmatpush.bf16.msra.mxu0 %v5742
    %6319 = vmatpush.bf16.msra.mxu0 %v5730
    %6320 = vmatpush.bf16.msra.mxu0 %v5718
    %6321 = vmatpush.bf16.msra.mxu0 %v5706
    %6322 = vmatpush.bf16.msra.mxu0 %v5694
    %6323 = vmatmul.bf16.gmra.mxu0 %v3841
    %v6324 = vpop.f32.mrf.mxu0
    %v6325 = vadd.f32 %v6312, %v6324
    %v6326 = vpop.f32.mrf.mxu0
    %6327 = vdwg.mxu0
    %6328 = vmatpush.bf16.msra.mxu0 %v5491
    %6329 = vmatpush.bf16.msra.mxu0 %v5479
    %6330 = vmatpush.bf16.msra.mxu0 %v5467
    %6331 = vmatpush.bf16.msra.mxu0 %v5455
    %6332 = vmatpush.bf16.msra.mxu0 %v5443
    %6333 = vmatpush.bf16.msra.mxu0 %v5431
    %6334 = vmatpush.bf16.msra.mxu0 %v5419
    %6335 = vmatpush.bf16.msra.mxu0 %v5407
    %6336 = vmatmul.bf16.gmra.mxu0 %v3838
    %v6337 = vpop.f32.mrf.mxu0
    %v6338 = vadd.f32 %v4231, %v6337
    %v6339 = vpop.f32.mrf.mxu0
    %6340 = vdwg.mxu0
    %6341 = vmatpush.bf16.msra.mxu0 %v5587
    %6342 = vmatpush.bf16.msra.mxu0 %v5575
    %6343 = vmatpush.bf16.msra.mxu0 %v5563
    %6344 = vmatpush.bf16.msra.mxu0 %v5551
    %6345 = vmatpush.bf16.msra.mxu0 %v5539
    %6346 = vmatpush.bf16.msra.mxu0 %v5527
    %6347 = vmatpush.bf16.msra.mxu0 %v5515
    %6348 = vmatpush.bf16.msra.mxu0 %v5503
    %6349 = vmatmul.bf16.gmra.mxu0 %v3839
    %v6350 = vpop.f32.mrf.mxu0
    %v6351 = vadd.f32 %v6338, %v6350
    %v6352 = vpop.f32.mrf.mxu0
    %6353 = vdwg.mxu0
    %6354 = vmatpush.bf16.msra.mxu0 %v5683
    %6355 = vmatpush.bf16.msra.mxu0 %v5671
    %6356 = vmatpush.bf16.msra.mxu0 %v5659
    %6357 = vmatpush.bf16.msra.mxu0 %v5647
    %6358 = vmatpush.bf16.msra.mxu0 %v5635
    %6359 = vmatpush.bf16.msra.mxu0 %v5623
    %6360 = vmatpush.bf16.msra.mxu0 %v5611
    %6361 = vmatpush.bf16.msra.mxu0 %v5599
    %6362 = vmatmul.bf16.gmra.mxu0 %v3840
    %v6363 = vpop.f32.mrf.mxu0
    %v6364 = vadd.f32 %v6351, %v6363
    %v6365 = vpop.f32.mrf.mxu0
    %6366 = vdwg.mxu0
    %6367 = vmatpush.bf16.msra.mxu0 %v5779
    %6368 = vmatpush.bf16.msra.mxu0 %v5767
    %6369 = vmatpush.bf16.msra.mxu0 %v5755
    %6370 = vmatpush.bf16.msra.mxu0 %v5743
    %6371 = vmatpush.bf16.msra.mxu0 %v5731
    %6372 = vmatpush.bf16.msra.mxu0 %v5719
    %6373 = vmatpush.bf16.msra.mxu0 %v5707
    %6374 = vmatpush.bf16.msra.mxu0 %v5695
    %6375 = vmatmul.bf16.gmra.mxu0 %v3841
    %v6376 = vpop.f32.mrf.mxu0
    %v6377 = vadd.f32 %v6364, %v6376
    %v6378 = vpop.f32.mrf.mxu0
    %6379 = vdwg.mxu0
    %6380 = vmatpush.bf16.msra.mxu0 %v5492
    %6381 = vmatpush.bf16.msra.mxu0 %v5480
    %6382 = vmatpush.bf16.msra.mxu0 %v5468
    %6383 = vmatpush.bf16.msra.mxu0 %v5456
    %6384 = vmatpush.bf16.msra.mxu0 %v5444
    %6385 = vmatpush.bf16.msra.mxu0 %v5432
    %6386 = vmatpush.bf16.msra.mxu0 %v5420
    %6387 = vmatpush.bf16.msra.mxu0 %v5408
    %6388 = vmatmul.bf16.gmra.mxu0 %v3838
    %v6389 = vpop.f32.mrf.mxu0
    %v6390 = vadd.f32 %v4232, %v6389
    %v6391 = vpop.f32.mrf.mxu0
    %6392 = vdwg.mxu0
    %6393 = vmatpush.bf16.msra.mxu0 %v5588
    %6394 = vmatpush.bf16.msra.mxu0 %v5576
    %6395 = vmatpush.bf16.msra.mxu0 %v5564
    %6396 = vmatpush.bf16.msra.mxu0 %v5552
    %6397 = vmatpush.bf16.msra.mxu0 %v5540
    %6398 = vmatpush.bf16.msra.mxu0 %v5528
    %6399 = vmatpush.bf16.msra.mxu0 %v5516
    %6400 = vmatpush.bf16.msra.mxu0 %v5504
    %6401 = vmatmul.bf16.gmra.mxu0 %v3839
    %v6402 = vpop.f32.mrf.mxu0
    %v6403 = vadd.f32 %v6390, %v6402
    %v6404 = vpop.f32.mrf.mxu0
    %6405 = vdwg.mxu0
    %6406 = vmatpush.bf16.msra.mxu0 %v5684
    %6407 = vmatpush.bf16.msra.mxu0 %v5672
    %6408 = vmatpush.bf16.msra.mxu0 %v5660
    %6409 = vmatpush.bf16.msra.mxu0 %v5648
    %6410 = vmatpush.bf16.msra.mxu0 %v5636
    %6411 = vmatpush.bf16.msra.mxu0 %v5624
    %6412 = vmatpush.bf16.msra.mxu0 %v5612
    %6413 = vmatpush.bf16.msra.mxu0 %v5600
    %6414 = vmatmul.bf16.gmra.mxu0 %v3840
    %v6415 = vpop.f32.mrf.mxu0
    %v6416 = vadd.f32 %v6403, %v6415
    %v6417 = vpop.f32.mrf.mxu0
    %6418 = vdwg.mxu0
    %6419 = vmatpush.bf16.msra.mxu0 %v5780
    %6420 = vmatpush.bf16.msra.mxu0 %v5768
    %6421 = vmatpush.bf16.msra.mxu0 %v5756
    %6422 = vmatpush.bf16.msra.mxu0 %v5744
    %6423 = vmatpush.bf16.msra.mxu0 %v5732
    %6424 = vmatpush.bf16.msra.mxu0 %v5720
    %6425 = vmatpush.bf16.msra.mxu0 %v5708
    %6426 = vmatpush.bf16.msra.mxu0 %v5696
    %6427 = vmatmul.bf16.gmra.mxu0 %v3841
    %v6428 = vpop.f32.mrf.mxu0
    %v6429 = vadd.f32 %v6416, %v6428
    %v6430 = vpop.f32.mrf.mxu0
    %6431 = vdwg.mxu0
    %6432 = vmatpush.bf16.msra.mxu0 %v5493
    %6433 = vmatpush.bf16.msra.mxu0 %v5481
    %6434 = vmatpush.bf16.msra.mxu0 %v5469
    %6435 = vmatpush.bf16.msra.mxu0 %v5457
    %6436 = vmatpush.bf16.msra.mxu0 %v5445
    %6437 = vmatpush.bf16.msra.mxu0 %v5433
    %6438 = vmatpush.bf16.msra.mxu0 %v5421
    %6439 = vmatpush.bf16.msra.mxu0 %v5409
    %6440 = vmatmul.bf16.gmra.mxu0 %v3838
    %v6441 = vpop.f32.mrf.mxu0
    %v6442 = vadd.f32 %v4233, %v6441
    %v6443 = vpop.f32.mrf.mxu0
    %6444 = vdwg.mxu0
    %6445 = vmatpush.bf16.msra.mxu0 %v5589
    %6446 = vmatpush.bf16.msra.mxu0 %v5577
    %6447 = vmatpush.bf16.msra.mxu0 %v5565
    %6448 = vmatpush.bf16.msra.mxu0 %v5553
    %6449 = vmatpush.bf16.msra.mxu0 %v5541
    %6450 = vmatpush.bf16.msra.mxu0 %v5529
    %6451 = vmatpush.bf16.msra.mxu0 %v5517
    %6452 = vmatpush.bf16.msra.mxu0 %v5505
    %6453 = vmatmul.bf16.gmra.mxu0 %v3839
    %v6454 = vpop.f32.mrf.mxu0
    %v6455 = vadd.f32 %v6442, %v6454
    %v6456 = vpop.f32.mrf.mxu0
    %6457 = vdwg.mxu0
    %6458 = vmatpush.bf16.msra.mxu0 %v5685
    %6459 = vmatpush.bf16.msra.mxu0 %v5673
    %6460 = vmatpush.bf16.msra.mxu0 %v5661
    %6461 = vmatpush.bf16.msra.mxu0 %v5649
    %6462 = vmatpush.bf16.msra.mxu0 %v5637
    %6463 = vmatpush.bf16.msra.mxu0 %v5625
    %6464 = vmatpush.bf16.msra.mxu0 %v5613
    %6465 = vmatpush.bf16.msra.mxu0 %v5601
    %6466 = vmatmul.bf16.gmra.mxu0 %v3840
    %v6467 = vpop.f32.mrf.mxu0
    %v6468 = vadd.f32 %v6455, %v6467
    %v6469 = vpop.f32.mrf.mxu0
    %6470 = vdwg.mxu0
    %6471 = vmatpush.bf16.msra.mxu0 %v5781
    %6472 = vmatpush.bf16.msra.mxu0 %v5769
    %6473 = vmatpush.bf16.msra.mxu0 %v5757
    %6474 = vmatpush.bf16.msra.mxu0 %v5745
    %6475 = vmatpush.bf16.msra.mxu0 %v5733
    %6476 = vmatpush.bf16.msra.mxu0 %v5721
    %6477 = vmatpush.bf16.msra.mxu0 %v5709
    %6478 = vmatpush.bf16.msra.mxu0 %v5697
    %6479 = vmatmul.bf16.gmra.mxu0 %v3841
    %v6480 = vpop.f32.mrf.mxu0
    %v6481 = vadd.f32 %v6468, %v6480
    %v6482 = vpop.f32.mrf.mxu0
    %6483 = vdwg.mxu0
    %6484 = vmatpush.bf16.msra.mxu0 %v5494
    %6485 = vmatpush.bf16.msra.mxu0 %v5482
    %6486 = vmatpush.bf16.msra.mxu0 %v5470
    %6487 = vmatpush.bf16.msra.mxu0 %v5458
    %6488 = vmatpush.bf16.msra.mxu0 %v5446
    %6489 = vmatpush.bf16.msra.mxu0 %v5434
    %6490 = vmatpush.bf16.msra.mxu0 %v5422
    %6491 = vmatpush.bf16.msra.mxu0 %v5410
    %6492 = vmatmul.bf16.gmra.mxu0 %v3838
    %v6493 = vpop.f32.mrf.mxu0
    %v6494 = vadd.f32 %v4234, %v6493
    %v6495 = vpop.f32.mrf.mxu0
    %6496 = vdwg.mxu0
    %6497 = vmatpush.bf16.msra.mxu0 %v5590
    %6498 = vmatpush.bf16.msra.mxu0 %v5578
    %6499 = vmatpush.bf16.msra.mxu0 %v5566
    %6500 = vmatpush.bf16.msra.mxu0 %v5554
    %6501 = vmatpush.bf16.msra.mxu0 %v5542
    %6502 = vmatpush.bf16.msra.mxu0 %v5530
    %6503 = vmatpush.bf16.msra.mxu0 %v5518
    %6504 = vmatpush.bf16.msra.mxu0 %v5506
    %6505 = vmatmul.bf16.gmra.mxu0 %v3839
    %v6506 = vpop.f32.mrf.mxu0
    %v6507 = vadd.f32 %v6494, %v6506
    %v6508 = vpop.f32.mrf.mxu0
    %6509 = vdwg.mxu0
    %6510 = vmatpush.bf16.msra.mxu0 %v5686
    %6511 = vmatpush.bf16.msra.mxu0 %v5674
    %6512 = vmatpush.bf16.msra.mxu0 %v5662
    %6513 = vmatpush.bf16.msra.mxu0 %v5650
    %6514 = vmatpush.bf16.msra.mxu0 %v5638
    %6515 = vmatpush.bf16.msra.mxu0 %v5626
    %6516 = vmatpush.bf16.msra.mxu0 %v5614
    %6517 = vmatpush.bf16.msra.mxu0 %v5602
    %6518 = vmatmul.bf16.gmra.mxu0 %v3840
    %v6519 = vpop.f32.mrf.mxu0
    %v6520 = vadd.f32 %v6507, %v6519
    %v6521 = vpop.f32.mrf.mxu0
    %6522 = vdwg.mxu0
    %6523 = vmatpush.bf16.msra.mxu0 %v5782
    %6524 = vmatpush.bf16.msra.mxu0 %v5770
    %6525 = vmatpush.bf16.msra.mxu0 %v5758
    %6526 = vmatpush.bf16.msra.mxu0 %v5746
    %6527 = vmatpush.bf16.msra.mxu0 %v5734
    %6528 = vmatpush.bf16.msra.mxu0 %v5722
    %6529 = vmatpush.bf16.msra.mxu0 %v5710
    %6530 = vmatpush.bf16.msra.mxu0 %v5698
    %6531 = vmatmul.bf16.gmra.mxu0 %v3841
    %v6532 = vpop.f32.mrf.mxu0
    %v6533 = vadd.f32 %v6520, %v6532
    %v6534 = vpop.f32.mrf.mxu0
    %6535 = vdwg.mxu0
    %6536 = vmatpush.bf16.msra.mxu0 %v5495
    %6537 = vmatpush.bf16.msra.mxu0 %v5483
    %6538 = vmatpush.bf16.msra.mxu0 %v5471
    %6539 = vmatpush.bf16.msra.mxu0 %v5459
    %6540 = vmatpush.bf16.msra.mxu0 %v5447
    %6541 = vmatpush.bf16.msra.mxu0 %v5435
    %6542 = vmatpush.bf16.msra.mxu0 %v5423
    %6543 = vmatpush.bf16.msra.mxu0 %v5411
    %6544 = vmatmul.bf16.gmra.mxu0 %v3838
    %v6545 = vpop.f32.mrf.mxu0
    %v6546 = vadd.f32 %v4235, %v6545
    %v6547 = vpop.f32.mrf.mxu0
    %6548 = vdwg.mxu0
    %6549 = vmatpush.bf16.msra.mxu0 %v5591
    %6550 = vmatpush.bf16.msra.mxu0 %v5579
    %6551 = vmatpush.bf16.msra.mxu0 %v5567
    %6552 = vmatpush.bf16.msra.mxu0 %v5555
    %6553 = vmatpush.bf16.msra.mxu0 %v5543
    %6554 = vmatpush.bf16.msra.mxu0 %v5531
    %6555 = vmatpush.bf16.msra.mxu0 %v5519
    %6556 = vmatpush.bf16.msra.mxu0 %v5507
    %6557 = vmatmul.bf16.gmra.mxu0 %v3839
    %v6558 = vpop.f32.mrf.mxu0
    %v6559 = vadd.f32 %v6546, %v6558
    %v6560 = vpop.f32.mrf.mxu0
    %6561 = vdwg.mxu0
    %6562 = vmatpush.bf16.msra.mxu0 %v5687
    %6563 = vmatpush.bf16.msra.mxu0 %v5675
    %6564 = vmatpush.bf16.msra.mxu0 %v5663
    %6565 = vmatpush.bf16.msra.mxu0 %v5651
    %6566 = vmatpush.bf16.msra.mxu0 %v5639
    %6567 = vmatpush.bf16.msra.mxu0 %v5627
    %6568 = vmatpush.bf16.msra.mxu0 %v5615
    %6569 = vmatpush.bf16.msra.mxu0 %v5603
    %6570 = vmatmul.bf16.gmra.mxu0 %v3840
    %v6571 = vpop.f32.mrf.mxu0
    %v6572 = vadd.f32 %v6559, %v6571
    %v6573 = vpop.f32.mrf.mxu0
    %6574 = vdwg.mxu0
    %6575 = vmatpush.bf16.msra.mxu0 %v5783
    %6576 = vmatpush.bf16.msra.mxu0 %v5771
    %6577 = vmatpush.bf16.msra.mxu0 %v5759
    %6578 = vmatpush.bf16.msra.mxu0 %v5747
    %6579 = vmatpush.bf16.msra.mxu0 %v5735
    %6580 = vmatpush.bf16.msra.mxu0 %v5723
    %6581 = vmatpush.bf16.msra.mxu0 %v5711
    %6582 = vmatpush.bf16.msra.mxu0 %v5699
    %6583 = vmatmul.bf16.gmra.mxu0 %v3841
    %v6584 = vpop.f32.mrf.mxu0
    %v6585 = vadd.f32 %v6572, %v6584
    %v6586 = vpop.f32.mrf.mxu0
    %6587 = vdwg.mxu0
    %6588 = vmatpush.bf16.msra.mxu0 %v5496
    %6589 = vmatpush.bf16.msra.mxu0 %v5484
    %6590 = vmatpush.bf16.msra.mxu0 %v5472
    %6591 = vmatpush.bf16.msra.mxu0 %v5460
    %6592 = vmatpush.bf16.msra.mxu0 %v5448
    %6593 = vmatpush.bf16.msra.mxu0 %v5436
    %6594 = vmatpush.bf16.msra.mxu0 %v5424
    %6595 = vmatpush.bf16.msra.mxu0 %v5412
    %6596 = vmatmul.bf16.gmra.mxu0 %v3838
    %v6597 = vpop.f32.mrf.mxu0
    %v6598 = vadd.f32 %v4236, %v6597
    %v6599 = vpop.f32.mrf.mxu0
    %6600 = vdwg.mxu0
    %6601 = vmatpush.bf16.msra.mxu0 %v5592
    %6602 = vmatpush.bf16.msra.mxu0 %v5580
    %6603 = vmatpush.bf16.msra.mxu0 %v5568
    %6604 = vmatpush.bf16.msra.mxu0 %v5556
    %6605 = vmatpush.bf16.msra.mxu0 %v5544
    %6606 = vmatpush.bf16.msra.mxu0 %v5532
    %6607 = vmatpush.bf16.msra.mxu0 %v5520
    %6608 = vmatpush.bf16.msra.mxu0 %v5508
    %6609 = vmatmul.bf16.gmra.mxu0 %v3839
    %v6610 = vpop.f32.mrf.mxu0
    %v6611 = vadd.f32 %v6598, %v6610
    %v6612 = vpop.f32.mrf.mxu0
    %6613 = vdwg.mxu0
    %6614 = vmatpush.bf16.msra.mxu0 %v5688
    %6615 = vmatpush.bf16.msra.mxu0 %v5676
    %6616 = vmatpush.bf16.msra.mxu0 %v5664
    %6617 = vmatpush.bf16.msra.mxu0 %v5652
    %6618 = vmatpush.bf16.msra.mxu0 %v5640
    %6619 = vmatpush.bf16.msra.mxu0 %v5628
    %6620 = vmatpush.bf16.msra.mxu0 %v5616
    %6621 = vmatpush.bf16.msra.mxu0 %v5604
    %6622 = vmatmul.bf16.gmra.mxu0 %v3840
    %v6623 = vpop.f32.mrf.mxu0
    %v6624 = vadd.f32 %v6611, %v6623
    %v6625 = vpop.f32.mrf.mxu0
    %6626 = vdwg.mxu0
    %6627 = vmatpush.bf16.msra.mxu0 %v5784
    %6628 = vmatpush.bf16.msra.mxu0 %v5772
    %6629 = vmatpush.bf16.msra.mxu0 %v5760
    %6630 = vmatpush.bf16.msra.mxu0 %v5748
    %6631 = vmatpush.bf16.msra.mxu0 %v5736
    %6632 = vmatpush.bf16.msra.mxu0 %v5724
    %6633 = vmatpush.bf16.msra.mxu0 %v5712
    %6634 = vmatpush.bf16.msra.mxu0 %v5700
    %6635 = vmatmul.bf16.gmra.mxu0 %v3841
    %v6636 = vpop.f32.mrf.mxu0
    %v6637 = vadd.f32 %v6624, %v6636
    %v6638 = vpop.f32.mrf.mxu0
    %6639 = vdwg.mxu0
    %6640 = vmatpush.bf16.msra.mxu0 %v5497
    %6641 = vmatpush.bf16.msra.mxu0 %v5485
    %6642 = vmatpush.bf16.msra.mxu0 %v5473
    %6643 = vmatpush.bf16.msra.mxu0 %v5461
    %6644 = vmatpush.bf16.msra.mxu0 %v5449
    %6645 = vmatpush.bf16.msra.mxu0 %v5437
    %6646 = vmatpush.bf16.msra.mxu0 %v5425
    %6647 = vmatpush.bf16.msra.mxu0 %v5413
    %6648 = vmatmul.bf16.gmra.mxu0 %v3838
    %v6649 = vpop.f32.mrf.mxu0
    %v6650 = vadd.f32 %v4237, %v6649
    %v6651 = vpop.f32.mrf.mxu0
    %6652 = vdwg.mxu0
    %6653 = vmatpush.bf16.msra.mxu0 %v5593
    %6654 = vmatpush.bf16.msra.mxu0 %v5581
    %6655 = vmatpush.bf16.msra.mxu0 %v5569
    %6656 = vmatpush.bf16.msra.mxu0 %v5557
    %6657 = vmatpush.bf16.msra.mxu0 %v5545
    %6658 = vmatpush.bf16.msra.mxu0 %v5533
    %6659 = vmatpush.bf16.msra.mxu0 %v5521
    %6660 = vmatpush.bf16.msra.mxu0 %v5509
    %6661 = vmatmul.bf16.gmra.mxu0 %v3839
    %v6662 = vpop.f32.mrf.mxu0
    %v6663 = vadd.f32 %v6650, %v6662
    %v6664 = vpop.f32.mrf.mxu0
    %6665 = vdwg.mxu0
    %6666 = vmatpush.bf16.msra.mxu0 %v5689
    %6667 = vmatpush.bf16.msra.mxu0 %v5677
    %6668 = vmatpush.bf16.msra.mxu0 %v5665
    %6669 = vmatpush.bf16.msra.mxu0 %v5653
    %6670 = vmatpush.bf16.msra.mxu0 %v5641
    %6671 = vmatpush.bf16.msra.mxu0 %v5629
    %6672 = vmatpush.bf16.msra.mxu0 %v5617
    %6673 = vmatpush.bf16.msra.mxu0 %v5605
    %6674 = vmatmul.bf16.gmra.mxu0 %v3840
    %v6675 = vpop.f32.mrf.mxu0
    %v6676 = vadd.f32 %v6663, %v6675
    %v6677 = vpop.f32.mrf.mxu0
    %6678 = vdwg.mxu0
    %6679 = vmatpush.bf16.msra.mxu0 %v5785
    %6680 = vmatpush.bf16.msra.mxu0 %v5773
    %6681 = vmatpush.bf16.msra.mxu0 %v5761
    %6682 = vmatpush.bf16.msra.mxu0 %v5749
    %6683 = vmatpush.bf16.msra.mxu0 %v5737
    %6684 = vmatpush.bf16.msra.mxu0 %v5725
    %6685 = vmatpush.bf16.msra.mxu0 %v5713
    %6686 = vmatpush.bf16.msra.mxu0 %v5701
    %6687 = vmatmul.bf16.gmra.mxu0 %v3841
    %v6688 = vpop.f32.mrf.mxu0
    %v6689 = vadd.f32 %v6676, %v6688
    %v6690 = vpop.f32.mrf.mxu0
    %6691 = vdwg.mxu0
    %6692 = vmatpush.bf16.msra.mxu0 %v5498
    %6693 = vmatpush.bf16.msra.mxu0 %v5486
    %6694 = vmatpush.bf16.msra.mxu0 %v5474
    %6695 = vmatpush.bf16.msra.mxu0 %v5462
    %6696 = vmatpush.bf16.msra.mxu0 %v5450
    %6697 = vmatpush.bf16.msra.mxu0 %v5438
    %6698 = vmatpush.bf16.msra.mxu0 %v5426
    %6699 = vmatpush.bf16.msra.mxu0 %v5414
    %6700 = vmatmul.bf16.gmra.mxu0 %v3838
    %v6701 = vpop.f32.mrf.mxu0
    %v6702 = vadd.f32 %v4238, %v6701
    %v6703 = vpop.f32.mrf.mxu0
    %6704 = vdwg.mxu0
    %6705 = vmatpush.bf16.msra.mxu0 %v5594
    %6706 = vmatpush.bf16.msra.mxu0 %v5582
    %6707 = vmatpush.bf16.msra.mxu0 %v5570
    %6708 = vmatpush.bf16.msra.mxu0 %v5558
    %6709 = vmatpush.bf16.msra.mxu0 %v5546
    %6710 = vmatpush.bf16.msra.mxu0 %v5534
    %6711 = vmatpush.bf16.msra.mxu0 %v5522
    %6712 = vmatpush.bf16.msra.mxu0 %v5510
    %6713 = vmatmul.bf16.gmra.mxu0 %v3839
    %v6714 = vpop.f32.mrf.mxu0
    %v6715 = vadd.f32 %v6702, %v6714
    %v6716 = vpop.f32.mrf.mxu0
    %6717 = vdwg.mxu0
    %6718 = vmatpush.bf16.msra.mxu0 %v5690
    %6719 = vmatpush.bf16.msra.mxu0 %v5678
    %6720 = vmatpush.bf16.msra.mxu0 %v5666
    %6721 = vmatpush.bf16.msra.mxu0 %v5654
    %6722 = vmatpush.bf16.msra.mxu0 %v5642
    %6723 = vmatpush.bf16.msra.mxu0 %v5630
    %6724 = vmatpush.bf16.msra.mxu0 %v5618
    %6725 = vmatpush.bf16.msra.mxu0 %v5606
    %6726 = vmatmul.bf16.gmra.mxu0 %v3840
    %v6727 = vpop.f32.mrf.mxu0
    %v6728 = vadd.f32 %v6715, %v6727
    %v6729 = vpop.f32.mrf.mxu0
    %6730 = vdwg.mxu0
    %6731 = vmatpush.bf16.msra.mxu0 %v5786
    %6732 = vmatpush.bf16.msra.mxu0 %v5774
    %6733 = vmatpush.bf16.msra.mxu0 %v5762
    %6734 = vmatpush.bf16.msra.mxu0 %v5750
    %6735 = vmatpush.bf16.msra.mxu0 %v5738
    %6736 = vmatpush.bf16.msra.mxu0 %v5726
    %6737 = vmatpush.bf16.msra.mxu0 %v5714
    %6738 = vmatpush.bf16.msra.mxu0 %v5702
    %6739 = vmatmul.bf16.gmra.mxu0 %v3841
    %v6740 = vpop.f32.mrf.mxu0
    %v6741 = vadd.f32 %v6728, %v6740
    %v6742 = vpop.f32.mrf.mxu0
    %6743 = vdwg.mxu0
    %6744 = vmatpush.bf16.msra.mxu0 %v5499
    %6745 = vmatpush.bf16.msra.mxu0 %v5487
    %6746 = vmatpush.bf16.msra.mxu0 %v5475
    %6747 = vmatpush.bf16.msra.mxu0 %v5463
    %6748 = vmatpush.bf16.msra.mxu0 %v5451
    %6749 = vmatpush.bf16.msra.mxu0 %v5439
    %6750 = vmatpush.bf16.msra.mxu0 %v5427
    %6751 = vmatpush.bf16.msra.mxu0 %v5415
    %6752 = vmatmul.bf16.gmra.mxu0 %v3838
    %v6753 = vpop.f32.mrf.mxu0
    %v6754 = vadd.f32 %v4239, %v6753
    %v6755 = vpop.f32.mrf.mxu0
    %6756 = vdwg.mxu0
    %6757 = vmatpush.bf16.msra.mxu0 %v5595
    %6758 = vmatpush.bf16.msra.mxu0 %v5583
    %6759 = vmatpush.bf16.msra.mxu0 %v5571
    %6760 = vmatpush.bf16.msra.mxu0 %v5559
    %6761 = vmatpush.bf16.msra.mxu0 %v5547
    %6762 = vmatpush.bf16.msra.mxu0 %v5535
    %6763 = vmatpush.bf16.msra.mxu0 %v5523
    %6764 = vmatpush.bf16.msra.mxu0 %v5511
    %6765 = vmatmul.bf16.gmra.mxu0 %v3839
    %v6766 = vpop.f32.mrf.mxu0
    %v6767 = vadd.f32 %v6754, %v6766
    %v6768 = vpop.f32.mrf.mxu0
    %6769 = vdwg.mxu0
    %6770 = vmatpush.bf16.msra.mxu0 %v5691
    %6771 = vmatpush.bf16.msra.mxu0 %v5679
    %6772 = vmatpush.bf16.msra.mxu0 %v5667
    %6773 = vmatpush.bf16.msra.mxu0 %v5655
    %6774 = vmatpush.bf16.msra.mxu0 %v5643
    %6775 = vmatpush.bf16.msra.mxu0 %v5631
    %6776 = vmatpush.bf16.msra.mxu0 %v5619
    %6777 = vmatpush.bf16.msra.mxu0 %v5607
    %6778 = vmatmul.bf16.gmra.mxu0 %v3840
    %v6779 = vpop.f32.mrf.mxu0
    %v6780 = vadd.f32 %v6767, %v6779
    %v6781 = vpop.f32.mrf.mxu0
    %6782 = vdwg.mxu0
    %6783 = vmatpush.bf16.msra.mxu0 %v5787
    %6784 = vmatpush.bf16.msra.mxu0 %v5775
    %6785 = vmatpush.bf16.msra.mxu0 %v5763
    %6786 = vmatpush.bf16.msra.mxu0 %v5751
    %6787 = vmatpush.bf16.msra.mxu0 %v5739
    %6788 = vmatpush.bf16.msra.mxu0 %v5727
    %6789 = vmatpush.bf16.msra.mxu0 %v5715
    %6790 = vmatpush.bf16.msra.mxu0 %v5703
    %6791 = vmatmul.bf16.gmra.mxu0 %v3841
    %v6792 = vpop.f32.mrf.mxu0
    %v6793 = vadd.f32 %v6780, %v6792
    %v6794 = vpop.f32.mrf.mxu0
    %6795 = vdwg.mxu0
    %v6796 = vadd.f32 %v3820, %v6221
    %v6797 = vadd.f32 %v3821, %v6273
    %v6798 = vadd.f32 %v3822, %v6325
    %v6799 = vadd.f32 %v3823, %v6377
    %v6800 = vxor.u32 %v6796, 2147483648
    %v6801 = vxor.u32 %v6797, 2147483648
    %v6802 = vxor.u32 %v6798, 2147483648
    %v6803 = vxor.u32 %v6799, 2147483648
    %v6804 = vmul.f32 %v6800, 1.442695
    %v6805 = vpow.pop %v6804
    %v6806 = vmul.f32 %v6801, 1.442695
    %v6807 = vpow.pop %v6806
    %v6808 = vmul.f32 %v6802, 1.442695
    %v6809 = vpow.pop %v6808
    %v6810 = vmul.f32 %v6803, 1.442695
    %v6811 = vpow.pop %v6810
    %v6812 = vadd.f32 %v6805, 1.0
    %v6813 = vadd.f32 %v6807, 1.0
    %v6814 = vadd.f32 %v6809, 1.0
    %v6815 = vadd.f32 %v6811, 1.0
    %v6816 = vrcp.pop %v6812
    %v6817 = vmul.f32 %v6812, %v6816
    %v6818 = vsub.f32 1.0, %v6817
    %v6819 = vmul.f32 %v6816, %v6818
    %v6820 = vadd.f32 %v6816, %v6819
    %vm6821 = vweird.f32 %v6812
    %vm6822 = vweird.f32 %v6816
    %vm6823 = vmor %vm6821, %vm6822
    %v6824 = vsel %vm6823, %v6816, %v6820
    %v6825 = vand.u32 2147483647, %v6812
    %vm6826 = vcmp.eq.f32.partialorder %v6825, 8.507059e+37
    %v6827 = vand.u32 %v6812, 2147483648
    %v6828 = vor.u32 1.1754944e-38, %v6827
    %v6829 = vsel %vm6826, %v6828, %v6824
    %v6830 = vmul.f32 1.0, %v6829
    %v6831 = vrcp.pop %v6813
    %v6832 = vmul.f32 %v6813, %v6831
    %v6833 = vsub.f32 1.0, %v6832
    %v6834 = vmul.f32 %v6831, %v6833
    %v6835 = vadd.f32 %v6831, %v6834
    %vm6836 = vweird.f32 %v6813
    %vm6837 = vweird.f32 %v6831
    %vm6838 = vmor %vm6836, %vm6837
    %v6839 = vsel %vm6838, %v6831, %v6835
    %v6840 = vand.u32 2147483647, %v6813
    %vm6841 = vcmp.eq.f32.partialorder %v6840, 8.507059e+37
    %v6842 = vand.u32 %v6813, 2147483648
    %v6843 = vor.u32 1.1754944e-38, %v6842
    %v6844 = vsel %vm6841, %v6843, %v6839
    %v6845 = vmul.f32 1.0, %v6844
    %v6846 = vrcp.pop %v6814
    %v6847 = vmul.f32 %v6814, %v6846
    %v6848 = vsub.f32 1.0, %v6847
    %v6849 = vmul.f32 %v6846, %v6848
    %v6850 = vadd.f32 %v6846, %v6849
    %vm6851 = vweird.f32 %v6814
    %vm6852 = vweird.f32 %v6846
    %vm6853 = vmor %vm6851, %vm6852
    %v6854 = vsel %vm6853, %v6846, %v6850
    %v6855 = vand.u32 2147483647, %v6814
    %vm6856 = vcmp.eq.f32.partialorder %v6855, 8.507059e+37
    %v6857 = vand.u32 %v6814, 2147483648
    %v6858 = vor.u32 1.1754944e-38, %v6857
    %v6859 = vsel %vm6856, %v6858, %v6854
    %v6860 = vmul.f32 1.0, %v6859
    %v6861 = vrcp.pop %v6815
    %v6862 = vmul.f32 %v6815, %v6861
    %v6863 = vsub.f32 1.0, %v6862
    %v6864 = vmul.f32 %v6861, %v6863
    %v6865 = vadd.f32 %v6861, %v6864
    %vm6866 = vweird.f32 %v6815
    %vm6867 = vweird.f32 %v6861
    %vm6868 = vmor %vm6866, %vm6867
    %v6869 = vsel %vm6868, %v6861, %v6865
    %v6870 = vand.u32 2147483647, %v6815
    %vm6871 = vcmp.eq.f32.partialorder %v6870, 8.507059e+37
    %v6872 = vand.u32 %v6815, 2147483648
    %v6873 = vor.u32 1.1754944e-38, %v6872
    %v6874 = vsel %vm6871, %v6873, %v6869
    %v6875 = vmul.f32 1.0, %v6874
    %v6876 = vadd.f32 %v3824, %v6429
    %v6877 = vadd.f32 %v3825, %v6481
    %v6878 = vadd.f32 %v3826, %v6533
    %v6879 = vadd.f32 %v3827, %v6585
    %v6880 = vxor.u32 %v6876, 2147483648
    %v6881 = vxor.u32 %v6877, 2147483648
    %v6882 = vxor.u32 %v6878, 2147483648
    %v6883 = vxor.u32 %v6879, 2147483648
    %v6884 = vmul.f32 %v6880, 1.442695
    %v6885 = vpow.pop %v6884
    %v6886 = vmul.f32 %v6881, 1.442695
    %v6887 = vpow.pop %v6886
    %v6888 = vmul.f32 %v6882, 1.442695
    %v6889 = vpow.pop %v6888
    %v6890 = vmul.f32 %v6883, 1.442695
    %v6891 = vpow.pop %v6890
    %v6892 = vadd.f32 %v6885, 1.0
    %v6893 = vadd.f32 %v6887, 1.0
    %v6894 = vadd.f32 %v6889, 1.0
    %v6895 = vadd.f32 %v6891, 1.0
    %v6896 = vrcp.pop %v6892
    %v6897 = vmul.f32 %v6892, %v6896
    %v6898 = vsub.f32 1.0, %v6897
    %v6899 = vmul.f32 %v6896, %v6898
    %v6900 = vadd.f32 %v6896, %v6899
    %vm6901 = vweird.f32 %v6892
    %vm6902 = vweird.f32 %v6896
    %vm6903 = vmor %vm6901, %vm6902
    %v6904 = vsel %vm6903, %v6896, %v6900
    %v6905 = vand.u32 2147483647, %v6892
    %vm6906 = vcmp.eq.f32.partialorder %v6905, 8.507059e+37
    %v6907 = vand.u32 %v6892, 2147483648
    %v6908 = vor.u32 1.1754944e-38, %v6907
    %v6909 = vsel %vm6906, %v6908, %v6904
    %v6910 = vmul.f32 1.0, %v6909
    %v6911 = vrcp.pop %v6893
    %v6912 = vmul.f32 %v6893, %v6911
    %v6913 = vsub.f32 1.0, %v6912
    %v6914 = vmul.f32 %v6911, %v6913
    %v6915 = vadd.f32 %v6911, %v6914
    %vm6916 = vweird.f32 %v6893
    %vm6917 = vweird.f32 %v6911
    %vm6918 = vmor %vm6916, %vm6917
    %v6919 = vsel %vm6918, %v6911, %v6915
    %v6920 = vand.u32 2147483647, %v6893
    %vm6921 = vcmp.eq.f32.partialorder %v6920, 8.507059e+37
    %v6922 = vand.u32 %v6893, 2147483648
    %v6923 = vor.u32 1.1754944e-38, %v6922
    %v6924 = vsel %vm6921, %v6923, %v6919
    %v6925 = vmul.f32 1.0, %v6924
    %v6926 = vrcp.pop %v6894
    %v6927 = vmul.f32 %v6894, %v6926
    %v6928 = vsub.f32 1.0, %v6927
    %v6929 = vmul.f32 %v6926, %v6928
    %v6930 = vadd.f32 %v6926, %v6929
    %vm6931 = vweird.f32 %v6894
    %vm6932 = vweird.f32 %v6926
    %vm6933 = vmor %vm6931, %vm6932
    %v6934 = vsel %vm6933, %v6926, %v6930
    %v6935 = vand.u32 2147483647, %v6894
    %vm6936 = vcmp.eq.f32.partialorder %v6935, 8.507059e+37
    %v6937 = vand.u32 %v6894, 2147483648
    %v6938 = vor.u32 1.1754944e-38, %v6937
    %v6939 = vsel %vm6936, %v6938, %v6934
    %v6940 = vmul.f32 1.0, %v6939
    %v6941 = vrcp.pop %v6895
    %v6942 = vmul.f32 %v6895, %v6941
    %v6943 = vsub.f32 1.0, %v6942
    %v6944 = vmul.f32 %v6941, %v6943
    %v6945 = vadd.f32 %v6941, %v6944
    %vm6946 = vweird.f32 %v6895
    %vm6947 = vweird.f32 %v6941
    %vm6948 = vmor %vm6946, %vm6947
    %v6949 = vsel %vm6948, %v6941, %v6945
    %v6950 = vand.u32 2147483647, %v6895
    %vm6951 = vcmp.eq.f32.partialorder %v6950, 8.507059e+37
    %v6952 = vand.u32 %v6895, 2147483648
    %v6953 = vor.u32 1.1754944e-38, %v6952
    %v6954 = vsel %vm6951, %v6953, %v6949
    %v6955 = vmul.f32 1.0, %v6954
    %v6956 = vmul.f32 %v6830, %v6637
    %v6957 = vmul.f32 %v6845, %v6689
    %v6958 = vmul.f32 %v6860, %v6741
    %v6959 = vmul.f32 %v6875, %v6793
    %v6960 = vadd.f32 %v3828, %v6956
    %v6961 = vadd.f32 %v3829, %v6957
    %v6962 = vadd.f32 %v3830, %v6958
    %v6963 = vadd.f32 %v3831, %v6959
    %v6964 = vtanh.pop %v6960
    %v6965 = vtanh.pop %v6961
    %v6966 = vtanh.pop %v6962
    %v6967 = vtanh.pop %v6963
    %v6968 = vsub.f32 1.0, %v6910
    %v6969 = vsub.f32 1.0, %v6925
    %v6970 = vsub.f32 1.0, %v6940
    %v6971 = vsub.f32 1.0, %v6955
    %v6972 = vmul.f32 %v6968, %v6964
    %v6973 = vmul.f32 %v6969, %v6965
    %v6974 = vmul.f32 %v6970, %v6966
    %v6975 = vmul.f32 %v6971, %v6967
    %v6976 = vmul.f32 %v6910, %v3832
    %v6977 = vmul.f32 %v6925, %v3833
    %v6978 = vmul.f32 %v6940, %v3834
    %v6979 = vmul.f32 %v6955, %v3835
    %v6980 = vadd.f32 %v6972, %v6976
    %v6981 = vadd.f32 %v6973, %v6977
    %v6982 = vadd.f32 %v6974, %v6978
    %v6983 = vadd.f32 %v6975, %v6979
    %6984 = vst [vmem:[%s65] sm:$0xff] %v6980
    %6985 = vst [vmem:[%s65 + $0x8] sm:$0xff] %v6981
    %6986 = vst [vmem:[%s65 + $0x10] sm:$0xff] %v6982
    %6987 = vst [vmem:[%s65 + $0x18] sm:$0xff] %v6983
    %v6988 = vpack.c.bf16 %v6980, %v6980
    %v6989 = vpack.c.bf16 %v6981, %v6981
    %v6990 = vpack.c.bf16 %v6982, %v6982
    %v6991 = vpack.c.bf16 %v6983, %v6983
    %v6992 = vld [vmem:[#allocation2] sm:$0xff]
    %v6993 = vld [vmem:[#allocation2 + $0x8] sm:$0xff]
    %v6994 = vld [vmem:[#allocation2 + $0x10] sm:$0xff]
    %v6995 = vld [vmem:[#allocation2 + $0x18] sm:$0xff]
    %v6996 = vld [vmem:[#allocation2 + $0x20] sm:$0xff]
    %v6997 = vld [vmem:[#allocation2 + $0x28] sm:$0xff]
    %v6998 = vld [vmem:[#allocation2 + $0x30] sm:$0xff]
    %v6999 = vld [vmem:[#allocation2 + $0x38] sm:$0xff]
    %v7000 = vld [vmem:[#allocation2 + $0x40] sm:$0xff]
    %v7001 = vld [vmem:[#allocation2 + $0x48] sm:$0xff]
    %v7002 = vld [vmem:[#allocation2 + $0x50] sm:$0xff]
    %v7003 = vld [vmem:[#allocation2 + $0x58] sm:$0xff]
    %v7004 = vld [vmem:[#allocation2 + $0x60] sm:$0xff]
    %v7005 = vld [vmem:[#allocation2 + $0x68] sm:$0xff]
    %v7006 = vld [vmem:[#allocation2 + $0x70] sm:$0xff]
    %v7007 = vld [vmem:[#allocation2 + $0x78] sm:$0xff]
    %v7008 = vunpack.c.l.bf16 %v6992
    %v7009 = vunpack.c.h.bf16 %v6992
    %v7010 = vunpack.c.l.bf16 %v6993
    %v7011 = vunpack.c.h.bf16 %v6993
    %v7012 = vunpack.c.l.bf16 %v6994
    %v7013 = vunpack.c.h.bf16 %v6994
    %v7014 = vunpack.c.l.bf16 %v6995
    %v7015 = vunpack.c.h.bf16 %v6995
    %v7016 = vunpack.c.l.bf16 %v6996
    %v7017 = vunpack.c.h.bf16 %v6996
    %v7018 = vunpack.c.l.bf16 %v6997
    %v7019 = vunpack.c.h.bf16 %v6997
    %v7020 = vunpack.c.l.bf16 %v6998
    %v7021 = vunpack.c.h.bf16 %v6998
    %v7022 = vunpack.c.l.bf16 %v6999
    %v7023 = vunpack.c.h.bf16 %v6999
    %v7024 = vunpack.c.l.bf16 %v7000
    %v7025 = vunpack.c.h.bf16 %v7000
    %v7026 = vunpack.c.l.bf16 %v7001
    %v7027 = vunpack.c.h.bf16 %v7001
    %v7028 = vunpack.c.l.bf16 %v7002
    %v7029 = vunpack.c.h.bf16 %v7002
    %v7030 = vunpack.c.l.bf16 %v7003
    %v7031 = vunpack.c.h.bf16 %v7003
    %v7032 = vunpack.c.l.bf16 %v7004
    %v7033 = vunpack.c.h.bf16 %v7004
    %v7034 = vunpack.c.l.bf16 %v7005
    %v7035 = vunpack.c.h.bf16 %v7005
    %v7036 = vunpack.c.l.bf16 %v7006
    %v7037 = vunpack.c.h.bf16 %v7006
    %v7038 = vunpack.c.l.bf16 %v7007
    %v7039 = vunpack.c.h.bf16 %v7007
    %v7040 = vld [vmem:[#allocation27] sm:$0xff]
    %v7041 = vld [vmem:[#allocation27 + $0x8] sm:$0xff]
    %v7042 = vld [vmem:[#allocation27 + $0x10] sm:$0xff]
    %v7043 = vld [vmem:[#allocation27 + $0x18] sm:$0xff]
    %v7044 = vld [vmem:[#allocation27 + $0x20] sm:$0xff]
    %v7045 = vld [vmem:[#allocation27 + $0x28] sm:$0xff]
    %v7046 = vld [vmem:[#allocation27 + $0x30] sm:$0xff]
    %v7047 = vld [vmem:[#allocation27 + $0x38] sm:$0xff]
    %v7048 = vld [vmem:[#allocation27 + $0x40] sm:$0xff]
    %v7049 = vld [vmem:[#allocation27 + $0x48] sm:$0xff]
    %v7050 = vld [vmem:[#allocation27 + $0x50] sm:$0xff]
    %v7051 = vld [vmem:[#allocation27 + $0x58] sm:$0xff]
    %v7052 = vld [vmem:[#allocation27 + $0x60] sm:$0xff]
    %v7053 = vld [vmem:[#allocation27 + $0x68] sm:$0xff]
    %v7054 = vld [vmem:[#allocation27 + $0x70] sm:$0xff]
    %v7055 = vld [vmem:[#allocation27 + $0x78] sm:$0xff]
    %v7056 = vld [vmem:[#allocation27 + $0x80] sm:$0xff]
    %v7057 = vld [vmem:[#allocation27 + $0x88] sm:$0xff]
    %v7058 = vld [vmem:[#allocation27 + $0x90] sm:$0xff]
    %v7059 = vld [vmem:[#allocation27 + $0x98] sm:$0xff]
    %v7060 = vld [vmem:[#allocation27 + $0xa0] sm:$0xff]
    %v7061 = vld [vmem:[#allocation27 + $0xa8] sm:$0xff]
    %v7062 = vld [vmem:[#allocation27 + $0xb0] sm:$0xff]
    %v7063 = vld [vmem:[#allocation27 + $0xb8] sm:$0xff]
    %v7064 = vld [vmem:[#allocation27 + $0xc0] sm:$0xff]
    %v7065 = vld [vmem:[#allocation27 + $0xc8] sm:$0xff]
    %v7066 = vld [vmem:[#allocation27 + $0xd0] sm:$0xff]
    %v7067 = vld [vmem:[#allocation27 + $0xd8] sm:$0xff]
    %v7068 = vld [vmem:[#allocation27 + $0xe0] sm:$0xff]
    %v7069 = vld [vmem:[#allocation27 + $0xe8] sm:$0xff]
    %v7070 = vld [vmem:[#allocation27 + $0xf0] sm:$0xff]
    %v7071 = vld [vmem:[#allocation27 + $0xf8] sm:$0xff]
    %v7072 = vld [vmem:[#allocation27 + $0x100] sm:$0xff]
    %v7073 = vld [vmem:[#allocation27 + $0x108] sm:$0xff]
    %v7074 = vld [vmem:[#allocation27 + $0x110] sm:$0xff]
    %v7075 = vld [vmem:[#allocation27 + $0x118] sm:$0xff]
    %v7076 = vld [vmem:[#allocation27 + $0x120] sm:$0xff]
    %v7077 = vld [vmem:[#allocation27 + $0x128] sm:$0xff]
    %v7078 = vld [vmem:[#allocation27 + $0x130] sm:$0xff]
    %v7079 = vld [vmem:[#allocation27 + $0x138] sm:$0xff]
    %v7080 = vld [vmem:[#allocation27 + $0x140] sm:$0xff]
    %v7081 = vld [vmem:[#allocation27 + $0x148] sm:$0xff]
    %v7082 = vld [vmem:[#allocation27 + $0x150] sm:$0xff]
    %v7083 = vld [vmem:[#allocation27 + $0x158] sm:$0xff]
    %v7084 = vld [vmem:[#allocation27 + $0x160] sm:$0xff]
    %v7085 = vld [vmem:[#allocation27 + $0x168] sm:$0xff]
    %v7086 = vld [vmem:[#allocation27 + $0x170] sm:$0xff]
    %v7087 = vld [vmem:[#allocation27 + $0x178] sm:$0xff]
    %v7088 = vld [vmem:[#allocation27 + $0x180] sm:$0xff]
    %v7089 = vld [vmem:[#allocation27 + $0x188] sm:$0xff]
    %v7090 = vld [vmem:[#allocation27 + $0x190] sm:$0xff]
    %v7091 = vld [vmem:[#allocation27 + $0x198] sm:$0xff]
    %v7092 = vld [vmem:[#allocation27 + $0x1a0] sm:$0xff]
    %v7093 = vld [vmem:[#allocation27 + $0x1a8] sm:$0xff]
    %v7094 = vld [vmem:[#allocation27 + $0x1b0] sm:$0xff]
    %v7095 = vld [vmem:[#allocation27 + $0x1b8] sm:$0xff]
    %v7096 = vld [vmem:[#allocation27 + $0x1c0] sm:$0xff]
    %v7097 = vld [vmem:[#allocation27 + $0x1c8] sm:$0xff]
    %v7098 = vld [vmem:[#allocation27 + $0x1d0] sm:$0xff]
    %v7099 = vld [vmem:[#allocation27 + $0x1d8] sm:$0xff]
    %v7100 = vld [vmem:[#allocation27 + $0x1e0] sm:$0xff]
    %v7101 = vld [vmem:[#allocation27 + $0x1e8] sm:$0xff]
    %v7102 = vld [vmem:[#allocation27 + $0x1f0] sm:$0xff]
    %v7103 = vld [vmem:[#allocation27 + $0x1f8] sm:$0xff]
    %v7104 = vld [vmem:[#allocation27 + $0x200] sm:$0xff]
    %v7105 = vld [vmem:[#allocation27 + $0x208] sm:$0xff]
    %v7106 = vld [vmem:[#allocation27 + $0x210] sm:$0xff]
    %v7107 = vld [vmem:[#allocation27 + $0x218] sm:$0xff]
    %v7108 = vld [vmem:[#allocation27 + $0x220] sm:$0xff]
    %v7109 = vld [vmem:[#allocation27 + $0x228] sm:$0xff]
    %v7110 = vld [vmem:[#allocation27 + $0x230] sm:$0xff]
    %v7111 = vld [vmem:[#allocation27 + $0x238] sm:$0xff]
    %v7112 = vld [vmem:[#allocation27 + $0x240] sm:$0xff]
    %v7113 = vld [vmem:[#allocation27 + $0x248] sm:$0xff]
    %v7114 = vld [vmem:[#allocation27 + $0x250] sm:$0xff]
    %v7115 = vld [vmem:[#allocation27 + $0x258] sm:$0xff]
    %v7116 = vld [vmem:[#allocation27 + $0x260] sm:$0xff]
    %v7117 = vld [vmem:[#allocation27 + $0x268] sm:$0xff]
    %v7118 = vld [vmem:[#allocation27 + $0x270] sm:$0xff]
    %v7119 = vld [vmem:[#allocation27 + $0x278] sm:$0xff]
    %v7120 = vld [vmem:[#allocation27 + $0x280] sm:$0xff]
    %v7121 = vld [vmem:[#allocation27 + $0x288] sm:$0xff]
    %v7122 = vld [vmem:[#allocation27 + $0x290] sm:$0xff]
    %v7123 = vld [vmem:[#allocation27 + $0x298] sm:$0xff]
    %v7124 = vld [vmem:[#allocation27 + $0x2a0] sm:$0xff]
    %v7125 = vld [vmem:[#allocation27 + $0x2a8] sm:$0xff]
    %v7126 = vld [vmem:[#allocation27 + $0x2b0] sm:$0xff]
    %v7127 = vld [vmem:[#allocation27 + $0x2b8] sm:$0xff]
    %v7128 = vld [vmem:[#allocation27 + $0x2c0] sm:$0xff]
    %v7129 = vld [vmem:[#allocation27 + $0x2c8] sm:$0xff]
    %v7130 = vld [vmem:[#allocation27 + $0x2d0] sm:$0xff]
    %v7131 = vld [vmem:[#allocation27 + $0x2d8] sm:$0xff]
    %v7132 = vld [vmem:[#allocation27 + $0x2e0] sm:$0xff]
    %v7133 = vld [vmem:[#allocation27 + $0x2e8] sm:$0xff]
    %v7134 = vld [vmem:[#allocation27 + $0x2f0] sm:$0xff]
    %v7135 = vld [vmem:[#allocation27 + $0x2f8] sm:$0xff]
    %v7136 = vld [vmem:[#allocation27 + $0x300] sm:$0xff]
    %v7137 = vld [vmem:[#allocation27 + $0x308] sm:$0xff]
    %v7138 = vld [vmem:[#allocation27 + $0x310] sm:$0xff]
    %v7139 = vld [vmem:[#allocation27 + $0x318] sm:$0xff]
    %v7140 = vld [vmem:[#allocation27 + $0x320] sm:$0xff]
    %v7141 = vld [vmem:[#allocation27 + $0x328] sm:$0xff]
    %v7142 = vld [vmem:[#allocation27 + $0x330] sm:$0xff]
    %v7143 = vld [vmem:[#allocation27 + $0x338] sm:$0xff]
    %v7144 = vld [vmem:[#allocation27 + $0x340] sm:$0xff]
    %v7145 = vld [vmem:[#allocation27 + $0x348] sm:$0xff]
    %v7146 = vld [vmem:[#allocation27 + $0x350] sm:$0xff]
    %v7147 = vld [vmem:[#allocation27 + $0x358] sm:$0xff]
    %v7148 = vld [vmem:[#allocation27 + $0x360] sm:$0xff]
    %v7149 = vld [vmem:[#allocation27 + $0x368] sm:$0xff]
    %v7150 = vld [vmem:[#allocation27 + $0x370] sm:$0xff]
    %v7151 = vld [vmem:[#allocation27 + $0x378] sm:$0xff]
    %v7152 = vld [vmem:[#allocation27 + $0x380] sm:$0xff]
    %v7153 = vld [vmem:[#allocation27 + $0x388] sm:$0xff]
    %v7154 = vld [vmem:[#allocation27 + $0x390] sm:$0xff]
    %v7155 = vld [vmem:[#allocation27 + $0x398] sm:$0xff]
    %v7156 = vld [vmem:[#allocation27 + $0x3a0] sm:$0xff]
    %v7157 = vld [vmem:[#allocation27 + $0x3a8] sm:$0xff]
    %v7158 = vld [vmem:[#allocation27 + $0x3b0] sm:$0xff]
    %v7159 = vld [vmem:[#allocation27 + $0x3b8] sm:$0xff]
    %v7160 = vld [vmem:[#allocation27 + $0x3c0] sm:$0xff]
    %v7161 = vld [vmem:[#allocation27 + $0x3c8] sm:$0xff]
    %v7162 = vld [vmem:[#allocation27 + $0x3d0] sm:$0xff]
    %v7163 = vld [vmem:[#allocation27 + $0x3d8] sm:$0xff]
    %v7164 = vld [vmem:[#allocation27 + $0x3e0] sm:$0xff]
    %v7165 = vld [vmem:[#allocation27 + $0x3e8] sm:$0xff]
    %v7166 = vld [vmem:[#allocation27 + $0x3f0] sm:$0xff]
    %v7167 = vld [vmem:[#allocation27 + $0x3f8] sm:$0xff]
    %v7296 = vunpack.c.l.b16 %v7040
    %v7297 = vunpack.c.h.b16 %v7040
    %v7298 = vunpack.c.l.b16 %v7041
    %v7299 = vunpack.c.h.b16 %v7041
    %v7300 = vunpack.c.l.b16 %v7042
    %v7301 = vunpack.c.h.b16 %v7042
    %v7302 = vunpack.c.l.b16 %v7043
    %v7303 = vunpack.c.h.b16 %v7043
    %v7304 = vunpack.c.l.b16 %v7044
    %v7305 = vunpack.c.h.b16 %v7044
    %v7306 = vunpack.c.l.b16 %v7045
    %v7307 = vunpack.c.h.b16 %v7045
    %v7308 = vunpack.c.l.b16 %v7046
    %v7309 = vunpack.c.h.b16 %v7046
    %v7310 = vunpack.c.l.b16 %v7047
    %v7311 = vunpack.c.h.b16 %v7047
    %v7312 = vunpack.c.l.b16 %v7048
    %v7313 = vunpack.c.h.b16 %v7048
    %v7314 = vunpack.c.l.b16 %v7049
    %v7315 = vunpack.c.h.b16 %v7049
    %v7316 = vunpack.c.l.b16 %v7050
    %v7317 = vunpack.c.h.b16 %v7050
    %v7318 = vunpack.c.l.b16 %v7051
    %v7319 = vunpack.c.h.b16 %v7051
    %v7320 = vunpack.c.l.b16 %v7052
    %v7321 = vunpack.c.h.b16 %v7052
    %v7322 = vunpack.c.l.b16 %v7053
    %v7323 = vunpack.c.h.b16 %v7053
    %v7324 = vunpack.c.l.b16 %v7054
    %v7325 = vunpack.c.h.b16 %v7054
    %v7326 = vunpack.c.l.b16 %v7055
    %v7327 = vunpack.c.h.b16 %v7055
    %v7328 = vunpack.c.l.b16 %v7056
    %v7329 = vunpack.c.h.b16 %v7056
    %v7330 = vunpack.c.l.b16 %v7057
    %v7331 = vunpack.c.h.b16 %v7057
    %v7332 = vunpack.c.l.b16 %v7058
    %v7333 = vunpack.c.h.b16 %v7058
    %v7334 = vunpack.c.l.b16 %v7059
    %v7335 = vunpack.c.h.b16 %v7059
    %v7336 = vunpack.c.l.b16 %v7060
    %v7337 = vunpack.c.h.b16 %v7060
    %v7338 = vunpack.c.l.b16 %v7061
    %v7339 = vunpack.c.h.b16 %v7061
    %v7340 = vunpack.c.l.b16 %v7062
    %v7341 = vunpack.c.h.b16 %v7062
    %v7342 = vunpack.c.l.b16 %v7063
    %v7343 = vunpack.c.h.b16 %v7063
    %v7344 = vunpack.c.l.b16 %v7064
    %v7345 = vunpack.c.h.b16 %v7064
    %v7346 = vunpack.c.l.b16 %v7065
    %v7347 = vunpack.c.h.b16 %v7065
    %v7348 = vunpack.c.l.b16 %v7066
    %v7349 = vunpack.c.h.b16 %v7066
    %v7350 = vunpack.c.l.b16 %v7067
    %v7351 = vunpack.c.h.b16 %v7067
    %v7352 = vunpack.c.l.b16 %v7068
    %v7353 = vunpack.c.h.b16 %v7068
    %v7354 = vunpack.c.l.b16 %v7069
    %v7355 = vunpack.c.h.b16 %v7069
    %v7356 = vunpack.c.l.b16 %v7070
    %v7357 = vunpack.c.h.b16 %v7070
    %v7358 = vunpack.c.l.b16 %v7071
    %v7359 = vunpack.c.h.b16 %v7071
    %v7360 = vunpack.c.l.b16 %v7072
    %v7361 = vunpack.c.h.b16 %v7072
    %v7362 = vunpack.c.l.b16 %v7073
    %v7363 = vunpack.c.h.b16 %v7073
    %v7364 = vunpack.c.l.b16 %v7074
    %v7365 = vunpack.c.h.b16 %v7074
    %v7366 = vunpack.c.l.b16 %v7075
    %v7367 = vunpack.c.h.b16 %v7075
    %v7368 = vunpack.c.l.b16 %v7076
    %v7369 = vunpack.c.h.b16 %v7076
    %v7370 = vunpack.c.l.b16 %v7077
    %v7371 = vunpack.c.h.b16 %v7077
    %v7372 = vunpack.c.l.b16 %v7078
    %v7373 = vunpack.c.h.b16 %v7078
    %v7374 = vunpack.c.l.b16 %v7079
    %v7375 = vunpack.c.h.b16 %v7079
    %v7376 = vunpack.c.l.b16 %v7080
    %v7377 = vunpack.c.h.b16 %v7080
    %v7378 = vunpack.c.l.b16 %v7081
    %v7379 = vunpack.c.h.b16 %v7081
    %v7380 = vunpack.c.l.b16 %v7082
    %v7381 = vunpack.c.h.b16 %v7082
    %v7382 = vunpack.c.l.b16 %v7083
    %v7383 = vunpack.c.h.b16 %v7083
    %v7384 = vunpack.c.l.b16 %v7084
    %v7385 = vunpack.c.h.b16 %v7084
    %v7386 = vunpack.c.l.b16 %v7085
    %v7387 = vunpack.c.h.b16 %v7085
    %v7388 = vunpack.c.l.b16 %v7086
    %v7389 = vunpack.c.h.b16 %v7086
    %v7390 = vunpack.c.l.b16 %v7087
    %v7391 = vunpack.c.h.b16 %v7087
    %v7392 = vunpack.c.l.b16 %v7088
    %v7393 = vunpack.c.h.b16 %v7088
    %v7394 = vunpack.c.l.b16 %v7089
    %v7395 = vunpack.c.h.b16 %v7089
    %v7396 = vunpack.c.l.b16 %v7090
    %v7397 = vunpack.c.h.b16 %v7090
    %v7398 = vunpack.c.l.b16 %v7091
    %v7399 = vunpack.c.h.b16 %v7091
    %v7400 = vunpack.c.l.b16 %v7092
    %v7401 = vunpack.c.h.b16 %v7092
    %v7402 = vunpack.c.l.b16 %v7093
    %v7403 = vunpack.c.h.b16 %v7093
    %v7404 = vunpack.c.l.b16 %v7094
    %v7405 = vunpack.c.h.b16 %v7094
    %v7406 = vunpack.c.l.b16 %v7095
    %v7407 = vunpack.c.h.b16 %v7095
    %v7408 = vunpack.c.l.b16 %v7096
    %v7409 = vunpack.c.h.b16 %v7096
    %v7410 = vunpack.c.l.b16 %v7097
    %v7411 = vunpack.c.h.b16 %v7097
    %v7412 = vunpack.c.l.b16 %v7098
    %v7413 = vunpack.c.h.b16 %v7098
    %v7414 = vunpack.c.l.b16 %v7099
    %v7415 = vunpack.c.h.b16 %v7099
    %v7416 = vunpack.c.l.b16 %v7100
    %v7417 = vunpack.c.h.b16 %v7100
    %v7418 = vunpack.c.l.b16 %v7101
    %v7419 = vunpack.c.h.b16 %v7101
    %v7420 = vunpack.c.l.b16 %v7102
    %v7421 = vunpack.c.h.b16 %v7102
    %v7422 = vunpack.c.l.b16 %v7103
    %v7423 = vunpack.c.h.b16 %v7103
    %v7424 = vunpack.c.l.b16 %v7104
    %v7425 = vunpack.c.h.b16 %v7104
    %v7426 = vunpack.c.l.b16 %v7105
    %v7427 = vunpack.c.h.b16 %v7105
    %v7428 = vunpack.c.l.b16 %v7106
    %v7429 = vunpack.c.h.b16 %v7106
    %v7430 = vunpack.c.l.b16 %v7107
    %v7431 = vunpack.c.h.b16 %v7107
    %v7432 = vunpack.c.l.b16 %v7108
    %v7433 = vunpack.c.h.b16 %v7108
    %v7434 = vunpack.c.l.b16 %v7109
    %v7435 = vunpack.c.h.b16 %v7109
    %v7436 = vunpack.c.l.b16 %v7110
    %v7437 = vunpack.c.h.b16 %v7110
    %v7438 = vunpack.c.l.b16 %v7111
    %v7439 = vunpack.c.h.b16 %v7111
    %v7440 = vunpack.c.l.b16 %v7112
    %v7441 = vunpack.c.h.b16 %v7112
    %v7442 = vunpack.c.l.b16 %v7113
    %v7443 = vunpack.c.h.b16 %v7113
    %v7444 = vunpack.c.l.b16 %v7114
    %v7445 = vunpack.c.h.b16 %v7114
    %v7446 = vunpack.c.l.b16 %v7115
    %v7447 = vunpack.c.h.b16 %v7115
    %v7448 = vunpack.c.l.b16 %v7116
    %v7449 = vunpack.c.h.b16 %v7116
    %v7450 = vunpack.c.l.b16 %v7117
    %v7451 = vunpack.c.h.b16 %v7117
    %v7452 = vunpack.c.l.b16 %v7118
    %v7453 = vunpack.c.h.b16 %v7118
    %v7454 = vunpack.c.l.b16 %v7119
    %v7455 = vunpack.c.h.b16 %v7119
    %v7456 = vunpack.c.l.b16 %v7120
    %v7457 = vunpack.c.h.b16 %v7120
    %v7458 = vunpack.c.l.b16 %v7121
    %v7459 = vunpack.c.h.b16 %v7121
    %v7460 = vunpack.c.l.b16 %v7122
    %v7461 = vunpack.c.h.b16 %v7122
    %v7462 = vunpack.c.l.b16 %v7123
    %v7463 = vunpack.c.h.b16 %v7123
    %v7464 = vunpack.c.l.b16 %v7124
    %v7465 = vunpack.c.h.b16 %v7124
    %v7466 = vunpack.c.l.b16 %v7125
    %v7467 = vunpack.c.h.b16 %v7125
    %v7468 = vunpack.c.l.b16 %v7126
    %v7469 = vunpack.c.h.b16 %v7126
    %v7470 = vunpack.c.l.b16 %v7127
    %v7471 = vunpack.c.h.b16 %v7127
    %v7472 = vunpack.c.l.b16 %v7128
    %v7473 = vunpack.c.h.b16 %v7128
    %v7474 = vunpack.c.l.b16 %v7129
    %v7475 = vunpack.c.h.b16 %v7129
    %v7476 = vunpack.c.l.b16 %v7130
    %v7477 = vunpack.c.h.b16 %v7130
    %v7478 = vunpack.c.l.b16 %v7131
    %v7479 = vunpack.c.h.b16 %v7131
    %v7480 = vunpack.c.l.b16 %v7132
    %v7481 = vunpack.c.h.b16 %v7132
    %v7482 = vunpack.c.l.b16 %v7133
    %v7483 = vunpack.c.h.b16 %v7133
    %v7484 = vunpack.c.l.b16 %v7134
    %v7485 = vunpack.c.h.b16 %v7134
    %v7486 = vunpack.c.l.b16 %v7135
    %v7487 = vunpack.c.h.b16 %v7135
    %v7488 = vunpack.c.l.b16 %v7136
    %v7489 = vunpack.c.h.b16 %v7136
    %v7490 = vunpack.c.l.b16 %v7137
    %v7491 = vunpack.c.h.b16 %v7137
    %v7492 = vunpack.c.l.b16 %v7138
    %v7493 = vunpack.c.h.b16 %v7138
    %v7494 = vunpack.c.l.b16 %v7139
    %v7495 = vunpack.c.h.b16 %v7139
    %v7496 = vunpack.c.l.b16 %v7140
    %v7497 = vunpack.c.h.b16 %v7140
    %v7498 = vunpack.c.l.b16 %v7141
    %v7499 = vunpack.c.h.b16 %v7141
    %v7500 = vunpack.c.l.b16 %v7142
    %v7501 = vunpack.c.h.b16 %v7142
    %v7502 = vunpack.c.l.b16 %v7143
    %v7503 = vunpack.c.h.b16 %v7143
    %v7504 = vunpack.c.l.b16 %v7144
    %v7505 = vunpack.c.h.b16 %v7144
    %v7506 = vunpack.c.l.b16 %v7145
    %v7507 = vunpack.c.h.b16 %v7145
    %v7508 = vunpack.c.l.b16 %v7146
    %v7509 = vunpack.c.h.b16 %v7146
    %v7510 = vunpack.c.l.b16 %v7147
    %v7511 = vunpack.c.h.b16 %v7147
    %v7512 = vunpack.c.l.b16 %v7148
    %v7513 = vunpack.c.h.b16 %v7148
    %v7514 = vunpack.c.l.b16 %v7149
    %v7515 = vunpack.c.h.b16 %v7149
    %v7516 = vunpack.c.l.b16 %v7150
    %v7517 = vunpack.c.h.b16 %v7150
    %v7518 = vunpack.c.l.b16 %v7151
    %v7519 = vunpack.c.h.b16 %v7151
    %v7520 = vunpack.c.l.b16 %v7152
    %v7521 = vunpack.c.h.b16 %v7152
    %v7522 = vunpack.c.l.b16 %v7153
    %v7523 = vunpack.c.h.b16 %v7153
    %v7524 = vunpack.c.l.b16 %v7154
    %v7525 = vunpack.c.h.b16 %v7154
    %v7526 = vunpack.c.l.b16 %v7155
    %v7527 = vunpack.c.h.b16 %v7155
    %v7528 = vunpack.c.l.b16 %v7156
    %v7529 = vunpack.c.h.b16 %v7156
    %v7530 = vunpack.c.l.b16 %v7157
    %v7531 = vunpack.c.h.b16 %v7157
    %v7532 = vunpack.c.l.b16 %v7158
    %v7533 = vunpack.c.h.b16 %v7158
    %v7534 = vunpack.c.l.b16 %v7159
    %v7535 = vunpack.c.h.b16 %v7159
    %v7536 = vunpack.c.l.b16 %v7160
    %v7537 = vunpack.c.h.b16 %v7160
    %v7538 = vunpack.c.l.b16 %v7161
    %v7539 = vunpack.c.h.b16 %v7161
    %v7540 = vunpack.c.l.b16 %v7162
    %v7541 = vunpack.c.h.b16 %v7162
    %v7542 = vunpack.c.l.b16 %v7163
    %v7543 = vunpack.c.h.b16 %v7163
    %v7544 = vunpack.c.l.b16 %v7164
    %v7545 = vunpack.c.h.b16 %v7164
    %v7546 = vunpack.c.l.b16 %v7165
    %v7547 = vunpack.c.h.b16 %v7165
    %v7548 = vunpack.c.l.b16 %v7166
    %v7549 = vunpack.c.h.b16 %v7166
    %v7550 = vunpack.c.l.b16 %v7167
    %v7551 = vunpack.c.h.b16 %v7167
    %v7552 = vpack.c.b16 %v7300, %v7296
    %v7553 = vpack.c.b16 %v7301, %v7297
    %v7554 = vpack.c.b16 %v7302, %v7298
    %v7555 = vpack.c.b16 %v7303, %v7299
    %v7556 = vpack.c.b16 %v7308, %v7304
    %v7557 = vpack.c.b16 %v7309, %v7305
    %v7558 = vpack.c.b16 %v7310, %v7306
    %v7559 = vpack.c.b16 %v7311, %v7307
    %v7560 = vpack.c.b16 %v7316, %v7312
    %v7561 = vpack.c.b16 %v7317, %v7313
    %v7562 = vpack.c.b16 %v7318, %v7314
    %v7563 = vpack.c.b16 %v7319, %v7315
    %v7564 = vpack.c.b16 %v7324, %v7320
    %v7565 = vpack.c.b16 %v7325, %v7321
    %v7566 = vpack.c.b16 %v7326, %v7322
    %v7567 = vpack.c.b16 %v7327, %v7323
    %v7568 = vpack.c.b16 %v7332, %v7328
    %v7569 = vpack.c.b16 %v7333, %v7329
    %v7570 = vpack.c.b16 %v7334, %v7330
    %v7571 = vpack.c.b16 %v7335, %v7331
    %v7572 = vpack.c.b16 %v7340, %v7336
    %v7573 = vpack.c.b16 %v7341, %v7337
    %v7574 = vpack.c.b16 %v7342, %v7338
    %v7575 = vpack.c.b16 %v7343, %v7339
    %v7576 = vpack.c.b16 %v7348, %v7344
    %v7577 = vpack.c.b16 %v7349, %v7345
    %v7578 = vpack.c.b16 %v7350, %v7346
    %v7579 = vpack.c.b16 %v7351, %v7347
    %v7580 = vpack.c.b16 %v7356, %v7352
    %v7581 = vpack.c.b16 %v7357, %v7353
    %v7582 = vpack.c.b16 %v7358, %v7354
    %v7583 = vpack.c.b16 %v7359, %v7355
    %v7584 = vpack.c.b16 %v7364, %v7360
    %v7585 = vpack.c.b16 %v7365, %v7361
    %v7586 = vpack.c.b16 %v7366, %v7362
    %v7587 = vpack.c.b16 %v7367, %v7363
    %v7588 = vpack.c.b16 %v7372, %v7368
    %v7589 = vpack.c.b16 %v7373, %v7369
    %v7590 = vpack.c.b16 %v7374, %v7370
    %v7591 = vpack.c.b16 %v7375, %v7371
    %v7592 = vpack.c.b16 %v7380, %v7376
    %v7593 = vpack.c.b16 %v7381, %v7377
    %v7594 = vpack.c.b16 %v7382, %v7378
    %v7595 = vpack.c.b16 %v7383, %v7379
    %v7596 = vpack.c.b16 %v7388, %v7384
    %v7597 = vpack.c.b16 %v7389, %v7385
    %v7598 = vpack.c.b16 %v7390, %v7386
    %v7599 = vpack.c.b16 %v7391, %v7387
    %v7600 = vpack.c.b16 %v7396, %v7392
    %v7601 = vpack.c.b16 %v7397, %v7393
    %v7602 = vpack.c.b16 %v7398, %v7394
    %v7603 = vpack.c.b16 %v7399, %v7395
    %v7604 = vpack.c.b16 %v7404, %v7400
    %v7605 = vpack.c.b16 %v7405, %v7401
    %v7606 = vpack.c.b16 %v7406, %v7402
    %v7607 = vpack.c.b16 %v7407, %v7403
    %v7608 = vpack.c.b16 %v7412, %v7408
    %v7609 = vpack.c.b16 %v7413, %v7409
    %v7610 = vpack.c.b16 %v7414, %v7410
    %v7611 = vpack.c.b16 %v7415, %v7411
    %v7612 = vpack.c.b16 %v7420, %v7416
    %v7613 = vpack.c.b16 %v7421, %v7417
    %v7614 = vpack.c.b16 %v7422, %v7418
    %v7615 = vpack.c.b16 %v7423, %v7419
    %v7616 = vpack.c.b16 %v7428, %v7424
    %v7617 = vpack.c.b16 %v7429, %v7425
    %v7618 = vpack.c.b16 %v7430, %v7426
    %v7619 = vpack.c.b16 %v7431, %v7427
    %v7620 = vpack.c.b16 %v7436, %v7432
    %v7621 = vpack.c.b16 %v7437, %v7433
    %v7622 = vpack.c.b16 %v7438, %v7434
    %v7623 = vpack.c.b16 %v7439, %v7435
    %v7624 = vpack.c.b16 %v7444, %v7440
    %v7625 = vpack.c.b16 %v7445, %v7441
    %v7626 = vpack.c.b16 %v7446, %v7442
    %v7627 = vpack.c.b16 %v7447, %v7443
    %v7628 = vpack.c.b16 %v7452, %v7448
    %v7629 = vpack.c.b16 %v7453, %v7449
    %v7630 = vpack.c.b16 %v7454, %v7450
    %v7631 = vpack.c.b16 %v7455, %v7451
    %v7632 = vpack.c.b16 %v7460, %v7456
    %v7633 = vpack.c.b16 %v7461, %v7457
    %v7634 = vpack.c.b16 %v7462, %v7458
    %v7635 = vpack.c.b16 %v7463, %v7459
    %v7636 = vpack.c.b16 %v7468, %v7464
    %v7637 = vpack.c.b16 %v7469, %v7465
    %v7638 = vpack.c.b16 %v7470, %v7466
    %v7639 = vpack.c.b16 %v7471, %v7467
    %v7640 = vpack.c.b16 %v7476, %v7472
    %v7641 = vpack.c.b16 %v7477, %v7473
    %v7642 = vpack.c.b16 %v7478, %v7474
    %v7643 = vpack.c.b16 %v7479, %v7475
    %v7644 = vpack.c.b16 %v7484, %v7480
    %v7645 = vpack.c.b16 %v7485, %v7481
    %v7646 = vpack.c.b16 %v7486, %v7482
    %v7647 = vpack.c.b16 %v7487, %v7483
    %v7648 = vpack.c.b16 %v7492, %v7488
    %v7649 = vpack.c.b16 %v7493, %v7489
    %v7650 = vpack.c.b16 %v7494, %v7490
    %v7651 = vpack.c.b16 %v7495, %v7491
    %v7652 = vpack.c.b16 %v7500, %v7496
    %v7653 = vpack.c.b16 %v7501, %v7497
    %v7654 = vpack.c.b16 %v7502, %v7498
    %v7655 = vpack.c.b16 %v7503, %v7499
    %v7656 = vpack.c.b16 %v7508, %v7504
    %v7657 = vpack.c.b16 %v7509, %v7505
    %v7658 = vpack.c.b16 %v7510, %v7506
    %v7659 = vpack.c.b16 %v7511, %v7507
    %v7660 = vpack.c.b16 %v7516, %v7512
    %v7661 = vpack.c.b16 %v7517, %v7513
    %v7662 = vpack.c.b16 %v7518, %v7514
    %v7663 = vpack.c.b16 %v7519, %v7515
    %v7664 = vpack.c.b16 %v7524, %v7520
    %v7665 = vpack.c.b16 %v7525, %v7521
    %v7666 = vpack.c.b16 %v7526, %v7522
    %v7667 = vpack.c.b16 %v7527, %v7523
    %v7668 = vpack.c.b16 %v7532, %v7528
    %v7669 = vpack.c.b16 %v7533, %v7529
    %v7670 = vpack.c.b16 %v7534, %v7530
    %v7671 = vpack.c.b16 %v7535, %v7531
    %v7672 = vpack.c.b16 %v7540, %v7536
    %v7673 = vpack.c.b16 %v7541, %v7537
    %v7674 = vpack.c.b16 %v7542, %v7538
    %v7675 = vpack.c.b16 %v7543, %v7539
    %v7676 = vpack.c.b16 %v7548, %v7544
    %v7677 = vpack.c.b16 %v7549, %v7545
    %v7678 = vpack.c.b16 %v7550, %v7546
    %v7679 = vpack.c.b16 %v7551, %v7547
    %7808 = vmatpush.bf16.msra.mxu0 %v7580
    %7809 = vmatpush.bf16.msra.mxu0 %v7576
    %7810 = vmatpush.bf16.msra.mxu0 %v7572
    %7811 = vmatpush.bf16.msra.mxu0 %v7568
    %7812 = vmatpush.bf16.msra.mxu0 %v7564
    %7813 = vmatpush.bf16.msra.mxu0 %v7560
    %7814 = vmatpush.bf16.msra.mxu0 %v7556
    %7815 = vmatpush.bf16.msra.mxu0 %v7552
    %7816 = vmatmul.bf16.gmra.mxu0 %v6988
    %v7817 = vpop.f32.mrf.mxu0
    %v7818 = vadd.f32 0.0, %v7817
    %v7819 = vpop.f32.mrf.mxu0
    %7820 = vdwg.mxu0
    %7821 = vmatpush.bf16.msra.mxu0 %v7612
    %7822 = vmatpush.bf16.msra.mxu0 %v7608
    %7823 = vmatpush.bf16.msra.mxu0 %v7604
    %7824 = vmatpush.bf16.msra.mxu0 %v7600
    %7825 = vmatpush.bf16.msra.mxu0 %v7596
    %7826 = vmatpush.bf16.msra.mxu0 %v7592
    %7827 = vmatpush.bf16.msra.mxu0 %v7588
    %7828 = vmatpush.bf16.msra.mxu0 %v7584
    %7829 = vmatmul.bf16.gmra.mxu0 %v6989
    %v7830 = vpop.f32.mrf.mxu0
    %v7831 = vadd.f32 %v7818, %v7830
    %v7832 = vpop.f32.mrf.mxu0
    %7833 = vdwg.mxu0
    %7834 = vmatpush.bf16.msra.mxu0 %v7644
    %7835 = vmatpush.bf16.msra.mxu0 %v7640
    %7836 = vmatpush.bf16.msra.mxu0 %v7636
    %7837 = vmatpush.bf16.msra.mxu0 %v7632
    %7838 = vmatpush.bf16.msra.mxu0 %v7628
    %7839 = vmatpush.bf16.msra.mxu0 %v7624
    %7840 = vmatpush.bf16.msra.mxu0 %v7620
    %7841 = vmatpush.bf16.msra.mxu0 %v7616
    %7842 = vmatmul.bf16.gmra.mxu0 %v6990
    %v7843 = vpop.f32.mrf.mxu0
    %v7844 = vadd.f32 %v7831, %v7843
    %v7845 = vpop.f32.mrf.mxu0
    %7846 = vdwg.mxu0
    %7847 = vmatpush.bf16.msra.mxu0 %v7676
    %7848 = vmatpush.bf16.msra.mxu0 %v7672
    %7849 = vmatpush.bf16.msra.mxu0 %v7668
    %7850 = vmatpush.bf16.msra.mxu0 %v7664
    %7851 = vmatpush.bf16.msra.mxu0 %v7660
    %7852 = vmatpush.bf16.msra.mxu0 %v7656
    %7853 = vmatpush.bf16.msra.mxu0 %v7652
    %7854 = vmatpush.bf16.msra.mxu0 %v7648
    %7855 = vmatmul.bf16.gmra.mxu0 %v6991
    %v7856 = vpop.f32.mrf.mxu0
    %v7857 = vadd.f32 %v7844, %v7856
    %v7858 = vpop.f32.mrf.mxu0
    %7859 = vdwg.mxu0
    %7860 = vmatpush.bf16.msra.mxu0 %v7581
    %7861 = vmatpush.bf16.msra.mxu0 %v7577
    %7862 = vmatpush.bf16.msra.mxu0 %v7573
    %7863 = vmatpush.bf16.msra.mxu0 %v7569
    %7864 = vmatpush.bf16.msra.mxu0 %v7565
    %7865 = vmatpush.bf16.msra.mxu0 %v7561
    %7866 = vmatpush.bf16.msra.mxu0 %v7557
    %7867 = vmatpush.bf16.msra.mxu0 %v7553
    %7868 = vmatmul.bf16.gmra.mxu0 %v6988
    %v7869 = vpop.f32.mrf.mxu0
    %v7870 = vadd.f32 0.0, %v7869
    %v7871 = vpop.f32.mrf.mxu0
    %7872 = vdwg.mxu0
    %7873 = vmatpush.bf16.msra.mxu0 %v7613
    %7874 = vmatpush.bf16.msra.mxu0 %v7609
    %7875 = vmatpush.bf16.msra.mxu0 %v7605
    %7876 = vmatpush.bf16.msra.mxu0 %v7601
    %7877 = vmatpush.bf16.msra.mxu0 %v7597
    %7878 = vmatpush.bf16.msra.mxu0 %v7593
    %7879 = vmatpush.bf16.msra.mxu0 %v7589
    %7880 = vmatpush.bf16.msra.mxu0 %v7585
    %7881 = vmatmul.bf16.gmra.mxu0 %v6989
    %v7882 = vpop.f32.mrf.mxu0
    %v7883 = vadd.f32 %v7870, %v7882
    %v7884 = vpop.f32.mrf.mxu0
    %7885 = vdwg.mxu0
    %7886 = vmatpush.bf16.msra.mxu0 %v7645
    %7887 = vmatpush.bf16.msra.mxu0 %v7641
    %7888 = vmatpush.bf16.msra.mxu0 %v7637
    %7889 = vmatpush.bf16.msra.mxu0 %v7633
    %7890 = vmatpush.bf16.msra.mxu0 %v7629
    %7891 = vmatpush.bf16.msra.mxu0 %v7625
    %7892 = vmatpush.bf16.msra.mxu0 %v7621
    %7893 = vmatpush.bf16.msra.mxu0 %v7617
    %7894 = vmatmul.bf16.gmra.mxu0 %v6990
    %v7895 = vpop.f32.mrf.mxu0
    %v7896 = vadd.f32 %v7883, %v7895
    %v7897 = vpop.f32.mrf.mxu0
    %7898 = vdwg.mxu0
    %7899 = vmatpush.bf16.msra.mxu0 %v7677
    %7900 = vmatpush.bf16.msra.mxu0 %v7673
    %7901 = vmatpush.bf16.msra.mxu0 %v7669
    %7902 = vmatpush.bf16.msra.mxu0 %v7665
    %7903 = vmatpush.bf16.msra.mxu0 %v7661
    %7904 = vmatpush.bf16.msra.mxu0 %v7657
    %7905 = vmatpush.bf16.msra.mxu0 %v7653
    %7906 = vmatpush.bf16.msra.mxu0 %v7649
    %7907 = vmatmul.bf16.gmra.mxu0 %v6991
    %v7908 = vpop.f32.mrf.mxu0
    %v7909 = vadd.f32 %v7896, %v7908
    %v7910 = vpop.f32.mrf.mxu0
    %7911 = vdwg.mxu0
    %7912 = vmatpush.bf16.msra.mxu0 %v7582
    %7913 = vmatpush.bf16.msra.mxu0 %v7578
    %7914 = vmatpush.bf16.msra.mxu0 %v7574
    %7915 = vmatpush.bf16.msra.mxu0 %v7570
    %7916 = vmatpush.bf16.msra.mxu0 %v7566
    %7917 = vmatpush.bf16.msra.mxu0 %v7562
    %7918 = vmatpush.bf16.msra.mxu0 %v7558
    %7919 = vmatpush.bf16.msra.mxu0 %v7554
    %7920 = vmatmul.bf16.gmra.mxu0 %v6988
    %v7921 = vpop.f32.mrf.mxu0
    %v7922 = vadd.f32 0.0, %v7921
    %v7923 = vpop.f32.mrf.mxu0
    %7924 = vdwg.mxu0
    %7925 = vmatpush.bf16.msra.mxu0 %v7614
    %7926 = vmatpush.bf16.msra.mxu0 %v7610
    %7927 = vmatpush.bf16.msra.mxu0 %v7606
    %7928 = vmatpush.bf16.msra.mxu0 %v7602
    %7929 = vmatpush.bf16.msra.mxu0 %v7598
    %7930 = vmatpush.bf16.msra.mxu0 %v7594
    %7931 = vmatpush.bf16.msra.mxu0 %v7590
    %7932 = vmatpush.bf16.msra.mxu0 %v7586
    %7933 = vmatmul.bf16.gmra.mxu0 %v6989
    %v7934 = vpop.f32.mrf.mxu0
    %v7935 = vadd.f32 %v7922, %v7934
    %v7936 = vpop.f32.mrf.mxu0
    %7937 = vdwg.mxu0
    %7938 = vmatpush.bf16.msra.mxu0 %v7646
    %7939 = vmatpush.bf16.msra.mxu0 %v7642
    %7940 = vmatpush.bf16.msra.mxu0 %v7638
    %7941 = vmatpush.bf16.msra.mxu0 %v7634
    %7942 = vmatpush.bf16.msra.mxu0 %v7630
    %7943 = vmatpush.bf16.msra.mxu0 %v7626
    %7944 = vmatpush.bf16.msra.mxu0 %v7622
    %7945 = vmatpush.bf16.msra.mxu0 %v7618
    %7946 = vmatmul.bf16.gmra.mxu0 %v6990
    %v7947 = vpop.f32.mrf.mxu0
    %v7948 = vadd.f32 %v7935, %v7947
    %v7949 = vpop.f32.mrf.mxu0
    %7950 = vdwg.mxu0
    %7951 = vmatpush.bf16.msra.mxu0 %v7678
    %7952 = vmatpush.bf16.msra.mxu0 %v7674
    %7953 = vmatpush.bf16.msra.mxu0 %v7670
    %7954 = vmatpush.bf16.msra.mxu0 %v7666
    %7955 = vmatpush.bf16.msra.mxu0 %v7662
    %7956 = vmatpush.bf16.msra.mxu0 %v7658
    %7957 = vmatpush.bf16.msra.mxu0 %v7654
    %7958 = vmatpush.bf16.msra.mxu0 %v7650
    %7959 = vmatmul.bf16.gmra.mxu0 %v6991
    %v7960 = vpop.f32.mrf.mxu0
    %v7961 = vadd.f32 %v7948, %v7960
    %v7962 = vpop.f32.mrf.mxu0
    %7963 = vdwg.mxu0
    %7964 = vmatpush.bf16.msra.mxu0 %v7583
    %7965 = vmatpush.bf16.msra.mxu0 %v7579
    %7966 = vmatpush.bf16.msra.mxu0 %v7575
    %7967 = vmatpush.bf16.msra.mxu0 %v7571
    %7968 = vmatpush.bf16.msra.mxu0 %v7567
    %7969 = vmatpush.bf16.msra.mxu0 %v7563
    %7970 = vmatpush.bf16.msra.mxu0 %v7559
    %7971 = vmatpush.bf16.msra.mxu0 %v7555
    %7972 = vmatmul.bf16.gmra.mxu0 %v6988
    %v7973 = vpop.f32.mrf.mxu0
    %v7974 = vadd.f32 0.0, %v7973
    %v7975 = vpop.f32.mrf.mxu0
    %7976 = vdwg.mxu0
    %7977 = vmatpush.bf16.msra.mxu0 %v7615
    %7978 = vmatpush.bf16.msra.mxu0 %v7611
    %7979 = vmatpush.bf16.msra.mxu0 %v7607
    %7980 = vmatpush.bf16.msra.mxu0 %v7603
    %7981 = vmatpush.bf16.msra.mxu0 %v7599
    %7982 = vmatpush.bf16.msra.mxu0 %v7595
    %7983 = vmatpush.bf16.msra.mxu0 %v7591
    %7984 = vmatpush.bf16.msra.mxu0 %v7587
    %7985 = vmatmul.bf16.gmra.mxu0 %v6989
    %v7986 = vpop.f32.mrf.mxu0
    %v7987 = vadd.f32 %v7974, %v7986
    %v7988 = vpop.f32.mrf.mxu0
    %7989 = vdwg.mxu0
    %7990 = vmatpush.bf16.msra.mxu0 %v7647
    %7991 = vmatpush.bf16.msra.mxu0 %v7643
    %7992 = vmatpush.bf16.msra.mxu0 %v7639
    %7993 = vmatpush.bf16.msra.mxu0 %v7635
    %7994 = vmatpush.bf16.msra.mxu0 %v7631
    %7995 = vmatpush.bf16.msra.mxu0 %v7627
    %7996 = vmatpush.bf16.msra.mxu0 %v7623
    %7997 = vmatpush.bf16.msra.mxu0 %v7619
    %7998 = vmatmul.bf16.gmra.mxu0 %v6990
    %v7999 = vpop.f32.mrf.mxu0
    %v8000 = vadd.f32 %v7987, %v7999
    %v8001 = vpop.f32.mrf.mxu0
    %8002 = vdwg.mxu0
    %8003 = vmatpush.bf16.msra.mxu0 %v7679
    %8004 = vmatpush.bf16.msra.mxu0 %v7675
    %8005 = vmatpush.bf16.msra.mxu0 %v7671
    %8006 = vmatpush.bf16.msra.mxu0 %v7667
    %8007 = vmatpush.bf16.msra.mxu0 %v7663
    %8008 = vmatpush.bf16.msra.mxu0 %v7659
    %8009 = vmatpush.bf16.msra.mxu0 %v7655
    %8010 = vmatpush.bf16.msra.mxu0 %v7651
    %8011 = vmatmul.bf16.gmra.mxu0 %v6991
    %v8012 = vpop.f32.mrf.mxu0
    %v8013 = vadd.f32 %v8000, %v8012
    %v8014 = vpop.f32.mrf.mxu0
    %8015 = vdwg.mxu0
    %v8020 = vrot.slane %v7909, 7
    %v8021 = vrot.slane %v7961, 6
    %v8022 = vrot.slane %v8013, 5
    %vm8023 = vcmask 1040384
    %v8024 = vsel %vm8023, %v7857, %v8020
    %vm8025 = vcmask 1042434
    %v8026 = vsel %vm8025, %v8021, %v8022
    %vm8027 = vcmask 1041408
    %v8028 = vsel %vm8027, %v8024, %v8026
    %vm8029 = vcmask 1041409
    %v8030 = vsel %vm8029, %v7857, %v8020
    %vm8031 = vcmask 1043459
    %v8032 = vsel %vm8031, %v8021, %v8022
    %vm8033 = vcmask 1042433
    %v8034 = vsel %vm8033, %v8030, %v8032
    %v8035 = vrot.slane %v8034, 1
    %v8036 = vsel %vm8025, %v7857, %v8020
    %vm8037 = vcmask 1044484
    %v8038 = vsel %vm8037, %v8021, %v8022
    %vm8039 = vcmask 1043458
    %v8040 = vsel %vm8039, %v8036, %v8038
    %v8041 = vrot.slane %v8040, 2
    %v8042 = vsel %vm8031, %v7857, %v8020
    %vm8043 = vcmask 1045509
    %v8044 = vsel %vm8043, %v8021, %v8022
    %vm8045 = vcmask 1044483
    %v8046 = vsel %vm8045, %v8042, %v8044
    %v8047 = vrot.slane %v8046, 3
    %v8048 = vsel %vm8037, %v7857, %v8020
    %vm8049 = vcmask 1046534
    %v8050 = vsel %vm8049, %v8021, %v8022
    %vm8051 = vcmask 1045508
    %v8052 = vsel %vm8051, %v8048, %v8050
    %v8053 = vrot.slane %v8052, 4
    %v8054 = vsel %vm8043, %v7857, %v8020
    %vm8055 = vcmask 1046528
    %v8056 = vsel %vm8055, %v8022, %v8021
    %vm8057 = vcmask 1046533
    %v8058 = vsel %vm8057, %v8054, %v8056
    %v8059 = vrot.slane %v8058, 5
    %v8060 = vsel %vm8049, %v7857, %v8020
    %v8061 = vsel %vm8023, %v8021, %v8022
    %vm8062 = vcmask 1045504
    %v8063 = vsel %vm8062, %v8061, %v8060
    %v8064 = vrot.slane %v8063, 6
    %v8065 = vsel %vm8055, %v8020, %v7857
    %v8066 = vsel %vm8029, %v8021, %v8022
    %vm8067 = vcmask 1046529
    %v8068 = vsel %vm8067, %v8066, %v8065
    %v8069 = vrot.slane %v8068, 7
    %v8070 = vperm.slane %v8028, 0
    %v8071 = vperm.slane %v8028, 1
    %v8072 = vperm.slane %v8028, 2
    %v8073 = vperm.slane %v8028, 3
    %v8074 = vperm.slane %v8035, 0
    %v8075 = vperm.slane %v8035, 1
    %v8076 = vperm.slane %v8035, 2
    %v8077 = vperm.slane %v8035, 3
    %v8078 = vperm.slane %v8041, 0
    %v8079 = vperm.slane %v8041, 1
    %v8080 = vperm.slane %v8041, 2
    %v8081 = vperm.slane %v8041, 3
    %v8082 = vperm.slane %v8047, 0
    %v8083 = vperm.slane %v8047, 1
    %v8084 = vperm.slane %v8047, 2
    %v8085 = vperm.slane %v8047, 3
    %v8086 = vperm.slane %v8053, 0
    %v8087 = vperm.slane %v8053, 1
    %v8088 = vperm.slane %v8053, 2
    %v8089 = vperm.slane %v8053, 3
    %v8090 = vperm.slane %v8059, 0
    %v8091 = vperm.slane %v8059, 1
    %v8092 = vperm.slane %v8059, 2
    %v8093 = vperm.slane %v8059, 3
    %v8094 = vperm.slane %v8064, 0
    %v8095 = vperm.slane %v8064, 1
    %v8096 = vperm.slane %v8064, 2
    %v8097 = vperm.slane %v8064, 3
    %v8098 = vperm.slane %v8069, 0
    %v8099 = vperm.slane %v8069, 1
    %v8100 = vperm.slane %v8069, 2
    %v8101 = vperm.slane %v8069, 3
    %v8134 = vmul.f32 %v7008, %v8070
    %v8135 = vmul.f32 %v7009, %v8071
    %v8136 = vmul.f32 %v7010, %v8072
    %v8137 = vmul.f32 %v7011, %v8073
    %v8138 = vmul.f32 %v7012, %v8074
    %v8139 = vmul.f32 %v7013, %v8075
    %v8140 = vmul.f32 %v7014, %v8076
    %v8141 = vmul.f32 %v7015, %v8077
    %v8142 = vmul.f32 %v7016, %v8078
    %v8143 = vmul.f32 %v7017, %v8079
    %v8144 = vmul.f32 %v7018, %v8080
    %v8145 = vmul.f32 %v7019, %v8081
    %v8146 = vmul.f32 %v7020, %v8082
    %v8147 = vmul.f32 %v7021, %v8083
    %v8148 = vmul.f32 %v7022, %v8084
    %v8149 = vmul.f32 %v7023, %v8085
    %v8150 = vmul.f32 %v7024, %v8086
    %v8151 = vmul.f32 %v7025, %v8087
    %v8152 = vmul.f32 %v7026, %v8088
    %v8153 = vmul.f32 %v7027, %v8089
    %v8154 = vmul.f32 %v7028, %v8090
    %v8155 = vmul.f32 %v7029, %v8091
    %v8156 = vmul.f32 %v7030, %v8092
    %v8157 = vmul.f32 %v7031, %v8093
    %v8158 = vmul.f32 %v7032, %v8094
    %v8159 = vmul.f32 %v7033, %v8095
    %v8160 = vmul.f32 %v7034, %v8096
    %v8161 = vmul.f32 %v7035, %v8097
    %v8162 = vmul.f32 %v7036, %v8098
    %v8163 = vmul.f32 %v7037, %v8099
    %v8164 = vmul.f32 %v7038, %v8100
    %v8165 = vmul.f32 %v7039, %v8101
    %v8166 = vadd.f32 %v8134, %v8135
    %v8167 = vadd.f32 %v8166, %v8136
    %v8168 = vadd.f32 %v8167, %v8137
    %8169 = vadd.xlane.f32.xlu0 %v8168
    %v8170 = vpop.xlane.xlu0 %8169
    %v8171 = vadd.f32 %v8138, %v8139
    %v8172 = vadd.f32 %v8171, %v8140
    %v8173 = vadd.f32 %v8172, %v8141
    %8174 = vadd.xlane.f32.xlu0 %v8173
    %v8175 = vpop.xlane.xlu0 %8174
    %v8176 = vadd.f32 %v8142, %v8143
    %v8177 = vadd.f32 %v8176, %v8144
    %v8178 = vadd.f32 %v8177, %v8145
    %8179 = vadd.xlane.f32.xlu0 %v8178
    %v8180 = vpop.xlane.xlu0 %8179
    %v8181 = vadd.f32 %v8146, %v8147
    %v8182 = vadd.f32 %v8181, %v8148
    %v8183 = vadd.f32 %v8182, %v8149
    %8184 = vadd.xlane.f32.xlu0 %v8183
    %v8185 = vpop.xlane.xlu0 %8184
    %v8186 = vadd.f32 %v8150, %v8151
    %v8187 = vadd.f32 %v8186, %v8152
    %v8188 = vadd.f32 %v8187, %v8153
    %8189 = vadd.xlane.f32.xlu0 %v8188
    %v8190 = vpop.xlane.xlu0 %8189
    %v8191 = vadd.f32 %v8154, %v8155
    %v8192 = vadd.f32 %v8191, %v8156
    %v8193 = vadd.f32 %v8192, %v8157
    %8194 = vadd.xlane.f32.xlu0 %v8193
    %v8195 = vpop.xlane.xlu0 %8194
    %v8196 = vadd.f32 %v8158, %v8159
    %v8197 = vadd.f32 %v8196, %v8160
    %v8198 = vadd.f32 %v8197, %v8161
    %8199 = vadd.xlane.f32.xlu0 %v8198
    %v8200 = vpop.xlane.xlu0 %8199
    %v8201 = vadd.f32 %v8162, %v8163
    %v8202 = vadd.f32 %v8201, %v8164
    %v8203 = vadd.f32 %v8202, %v8165
    %8204 = vadd.xlane.f32.xlu0 %v8203
    %v8205 = vpop.xlane.xlu0 %8204
    %v8214 = vlaneseq
    %v8215 = vand.u32 %v8214, 127
    %v8216 = vperm.slane %v8170, %v8215
    %v8217 = vperm.slane %v8175, %v8215
    %v8218 = vperm.slane %v8180, %v8215
    %v8219 = vperm.slane %v8185, %v8215
    %v8220 = vperm.slane %v8190, %v8215
    %v8221 = vperm.slane %v8195, %v8215
    %v8222 = vperm.slane %v8200, %v8215
    %v8223 = vperm.slane %v8205, %v8215
    %v8224 = vsel %vm8029, %v8217, %v8216
    %v8225 = vsel %vm8025, %v8218, %v8224
    %v8226 = vsel %vm8031, %v8219, %v8225
    %v8227 = vsel %vm8037, %v8220, %v8226
    %v8228 = vsel %vm8043, %v8221, %v8227
    %v8229 = vsel %vm8049, %v8222, %v8228
    %vm8230 = vcmask 1047559
    %v8231 = vsel %vm8230, %v8223, %v8229
    %vm8233 = vcmask 64512
    %v8234 = vsel %vm8233, %v8231, -inf
    %8235 = vmax.xlane.f32.xlu0 %v8234
    %v8236 = vpop.xlane.xlu0 %8235
    %v8238 = vperm.slane %v8236, 0
    %v8239 = vperm.slane %v8236, 1
    %v8240 = vperm.slane %v8236, 2
    %v8241 = vperm.slane %v8236, 3
    %v8242 = vperm.slane %v8236, 4
    %v8243 = vperm.slane %v8236, 5
    %v8244 = vperm.slane %v8236, 6
    %v8245 = vperm.slane %v8236, 7
    %v8254 = vsub.f32 %v8170, %v8238
    %v8255 = vsub.f32 %v8175, %v8239
    %v8256 = vsub.f32 %v8180, %v8240
    %v8257 = vsub.f32 %v8185, %v8241
    %v8258 = vsub.f32 %v8190, %v8242
    %v8259 = vsub.f32 %v8195, %v8243
    %v8260 = vsub.f32 %v8200, %v8244
    %v8261 = vsub.f32 %v8205, %v8245
    %v8262 = vmul.f32 %v8254, 1.442695
    %v8263 = vpow.pop %v8262
    %v8264 = vmul.f32 %v8255, 1.442695
    %v8265 = vpow.pop %v8264
    %v8266 = vmul.f32 %v8256, 1.442695
    %v8267 = vpow.pop %v8266
    %v8268 = vmul.f32 %v8257, 1.442695
    %v8269 = vpow.pop %v8268
    %v8270 = vmul.f32 %v8258, 1.442695
    %v8271 = vpow.pop %v8270
    %v8272 = vmul.f32 %v8259, 1.442695
    %v8273 = vpow.pop %v8272
    %v8274 = vmul.f32 %v8260, 1.442695
    %v8275 = vpow.pop %v8274
    %v8276 = vmul.f32 %v8261, 1.442695
    %v8277 = vpow.pop %v8276
    %8286 = vset.pattern.permute.xlu0 0
    %8287 = vperm.xlu0 %8286, %v8263
    %v8288 = vpop.permute.xlu0 %8287
    %8289 = vset.pattern.permute.xlu0 0
    %8290 = vperm.xlu0 %8289, %v8265
    %v8291 = vpop.permute.xlu0 %8290
    %8292 = vset.pattern.permute.xlu0 0
    %8293 = vperm.xlu0 %8292, %v8267
    %v8294 = vpop.permute.xlu0 %8293
    %8295 = vset.pattern.permute.xlu0 0
    %8296 = vperm.xlu0 %8295, %v8269
    %v8297 = vpop.permute.xlu0 %8296
    %8298 = vset.pattern.permute.xlu0 0
    %8299 = vperm.xlu0 %8298, %v8271
    %v8300 = vpop.permute.xlu0 %8299
    %8301 = vset.pattern.permute.xlu0 0
    %8302 = vperm.xlu0 %8301, %v8273
    %v8303 = vpop.permute.xlu0 %8302
    %8304 = vset.pattern.permute.xlu0 0
    %8305 = vperm.xlu0 %8304, %v8275
    %v8306 = vpop.permute.xlu0 %8305
    %8307 = vset.pattern.permute.xlu0 0
    %8308 = vperm.xlu0 %8307, %v8277
    %v8309 = vpop.permute.xlu0 %8308
    %v8310 = vperm.slane %v8288, %v8215
    %v8311 = vperm.slane %v8291, %v8215
    %v8312 = vperm.slane %v8294, %v8215
    %v8313 = vperm.slane %v8297, %v8215
    %v8314 = vperm.slane %v8300, %v8215
    %v8315 = vperm.slane %v8303, %v8215
    %v8316 = vperm.slane %v8306, %v8215
    %v8317 = vperm.slane %v8309, %v8215
    %v8318 = vsel %vm8029, %v8311, %v8310
    %v8319 = vsel %vm8025, %v8312, %v8318
    %v8320 = vsel %vm8031, %v8313, %v8319
    %v8321 = vsel %vm8037, %v8314, %v8320
    %v8322 = vsel %vm8043, %v8315, %v8321
    %v8323 = vsel %vm8049, %v8316, %v8322
    %v8324 = vsel %vm8230, %v8317, %v8323
    %v8326 = vsel %vm8233, %v8324, 0.0
    %8327 = vadd.xlane.f32.xlu0 %v8326
    %v8328 = vpop.xlane.xlu0 %8327
    %v8330 = vperm.slane %v8328, 0
    %v8331 = vperm.slane %v8328, 1
    %v8332 = vperm.slane %v8328, 2
    %v8333 = vperm.slane %v8328, 3
    %v8334 = vperm.slane %v8328, 4
    %v8335 = vperm.slane %v8328, 5
    %v8336 = vperm.slane %v8328, 6
    %v8337 = vperm.slane %v8328, 7
    %v8346 = vrcp.pop %v8330
    %v8347 = vmul.f32 %v8330, %v8346
    %v8348 = vsub.f32 1.0, %v8347
    %v8349 = vmul.f32 %v8346, %v8348
    %v8350 = vadd.f32 %v8346, %v8349
    %vm8351 = vweird.f32 %v8330
    %vm8352 = vweird.f32 %v8346
    %vm8353 = vmor %vm8351, %vm8352
    %v8354 = vsel %vm8353, %v8346, %v8350
    %v8355 = vand.u32 2147483647, %v8330
    %vm8356 = vcmp.eq.f32.partialorder %v8355, 8.507059e+37
    %v8357 = vand.u32 %v8330, 2147483648
    %v8358 = vor.u32 1.1754944e-38, %v8357
    %v8359 = vsel %vm8356, %v8358, %v8354
    %v8360 = vmul.f32 %v8263, %v8359
    %v8361 = vrcp.pop %v8331
    %v8362 = vmul.f32 %v8331, %v8361
    %v8363 = vsub.f32 1.0, %v8362
    %v8364 = vmul.f32 %v8361, %v8363
    %v8365 = vadd.f32 %v8361, %v8364
    %vm8366 = vweird.f32 %v8331
    %vm8367 = vweird.f32 %v8361
    %vm8368 = vmor %vm8366, %vm8367
    %v8369 = vsel %vm8368, %v8361, %v8365
    %v8370 = vand.u32 2147483647, %v8331
    %vm8371 = vcmp.eq.f32.partialorder %v8370, 8.507059e+37
    %v8372 = vand.u32 %v8331, 2147483648
    %v8373 = vor.u32 1.1754944e-38, %v8372
    %v8374 = vsel %vm8371, %v8373, %v8369
    %v8375 = vmul.f32 %v8265, %v8374
    %v8376 = vrcp.pop %v8332
    %v8377 = vmul.f32 %v8332, %v8376
    %v8378 = vsub.f32 1.0, %v8377
    %v8379 = vmul.f32 %v8376, %v8378
    %v8380 = vadd.f32 %v8376, %v8379
    %vm8381 = vweird.f32 %v8332
    %vm8382 = vweird.f32 %v8376
    %vm8383 = vmor %vm8381, %vm8382
    %v8384 = vsel %vm8383, %v8376, %v8380
    %v8385 = vand.u32 2147483647, %v8332
    %vm8386 = vcmp.eq.f32.partialorder %v8385, 8.507059e+37
    %v8387 = vand.u32 %v8332, 2147483648
    %v8388 = vor.u32 1.1754944e-38, %v8387
    %v8389 = vsel %vm8386, %v8388, %v8384
    %v8390 = vmul.f32 %v8267, %v8389
    %v8391 = vrcp.pop %v8333
    %v8392 = vmul.f32 %v8333, %v8391
    %v8393 = vsub.f32 1.0, %v8392
    %v8394 = vmul.f32 %v8391, %v8393
    %v8395 = vadd.f32 %v8391, %v8394
    %vm8396 = vweird.f32 %v8333
    %vm8397 = vweird.f32 %v8391
    %vm8398 = vmor %vm8396, %vm8397
    %v8399 = vsel %vm8398, %v8391, %v8395
    %v8400 = vand.u32 2147483647, %v8333
    %vm8401 = vcmp.eq.f32.partialorder %v8400, 8.507059e+37
    %v8402 = vand.u32 %v8333, 2147483648
    %v8403 = vor.u32 1.1754944e-38, %v8402
    %v8404 = vsel %vm8401, %v8403, %v8399
    %v8405 = vmul.f32 %v8269, %v8404
    %v8406 = vrcp.pop %v8334
    %v8407 = vmul.f32 %v8334, %v8406
    %v8408 = vsub.f32 1.0, %v8407
    %v8409 = vmul.f32 %v8406, %v8408
    %v8410 = vadd.f32 %v8406, %v8409
    %vm8411 = vweird.f32 %v8334
    %vm8412 = vweird.f32 %v8406
    %vm8413 = vmor %vm8411, %vm8412
    %v8414 = vsel %vm8413, %v8406, %v8410
    %v8415 = vand.u32 2147483647, %v8334
    %vm8416 = vcmp.eq.f32.partialorder %v8415, 8.507059e+37
    %v8417 = vand.u32 %v8334, 2147483648
    %v8418 = vor.u32 1.1754944e-38, %v8417
    %v8419 = vsel %vm8416, %v8418, %v8414
    %v8420 = vmul.f32 %v8271, %v8419
    %v8421 = vrcp.pop %v8335
    %v8422 = vmul.f32 %v8335, %v8421
    %v8423 = vsub.f32 1.0, %v8422
    %v8424 = vmul.f32 %v8421, %v8423
    %v8425 = vadd.f32 %v8421, %v8424
    %vm8426 = vweird.f32 %v8335
    %vm8427 = vweird.f32 %v8421
    %vm8428 = vmor %vm8426, %vm8427
    %v8429 = vsel %vm8428, %v8421, %v8425
    %v8430 = vand.u32 2147483647, %v8335
    %vm8431 = vcmp.eq.f32.partialorder %v8430, 8.507059e+37
    %v8432 = vand.u32 %v8335, 2147483648
    %v8433 = vor.u32 1.1754944e-38, %v8432
    %v8434 = vsel %vm8431, %v8433, %v8429
    %v8435 = vmul.f32 %v8273, %v8434
    %v8436 = vrcp.pop %v8336
    %v8437 = vmul.f32 %v8336, %v8436
    %v8438 = vsub.f32 1.0, %v8437
    %v8439 = vmul.f32 %v8436, %v8438
    %v8440 = vadd.f32 %v8436, %v8439
    %vm8441 = vweird.f32 %v8336
    %vm8442 = vweird.f32 %v8436
    %vm8443 = vmor %vm8441, %vm8442
    %v8444 = vsel %vm8443, %v8436, %v8440
    %v8445 = vand.u32 2147483647, %v8336
    %vm8446 = vcmp.eq.f32.partialorder %v8445, 8.507059e+37
    %v8447 = vand.u32 %v8336, 2147483648
    %v8448 = vor.u32 1.1754944e-38, %v8447
    %v8449 = vsel %vm8446, %v8448, %v8444
    %v8450 = vmul.f32 %v8275, %v8449
    %v8451 = vrcp.pop %v8337
    %v8452 = vmul.f32 %v8337, %v8451
    %v8453 = vsub.f32 1.0, %v8452
    %v8454 = vmul.f32 %v8451, %v8453
    %v8455 = vadd.f32 %v8451, %v8454
    %vm8456 = vweird.f32 %v8337
    %vm8457 = vweird.f32 %v8451
    %vm8458 = vmor %vm8456, %vm8457
    %v8459 = vsel %vm8458, %v8451, %v8455
    %v8460 = vand.u32 2147483647, %v8337
    %vm8461 = vcmp.eq.f32.partialorder %v8460, 8.507059e+37
    %v8462 = vand.u32 %v8337, 2147483648
    %v8463 = vor.u32 1.1754944e-38, %v8462
    %v8464 = vsel %vm8461, %v8463, %v8459
    %v8465 = vmul.f32 %v8277, %v8464
    %v8466 = vld [vmem:[%s11] sm:$0xff]
    %8468 = vset.pattern.permute.xlu0 0
    %8469 = vperm.xlu0 %8468, %v8466
    %v8470 = vpop.permute.xlu0 %8469
    %v8471 = vperm.slane %v8470, 0
    %v8472 = vperm.slane %v8470, 1
    %v8473 = vperm.slane %v8470, 2
    %v8474 = vperm.slane %v8470, 3
    %v8475 = vperm.slane %v8470, 4
    %v8476 = vperm.slane %v8470, 5
    %v8477 = vperm.slane %v8470, 6
    %v8478 = vperm.slane %v8470, 7
    %v8487 = vmul.f32 %v8360, %v8471
    %v8488 = vmul.f32 %v8375, %v8472
    %v8489 = vmul.f32 %v8390, %v8473
    %v8490 = vmul.f32 %v8405, %v8474
    %v8491 = vmul.f32 %v8420, %v8475
    %v8492 = vmul.f32 %v8435, %v8476
    %v8493 = vmul.f32 %v8450, %v8477
    %v8494 = vmul.f32 %v8465, %v8478
    %8503 = vset.pattern.permute.xlu0 0
    %8504 = vperm.xlu0 %8503, %v8487
    %v8505 = vpop.permute.xlu0 %8504
    %8506 = vset.pattern.permute.xlu0 0
    %8507 = vperm.xlu0 %8506, %v8488
    %v8508 = vpop.permute.xlu0 %8507
    %8509 = vset.pattern.permute.xlu0 0
    %8510 = vperm.xlu0 %8509, %v8489
    %v8511 = vpop.permute.xlu0 %8510
    %8512 = vset.pattern.permute.xlu0 0
    %8513 = vperm.xlu0 %8512, %v8490
    %v8514 = vpop.permute.xlu0 %8513
    %8515 = vset.pattern.permute.xlu0 0
    %8516 = vperm.xlu0 %8515, %v8491
    %v8517 = vpop.permute.xlu0 %8516
    %8518 = vset.pattern.permute.xlu0 0
    %8519 = vperm.xlu0 %8518, %v8492
    %v8520 = vpop.permute.xlu0 %8519
    %8521 = vset.pattern.permute.xlu0 0
    %8522 = vperm.xlu0 %8521, %v8493
    %v8523 = vpop.permute.xlu0 %8522
    %8524 = vset.pattern.permute.xlu0 0
    %8525 = vperm.xlu0 %8524, %v8494
    %v8526 = vpop.permute.xlu0 %8525
    %v8527 = vperm.slane %v8505, %v8215
    %v8528 = vperm.slane %v8508, %v8215
    %v8529 = vperm.slane %v8511, %v8215
    %v8530 = vperm.slane %v8514, %v8215
    %v8531 = vperm.slane %v8517, %v8215
    %v8532 = vperm.slane %v8520, %v8215
    %v8533 = vperm.slane %v8523, %v8215
    %v8534 = vperm.slane %v8526, %v8215
    %v8535 = vsel %vm8029, %v8528, %v8527
    %v8536 = vsel %vm8025, %v8529, %v8535
    %v8537 = vsel %vm8031, %v8530, %v8536
    %v8538 = vsel %vm8037, %v8531, %v8537
    %v8539 = vsel %vm8043, %v8532, %v8538
    %v8540 = vsel %vm8049, %v8533, %v8539
    %v8541 = vsel %vm8230, %v8534, %v8540
    %8543 = vst.msk [vmem:[%s59] sm:$0xff] %vm8233, %v8541
    %v8552 = vmul.f32 %v8505, %v7008
    %v8553 = vmul.f32 %v8505, %v7009
    %v8554 = vmul.f32 %v8505, %v7010
    %v8555 = vmul.f32 %v8505, %v7011
    %v8556 = vmul.f32 %v8508, %v7012
    %v8557 = vmul.f32 %v8508, %v7013
    %v8558 = vmul.f32 %v8508, %v7014
    %v8559 = vmul.f32 %v8508, %v7015
    %v8560 = vmul.f32 %v8511, %v7016
    %v8561 = vmul.f32 %v8511, %v7017
    %v8562 = vmul.f32 %v8511, %v7018
    %v8563 = vmul.f32 %v8511, %v7019
    %v8564 = vmul.f32 %v8514, %v7020
    %v8565 = vmul.f32 %v8514, %v7021
    %v8566 = vmul.f32 %v8514, %v7022
    %v8567 = vmul.f32 %v8514, %v7023
    %v8568 = vmul.f32 %v8517, %v7024
    %v8569 = vmul.f32 %v8517, %v7025
    %v8570 = vmul.f32 %v8517, %v7026
    %v8571 = vmul.f32 %v8517, %v7027
    %v8572 = vmul.f32 %v8520, %v7028
    %v8573 = vmul.f32 %v8520, %v7029
    %v8574 = vmul.f32 %v8520, %v7030
    %v8575 = vmul.f32 %v8520, %v7031
    %v8576 = vmul.f32 %v8523, %v7032
    %v8577 = vmul.f32 %v8523, %v7033
    %v8578 = vmul.f32 %v8523, %v7034
    %v8579 = vmul.f32 %v8523, %v7035
    %v8580 = vmul.f32 %v8526, %v7036
    %v8581 = vmul.f32 %v8526, %v7037
    %v8582 = vmul.f32 %v8526, %v7038
    %v8583 = vmul.f32 %v8526, %v7039
    %v8584 = vrot.slane %v8552, 4
    %v8585 = vadd.f32 %v8552, %v8584
    %v8586 = vrot.slane %v8585, 2
    %v8587 = vadd.f32 %v8585, %v8586
    %v8588 = vrot.slane %v8587, 1
    %v8589 = vadd.f32 %v8587, %v8588
    %v8590 = vrot.slane %v8553, 4
    %v8591 = vadd.f32 %v8553, %v8590
    %v8592 = vrot.slane %v8591, 2
    %v8593 = vadd.f32 %v8591, %v8592
    %v8594 = vrot.slane %v8593, 1
    %v8595 = vadd.f32 %v8593, %v8594
    %v8596 = vrot.slane %v8554, 4
    %v8597 = vadd.f32 %v8554, %v8596
    %v8598 = vrot.slane %v8597, 2
    %v8599 = vadd.f32 %v8597, %v8598
    %v8600 = vrot.slane %v8599, 1
    %v8601 = vadd.f32 %v8599, %v8600
    %v8602 = vrot.slane %v8555, 4
    %v8603 = vadd.f32 %v8555, %v8602
    %v8604 = vrot.slane %v8603, 2
    %v8605 = vadd.f32 %v8603, %v8604
    %v8606 = vrot.slane %v8605, 1
    %v8607 = vadd.f32 %v8605, %v8606
    %v8608 = vrot.slane %v8556, 4
    %v8609 = vadd.f32 %v8556, %v8608
    %v8610 = vrot.slane %v8609, 2
    %v8611 = vadd.f32 %v8609, %v8610
    %v8612 = vrot.slane %v8611, 1
    %v8613 = vadd.f32 %v8611, %v8612
    %v8614 = vrot.slane %v8557, 4
    %v8615 = vadd.f32 %v8557, %v8614
    %v8616 = vrot.slane %v8615, 2
    %v8617 = vadd.f32 %v8615, %v8616
    %v8618 = vrot.slane %v8617, 1
    %v8619 = vadd.f32 %v8617, %v8618
    %v8620 = vrot.slane %v8558, 4
    %v8621 = vadd.f32 %v8558, %v8620
    %v8622 = vrot.slane %v8621, 2
    %v8623 = vadd.f32 %v8621, %v8622
    %v8624 = vrot.slane %v8623, 1
    %v8625 = vadd.f32 %v8623, %v8624
    %v8626 = vrot.slane %v8559, 4
    %v8627 = vadd.f32 %v8559, %v8626
    %v8628 = vrot.slane %v8627, 2
    %v8629 = vadd.f32 %v8627, %v8628
    %v8630 = vrot.slane %v8629, 1
    %v8631 = vadd.f32 %v8629, %v8630
    %v8632 = vrot.slane %v8560, 4
    %v8633 = vadd.f32 %v8560, %v8632
    %v8634 = vrot.slane %v8633, 2
    %v8635 = vadd.f32 %v8633, %v8634
    %v8636 = vrot.slane %v8635, 1
    %v8637 = vadd.f32 %v8635, %v8636
    %v8638 = vrot.slane %v8561, 4
    %v8639 = vadd.f32 %v8561, %v8638
    %v8640 = vrot.slane %v8639, 2
    %v8641 = vadd.f32 %v8639, %v8640
    %v8642 = vrot.slane %v8641, 1
    %v8643 = vadd.f32 %v8641, %v8642
    %v8644 = vrot.slane %v8562, 4
    %v8645 = vadd.f32 %v8562, %v8644
    %v8646 = vrot.slane %v8645, 2
    %v8647 = vadd.f32 %v8645, %v8646
    %v8648 = vrot.slane %v8647, 1
    %v8649 = vadd.f32 %v8647, %v8648
    %v8650 = vrot.slane %v8563, 4
    %v8651 = vadd.f32 %v8563, %v8650
    %v8652 = vrot.slane %v8651, 2
    %v8653 = vadd.f32 %v8651, %v8652
    %v8654 = vrot.slane %v8653, 1
    %v8655 = vadd.f32 %v8653, %v8654
    %v8656 = vrot.slane %v8564, 4
    %v8657 = vadd.f32 %v8564, %v8656
    %v8658 = vrot.slane %v8657, 2
    %v8659 = vadd.f32 %v8657, %v8658
    %v8660 = vrot.slane %v8659, 1
    %v8661 = vadd.f32 %v8659, %v8660
    %v8662 = vrot.slane %v8565, 4
    %v8663 = vadd.f32 %v8565, %v8662
    %v8664 = vrot.slane %v8663, 2
    %v8665 = vadd.f32 %v8663, %v8664
    %v8666 = vrot.slane %v8665, 1
    %v8667 = vadd.f32 %v8665, %v8666
    %v8668 = vrot.slane %v8566, 4
    %v8669 = vadd.f32 %v8566, %v8668
    %v8670 = vrot.slane %v8669, 2
    %v8671 = vadd.f32 %v8669, %v8670
    %v8672 = vrot.slane %v8671, 1
    %v8673 = vadd.f32 %v8671, %v8672
    %v8674 = vrot.slane %v8567, 4
    %v8675 = vadd.f32 %v8567, %v8674
    %v8676 = vrot.slane %v8675, 2
    %v8677 = vadd.f32 %v8675, %v8676
    %v8678 = vrot.slane %v8677, 1
    %v8679 = vadd.f32 %v8677, %v8678
    %v8680 = vrot.slane %v8568, 4
    %v8681 = vadd.f32 %v8568, %v8680
    %v8682 = vrot.slane %v8681, 2
    %v8683 = vadd.f32 %v8681, %v8682
    %v8684 = vrot.slane %v8683, 1
    %v8685 = vadd.f32 %v8683, %v8684
    %v8686 = vrot.slane %v8569, 4
    %v8687 = vadd.f32 %v8569, %v8686
    %v8688 = vrot.slane %v8687, 2
    %v8689 = vadd.f32 %v8687, %v8688
    %v8690 = vrot.slane %v8689, 1
    %v8691 = vadd.f32 %v8689, %v8690
    %v8692 = vrot.slane %v8570, 4
    %v8693 = vadd.f32 %v8570, %v8692
    %v8694 = vrot.slane %v8693, 2
    %v8695 = vadd.f32 %v8693, %v8694
    %v8696 = vrot.slane %v8695, 1
    %v8697 = vadd.f32 %v8695, %v8696
    %v8698 = vrot.slane %v8571, 4
    %v8699 = vadd.f32 %v8571, %v8698
    %v8700 = vrot.slane %v8699, 2
    %v8701 = vadd.f32 %v8699, %v8700
    %v8702 = vrot.slane %v8701, 1
    %v8703 = vadd.f32 %v8701, %v8702
    %v8704 = vrot.slane %v8572, 4
    %v8705 = vadd.f32 %v8572, %v8704
    %v8706 = vrot.slane %v8705, 2
    %v8707 = vadd.f32 %v8705, %v8706
    %v8708 = vrot.slane %v8707, 1
    %v8709 = vadd.f32 %v8707, %v8708
    %v8710 = vrot.slane %v8573, 4
    %v8711 = vadd.f32 %v8573, %v8710
    %v8712 = vrot.slane %v8711, 2
    %v8713 = vadd.f32 %v8711, %v8712
    %v8714 = vrot.slane %v8713, 1
    %v8715 = vadd.f32 %v8713, %v8714
    %v8716 = vrot.slane %v8574, 4
    %v8717 = vadd.f32 %v8574, %v8716
    %v8718 = vrot.slane %v8717, 2
    %v8719 = vadd.f32 %v8717, %v8718
    %v8720 = vrot.slane %v8719, 1
    %v8721 = vadd.f32 %v8719, %v8720
    %v8722 = vrot.slane %v8575, 4
    %v8723 = vadd.f32 %v8575, %v8722
    %v8724 = vrot.slane %v8723, 2
    %v8725 = vadd.f32 %v8723, %v8724
    %v8726 = vrot.slane %v8725, 1
    %v8727 = vadd.f32 %v8725, %v8726
    %v8728 = vrot.slane %v8576, 4
    %v8729 = vadd.f32 %v8576, %v8728
    %v8730 = vrot.slane %v8729, 2
    %v8731 = vadd.f32 %v8729, %v8730
    %v8732 = vrot.slane %v8731, 1
    %v8733 = vadd.f32 %v8731, %v8732
    %v8734 = vrot.slane %v8577, 4
    %v8735 = vadd.f32 %v8577, %v8734
    %v8736 = vrot.slane %v8735, 2
    %v8737 = vadd.f32 %v8735, %v8736
    %v8738 = vrot.slane %v8737, 1
    %v8739 = vadd.f32 %v8737, %v8738
    %v8740 = vrot.slane %v8578, 4
    %v8741 = vadd.f32 %v8578, %v8740
    %v8742 = vrot.slane %v8741, 2
    %v8743 = vadd.f32 %v8741, %v8742
    %v8744 = vrot.slane %v8743, 1
    %v8745 = vadd.f32 %v8743, %v8744
    %v8746 = vrot.slane %v8579, 4
    %v8747 = vadd.f32 %v8579, %v8746
    %v8748 = vrot.slane %v8747, 2
    %v8749 = vadd.f32 %v8747, %v8748
    %v8750 = vrot.slane %v8749, 1
    %v8751 = vadd.f32 %v8749, %v8750
    %v8752 = vrot.slane %v8580, 4
    %v8753 = vadd.f32 %v8580, %v8752
    %v8754 = vrot.slane %v8753, 2
    %v8755 = vadd.f32 %v8753, %v8754
    %v8756 = vrot.slane %v8755, 1
    %v8757 = vadd.f32 %v8755, %v8756
    %v8758 = vrot.slane %v8581, 4
    %v8759 = vadd.f32 %v8581, %v8758
    %v8760 = vrot.slane %v8759, 2
    %v8761 = vadd.f32 %v8759, %v8760
    %v8762 = vrot.slane %v8761, 1
    %v8763 = vadd.f32 %v8761, %v8762
    %v8764 = vrot.slane %v8582, 4
    %v8765 = vadd.f32 %v8582, %v8764
    %v8766 = vrot.slane %v8765, 2
    %v8767 = vadd.f32 %v8765, %v8766
    %v8768 = vrot.slane %v8767, 1
    %v8769 = vadd.f32 %v8767, %v8768
    %v8770 = vrot.slane %v8583, 4
    %v8771 = vadd.f32 %v8583, %v8770
    %v8772 = vrot.slane %v8771, 2
    %v8773 = vadd.f32 %v8771, %v8772
    %v8774 = vrot.slane %v8773, 1
    %v8775 = vadd.f32 %v8773, %v8774
    %v8776 = vld [vmem:[#allocation28] sm:$0xf]
    %v8777 = vld [vmem:[#allocation28 + $0x4] sm:$0xf]
    %v8778 = vld [vmem:[#allocation28 + $0x8] sm:$0xf]
    %v8779 = vld [vmem:[#allocation28 + $0xc] sm:$0xf]
    %v8780 = vld [vmem:[#allocation28 + $0x10] sm:$0xf]
    %v8781 = vld [vmem:[#allocation28 + $0x14] sm:$0xf]
    %v8782 = vld [vmem:[#allocation28 + $0x18] sm:$0xf]
    %v8783 = vld [vmem:[#allocation28 + $0x1c] sm:$0xf]
    %v8784 = vld [vmem:[#allocation28 + $0x20] sm:$0xf]
    %v8785 = vld [vmem:[#allocation28 + $0x24] sm:$0xf]
    %v8786 = vld [vmem:[#allocation28 + $0x28] sm:$0xf]
    %v8787 = vld [vmem:[#allocation28 + $0x2c] sm:$0xf]
    %v8788 = vld [vmem:[#allocation28 + $0x30] sm:$0xf]
    %v8789 = vld [vmem:[#allocation28 + $0x34] sm:$0xf]
    %v8790 = vld [vmem:[#allocation28 + $0x38] sm:$0xf]
    %v8791 = vld [vmem:[#allocation28 + $0x3c] sm:$0xf]
    %v8792 = vld [vmem:[#allocation28 + $0x40] sm:$0xf]
    %v8793 = vld [vmem:[#allocation28 + $0x44] sm:$0xf]
    %v8794 = vld [vmem:[#allocation28 + $0x48] sm:$0xf]
    %v8795 = vld [vmem:[#allocation28 + $0x4c] sm:$0xf]
    %v8796 = vld [vmem:[#allocation28 + $0x50] sm:$0xf]
    %v8797 = vld [vmem:[#allocation28 + $0x54] sm:$0xf]
    %v8798 = vld [vmem:[#allocation28 + $0x58] sm:$0xf]
    %v8799 = vld [vmem:[#allocation28 + $0x5c] sm:$0xf]
    %v8800 = vld [vmem:[#allocation28 + $0x60] sm:$0xf]
    %v8801 = vld [vmem:[#allocation28 + $0x64] sm:$0xf]
    %v8802 = vld [vmem:[#allocation28 + $0x68] sm:$0xf]
    %v8803 = vld [vmem:[#allocation28 + $0x6c] sm:$0xf]
    %v8804 = vld [vmem:[#allocation28 + $0x70] sm:$0xf]
    %v8805 = vld [vmem:[#allocation28 + $0x74] sm:$0xf]
    %v8806 = vld [vmem:[#allocation28 + $0x78] sm:$0xf]
    %v8807 = vld [vmem:[#allocation28 + $0x7c] sm:$0xf]
    %v8808 = vld [vmem:[#allocation28 + $0x80] sm:$0xf]
    %v8809 = vld [vmem:[#allocation28 + $0x84] sm:$0xf]
    %v8810 = vld [vmem:[#allocation28 + $0x88] sm:$0xf]
    %v8811 = vld [vmem:[#allocation28 + $0x8c] sm:$0xf]
    %v8812 = vld [vmem:[#allocation28 + $0x90] sm:$0xf]
    %v8813 = vld [vmem:[#allocation28 + $0x94] sm:$0xf]
    %v8814 = vld [vmem:[#allocation28 + $0x98] sm:$0xf]
    %v8815 = vld [vmem:[#allocation28 + $0x9c] sm:$0xf]
    %v8816 = vld [vmem:[#allocation28 + $0xa0] sm:$0xf]
    %v8817 = vld [vmem:[#allocation28 + $0xa4] sm:$0xf]
    %v8818 = vld [vmem:[#allocation28 + $0xa8] sm:$0xf]
    %v8819 = vld [vmem:[#allocation28 + $0xac] sm:$0xf]
    %v8820 = vld [vmem:[#allocation28 + $0xb0] sm:$0xf]
    %v8821 = vld [vmem:[#allocation28 + $0xb4] sm:$0xf]
    %v8822 = vld [vmem:[#allocation28 + $0xb8] sm:$0xf]
    %v8823 = vld [vmem:[#allocation28 + $0xbc] sm:$0xf]
    %v8824 = vld [vmem:[#allocation28 + $0xc0] sm:$0xf]
    %v8825 = vld [vmem:[#allocation28 + $0xc4] sm:$0xf]
    %v8826 = vld [vmem:[#allocation28 + $0xc8] sm:$0xf]
    %v8827 = vld [vmem:[#allocation28 + $0xcc] sm:$0xf]
    %v8828 = vld [vmem:[#allocation28 + $0xd0] sm:$0xf]
    %v8829 = vld [vmem:[#allocation28 + $0xd4] sm:$0xf]
    %v8830 = vld [vmem:[#allocation28 + $0xd8] sm:$0xf]
    %v8831 = vld [vmem:[#allocation28 + $0xdc] sm:$0xf]
    %v8832 = vld [vmem:[#allocation28 + $0xe0] sm:$0xf]
    %v8833 = vld [vmem:[#allocation28 + $0xe4] sm:$0xf]
    %v8834 = vld [vmem:[#allocation28 + $0xe8] sm:$0xf]
    %v8835 = vld [vmem:[#allocation28 + $0xec] sm:$0xf]
    %v8836 = vld [vmem:[#allocation28 + $0xf0] sm:$0xf]
    %v8837 = vld [vmem:[#allocation28 + $0xf4] sm:$0xf]
    %v8838 = vld [vmem:[#allocation28 + $0xf8] sm:$0xf]
    %v8839 = vld [vmem:[#allocation28 + $0xfc] sm:$0xf]
    %v8840 = vld [vmem:[#allocation30] sm:$0x1]
    %v8842 = vperm.slane %v8840, 0
    %v8908 = vunpack.c.l.b16 %v8776
    %v8909 = vunpack.c.l.b16 %v8777
    %v8910 = vunpack.c.l.b16 %v8778
    %v8911 = vunpack.c.l.b16 %v8779
    %v8912 = vunpack.c.l.b16 %v8780
    %v8913 = vunpack.c.l.b16 %v8781
    %v8914 = vunpack.c.l.b16 %v8782
    %v8915 = vunpack.c.l.b16 %v8783
    %v8916 = vunpack.c.l.b16 %v8784
    %v8917 = vunpack.c.l.b16 %v8785
    %v8918 = vunpack.c.l.b16 %v8786
    %v8919 = vunpack.c.l.b16 %v8787
    %v8920 = vunpack.c.l.b16 %v8788
    %v8921 = vunpack.c.l.b16 %v8789
    %v8922 = vunpack.c.l.b16 %v8790
    %v8923 = vunpack.c.l.b16 %v8791
    %v8924 = vunpack.c.l.b16 %v8792
    %v8925 = vunpack.c.l.b16 %v8793
    %v8926 = vunpack.c.l.b16 %v8794
    %v8927 = vunpack.c.l.b16 %v8795
    %v8928 = vunpack.c.l.b16 %v8796
    %v8929 = vunpack.c.l.b16 %v8797
    %v8930 = vunpack.c.l.b16 %v8798
    %v8931 = vunpack.c.l.b16 %v8799
    %v8932 = vunpack.c.l.b16 %v8800
    %v8933 = vunpack.c.l.b16 %v8801
    %v8934 = vunpack.c.l.b16 %v8802
    %v8935 = vunpack.c.l.b16 %v8803
    %v8936 = vunpack.c.l.b16 %v8804
    %v8937 = vunpack.c.l.b16 %v8805
    %v8938 = vunpack.c.l.b16 %v8806
    %v8939 = vunpack.c.l.b16 %v8807
    %v8940 = vunpack.c.l.b16 %v8808
    %v8941 = vunpack.c.l.b16 %v8809
    %v8942 = vunpack.c.l.b16 %v8810
    %v8943 = vunpack.c.l.b16 %v8811
    %v8944 = vunpack.c.l.b16 %v8812
    %v8945 = vunpack.c.l.b16 %v8813
    %v8946 = vunpack.c.l.b16 %v8814
    %v8947 = vunpack.c.l.b16 %v8815
    %v8948 = vunpack.c.l.b16 %v8816
    %v8949 = vunpack.c.l.b16 %v8817
    %v8950 = vunpack.c.l.b16 %v8818
    %v8951 = vunpack.c.l.b16 %v8819
    %v8952 = vunpack.c.l.b16 %v8820
    %v8953 = vunpack.c.l.b16 %v8821
    %v8954 = vunpack.c.l.b16 %v8822
    %v8955 = vunpack.c.l.b16 %v8823
    %v8956 = vunpack.c.l.b16 %v8824
    %v8957 = vunpack.c.l.b16 %v8825
    %v8958 = vunpack.c.l.b16 %v8826
    %v8959 = vunpack.c.l.b16 %v8827
    %v8960 = vunpack.c.l.b16 %v8828
    %v8961 = vunpack.c.l.b16 %v8829
    %v8962 = vunpack.c.l.b16 %v8830
    %v8963 = vunpack.c.l.b16 %v8831
    %v8964 = vunpack.c.l.b16 %v8832
    %v8965 = vunpack.c.l.b16 %v8833
    %v8966 = vunpack.c.l.b16 %v8834
    %v8967 = vunpack.c.l.b16 %v8835
    %v8968 = vunpack.c.l.b16 %v8836
    %v8969 = vunpack.c.l.b16 %v8837
    %v8970 = vunpack.c.l.b16 %v8838
    %v8971 = vunpack.c.l.b16 %v8839
    %v8972 = vpack.c.b16 %v8909, %v8908
    %v8973 = vpack.c.b16 %v8911, %v8910
    %v8974 = vpack.c.b16 %v8913, %v8912
    %v8975 = vpack.c.b16 %v8915, %v8914
    %v8976 = vpack.c.b16 %v8917, %v8916
    %v8977 = vpack.c.b16 %v8919, %v8918
    %v8978 = vpack.c.b16 %v8921, %v8920
    %v8979 = vpack.c.b16 %v8923, %v8922
    %v8980 = vpack.c.b16 %v8925, %v8924
    %v8981 = vpack.c.b16 %v8927, %v8926
    %v8982 = vpack.c.b16 %v8929, %v8928
    %v8983 = vpack.c.b16 %v8931, %v8930
    %v8984 = vpack.c.b16 %v8933, %v8932
    %v8985 = vpack.c.b16 %v8935, %v8934
    %v8986 = vpack.c.b16 %v8937, %v8936
    %v8987 = vpack.c.b16 %v8939, %v8938
    %v8988 = vpack.c.b16 %v8941, %v8940
    %v8989 = vpack.c.b16 %v8943, %v8942
    %v8990 = vpack.c.b16 %v8945, %v8944
    %v8991 = vpack.c.b16 %v8947, %v8946
    %v8992 = vpack.c.b16 %v8949, %v8948
    %v8993 = vpack.c.b16 %v8951, %v8950
    %v8994 = vpack.c.b16 %v8953, %v8952
    %v8995 = vpack.c.b16 %v8955, %v8954
    %v8996 = vpack.c.b16 %v8957, %v8956
    %v8997 = vpack.c.b16 %v8959, %v8958
    %v8998 = vpack.c.b16 %v8961, %v8960
    %v8999 = vpack.c.b16 %v8963, %v8962
    %v9000 = vpack.c.b16 %v8965, %v8964
    %v9001 = vpack.c.b16 %v8967, %v8966
    %v9002 = vpack.c.b16 %v8969, %v8968
    %v9003 = vpack.c.b16 %v8971, %v8970
    %9036 = vmatpush.bf16.msra.mxu0 %v8979
    %9037 = vmatpush.bf16.msra.mxu0 %v8978
    %9038 = vmatpush.bf16.msra.mxu0 %v8977
    %9039 = vmatpush.bf16.msra.mxu0 %v8976
    %9040 = vmatpush.bf16.msra.mxu0 %v8975
    %9041 = vmatpush.bf16.msra.mxu0 %v8974
    %9042 = vmatpush.bf16.msra.mxu0 %v8973
    %9043 = vmatpush.bf16.msra.mxu0 %v8972
    %9044 = vmatmul.bf16.gmra.mxu0 %v6988
    %v9045 = vpop.f32.mrf.mxu0
    %v9046 = vadd.f32 %v8842, %v9045
    %v9047 = vpop.f32.mrf.mxu0
    %9048 = vdwg.mxu0
    %9049 = vmatpush.bf16.msra.mxu0 %v8987
    %9050 = vmatpush.bf16.msra.mxu0 %v8986
    %9051 = vmatpush.bf16.msra.mxu0 %v8985
    %9052 = vmatpush.bf16.msra.mxu0 %v8984
    %9053 = vmatpush.bf16.msra.mxu0 %v8983
    %9054 = vmatpush.bf16.msra.mxu0 %v8982
    %9055 = vmatpush.bf16.msra.mxu0 %v8981
    %9056 = vmatpush.bf16.msra.mxu0 %v8980
    %9057 = vmatmul.bf16.gmra.mxu0 %v6989
    %v9058 = vpop.f32.mrf.mxu0
    %v9059 = vadd.f32 %v9046, %v9058
    %v9060 = vpop.f32.mrf.mxu0
    %9061 = vdwg.mxu0
    %9062 = vmatpush.bf16.msra.mxu0 %v8995
    %9063 = vmatpush.bf16.msra.mxu0 %v8994
    %9064 = vmatpush.bf16.msra.mxu0 %v8993
    %9065 = vmatpush.bf16.msra.mxu0 %v8992
    %9066 = vmatpush.bf16.msra.mxu0 %v8991
    %9067 = vmatpush.bf16.msra.mxu0 %v8990
    %9068 = vmatpush.bf16.msra.mxu0 %v8989
    %9069 = vmatpush.bf16.msra.mxu0 %v8988
    %9070 = vmatmul.bf16.gmra.mxu0 %v6990
    %v9071 = vpop.f32.mrf.mxu0
    %v9072 = vadd.f32 %v9059, %v9071
    %v9073 = vpop.f32.mrf.mxu0
    %9074 = vdwg.mxu0
    %9075 = vmatpush.bf16.msra.mxu0 %v9003
    %9076 = vmatpush.bf16.msra.mxu0 %v9002
    %9077 = vmatpush.bf16.msra.mxu0 %v9001
    %9078 = vmatpush.bf16.msra.mxu0 %v9000
    %9079 = vmatpush.bf16.msra.mxu0 %v8999
    %9080 = vmatpush.bf16.msra.mxu0 %v8998
    %9081 = vmatpush.bf16.msra.mxu0 %v8997
    %9082 = vmatpush.bf16.msra.mxu0 %v8996
    %9083 = vmatmul.bf16.gmra.mxu0 %v6991
    %v9084 = vpop.f32.mrf.mxu0
    %v9085 = vadd.f32 %v9072, %v9084
    %v9086 = vpop.f32.mrf.mxu0
    %9087 = vdwg.mxu0
    %vm9088 = vcmp.lt.s32.totalorder %v8215, 4
    %v9089 = vsel %vm9088, %v9085, -1e+30
    %9090 = vmax.xlane.f32.xlu0 %v9089
    %v9091 = vpop.xlane.xlu0 %9090
    %v9092 = vsub.f32 %v9089, %v9091
    %v9093 = vmul.f32 %v9092, 1.442695
    %v9094 = vpow.pop %v9093
    %9095 = vadd.xlane.f32.xlu0 %v9094
    %v9096 = vpop.xlane.xlu0 %9095
    %v9097 = vlog2.pop %v9096
    %v9098 = vmul.f32 %v9097, 0.6931472
    %v9099 = vadd.f32 %v9098, %v9091
    %v9100 = vsub.f32 %v9089, %v9099
    %9101 = vst [vmem:[%s57] sm:$0xff] %v9100
    %v9102 = vld [vmem:[#allocation31] sm:$0xf]
    %v9103 = vld [vmem:[#allocation31 + $0x4] sm:$0xf]
    %v9104 = vld [vmem:[#allocation31 + $0x8] sm:$0xf]
    %v9105 = vld [vmem:[#allocation31 + $0xc] sm:$0xf]
    %v9106 = vld [vmem:[#allocation31 + $0x10] sm:$0xf]
    %v9107 = vld [vmem:[#allocation31 + $0x14] sm:$0xf]
    %v9108 = vld [vmem:[#allocation31 + $0x18] sm:$0xf]
    %v9109 = vld [vmem:[#allocation31 + $0x1c] sm:$0xf]
    %v9110 = vld [vmem:[#allocation31 + $0x20] sm:$0xf]
    %v9111 = vld [vmem:[#allocation31 + $0x24] sm:$0xf]
    %v9112 = vld [vmem:[#allocation31 + $0x28] sm:$0xf]
    %v9113 = vld [vmem:[#allocation31 + $0x2c] sm:$0xf]
    %v9114 = vld [vmem:[#allocation31 + $0x30] sm:$0xf]
    %v9115 = vld [vmem:[#allocation31 + $0x34] sm:$0xf]
    %v9116 = vld [vmem:[#allocation31 + $0x38] sm:$0xf]
    %v9117 = vld [vmem:[#allocation31 + $0x3c] sm:$0xf]
    %v9118 = vld [vmem:[#allocation31 + $0x40] sm:$0xf]
    %v9119 = vld [vmem:[#allocation31 + $0x44] sm:$0xf]
    %v9120 = vld [vmem:[#allocation31 + $0x48] sm:$0xf]
    %v9121 = vld [vmem:[#allocation31 + $0x4c] sm:$0xf]
    %v9122 = vld [vmem:[#allocation31 + $0x50] sm:$0xf]
    %v9123 = vld [vmem:[#allocation31 + $0x54] sm:$0xf]
    %v9124 = vld [vmem:[#allocation31 + $0x58] sm:$0xf]
    %v9125 = vld [vmem:[#allocation31 + $0x5c] sm:$0xf]
    %v9126 = vld [vmem:[#allocation31 + $0x60] sm:$0xf]
    %v9127 = vld [vmem:[#allocation31 + $0x64] sm:$0xf]
    %v9128 = vld [vmem:[#allocation31 + $0x68] sm:$0xf]
    %v9129 = vld [vmem:[#allocation31 + $0x6c] sm:$0xf]
    %v9130 = vld [vmem:[#allocation31 + $0x70] sm:$0xf]
    %v9131 = vld [vmem:[#allocation31 + $0x74] sm:$0xf]
    %v9132 = vld [vmem:[#allocation31 + $0x78] sm:$0xf]
    %v9133 = vld [vmem:[#allocation31 + $0x7c] sm:$0xf]
    %v9134 = vld [vmem:[#allocation31 + $0x80] sm:$0xf]
    %v9135 = vld [vmem:[#allocation31 + $0x84] sm:$0xf]
    %v9136 = vld [vmem:[#allocation31 + $0x88] sm:$0xf]
    %v9137 = vld [vmem:[#allocation31 + $0x8c] sm:$0xf]
    %v9138 = vld [vmem:[#allocation31 + $0x90] sm:$0xf]
    %v9139 = vld [vmem:[#allocation31 + $0x94] sm:$0xf]
    %v9140 = vld [vmem:[#allocation31 + $0x98] sm:$0xf]
    %v9141 = vld [vmem:[#allocation31 + $0x9c] sm:$0xf]
    %v9142 = vld [vmem:[#allocation31 + $0xa0] sm:$0xf]
    %v9143 = vld [vmem:[#allocation31 + $0xa4] sm:$0xf]
    %v9144 = vld [vmem:[#allocation31 + $0xa8] sm:$0xf]
    %v9145 = vld [vmem:[#allocation31 + $0xac] sm:$0xf]
    %v9146 = vld [vmem:[#allocation31 + $0xb0] sm:$0xf]
    %v9147 = vld [vmem:[#allocation31 + $0xb4] sm:$0xf]
    %v9148 = vld [vmem:[#allocation31 + $0xb8] sm:$0xf]
    %v9149 = vld [vmem:[#allocation31 + $0xbc] sm:$0xf]
    %v9150 = vld [vmem:[#allocation31 + $0xc0] sm:$0xf]
    %v9151 = vld [vmem:[#allocation31 + $0xc4] sm:$0xf]
    %v9152 = vld [vmem:[#allocation31 + $0xc8] sm:$0xf]
    %v9153 = vld [vmem:[#allocation31 + $0xcc] sm:$0xf]
    %v9154 = vld [vmem:[#allocation31 + $0xd0] sm:$0xf]
    %v9155 = vld [vmem:[#allocation31 + $0xd4] sm:$0xf]
    %v9156 = vld [vmem:[#allocation31 + $0xd8] sm:$0xf]
    %v9157 = vld [vmem:[#allocation31 + $0xdc] sm:$0xf]
    %v9158 = vld [vmem:[#allocation31 + $0xe0] sm:$0xf]
    %v9159 = vld [vmem:[#allocation31 + $0xe4] sm:$0xf]
    %v9160 = vld [vmem:[#allocation31 + $0xe8] sm:$0xf]
    %v9161 = vld [vmem:[#allocation31 + $0xec] sm:$0xf]
    %v9162 = vld [vmem:[#allocation31 + $0xf0] sm:$0xf]
    %v9163 = vld [vmem:[#allocation31 + $0xf4] sm:$0xf]
    %v9164 = vld [vmem:[#allocation31 + $0xf8] sm:$0xf]
    %v9165 = vld [vmem:[#allocation31 + $0xfc] sm:$0xf]
    %v9166 = vpack.c.bf16 %v8589, %v8589
    %v9167 = vpack.c.bf16 %v8595, %v8595
    %v9168 = vpack.c.bf16 %v8601, %v8601
    %v9169 = vpack.c.bf16 %v8607, %v8607
    %v9170 = vpack.c.bf16 %v8613, %v8613
    %v9171 = vpack.c.bf16 %v8619, %v8619
    %v9172 = vpack.c.bf16 %v8625, %v8625
    %v9173 = vpack.c.bf16 %v8631, %v8631
    %v9174 = vpack.c.bf16 %v8637, %v8637
    %v9175 = vpack.c.bf16 %v8643, %v8643
    %v9176 = vpack.c.bf16 %v8649, %v8649
    %v9177 = vpack.c.bf16 %v8655, %v8655
    %v9178 = vpack.c.bf16 %v8661, %v8661
    %v9179 = vpack.c.bf16 %v8667, %v8667
    %v9180 = vpack.c.bf16 %v8673, %v8673
    %v9181 = vpack.c.bf16 %v8679, %v8679
    %v9182 = vpack.c.bf16 %v8685, %v8685
    %v9183 = vpack.c.bf16 %v8691, %v8691
    %v9184 = vpack.c.bf16 %v8697, %v8697
    %v9185 = vpack.c.bf16 %v8703, %v8703
    %v9186 = vpack.c.bf16 %v8709, %v8709
    %v9187 = vpack.c.bf16 %v8715, %v8715
    %v9188 = vpack.c.bf16 %v8721, %v8721
    %v9189 = vpack.c.bf16 %v8727, %v8727
    %v9190 = vpack.c.bf16 %v8733, %v8733
    %v9191 = vpack.c.bf16 %v8739, %v8739
    %v9192 = vpack.c.bf16 %v8745, %v8745
    %v9193 = vpack.c.bf16 %v8751, %v8751
    %v9194 = vpack.c.bf16 %v8757, %v8757
    %v9195 = vpack.c.bf16 %v8763, %v8763
    %v9196 = vpack.c.bf16 %v8769, %v8769
    %v9197 = vpack.c.bf16 %v8775, %v8775
    %v9198 = vld [vmem:[#allocation33] sm:$0xf]
    %v9199 = vld [vmem:[#allocation33 + $0x4] sm:$0xf]
    %v9200 = vld [vmem:[#allocation33 + $0x8] sm:$0xf]
    %v9201 = vld [vmem:[#allocation33 + $0xc] sm:$0xf]
    %v9202 = vld [vmem:[#allocation33 + $0x10] sm:$0xf]
    %v9203 = vld [vmem:[#allocation33 + $0x14] sm:$0xf]
    %v9204 = vld [vmem:[#allocation33 + $0x18] sm:$0xf]
    %v9205 = vld [vmem:[#allocation33 + $0x1c] sm:$0xf]
    %v9206 = vld [vmem:[#allocation33 + $0x20] sm:$0xf]
    %v9207 = vld [vmem:[#allocation33 + $0x24] sm:$0xf]
    %v9208 = vld [vmem:[#allocation33 + $0x28] sm:$0xf]
    %v9209 = vld [vmem:[#allocation33 + $0x2c] sm:$0xf]
    %v9210 = vld [vmem:[#allocation33 + $0x30] sm:$0xf]
    %v9211 = vld [vmem:[#allocation33 + $0x34] sm:$0xf]
    %v9212 = vld [vmem:[#allocation33 + $0x38] sm:$0xf]
    %v9213 = vld [vmem:[#allocation33 + $0x3c] sm:$0xf]
    %v9214 = vld [vmem:[#allocation33 + $0x40] sm:$0xf]
    %v9215 = vld [vmem:[#allocation33 + $0x44] sm:$0xf]
    %v9216 = vld [vmem:[#allocation33 + $0x48] sm:$0xf]
    %v9217 = vld [vmem:[#allocation33 + $0x4c] sm:$0xf]
    %v9218 = vld [vmem:[#allocation33 + $0x50] sm:$0xf]
    %v9219 = vld [vmem:[#allocation33 + $0x54] sm:$0xf]
    %v9220 = vld [vmem:[#allocation33 + $0x58] sm:$0xf]
    %v9221 = vld [vmem:[#allocation33 + $0x5c] sm:$0xf]
    %v9222 = vld [vmem:[#allocation33 + $0x60] sm:$0xf]
    %v9223 = vld [vmem:[#allocation33 + $0x64] sm:$0xf]
    %v9224 = vld [vmem:[#allocation33 + $0x68] sm:$0xf]
    %v9225 = vld [vmem:[#allocation33 + $0x6c] sm:$0xf]
    %v9226 = vld [vmem:[#allocation33 + $0x70] sm:$0xf]
    %v9227 = vld [vmem:[#allocation33 + $0x74] sm:$0xf]
    %v9228 = vld [vmem:[#allocation33 + $0x78] sm:$0xf]
    %v9229 = vld [vmem:[#allocation33 + $0x7c] sm:$0xf]
    %v9230 = vld [vmem:[#allocation33 + $0x80] sm:$0xf]
    %v9231 = vld [vmem:[#allocation33 + $0x84] sm:$0xf]
    %v9232 = vld [vmem:[#allocation33 + $0x88] sm:$0xf]
    %v9233 = vld [vmem:[#allocation33 + $0x8c] sm:$0xf]
    %v9234 = vld [vmem:[#allocation33 + $0x90] sm:$0xf]
    %v9235 = vld [vmem:[#allocation33 + $0x94] sm:$0xf]
    %v9236 = vld [vmem:[#allocation33 + $0x98] sm:$0xf]
    %v9237 = vld [vmem:[#allocation33 + $0x9c] sm:$0xf]
    %v9238 = vld [vmem:[#allocation33 + $0xa0] sm:$0xf]
    %v9239 = vld [vmem:[#allocation33 + $0xa4] sm:$0xf]
    %v9240 = vld [vmem:[#allocation33 + $0xa8] sm:$0xf]
    %v9241 = vld [vmem:[#allocation33 + $0xac] sm:$0xf]
    %v9242 = vld [vmem:[#allocation33 + $0xb0] sm:$0xf]
    %v9243 = vld [vmem:[#allocation33 + $0xb4] sm:$0xf]
    %v9244 = vld [vmem:[#allocation33 + $0xb8] sm:$0xf]
    %v9245 = vld [vmem:[#allocation33 + $0xbc] sm:$0xf]
    %v9246 = vld [vmem:[#allocation33 + $0xc0] sm:$0xf]
    %v9247 = vld [vmem:[#allocation33 + $0xc4] sm:$0xf]
    %v9248 = vld [vmem:[#allocation33 + $0xc8] sm:$0xf]
    %v9249 = vld [vmem:[#allocation33 + $0xcc] sm:$0xf]
    %v9250 = vld [vmem:[#allocation33 + $0xd0] sm:$0xf]
    %v9251 = vld [vmem:[#allocation33 + $0xd4] sm:$0xf]
    %v9252 = vld [vmem:[#allocation33 + $0xd8] sm:$0xf]
    %v9253 = vld [vmem:[#allocation33 + $0xdc] sm:$0xf]
    %v9254 = vld [vmem:[#allocation33 + $0xe0] sm:$0xf]
    %v9255 = vld [vmem:[#allocation33 + $0xe4] sm:$0xf]
    %v9256 = vld [vmem:[#allocation33 + $0xe8] sm:$0xf]
    %v9257 = vld [vmem:[#allocation33 + $0xec] sm:$0xf]
    %v9258 = vld [vmem:[#allocation33 + $0xf0] sm:$0xf]
    %v9259 = vld [vmem:[#allocation33 + $0xf4] sm:$0xf]
    %v9260 = vld [vmem:[#allocation33 + $0xf8] sm:$0xf]
    %v9261 = vld [vmem:[#allocation33 + $0xfc] sm:$0xf]
    %v9294 = vunpack.c.l.b16 %v9166
    %v9295 = vunpack.c.l.b16 %v9167
    %v9296 = vunpack.c.l.b16 %v9168
    %v9297 = vunpack.c.l.b16 %v9169
    %v9298 = vunpack.c.l.b16 %v9170
    %v9299 = vunpack.c.l.b16 %v9171
    %v9300 = vunpack.c.l.b16 %v9172
    %v9301 = vunpack.c.l.b16 %v9173
    %v9302 = vunpack.c.l.b16 %v9174
    %v9303 = vunpack.c.l.b16 %v9175
    %v9304 = vunpack.c.l.b16 %v9176
    %v9305 = vunpack.c.l.b16 %v9177
    %v9306 = vunpack.c.l.b16 %v9178
    %v9307 = vunpack.c.l.b16 %v9179
    %v9308 = vunpack.c.l.b16 %v9180
    %v9309 = vunpack.c.l.b16 %v9181
    %v9310 = vunpack.c.l.b16 %v9182
    %v9311 = vunpack.c.l.b16 %v9183
    %v9312 = vunpack.c.l.b16 %v9184
    %v9313 = vunpack.c.l.b16 %v9185
    %v9314 = vunpack.c.l.b16 %v9186
    %v9315 = vunpack.c.l.b16 %v9187
    %v9316 = vunpack.c.l.b16 %v9188
    %v9317 = vunpack.c.l.b16 %v9189
    %v9318 = vunpack.c.l.b16 %v9190
    %v9319 = vunpack.c.l.b16 %v9191
    %v9320 = vunpack.c.l.b16 %v9192
    %v9321 = vunpack.c.l.b16 %v9193
    %v9322 = vunpack.c.l.b16 %v9194
    %v9323 = vunpack.c.l.b16 %v9195
    %v9324 = vunpack.c.l.b16 %v9196
    %v9325 = vunpack.c.l.b16 %v9197
    %v9326 = vsel %vm8029, %v9298, %v9294
    %v9327 = vsel %vm8025, %v9302, %v9326
    %v9328 = vsel %vm8031, %v9306, %v9327
    %v9329 = vsel %vm8037, %v9310, %v9328
    %v9330 = vsel %vm8043, %v9314, %v9329
    %v9331 = vsel %vm8049, %v9318, %v9330
    %v9332 = vsel %vm8230, %v9322, %v9331
    %v9333 = vsel %vm8029, %v9299, %v9295
    %v9334 = vsel %vm8025, %v9303, %v9333
    %v9335 = vsel %vm8031, %v9307, %v9334
    %v9336 = vsel %vm8037, %v9311, %v9335
    %v9337 = vsel %vm8043, %v9315, %v9336
    %v9338 = vsel %vm8049, %v9319, %v9337
    %v9339 = vsel %vm8230, %v9323, %v9338
    %v9340 = vsel %vm8029, %v9300, %v9296
    %v9341 = vsel %vm8025, %v9304, %v9340
    %v9342 = vsel %vm8031, %v9308, %v9341
    %v9343 = vsel %vm8037, %v9312, %v9342
    %v9344 = vsel %vm8043, %v9316, %v9343
    %v9345 = vsel %vm8049, %v9320, %v9344
    %v9346 = vsel %vm8230, %v9324, %v9345
    %v9347 = vsel %vm8029, %v9301, %v9297
    %v9348 = vsel %vm8025, %v9305, %v9347
    %v9349 = vsel %vm8031, %v9309, %v9348
    %v9350 = vsel %vm8037, %v9313, %v9349
    %v9351 = vsel %vm8043, %v9317, %v9350
    %v9352 = vsel %vm8049, %v9321, %v9351
    %v9353 = vsel %vm8230, %v9325, %v9352
    %v9354 = vpack.c.b16 %v9332, %v9332
    %v9355 = vpack.c.b16 %v9339, %v9339
    %v9356 = vpack.c.b16 %v9346, %v9346
    %v9357 = vpack.c.b16 %v9353, %v9353
    %v9426 = vunpack.c.l.b16 %v9198
    %v9427 = vunpack.c.l.b16 %v9199
    %v9428 = vunpack.c.l.b16 %v9200
    %v9429 = vunpack.c.l.b16 %v9201
    %v9430 = vunpack.c.l.b16 %v9202
    %v9431 = vunpack.c.l.b16 %v9203
    %v9432 = vunpack.c.l.b16 %v9204
    %v9433 = vunpack.c.l.b16 %v9205
    %v9434 = vunpack.c.l.b16 %v9206
    %v9435 = vunpack.c.l.b16 %v9207
    %v9436 = vunpack.c.l.b16 %v9208
    %v9437 = vunpack.c.l.b16 %v9209
    %v9438 = vunpack.c.l.b16 %v9210
    %v9439 = vunpack.c.l.b16 %v9211
    %v9440 = vunpack.c.l.b16 %v9212
    %v9441 = vunpack.c.l.b16 %v9213
    %v9442 = vunpack.c.l.b16 %v9214
    %v9443 = vunpack.c.l.b16 %v9215
    %v9444 = vunpack.c.l.b16 %v9216
    %v9445 = vunpack.c.l.b16 %v9217
    %v9446 = vunpack.c.l.b16 %v9218
    %v9447 = vunpack.c.l.b16 %v9219
    %v9448 = vunpack.c.l.b16 %v9220
    %v9449 = vunpack.c.l.b16 %v9221
    %v9450 = vunpack.c.l.b16 %v9222
    %v9451 = vunpack.c.l.b16 %v9223
    %v9452 = vunpack.c.l.b16 %v9224
    %v9453 = vunpack.c.l.b16 %v9225
    %v9454 = vunpack.c.l.b16 %v9226
    %v9455 = vunpack.c.l.b16 %v9227
    %v9456 = vunpack.c.l.b16 %v9228
    %v9457 = vunpack.c.l.b16 %v9229
    %v9458 = vunpack.c.l.b16 %v9230
    %v9459 = vunpack.c.l.b16 %v9231
    %v9460 = vunpack.c.l.b16 %v9232
    %v9461 = vunpack.c.l.b16 %v9233
    %v9462 = vunpack.c.l.b16 %v9234
    %v9463 = vunpack.c.l.b16 %v9235
    %v9464 = vunpack.c.l.b16 %v9236
    %v9465 = vunpack.c.l.b16 %v9237
    %v9466 = vunpack.c.l.b16 %v9238
    %v9467 = vunpack.c.l.b16 %v9239
    %v9468 = vunpack.c.l.b16 %v9240
    %v9469 = vunpack.c.l.b16 %v9241
    %v9470 = vunpack.c.l.b16 %v9242
    %v9471 = vunpack.c.l.b16 %v9243
    %v9472 = vunpack.c.l.b16 %v9244
    %v9473 = vunpack.c.l.b16 %v9245
    %v9474 = vunpack.c.l.b16 %v9246
    %v9475 = vunpack.c.l.b16 %v9247
    %v9476 = vunpack.c.l.b16 %v9248
    %v9477 = vunpack.c.l.b16 %v9249
    %v9478 = vunpack.c.l.b16 %v9250
    %v9479 = vunpack.c.l.b16 %v9251
    %v9480 = vunpack.c.l.b16 %v9252
    %v9481 = vunpack.c.l.b16 %v9253
    %v9482 = vunpack.c.l.b16 %v9254
    %v9483 = vunpack.c.l.b16 %v9255
    %v9484 = vunpack.c.l.b16 %v9256
    %v9485 = vunpack.c.l.b16 %v9257
    %v9486 = vunpack.c.l.b16 %v9258
    %v9487 = vunpack.c.l.b16 %v9259
    %v9488 = vunpack.c.l.b16 %v9260
    %v9489 = vunpack.c.l.b16 %v9261
    %v9490 = vpack.c.b16 %v9427, %v9426
    %v9491 = vpack.c.b16 %v9429, %v9428
    %v9492 = vpack.c.b16 %v9431, %v9430
    %v9493 = vpack.c.b16 %v9433, %v9432
    %v9494 = vpack.c.b16 %v9435, %v9434
    %v9495 = vpack.c.b16 %v9437, %v9436
    %v9496 = vpack.c.b16 %v9439, %v9438
    %v9497 = vpack.c.b16 %v9441, %v9440
    %v9498 = vpack.c.b16 %v9443, %v9442
    %v9499 = vpack.c.b16 %v9445, %v9444
    %v9500 = vpack.c.b16 %v9447, %v9446
    %v9501 = vpack.c.b16 %v9449, %v9448
    %v9502 = vpack.c.b16 %v9451, %v9450
    %v9503 = vpack.c.b16 %v9453, %v9452
    %v9504 = vpack.c.b16 %v9455, %v9454
    %v9505 = vpack.c.b16 %v9457, %v9456
    %v9506 = vpack.c.b16 %v9459, %v9458
    %v9507 = vpack.c.b16 %v9461, %v9460
    %v9508 = vpack.c.b16 %v9463, %v9462
    %v9509 = vpack.c.b16 %v9465, %v9464
    %v9510 = vpack.c.b16 %v9467, %v9466
    %v9511 = vpack.c.b16 %v9469, %v9468
    %v9512 = vpack.c.b16 %v9471, %v9470
    %v9513 = vpack.c.b16 %v9473, %v9472
    %v9514 = vpack.c.b16 %v9475, %v9474
    %v9515 = vpack.c.b16 %v9477, %v9476
    %v9516 = vpack.c.b16 %v9479, %v9478
    %v9517 = vpack.c.b16 %v9481, %v9480
    %v9518 = vpack.c.b16 %v9483, %v9482
    %v9519 = vpack.c.b16 %v9485, %v9484
    %v9520 = vpack.c.b16 %v9487, %v9486
    %v9521 = vpack.c.b16 %v9489, %v9488
    %9554 = vmatpush.bf16.msra.mxu0 %v9497
    %9555 = vmatpush.bf16.msra.mxu0 %v9496
    %9556 = vmatpush.bf16.msra.mxu0 %v9495
    %9557 = vmatpush.bf16.msra.mxu0 %v9494
    %9558 = vmatpush.bf16.msra.mxu0 %v9493
    %9559 = vmatpush.bf16.msra.mxu0 %v9492
    %9560 = vmatpush.bf16.msra.mxu0 %v9491
    %9561 = vmatpush.bf16.msra.mxu0 %v9490
    %9562 = vmatmul.bf16.gmra.mxu0 %v9354
    %v9563 = vpop.f32.mrf.mxu0
    %v9564 = vadd.f32 0.0, %v9563
    %v9565 = vpop.f32.mrf.mxu0
    %9566 = vdwg.mxu0
    %9567 = vmatpush.bf16.msra.mxu0 %v9505
    %9568 = vmatpush.bf16.msra.mxu0 %v9504
    %9569 = vmatpush.bf16.msra.mxu0 %v9503
    %9570 = vmatpush.bf16.msra.mxu0 %v9502
    %9571 = vmatpush.bf16.msra.mxu0 %v9501
    %9572 = vmatpush.bf16.msra.mxu0 %v9500
    %9573 = vmatpush.bf16.msra.mxu0 %v9499
    %9574 = vmatpush.bf16.msra.mxu0 %v9498
    %9575 = vmatmul.bf16.gmra.mxu0 %v9355
    %v9576 = vpop.f32.mrf.mxu0
    %v9577 = vadd.f32 %v9564, %v9576
    %v9578 = vpop.f32.mrf.mxu0
    %9579 = vdwg.mxu0
    %9580 = vmatpush.bf16.msra.mxu0 %v9513
    %9581 = vmatpush.bf16.msra.mxu0 %v9512
    %9582 = vmatpush.bf16.msra.mxu0 %v9511
    %9583 = vmatpush.bf16.msra.mxu0 %v9510
    %9584 = vmatpush.bf16.msra.mxu0 %v9509
    %9585 = vmatpush.bf16.msra.mxu0 %v9508
    %9586 = vmatpush.bf16.msra.mxu0 %v9507
    %9587 = vmatpush.bf16.msra.mxu0 %v9506
    %9588 = vmatmul.bf16.gmra.mxu0 %v9356
    %v9589 = vpop.f32.mrf.mxu0
    %v9590 = vadd.f32 %v9577, %v9589
    %v9591 = vpop.f32.mrf.mxu0
    %9592 = vdwg.mxu0
    %9593 = vmatpush.bf16.msra.mxu0 %v9521
    %9594 = vmatpush.bf16.msra.mxu0 %v9520
    %9595 = vmatpush.bf16.msra.mxu0 %v9519
    %9596 = vmatpush.bf16.msra.mxu0 %v9518
    %9597 = vmatpush.bf16.msra.mxu0 %v9517
    %9598 = vmatpush.bf16.msra.mxu0 %v9516
    %9599 = vmatpush.bf16.msra.mxu0 %v9515
    %9600 = vmatpush.bf16.msra.mxu0 %v9514
    %9601 = vmatmul.bf16.gmra.mxu0 %v9357
    %v9602 = vpop.f32.mrf.mxu0
    %v9603 = vadd.f32 %v9590, %v9602
    %v9604 = vpop.f32.mrf.mxu0
    %9605 = vdwg.mxu0
    %v9670 = vunpack.c.l.b16 %v9102
    %v9671 = vunpack.c.l.b16 %v9103
    %v9672 = vunpack.c.l.b16 %v9104
    %v9673 = vunpack.c.l.b16 %v9105
    %v9674 = vunpack.c.l.b16 %v9106
    %v9675 = vunpack.c.l.b16 %v9107
    %v9676 = vunpack.c.l.b16 %v9108
    %v9677 = vunpack.c.l.b16 %v9109
    %v9678 = vunpack.c.l.b16 %v9110
    %v9679 = vunpack.c.l.b16 %v9111
    %v9680 = vunpack.c.l.b16 %v9112
    %v9681 = vunpack.c.l.b16 %v9113
    %v9682 = vunpack.c.l.b16 %v9114
    %v9683 = vunpack.c.l.b16 %v9115
    %v9684 = vunpack.c.l.b16 %v9116
    %v9685 = vunpack.c.l.b16 %v9117
    %v9686 = vunpack.c.l.b16 %v9118
    %v9687 = vunpack.c.l.b16 %v9119
    %v9688 = vunpack.c.l.b16 %v9120
    %v9689 = vunpack.c.l.b16 %v9121
    %v9690 = vunpack.c.l.b16 %v9122
    %v9691 = vunpack.c.l.b16 %v9123
    %v9692 = vunpack.c.l.b16 %v9124
    %v9693 = vunpack.c.l.b16 %v9125
    %v9694 = vunpack.c.l.b16 %v9126
    %v9695 = vunpack.c.l.b16 %v9127
    %v9696 = vunpack.c.l.b16 %v9128
    %v9697 = vunpack.c.l.b16 %v9129
    %v9698 = vunpack.c.l.b16 %v9130
    %v9699 = vunpack.c.l.b16 %v9131
    %v9700 = vunpack.c.l.b16 %v9132
    %v9701 = vunpack.c.l.b16 %v9133
    %v9702 = vunpack.c.l.b16 %v9134
    %v9703 = vunpack.c.l.b16 %v9135
    %v9704 = vunpack.c.l.b16 %v9136
    %v9705 = vunpack.c.l.b16 %v9137
    %v9706 = vunpack.c.l.b16 %v9138
    %v9707 = vunpack.c.l.b16 %v9139
    %v9708 = vunpack.c.l.b16 %v9140
    %v9709 = vunpack.c.l.b16 %v9141
    %v9710 = vunpack.c.l.b16 %v9142
    %v9711 = vunpack.c.l.b16 %v9143
    %v9712 = vunpack.c.l.b16 %v9144
    %v9713 = vunpack.c.l.b16 %v9145
    %v9714 = vunpack.c.l.b16 %v9146
    %v9715 = vunpack.c.l.b16 %v9147
    %v9716 = vunpack.c.l.b16 %v9148
    %v9717 = vunpack.c.l.b16 %v9149
    %v9718 = vunpack.c.l.b16 %v9150
    %v9719 = vunpack.c.l.b16 %v9151
    %v9720 = vunpack.c.l.b16 %v9152
    %v9721 = vunpack.c.l.b16 %v9153
    %v9722 = vunpack.c.l.b16 %v9154
    %v9723 = vunpack.c.l.b16 %v9155
    %v9724 = vunpack.c.l.b16 %v9156
    %v9725 = vunpack.c.l.b16 %v9157
    %v9726 = vunpack.c.l.b16 %v9158
    %v9727 = vunpack.c.l.b16 %v9159
    %v9728 = vunpack.c.l.b16 %v9160
    %v9729 = vunpack.c.l.b16 %v9161
    %v9730 = vunpack.c.l.b16 %v9162
    %v9731 = vunpack.c.l.b16 %v9163
    %v9732 = vunpack.c.l.b16 %v9164
    %v9733 = vunpack.c.l.b16 %v9165
    %v9734 = vpack.c.b16 %v9671, %v9670
    %v9735 = vpack.c.b16 %v9673, %v9672
    %v9736 = vpack.c.b16 %v9675, %v9674
    %v9737 = vpack.c.b16 %v9677, %v9676
    %v9738 = vpack.c.b16 %v9679, %v9678
    %v9739 = vpack.c.b16 %v9681, %v9680
    %v9740 = vpack.c.b16 %v9683, %v9682
    %v9741 = vpack.c.b16 %v9685, %v9684
    %v9742 = vpack.c.b16 %v9687, %v9686
    %v9743 = vpack.c.b16 %v9689, %v9688
    %v9744 = vpack.c.b16 %v9691, %v9690
    %v9745 = vpack.c.b16 %v9693, %v9692
    %v9746 = vpack.c.b16 %v9695, %v9694
    %v9747 = vpack.c.b16 %v9697, %v9696
    %v9748 = vpack.c.b16 %v9699, %v9698
    %v9749 = vpack.c.b16 %v9701, %v9700
    %v9750 = vpack.c.b16 %v9703, %v9702
    %v9751 = vpack.c.b16 %v9705, %v9704
    %v9752 = vpack.c.b16 %v9707, %v9706
    %v9753 = vpack.c.b16 %v9709, %v9708
    %v9754 = vpack.c.b16 %v9711, %v9710
    %v9755 = vpack.c.b16 %v9713, %v9712
    %v9756 = vpack.c.b16 %v9715, %v9714
    %v9757 = vpack.c.b16 %v9717, %v9716
    %v9758 = vpack.c.b16 %v9719, %v9718
    %v9759 = vpack.c.b16 %v9721, %v9720
    %v9760 = vpack.c.b16 %v9723, %v9722
    %v9761 = vpack.c.b16 %v9725, %v9724
    %v9762 = vpack.c.b16 %v9727, %v9726
    %v9763 = vpack.c.b16 %v9729, %v9728
    %v9764 = vpack.c.b16 %v9731, %v9730
    %v9765 = vpack.c.b16 %v9733, %v9732
    %9798 = vmatpush.bf16.msra.mxu0 %v9741
    %9799 = vmatpush.bf16.msra.mxu0 %v9740
    %9800 = vmatpush.bf16.msra.mxu0 %v9739
    %9801 = vmatpush.bf16.msra.mxu0 %v9738
    %9802 = vmatpush.bf16.msra.mxu0 %v9737
    %9803 = vmatpush.bf16.msra.mxu0 %v9736
    %9804 = vmatpush.bf16.msra.mxu0 %v9735
    %9805 = vmatpush.bf16.msra.mxu0 %v9734
    %9806 = vmatmul.bf16.gmra.mxu0 %v6988
    %v9807 = vpop.f32.mrf.mxu0
    %v9808 = vadd.f32 %v9603, %v9807
    %v9809 = vpop.f32.mrf.mxu0
    %9810 = vdwg.mxu0
    %9811 = vmatpush.bf16.msra.mxu0 %v9749
    %9812 = vmatpush.bf16.msra.mxu0 %v9748
    %9813 = vmatpush.bf16.msra.mxu0 %v9747
    %9814 = vmatpush.bf16.msra.mxu0 %v9746
    %9815 = vmatpush.bf16.msra.mxu0 %v9745
    %9816 = vmatpush.bf16.msra.mxu0 %v9744
    %9817 = vmatpush.bf16.msra.mxu0 %v9743
    %9818 = vmatpush.bf16.msra.mxu0 %v9742
    %9819 = vmatmul.bf16.gmra.mxu0 %v6989
    %v9820 = vpop.f32.mrf.mxu0
    %v9821 = vadd.f32 %v9808, %v9820
    %v9822 = vpop.f32.mrf.mxu0
    %9823 = vdwg.mxu0
    %9824 = vmatpush.bf16.msra.mxu0 %v9757
    %9825 = vmatpush.bf16.msra.mxu0 %v9756
    %9826 = vmatpush.bf16.msra.mxu0 %v9755
    %9827 = vmatpush.bf16.msra.mxu0 %v9754
    %9828 = vmatpush.bf16.msra.mxu0 %v9753
    %9829 = vmatpush.bf16.msra.mxu0 %v9752
    %9830 = vmatpush.bf16.msra.mxu0 %v9751
    %9831 = vmatpush.bf16.msra.mxu0 %v9750
    %9832 = vmatmul.bf16.gmra.mxu0 %v6990
    %v9833 = vpop.f32.mrf.mxu0
    %v9834 = vadd.f32 %v9821, %v9833
    %v9835 = vpop.f32.mrf.mxu0
    %9836 = vdwg.mxu0
    %9837 = vmatpush.bf16.msra.mxu0 %v9765
    %9838 = vmatpush.bf16.msra.mxu0 %v9764
    %9839 = vmatpush.bf16.msra.mxu0 %v9763
    %9840 = vmatpush.bf16.msra.mxu0 %v9762
    %9841 = vmatpush.bf16.msra.mxu0 %v9761
    %9842 = vmatpush.bf16.msra.mxu0 %v9760
    %9843 = vmatpush.bf16.msra.mxu0 %v9759
    %9844 = vmatpush.bf16.msra.mxu0 %v9758
    %9845 = vmatmul.bf16.gmra.mxu0 %v6991
    %v9846 = vpop.f32.mrf.mxu0
    %v9847 = vadd.f32 %v9834, %v9846
    %v9848 = vpop.f32.mrf.mxu0
    %9849 = vdwg.mxu0
    %v9850 = vld [vmem:[#allocation34] sm:$0x1]
    %v9852 = vperm.slane %v9850, 0
    %v9854 = vadd.f32 %v9847, %v9852
    %vm9855 = vcmp.gt.f32.partialorder %v9854, 0.0
    %v9856 = vmin.f32 %v9854, 0.0
    %v9857 = vmul.f32 %v9856, 1.442695
    %v9858 = vpow.pop %v9857
    %v9859 = vsub.f32 %v9858, 1.0
    %v9860 = vsel %vm9855, %v9854, %v9859
    %9861 = vst [vmem:[%s55] sm:$0xff] %v9860
    // Predicated region
    $region198: #{decoder_step.1} parent=1 // pred_check
      _
    $region199: #{decoder_step.1} parent=1 // pred_check_branch
      %9863 = sbr.rel (0) target = $region201
    $region200: #{decoder_step.1} parent=1 // pred_region
      _
    $region201: #{decoder_step.1} parent=1 // pred_fallthru
      _
    // Predicated region
    $region202: #{decoder_step.1} parent=1 // pred_check
      _
    $region203: #{decoder_step.1} parent=1 // pred_check_branch
      %9865 = sbr.rel (0) target = $region205
    $region204: #{decoder_step.1} parent=1 // pred_region
      _
    $region205: #{decoder_step.1} parent=1 // pred_fallthru
      _
    // Predicated region
    $region206: #{decoder_step.1} parent=1 // pred_check
      _
    $region207: #{decoder_step.1} parent=1 // pred_check_branch
      %9867 = sbr.rel (0) target = $region209
    $region208: #{decoder_step.1} parent=1 // pred_region
      _
    $region209: #{decoder_step.1} parent=1 // pred_fallthru
      _
    // Predicated region
    $region210: #{decoder_step.1} parent=1 // pred_check
      _
    $region211: #{decoder_step.1} parent=1 // pred_check_branch
      %9869 = sbr.rel (0) target = $region213
    $region212: #{decoder_step.1} parent=1 // pred_region
      _
    $region213: #{decoder_step.1} parent=1 // pred_fallthru
      _
    // Predicated region
    $region214: #{decoder_step.1} parent=1 // pred_check
      _
    $region215: #{decoder_step.1} parent=1 // pred_check_branch
      %9871 = sbr.rel (0) target = $region217
    $region216: #{decoder_step.1} parent=1 // pred_region
      _
    $region217: #{decoder_step.1} parent=1 // pred_fallthru
      _
    // Predicated region
    $region218: #{decoder_step.1} parent=1 // pred_check
      _
    $region219: #{decoder_step.1} parent=1 // pred_check_branch
      %9873 = sbr.rel (0) target = $region221
    $region220: #{decoder_step.1} parent=1 // pred_region
      _
    $region221: #{decoder_step.1} parent=1 // pred_fallthru
      _
    // Predicated region
    $region222: #{decoder_step.1} parent=1 // pred_check
      _
    $region223: #{decoder_step.1} parent=1 // pred_check_branch
      %9875 = sbr.rel (0) target = $region225
    $region224: #{decoder_step.1} parent=1 // pred_region
      _
    $region225: #{decoder_step.1} parent=1 // pred_fallthru
      _
    // Predicated region
    $region226: #{decoder_step.1} parent=1 // pred_check
      _
    $region227: #{decoder_step.1} parent=1 // pred_check_branch
      %9877 = sbr.rel (0) target = $region229
    $region228: #{decoder_step.1} parent=1 // pred_region
      _
    $region229: #{decoder_step.1} parent=1 // pred_fallthru
      _
    // Predicated region
    $region230: #{decoder_step.1} parent=1 // pred_check
      _
    $region231: #{decoder_step.1} parent=1 // pred_check_branch
      %9879 = sbr.rel (0) target = $region233
    $region232: #{decoder_step.1} parent=1 // pred_region
      _
    $region233: #{decoder_step.1} parent=1 // pred_fallthru
      _
    // Predicated region
    $region234: #{decoder_step.1} parent=1 // pred_check
      _
    $region235: #{decoder_step.1} parent=1 // pred_check_branch
      %9881 = sbr.rel (0) target = $region237
    $region236: #{decoder_step.1} parent=1 // pred_region
      _
    $region237: #{decoder_step.1} parent=1 // pred_fallthru
      _
    // Predicated region
    $region238: #{decoder_step.1} parent=1 // pred_check
      _
    $region239: #{decoder_step.1} parent=1 // pred_check_branch
      %9883 = sbr.rel (0) target = $region241
    $region240: #{decoder_step.1} parent=1 // pred_region
      _
    $region241: #{decoder_step.1} parent=1 // pred_fallthru
      _
    // Predicated region
    $region242: #{decoder_step.1} parent=1 // pred_check
      _
    $region243: #{decoder_step.1} parent=1 // pred_check_branch
      %9885 = sbr.rel (0) target = $region245
    $region244: #{decoder_step.1} parent=1 // pred_region
      _
    $region245: #{decoder_step.1} parent=1 // pred_fallthru
      _
    %9886 = vsyncpa [#allocation3], 1
    %9887 = vsyncpa [#allocation5], 1
    %9888 = vsyncpa [#allocation8], 1
    %9889 = vsyncpa [#allocation11], 1
    %9890 = vsyncpa [#allocation14], 1
    %9891 = vsyncpa [#allocation17], 1
    %9892 = vsyncpa [#allocation20], 1
    %9893 = vsyncpa [#allocation23], 1
    %9894 = vsyncpa [#allocation26], 1
    %9895 = vsyncpa [#allocation29], 1
    %9896 = vsyncpa [#allocation32], 1
    %9897 = vsyncpa [#allocation35], 1

</llo_original>
